<compile_context>
chip_gen: v7x
topology: tpu7x:2x2x1
jax: 0.10.0
libtpu: 0.0.40
codegen_flags: <defaults>
</compile_context>

<pallas_src>
import jax
import jax.numpy as jnp
from jax.experimental import pallas as pl
from jax.experimental.pallas import tpu as pltpu

EPS_BN = 1e-5
EPS_LN = 1e-5
# Per-sample halo rows on each side of the sequence.  Must be >= the largest conv
# half-width (kernel_size=7 -> 3); rounded up to 4 so every scratch store starts on an
# 8-aligned row and the per-sample padded length L + 2*HALO is a multiple of 8.
HALO = 4


# ------------------------------- fused kernel --------------------------------

def mrlat_kernel(
        x_ref,                                     # (R, Cin) f32, flat per-sample-haloed rows
        w1_ref, b1_ref,                            # fused stage 1 (both stacks): (3*Cin, 4*cmid)
        vw2_ref, vb2_ref, vw3_ref, vb3_ref,        # values stack, stages 2-3 ([conv|res] fused)
        ww2_ref, wb2_ref, ww3_ref, wb3_ref,        # weights stack, stages 2-3
        g_ref, beta_ref, dw_ref, db_ref, ow_ref, ob_ref,   # shared LayerNorm + head
        o_ref,                                     # (Bb, nl_pad) f32 lane-dense logits slab
        pad_ref):                                  # (2*HALO + R, cmax) f32 zero-haloed scratch
    R = x_ref.shape[0]
    Bb = o_ref.shape[0]
    Lp = R // Bb                                   # per-sample padded length
    L = Lp - 2 * HALO
    cmid = b1_ref.shape[1] // 4
    cmax = pad_ref.shape[1]

    # Row-validity mask over the flattened (sample, padded position) layout: 1 on the L
    # real sequence rows of every sample, 0 on its halo rows.  Built with an unrolled
    # OR of range tests (no integer div/mod on the VPU).
    row = jax.lax.broadcasted_iota(jnp.int32, (R, 1), 0)
    valid = jnp.logical_and(row >= HALO, row < HALO + L)
    for b in range(1, Bb):
        lo = b * Lp + HALO
        valid = jnp.logical_or(valid, jnp.logical_and(row >= lo, row < lo + L))
    fvalid = valid.astype(jnp.float32)

    # Zero ONLY the global halo rows of the scratch (tiny).  Per-sample halo rows live
    # inside the activation slab and are zeroed via `fvalid` before every write.
    pad_ref[:HALO, :] = jnp.zeros((HALO, cmax), pad_ref.dtype)
    pad_ref[HALO + R:2 * HALO + R, :] = jnp.zeros((HALO, cmax), pad_ref.dtype)

    def fused_conv(h, ksize, w_ref, b_ref):
        """'same' Conv1d + folded BatchNorm + residual 1x1 conv as ONE MXU matmul.

        h: (R, cin) f32 with zero halo rows.  h is written once into the zero-haloed
        scratch, the k static tap slices are concatenated along lanes and the whole
        batch block hits the MXU as a single (R, k*cin) @ (k*cin, Nout) matmul with
        bf16 operands / f32 accumulation.  Nout packs [conv | residual] column blocks
        (the residual weight sits in the centre-tap row block), so the 1x1 residual
        conv costs no extra matmul issue.
        """
        cin = h.shape[1]
        p = (ksize - 1) // 2
        pad_ref[HALO:HALO + R, :cin] = h
        cols = jnp.concatenate(
            [pad_ref[HALO - p + dk:HALO - p + dk + R, :cin] for dk in range(ksize)],
            axis=1)                                          # (R, ksize*cin) f32
        return jnp.dot(cols.astype(jnp.bfloat16), w_ref[...],
                       preferred_element_type=jnp.float32) + b_ref[...]

    def stage(h, ksize, w_ref, b_ref):
        full = fused_conv(h * fvalid, ksize, w_ref, b_ref)   # halo rows -> 0 before write
        cs = full.shape[1] // 2
        # Dropout(p=0.0) == identity; BatchNorm already folded into the weights.
        return jnp.maximum(full[:, :cs], 0.0) + full[:, cs:]  # relu(conv) + residual

    # ---- stage 1: both stacks share x -> one im2col, one (R,3*Cin)@(3*Cin,4*cmid).
    full1 = fused_conv(x_ref[...], 3, w1_ref, b1_ref)        # x halo rows already zero
    v = jnp.maximum(full1[:, :cmid], 0.0) + full1[:, cmid:2 * cmid]
    w = jnp.maximum(full1[:, 2 * cmid:3 * cmid], 0.0) + full1[:, 3 * cmid:4 * cmid]

    # ---- remaining stages of each stack (the single scratch is reused sequentially).
    v = stage(v, 5, vw2_ref, vb2_ref)
    v = stage(v, 7, vw3_ref, vb3_ref)                        # (R, cout)
    w = stage(w, 5, ww2_ref, wb2_ref)
    w = stage(w, 7, ww3_ref, wb3_ref)                        # (R, cout)

    # ---- pooling over the sequence, per sample (halo rows masked out); fused in-kernel
    # so the (R, cout) activations never round-trip HBM.
    prod = v * w * fvalid                                    # halo rows -> 0
    vmax = jnp.where(valid, v, -jnp.inf)                     # halo rows -> -inf
    sums, maxs = [], []
    for b in range(Bb):                                      # static loop, 8-aligned slices
        r0, r1 = b * Lp, (b + 1) * Lp
        sums.append(jnp.sum(prod[r0:r1, :], axis=0, keepdims=True))
        maxs.append(jnp.max(vmax[r0:r1, :], axis=0, keepdims=True))
    x_sum = jnp.concatenate(sums, axis=0)                    # (Bb, cout)
    x_max = jnp.concatenate(maxs, axis=0)                    # (Bb, cout)

    # ---- shared LayerNorm + classification head, batched over the Bb samples.
    g = g_ref[...]
    beta = beta_ref[...]

    def layernorm(z):
        mu = jnp.mean(z, axis=-1, keepdims=True)
        var = jnp.mean(jnp.square(z - mu), axis=-1, keepdims=True)
        return (z - mu) * jax.lax.rsqrt(var + EPS_LN) * g + beta

    ab = jnp.concatenate([layernorm(x_sum), layernorm(x_max)], axis=1)   # (Bb, 2*cout)
    h = jnp.tanh(jnp.dot(ab.astype(jnp.bfloat16), dw_ref[...],
                         preferred_element_type=jnp.float32) + db_ref[...])
    o_ref[...] = (jnp.dot(h.astype(jnp.bfloat16), ow_ref[...],
                          preferred_element_type=jnp.float32) + ob_ref[...])


def mrlat_forward(embeddings, vstack, wstack, head, *, block_b=8):
    B, L, Cin = embeddings.shape
    assert B % block_b == 0, (B, block_b)
    args = pack_params(vstack, wstack, head)
    nl_pad = args[-2].shape[1]
    num_labels = head["ow"].shape[1]
    cmid = vstack[0]["w"].shape[1]
    cmax = max(Cin, cmid)
    Lp = L + 2 * HALO
    R = block_b * Lp

    # Per-sample zero halos baked into a flat row layout (cheap XLA ops, outside the
    # kernel): (B, L, Cin) -> (B * (L + 2*HALO), Cin).
    x_flat = jnp.pad(embeddings, ((0, 0), (HALO, HALO), (0, 0))).reshape(B * Lp, Cin)

    def const_spec(a):
        return pl.BlockSpec(a.shape, lambda i: (0,) * a.ndim)   # resident across steps

    logits_pad = pl.pallas_call(
        mrlat_kernel,
        out_shape=jax.ShapeDtypeStruct((B, nl_pad), jnp.float32),
        grid=(B // block_b,),
        in_specs=([pl.BlockSpec((R, Cin), lambda b: (b, 0))] +
                  [const_spec(a) for a in args]),
        out_specs=pl.BlockSpec((block_b, nl_pad), lambda b: (b, 0)),
        scratch_shapes=[pltpu.VMEM((2 * HALO + R, cmax), jnp.float32)],
        compiler_params=pltpu.CompilerParams(
            dimension_semantics=("parallel",),
            vmem_limit_bytes=32 * 1024 * 1024),
    )(x_flat, *args)
    return logits_pad[:, :num_labels]


# --------------------------- parameter init / packing -------------------------

def _init_stage(key, ksize, cin, cout):
    """Conv1d(k,'same') + BatchNorm1d(eval) + residual Conv1d(1) block parameters.

    Eval-mode BatchNorm is folded into the conv weight/bias (exact rewrite).  Matmul
    weights are stored in bfloat16; biases stay float32.
    """
    kw, kb, krw, krb, kg, kbe, km, kv = jax.random.split(key, 8)
    w = jax.random.normal(kw, (ksize, cin, cout), jnp.float32) / jnp.sqrt(ksize * cin)
    b = jax.random.normal(kb, (cout,), jnp.float32) / jnp.sqrt(cin)
    rw = jax.random.normal(krw, (cin, cout), jnp.float32) / jnp.sqrt(cin)
    rb = jax.random.normal(krb, (cout,), jnp.float32) / jnp.sqrt(cin)
    gamma = 1.0 + 0.1 * jax.random.normal(kg, (cout,), jnp.float32)
    beta = 0.1 * jax.random.normal(kbe, (cout,), jnp.float32)
    mean = 0.1 * jax.random.normal(km, (cout,), jnp.float32)
    var = 1.0 + 0.1 * jax.random.uniform(kv, (cout,), jnp.float32)
    s = gamma / jnp.sqrt(var + EPS_BN)
    w_fold = (w * s[None, None, :]).reshape(ksize * cin, cout)   # tap-major im2col layout
    b_fold = b * s + (beta - mean * s)
    return dict(ksize=ksize,
                w=w_fold.astype(jnp.bfloat16), b=b_fold[None, :],
                rw=rw.astype(jnp.bfloat16), rb=rb[None, :])


def init_msconv(key, cin, cmid, cout):
    k1, k2, k3 = jax.random.split(key, 3)
    return [_init_stage(k1, 3, cin, cmid),
            _init_stage(k2, 5, cmid, cmid),
            _init_stage(k3, 7, cmid, cout)]


def init_head(key, cout, num_labels):
    ks = jax.random.split(key, 6)
    dim = 2 * cout
    return dict(
        g=1.0 + 0.1 * jax.random.normal(ks[0], (1, cout), jnp.float32),
        beta=0.1 * jax.random.normal(ks[1], (1, cout), jnp.float32),
        dw=(jax.random.normal(ks[2], (dim, dim), jnp.float32) / jnp.sqrt(dim)
            ).astype(jnp.bfloat16),
        db=0.1 * jax.random.normal(ks[3], (1, dim), jnp.float32),
        ow=(jax.random.normal(ks[4], (dim, num_labels), jnp.float32) / jnp.sqrt(dim)
            ).astype(jnp.bfloat16),
        ob=0.1 * jax.random.normal(ks[5], (1, num_labels), jnp.float32),
    )


def _combine_stage(st):
    """[conv | residual-1x1] fused along the output (lane) dimension: (k*cin, 2*cout)."""
    kcin, cout = st["w"].shape
    ksize = st["ksize"]
    cin = kcin // ksize
    ctr = (ksize - 1) // 2                    # centre tap carries the 1x1 residual conv
    wc = jnp.zeros((kcin, 2 * cout), jnp.bfloat16)
    wc = wc.at[:, :cout].set(st["w"])
    wc = wc.at[ctr * cin:(ctr + 1) * cin, cout:].set(st["rw"])
    bc = jnp.concatenate([st["b"], st["rb"]], axis=1)            # (1, 2*cout) f32
    return wc, bc


def pack_params(vstack, wstack, head):
    """Pre-combine the 24 conv tensors + head params into 16 kernel arguments."""
    vc = [_combine_stage(s) for s in vstack]
    wc = [_combine_stage(s) for s in wstack]
    # Stage 1 of both stacks consumes the same im2col input -> also fuse along N.
    w1 = jnp.concatenate([vc[0][0], wc[0][0]], axis=1)           # (3*cin, 4*cmid)
    b1 = jnp.concatenate([vc[0][1], wc[0][1]], axis=1)           # (1, 4*cmid)
    dim, num_labels = head["ow"].shape
    nl_pad = -(-num_labels // 128) * 128                         # lane-dense logits slab
    ow_pad = jnp.zeros((dim, nl_pad), jnp.bfloat16).at[:, :num_labels].set(head["ow"])
    ob_pad = jnp.zeros((1, nl_pad), jnp.float32).at[:, :num_labels].set(head["ob"])
    return [w1, b1,
            vc[1][0], vc[1][1], vc[2][0], vc[2][1],
            wc[1][0], wc[1][1], wc[2][0], wc[2][1],
            head["g"], head["beta"], head["dw"], head["db"], ow_pad, ob_pad]


# --------------------------- pure-f32 JAX reference ---------------------------

def _msconv_ref(x, stages):
    h = x
    for st in stages:
        k = st["ksize"]
        p = (k - 1) // 2
        L = h.shape[1]
        res = jnp.einsum("blc,cd->bld", h, st["rw"].astype(jnp.float32)) + st["rb"]
        hpad = jnp.pad(h, ((0, 0), (p, p), (0, 0)))
        cols = jnp.concatenate([hpad[:, dk:dk + L, :] for dk in range(k)], axis=-1)
        y = jnp.einsum("blc,cd->bld", cols, st["w"].astype(jnp.float32)) + st["b"]
        h = jnp.maximum(y, 0.0) + res
    return h


def mrlat_ref(x, vstack, wstack, head):
    v = _msconv_ref(x, vstack)
    w = _msconv_ref(x, wstack)
    x_sum = jnp.sum(v * w, axis=1)
    x_max = jnp.max(v, axis=1)

    def ln(z):
        mu = jnp.mean(z, axis=-1, keepdims=True)
        var = jnp.mean(jnp.square(z - mu), axis=-1, keepdims=True)
        return (z - mu) * jax.lax.rsqrt(var + EPS_LN) * head["g"] + head["beta"]

    ab = jnp.concatenate([ln(x_sum), ln(x_max)], axis=1)
    h = jnp.tanh(ab @ head["dw"].astype(jnp.float32) + head["db"])
    return h @ head["ow"].astype(jnp.float32) + head["ob"]


# ------------------------------------ main ------------------------------------

if __name__ == "__main__":
    # Scaled-down Config (real model: conv_in=640, conv_mid=1280, conv_out=640,
    # num_labels=12, L = ESM token length).
    B, L = 16, 16
    conv_in, conv_mid, conv_out, num_labels = 32, 64, 32, 12
    block_b = 8   # 8 samples/step -> 192-row im2col matmuls, grid=(2,) "parallel" steps

    key = jax.random.PRNGKey(0)
    k_emb, k_v, k_w, k_h = jax.random.split(key, 4)

    # Stand-in for the frozen EsmModel's last_hidden_state.
    embeddings = jax.random.normal(k_emb, (B, L, conv_in), jnp.float32)

    vstack = init_msconv(k_v, conv_in, conv_mid, conv_out)
    wstack = init_msconv(k_w, conv_in, conv_mid, conv_out)
    head = init_head(k_h, conv_out, num_labels)

    logits = mrlat_forward(embeddings, vstack, wstack, head, block_b=block_b)
    logits = jax.block_until_ready(logits)

    ref = mrlat_ref(embeddings, vstack, wstack, head)
    assert logits.shape == (B, num_labels), logits.shape
    # Kernel feeds the MXU bf16 operands (f32 accumulation); the reference is pure f32
    # with the same bf16-stored weights.  Observed divergence is ~1e-2.
    err = float(jnp.max(jnp.abs(logits - ref)))
    assert err < 5e-2, f"max abs diff vs f32 reference: {err}"
    print("KERNEL_OK")
</pallas_src>

<mosaic_0001>
module attributes {stable_mosaic.version = 11 : i64} {
  func.func @mrlat_kernel(%arg0: i32, %arg1: memref<192x32xf32, #tpu.memory_space<vmem>>, %arg2: memref<96x256xbf16, #tpu.memory_space<vmem>>, %arg3: memref<1x256xf32, #tpu.memory_space<vmem>>, %arg4: memref<320x128xbf16, #tpu.memory_space<vmem>>, %arg5: memref<1x128xf32, #tpu.memory_space<vmem>>, %arg6: memref<448x64xbf16, #tpu.memory_space<vmem>>, %arg7: memref<1x64xf32, #tpu.memory_space<vmem>>, %arg8: memref<320x128xbf16, #tpu.memory_space<vmem>>, %arg9: memref<1x128xf32, #tpu.memory_space<vmem>>, %arg10: memref<448x64xbf16, #tpu.memory_space<vmem>>, %arg11: memref<1x64xf32, #tpu.memory_space<vmem>>, %arg12: memref<1x32xf32, #tpu.memory_space<vmem>>, %arg13: memref<1x32xf32, #tpu.memory_space<vmem>>, %arg14: memref<64x64xbf16, #tpu.memory_space<vmem>>, %arg15: memref<1x64xf32, #tpu.memory_space<vmem>>, %arg16: memref<64x128xbf16, #tpu.memory_space<vmem>>, %arg17: memref<1x128xf32, #tpu.memory_space<vmem>>, %arg18: memref<8x128xf32, #tpu.memory_space<vmem>>, %arg19: memref<200x64xf32, #tpu.memory_space<vmem>>) attributes {dimension_semantics = [#tpu.dimension_semantics<parallel>], iteration_bounds = array<i64: 2>, scalar_prefetch = 0 : i64, scratch_operands = 1 : i64, tpu.core_type = #tpu.core_type<tc>, window_params = [{transform_indices = @transform_0, window_bounds = array<i64: 192, 32>}, {pipeline_mode = #tpu.pipeline_mode<synchronous>, transform_indices = @transform_1, window_bounds = array<i64: 96, 256>}, {pipeline_mode = #tpu.pipeline_mode<synchronous>, transform_indices = @transform_2, window_bounds = array<i64: 1, 256>}, {pipeline_mode = #tpu.pipeline_mode<synchronous>, transform_indices = @transform_3, window_bounds = array<i64: 320, 128>}, {pipeline_mode = #tpu.pipeline_mode<synchronous>, transform_indices = @transform_4, window_bounds = array<i64: 1, 128>}, {pipeline_mode = #tpu.pipeline_mode<synchronous>, transform_indices = @transform_5, window_bounds = array<i64: 448, 64>}, {pipeline_mode = #tpu.pipeline_mode<synchronous>, transform_indices = @transform_6, window_bounds = array<i64: 1, 64>}, {pipeline_mode = #tpu.pipeline_mode<synchronous>, transform_indices = @transform_7, window_bounds = array<i64: 320, 128>}, {pipeline_mode = #tpu.pipeline_mode<synchronous>, transform_indices = @transform_8, window_bounds = array<i64: 1, 128>}, {pipeline_mode = #tpu.pipeline_mode<synchronous>, transform_indices = @transform_9, window_bounds = array<i64: 448, 64>}, {pipeline_mode = #tpu.pipeline_mode<synchronous>, transform_indices = @transform_10, window_bounds = array<i64: 1, 64>}, {pipeline_mode = #tpu.pipeline_mode<synchronous>, transform_indices = @transform_11, window_bounds = array<i64: 1, 32>}, {pipeline_mode = #tpu.pipeline_mode<synchronous>, transform_indices = @transform_12, window_bounds = array<i64: 1, 32>}, {pipeline_mode = #tpu.pipeline_mode<synchronous>, transform_indices = @transform_13, window_bounds = array<i64: 64, 64>}, {pipeline_mode = #tpu.pipeline_mode<synchronous>, transform_indices = @transform_14, window_bounds = array<i64: 1, 64>}, {pipeline_mode = #tpu.pipeline_mode<synchronous>, transform_indices = @transform_15, window_bounds = array<i64: 64, 128>}, {pipeline_mode = #tpu.pipeline_mode<synchronous>, transform_indices = @transform_16, window_bounds = array<i64: 1, 128>}, {transform_indices = @transform_17, window_bounds = array<i64: 8, 128>}]} {
    %0 = tpu.iota {dimensions = array<i32: 0>} : vector<192x1xi32>
    %c4_i32 = arith.constant 4 : i32
    %1 = vector.broadcast %c4_i32 : i32 to vector<192x1xi32>
    %2 = arith.cmpi sge, %0, %1 : vector<192x1xi32>
    %c20_i32 = arith.constant 20 : i32
    %3 = vector.broadcast %c20_i32 : i32 to vector<192x1xi32>
    %4 = arith.cmpi slt, %0, %3 : vector<192x1xi32>
    %5 = arith.andi %2, %4 : vector<192x1xi1>
    %c28_i32 = arith.constant 28 : i32
    %6 = vector.broadcast %c28_i32 : i32 to vector<192x1xi32>
    %7 = arith.cmpi sge, %0, %6 : vector<192x1xi32>
    %c44_i32 = arith.constant 44 : i32
    %8 = vector.broadcast %c44_i32 : i32 to vector<192x1xi32>
    %9 = arith.cmpi slt, %0, %8 : vector<192x1xi32>
    %10 = arith.andi %7, %9 : vector<192x1xi1>
    %11 = arith.ori %5, %10 : vector<192x1xi1>
    %c52_i32 = arith.constant 52 : i32
    %12 = vector.broadcast %c52_i32 : i32 to vector<192x1xi32>
    %13 = arith.cmpi sge, %0, %12 : vector<192x1xi32>
    %c68_i32 = arith.constant 68 : i32
    %14 = vector.broadcast %c68_i32 : i32 to vector<192x1xi32>
    %15 = arith.cmpi slt, %0, %14 : vector<192x1xi32>
    %16 = arith.andi %13, %15 : vector<192x1xi1>
    %17 = arith.ori %11, %16 : vector<192x1xi1>
    %c76_i32 = arith.constant 76 : i32
    %18 = vector.broadcast %c76_i32 : i32 to vector<192x1xi32>
    %19 = arith.cmpi sge, %0, %18 : vector<192x1xi32>
    %c92_i32 = arith.constant 92 : i32
    %20 = vector.broadcast %c92_i32 : i32 to vector<192x1xi32>
    %21 = arith.cmpi slt, %0, %20 : vector<192x1xi32>
    %22 = arith.andi %19, %21 : vector<192x1xi1>
    %23 = arith.ori %17, %22 : vector<192x1xi1>
    %c100_i32 = arith.constant 100 : i32
    %24 = vector.broadcast %c100_i32 : i32 to vector<192x1xi32>
    %25 = arith.cmpi sge, %0, %24 : vector<192x1xi32>
    %c116_i32 = arith.constant 116 : i32
    %26 = vector.broadcast %c116_i32 : i32 to vector<192x1xi32>
    %27 = arith.cmpi slt, %0, %26 : vector<192x1xi32>
    %28 = arith.andi %25, %27 : vector<192x1xi1>
    %29 = arith.ori %23, %28 : vector<192x1xi1>
    %c124_i32 = arith.constant 124 : i32
    %30 = vector.broadcast %c124_i32 : i32 to vector<192x1xi32>
    %31 = arith.cmpi sge, %0, %30 : vector<192x1xi32>
    %c140_i32 = arith.constant 140 : i32
    %32 = vector.broadcast %c140_i32 : i32 to vector<192x1xi32>
    %33 = arith.cmpi slt, %0, %32 : vector<192x1xi32>
    %34 = arith.andi %31, %33 : vector<192x1xi1>
    %35 = arith.ori %29, %34 : vector<192x1xi1>
    %c148_i32 = arith.constant 148 : i32
    %36 = vector.broadcast %c148_i32 : i32 to vector<192x1xi32>
    %37 = arith.cmpi sge, %0, %36 : vector<192x1xi32>
    %c164_i32 = arith.constant 164 : i32
    %38 = vector.broadcast %c164_i32 : i32 to vector<192x1xi32>
    %39 = arith.cmpi slt, %0, %38 : vector<192x1xi32>
    %40 = arith.andi %37, %39 : vector<192x1xi1>
    %41 = arith.ori %35, %40 : vector<192x1xi1>
    %c172_i32 = arith.constant 172 : i32
    %42 = vector.broadcast %c172_i32 : i32 to vector<192x1xi32>
    %43 = arith.cmpi sge, %0, %42 : vector<192x1xi32>
    %c188_i32 = arith.constant 188 : i32
    %44 = vector.broadcast %c188_i32 : i32 to vector<192x1xi32>
    %45 = arith.cmpi slt, %0, %44 : vector<192x1xi32>
    %46 = arith.andi %43, %45 : vector<192x1xi1>
    %47 = arith.ori %41, %46 : vector<192x1xi1>
    %48 = arith.extui %47 : vector<192x1xi1> to vector<192x1xi32>
    %49 = arith.sitofp %48 : vector<192x1xi32> to vector<192x1xf32>
    %cst = arith.constant 0.000000e+00 : f32
    %50 = vector.broadcast %cst : f32 to vector<4x64xf32>
    %c0 = arith.constant 0 : index
    %c0_0 = arith.constant 0 : index
    %51 = vector.load %arg19[%c0, %c0_0] : memref<200x64xf32, #tpu.memory_space<vmem>>, vector<4x64xf32>
    tpu.vector_store %arg19[%c0, %c0_0], %50 {strides = array<i32>} : memref<200x64xf32, #tpu.memory_space<vmem>>, vector<4x64xf32>,
    %cst_1 = arith.constant 0.000000e+00 : f32
    %52 = vector.broadcast %cst_1 : f32 to vector<4x64xf32>
    %c196 = arith.constant 196 : index
    %c0_2 = arith.constant 0 : index
    %53 = vector.load %arg19[%c196, %c0_2] : memref<200x64xf32, #tpu.memory_space<vmem>>, vector<4x64xf32>
    tpu.vector_store %arg19[%c196, %c0_2], %52 {strides = array<i32>} : memref<200x64xf32, #tpu.memory_space<vmem>>, vector<4x64xf32>,
    %c0_3 = arith.constant 0 : index
    %c0_4 = arith.constant 0 : index
    %54 = vector.load %arg1[%c0_3, %c0_4] : memref<192x32xf32, #tpu.memory_space<vmem>>, vector<192x32xf32>
    %c4 = arith.constant 4 : index
    %c0_5 = arith.constant 0 : index
    %55 = vector.load %arg19[%c4, %c0_5] : memref<200x64xf32, #tpu.memory_space<vmem>>, vector<192x32xf32>
    tpu.vector_store %arg19[%c4, %c0_5], %54 {strides = array<i32>} : memref<200x64xf32, #tpu.memory_space<vmem>>, vector<192x32xf32>,
    %c3 = arith.constant 3 : index
    %c0_6 = arith.constant 0 : index
    %56 = vector.load %arg19[%c3, %c0_6] : memref<200x64xf32, #tpu.memory_space<vmem>>, vector<192x32xf32>
    %c4_7 = arith.constant 4 : index
    %c0_8 = arith.constant 0 : index
    %57 = vector.load %arg19[%c4_7, %c0_8] : memref<200x64xf32, #tpu.memory_space<vmem>>, vector<192x32xf32>
    %c5 = arith.constant 5 : index
    %c0_9 = arith.constant 0 : index
    %58 = vector.load %arg19[%c5, %c0_9] : memref<200x64xf32, #tpu.memory_space<vmem>>, vector<192x32xf32>
    %59 = tpu.concatenate %56, %57, %58 in 1 : vector<192x32xf32>, vector<192x32xf32>, vector<192x32xf32> -> vector<192x96xf32>
    %60 = arith.truncf %59 : vector<192x96xf32> to vector<192x96xbf16>
    %c0_10 = arith.constant 0 : index
    %c0_11 = arith.constant 0 : index
    %61 = vector.load %arg2[%c0_10, %c0_11] : memref<96x256xbf16, #tpu.memory_space<vmem>>, vector<96x256xbf16>
    %cst_12 = arith.constant dense<0.000000e+00> : vector<192x256xf32>
    %62 = tpu.matmul %60, %61, %cst_12 {dimension_numbers = #tpu.dot_dimension_numbers<[1], [0], [0], [1], [0, 0, 1, 1], [], []>} : vector<192x96xbf16>, vector<96x256xbf16>, vector<192x256xf32> -> vector<192x256xf32>
    %c0_13 = arith.constant 0 : index
    %c0_14 = arith.constant 0 : index
    %63 = vector.load %arg3[%c0_13, %c0_14] : memref<1x256xf32, #tpu.memory_space<vmem>>, vector<1x256xf32>
    %64 = vector.broadcast %63 : vector<1x256xf32> to vector<192x256xf32>
    %65 = arith.addf %62, %64 : vector<192x256xf32>
    %66 = vector.extract_strided_slice %65 {offsets = [0, 0], sizes = [192, 64], strides = [1, 1]} : vector<192x256xf32> to vector<192x64xf32>
    %cst_15 = arith.constant 0.000000e+00 : f32
    %67 = vector.broadcast %cst_15 : f32 to vector<192x64xf32>
    %68 = arith.maximumf %66, %67 : vector<192x64xf32>
    %69 = vector.extract_strided_slice %65 {offsets = [0, 64], sizes = [192, 64], strides = [1, 1]} : vector<192x256xf32> to vector<192x64xf32>
    %70 = arith.addf %68, %69 : vector<192x64xf32>
    %71 = vector.extract_strided_slice %65 {offsets = [0, 128], sizes = [192, 64], strides = [1, 1]} : vector<192x256xf32> to vector<192x64xf32>
    %cst_16 = arith.constant 0.000000e+00 : f32
    %72 = vector.broadcast %cst_16 : f32 to vector<192x64xf32>
    %73 = arith.maximumf %71, %72 : vector<192x64xf32>
    %74 = vector.extract_strided_slice %65 {offsets = [0, 192], sizes = [192, 64], strides = [1, 1]} : vector<192x256xf32> to vector<192x64xf32>
    %75 = arith.addf %73, %74 : vector<192x64xf32>
    %76 = vector.broadcast %49 : vector<192x1xf32> to vector<192x64xf32>
    %77 = arith.mulf %70, %76 : vector<192x64xf32>
    %c4_17 = arith.constant 4 : index
    %c0_18 = arith.constant 0 : index
    %78 = vector.load %arg19[%c4_17, %c0_18] : memref<200x64xf32, #tpu.memory_space<vmem>>, vector<192x64xf32>
    tpu.vector_store %arg19[%c4_17, %c0_18], %77 {strides = array<i32>} : memref<200x64xf32, #tpu.memory_space<vmem>>, vector<192x64xf32>,
    %c2 = arith.constant 2 : index
    %c0_19 = arith.constant 0 : index
    %79 = vector.load %arg19[%c2, %c0_19] : memref<200x64xf32, #tpu.memory_space<vmem>>, vector<192x64xf32>
    %c3_20 = arith.constant 3 : index
    %c0_21 = arith.constant 0 : index
    %80 = vector.load %arg19[%c3_20, %c0_21] : memref<200x64xf32, #tpu.memory_space<vmem>>, vector<192x64xf32>
    %c4_22 = arith.constant 4 : index
    %c0_23 = arith.constant 0 : index
    %81 = vector.load %arg19[%c4_22, %c0_23] : memref<200x64xf32, #tpu.memory_space<vmem>>, vector<192x64xf32>
    %c5_24 = arith.constant 5 : index
    %c0_25 = arith.constant 0 : index
    %82 = vector.load %arg19[%c5_24, %c0_25] : memref<200x64xf32, #tpu.memory_space<vmem>>, vector<192x64xf32>
    %c6 = arith.constant 6 : index
    %c0_26 = arith.constant 0 : index
    %83 = vector.load %arg19[%c6, %c0_26] : memref<200x64xf32, #tpu.memory_space<vmem>>, vector<192x64xf32>
    %84 = tpu.concatenate %79, %80, %81, %82, %83 in 1 : vector<192x64xf32>, vector<192x64xf32>, vector<192x64xf32>, vector<192x64xf32>, vector<192x64xf32> -> vector<192x320xf32>
    %85 = arith.truncf %84 : vector<192x320xf32> to vector<192x320xbf16>
    %c0_27 = arith.constant 0 : index
    %c0_28 = arith.constant 0 : index
    %86 = vector.load %arg4[%c0_27, %c0_28] : memref<320x128xbf16, #tpu.memory_space<vmem>>, vector<320x128xbf16>
    %cst_29 = arith.constant dense<0.000000e+00> : vector<192x128xf32>
    %87 = tpu.matmul %85, %86, %cst_29 {dimension_numbers = #tpu.dot_dimension_numbers<[1], [0], [0], [1], [0, 0, 1, 1], [], []>} : vector<192x320xbf16>, vector<320x128xbf16>, vector<192x128xf32> -> vector<192x128xf32>
    %c0_30 = arith.constant 0 : index
    %c0_31 = arith.constant 0 : index
    %88 = vector.load %arg5[%c0_30, %c0_31] : memref<1x128xf32, #tpu.memory_space<vmem>>, vector<1x128xf32>
    %89 = vector.broadcast %88 : vector<1x128xf32> to vector<192x128xf32>
    %90 = arith.addf %87, %89 : vector<192x128xf32>
    %91 = vector.extract_strided_slice %90 {offsets = [0, 0], sizes = [192, 64], strides = [1, 1]} : vector<192x128xf32> to vector<192x64xf32>
    %cst_32 = arith.constant 0.000000e+00 : f32
    %92 = vector.broadcast %cst_32 : f32 to vector<192x64xf32>
    %93 = arith.maximumf %91, %92 : vector<192x64xf32>
    %94 = vector.extract_strided_slice %90 {offsets = [0, 64], sizes = [192, 64], strides = [1, 1]} : vector<192x128xf32> to vector<192x64xf32>
    %95 = arith.addf %93, %94 : vector<192x64xf32>
    %96 = vector.broadcast %49 : vector<192x1xf32> to vector<192x64xf32>
    %97 = arith.mulf %95, %96 : vector<192x64xf32>
    %c4_33 = arith.constant 4 : index
    %c0_34 = arith.constant 0 : index
    %98 = vector.load %arg19[%c4_33, %c0_34] : memref<200x64xf32, #tpu.memory_space<vmem>>, vector<192x64xf32>
    tpu.vector_store %arg19[%c4_33, %c0_34], %97 {strides = array<i32>} : memref<200x64xf32, #tpu.memory_space<vmem>>, vector<192x64xf32>,
    %c1 = arith.constant 1 : index
    %c0_35 = arith.constant 0 : index
    %99 = vector.load %arg19[%c1, %c0_35] : memref<200x64xf32, #tpu.memory_space<vmem>>, vector<192x64xf32>
    %c2_36 = arith.constant 2 : index
    %c0_37 = arith.constant 0 : index
    %100 = vector.load %arg19[%c2_36, %c0_37] : memref<200x64xf32, #tpu.memory_space<vmem>>, vector<192x64xf32>
    %c3_38 = arith.constant 3 : index
    %c0_39 = arith.constant 0 : index
    %101 = vector.load %arg19[%c3_38, %c0_39] : memref<200x64xf32, #tpu.memory_space<vmem>>, vector<192x64xf32>
    %c4_40 = arith.constant 4 : index
    %c0_41 = arith.constant 0 : index
    %102 = vector.load %arg19[%c4_40, %c0_41] : memref<200x64xf32, #tpu.memory_space<vmem>>, vector<192x64xf32>
    %c5_42 = arith.constant 5 : index
    %c0_43 = arith.constant 0 : index
    %103 = vector.load %arg19[%c5_42, %c0_43] : memref<200x64xf32, #tpu.memory_space<vmem>>, vector<192x64xf32>
    %c6_44 = arith.constant 6 : index
    %c0_45 = arith.constant 0 : index
    %104 = vector.load %arg19[%c6_44, %c0_45] : memref<200x64xf32, #tpu.memory_space<vmem>>, vector<192x64xf32>
    %c7 = arith.constant 7 : index
    %c0_46 = arith.constant 0 : index
    %105 = vector.load %arg19[%c7, %c0_46] : memref<200x64xf32, #tpu.memory_space<vmem>>, vector<192x64xf32>
    %106 = tpu.concatenate %99, %100, %101, %102, %103, %104, %105 in 1 : vector<192x64xf32>, vector<192x64xf32>, vector<192x64xf32>, vector<192x64xf32>, vector<192x64xf32>, vector<192x64xf32>, vector<192x64xf32> -> vector<192x448xf32>
    %107 = arith.truncf %106 : vector<192x448xf32> to vector<192x448xbf16>
    %c0_47 = arith.constant 0 : index
    %c0_48 = arith.constant 0 : index
    %108 = vector.load %arg6[%c0_47, %c0_48] : memref<448x64xbf16, #tpu.memory_space<vmem>>, vector<448x64xbf16>
    %cst_49 = arith.constant dense<0.000000e+00> : vector<192x64xf32>
    %109 = tpu.matmul %107, %108, %cst_49 {dimension_numbers = #tpu.dot_dimension_numbers<[1], [0], [0], [1], [0, 0, 1, 1], [], []>} : vector<192x448xbf16>, vector<448x64xbf16>, vector<192x64xf32> -> vector<192x64xf32>
    %c0_50 = arith.constant 0 : index
    %c0_51 = arith.constant 0 : index
    %110 = vector.load %arg7[%c0_50, %c0_51] : memref<1x64xf32, #tpu.memory_space<vmem>>, vector<1x64xf32>
    %111 = vector.broadcast %110 : vector<1x64xf32> to vector<192x64xf32>
    %112 = arith.addf %109, %111 : vector<192x64xf32>
    %113 = vector.extract_strided_slice %112 {offsets = [0, 0], sizes = [192, 32], strides = [1, 1]} : vector<192x64xf32> to vector<192x32xf32>
    %cst_52 = arith.constant 0.000000e+00 : f32
    %114 = vector.broadcast %cst_52 : f32 to vector<192x32xf32>
    %115 = arith.maximumf %113, %114 : vector<192x32xf32>
    %116 = vector.extract_strided_slice %112 {offsets = [0, 32], sizes = [192, 32], strides = [1, 1]} : vector<192x64xf32> to vector<192x32xf32>
    %117 = arith.addf %115, %116 : vector<192x32xf32>
    %118 = vector.broadcast %49 : vector<192x1xf32> to vector<192x64xf32>
    %119 = arith.mulf %75, %118 : vector<192x64xf32>
    %c4_53 = arith.constant 4 : index
    %c0_54 = arith.constant 0 : index
    %120 = vector.load %arg19[%c4_53, %c0_54] : memref<200x64xf32, #tpu.memory_space<vmem>>, vector<192x64xf32>
    tpu.vector_store %arg19[%c4_53, %c0_54], %119 {strides = array<i32>} : memref<200x64xf32, #tpu.memory_space<vmem>>, vector<192x64xf32>,
    %c2_55 = arith.constant 2 : index
    %c0_56 = arith.constant 0 : index
    %121 = vector.load %arg19[%c2_55, %c0_56] : memref<200x64xf32, #tpu.memory_space<vmem>>, vector<192x64xf32>
    %c3_57 = arith.constant 3 : index
    %c0_58 = arith.constant 0 : index
    %122 = vector.load %arg19[%c3_57, %c0_58] : memref<200x64xf32, #tpu.memory_space<vmem>>, vector<192x64xf32>
    %c4_59 = arith.constant 4 : index
    %c0_60 = arith.constant 0 : index
    %123 = vector.load %arg19[%c4_59, %c0_60] : memref<200x64xf32, #tpu.memory_space<vmem>>, vector<192x64xf32>
    %c5_61 = arith.constant 5 : index
    %c0_62 = arith.constant 0 : index
    %124 = vector.load %arg19[%c5_61, %c0_62] : memref<200x64xf32, #tpu.memory_space<vmem>>, vector<192x64xf32>
    %c6_63 = arith.constant 6 : index
    %c0_64 = arith.constant 0 : index
    %125 = vector.load %arg19[%c6_63, %c0_64] : memref<200x64xf32, #tpu.memory_space<vmem>>, vector<192x64xf32>
    %126 = tpu.concatenate %121, %122, %123, %124, %125 in 1 : vector<192x64xf32>, vector<192x64xf32>, vector<192x64xf32>, vector<192x64xf32>, vector<192x64xf32> -> vector<192x320xf32>
    %127 = arith.truncf %126 : vector<192x320xf32> to vector<192x320xbf16>
    %c0_65 = arith.constant 0 : index
    %c0_66 = arith.constant 0 : index
    %128 = vector.load %arg8[%c0_65, %c0_66] : memref<320x128xbf16, #tpu.memory_space<vmem>>, vector<320x128xbf16>
    %cst_67 = arith.constant dense<0.000000e+00> : vector<192x128xf32>
    %129 = tpu.matmul %127, %128, %cst_67 {dimension_numbers = #tpu.dot_dimension_numbers<[1], [0], [0], [1], [0, 0, 1, 1], [], []>} : vector<192x320xbf16>, vector<320x128xbf16>, vector<192x128xf32> -> vector<192x128xf32>
    %c0_68 = arith.constant 0 : index
    %c0_69 = arith.constant 0 : index
    %130 = vector.load %arg9[%c0_68, %c0_69] : memref<1x128xf32, #tpu.memory_space<vmem>>, vector<1x128xf32>
    %131 = vector.broadcast %130 : vector<1x128xf32> to vector<192x128xf32>
    %132 = arith.addf %129, %131 : vector<192x128xf32>
    %133 = vector.extract_strided_slice %132 {offsets = [0, 0], sizes = [192, 64], strides = [1, 1]} : vector<192x128xf32> to vector<192x64xf32>
    %cst_70 = arith.constant 0.000000e+00 : f32
    %134 = vector.broadcast %cst_70 : f32 to vector<192x64xf32>
    %135 = arith.maximumf %133, %134 : vector<192x64xf32>
    %136 = vector.extract_strided_slice %132 {offsets = [0, 64], sizes = [192, 64], strides = [1, 1]} : vector<192x128xf32> to vector<192x64xf32>
    %137 = arith.addf %135, %136 : vector<192x64xf32>
    %138 = vector.broadcast %49 : vector<192x1xf32> to vector<192x64xf32>
    %139 = arith.mulf %137, %138 : vector<192x64xf32>
    %c4_71 = arith.constant 4 : index
    %c0_72 = arith.constant 0 : index
    %140 = vector.load %arg19[%c4_71, %c0_72] : memref<200x64xf32, #tpu.memory_space<vmem>>, vector<192x64xf32>
    tpu.vector_store %arg19[%c4_71, %c0_72], %139 {strides = array<i32>} : memref<200x64xf32, #tpu.memory_space<vmem>>, vector<192x64xf32>,
    %c1_73 = arith.constant 1 : index
    %c0_74 = arith.constant 0 : index
    %141 = vector.load %arg19[%c1_73, %c0_74] : memref<200x64xf32, #tpu.memory_space<vmem>>, vector<192x64xf32>
    %c2_75 = arith.constant 2 : index
    %c0_76 = arith.constant 0 : index
    %142 = vector.load %arg19[%c2_75, %c0_76] : memref<200x64xf32, #tpu.memory_space<vmem>>, vector<192x64xf32>
    %c3_77 = arith.constant 3 : index
    %c0_78 = arith.constant 0 : index
    %143 = vector.load %arg19[%c3_77, %c0_78] : memref<200x64xf32, #tpu.memory_space<vmem>>, vector<192x64xf32>
    %c4_79 = arith.constant 4 : index
    %c0_80 = arith.constant 0 : index
    %144 = vector.load %arg19[%c4_79, %c0_80] : memref<200x64xf32, #tpu.memory_space<vmem>>, vector<192x64xf32>
    %c5_81 = arith.constant 5 : index
    %c0_82 = arith.constant 0 : index
    %145 = vector.load %arg19[%c5_81, %c0_82] : memref<200x64xf32, #tpu.memory_space<vmem>>, vector<192x64xf32>
    %c6_83 = arith.constant 6 : index
    %c0_84 = arith.constant 0 : index
    %146 = vector.load %arg19[%c6_83, %c0_84] : memref<200x64xf32, #tpu.memory_space<vmem>>, vector<192x64xf32>
    %c7_85 = arith.constant 7 : index
    %c0_86 = arith.constant 0 : index
    %147 = vector.load %arg19[%c7_85, %c0_86] : memref<200x64xf32, #tpu.memory_space<vmem>>, vector<192x64xf32>
    %148 = tpu.concatenate %141, %142, %143, %144, %145, %146, %147 in 1 : vector<192x64xf32>, vector<192x64xf32>, vector<192x64xf32>, vector<192x64xf32>, vector<192x64xf32>, vector<192x64xf32>, vector<192x64xf32> -> vector<192x448xf32>
    %149 = arith.truncf %148 : vector<192x448xf32> to vector<192x448xbf16>
    %c0_87 = arith.constant 0 : index
    %c0_88 = arith.constant 0 : index
    %150 = vector.load %arg10[%c0_87, %c0_88] : memref<448x64xbf16, #tpu.memory_space<vmem>>, vector<448x64xbf16>
    %cst_89 = arith.constant dense<0.000000e+00> : vector<192x64xf32>
    %151 = tpu.matmul %149, %150, %cst_89 {dimension_numbers = #tpu.dot_dimension_numbers<[1], [0], [0], [1], [0, 0, 1, 1], [], []>} : vector<192x448xbf16>, vector<448x64xbf16>, vector<192x64xf32> -> vector<192x64xf32>
    %c0_90 = arith.constant 0 : index
    %c0_91 = arith.constant 0 : index
    %152 = vector.load %arg11[%c0_90, %c0_91] : memref<1x64xf32, #tpu.memory_space<vmem>>, vector<1x64xf32>
    %153 = vector.broadcast %152 : vector<1x64xf32> to vector<192x64xf32>
    %154 = arith.addf %151, %153 : vector<192x64xf32>
    %155 = vector.extract_strided_slice %154 {offsets = [0, 0], sizes = [192, 32], strides = [1, 1]} : vector<192x64xf32> to vector<192x32xf32>
    %cst_92 = arith.constant 0.000000e+00 : f32
    %156 = vector.broadcast %cst_92 : f32 to vector<192x32xf32>
    %157 = arith.maximumf %155, %156 : vector<192x32xf32>
    %158 = vector.extract_strided_slice %154 {offsets = [0, 32], sizes = [192, 32], strides = [1, 1]} : vector<192x64xf32> to vector<192x32xf32>
    %159 = arith.addf %157, %158 : vector<192x32xf32>
    %160 = arith.mulf %117, %159 : vector<192x32xf32>
    %161 = vector.broadcast %49 : vector<192x1xf32> to vector<192x32xf32>
    %162 = arith.mulf %160, %161 : vector<192x32xf32>
    %cst_93 = arith.constant 0xFF800000 : f32
    %163 = vector.shape_cast %47 : vector<192x1xi1> to vector<192x1xi1>
    %164 = vector.broadcast %163 : vector<192x1xi1> to vector<192x32xi1>
    %165 = vector.broadcast %cst_93 : f32 to vector<192x32xf32>
    %166 = arith.select %164, %117, %165 : vector<192x32xi1>, vector<192x32xf32>
    %167 = vector.extract_strided_slice %162 {offsets = [0, 0], sizes = [24, 32], strides = [1, 1]} : vector<192x32xf32> to vector<24x32xf32>
    %cst_94 = arith.constant dense<0.000000e+00> : vector<32xf32>
    %168 = vector.multi_reduction <add>, %167, %cst_94 [0] : vector<24x32xf32> to vector<32xf32>
    %169 = vector.shape_cast %168 : vector<32xf32> to vector<1x32xf32>
    %170 = vector.extract_strided_slice %166 {offsets = [0, 0], sizes = [24, 32], strides = [1, 1]} : vector<192x32xf32> to vector<24x32xf32>
    %cst_95 = arith.constant dense<0xFF800000> : vector<32xf32>
    %171 = vector.multi_reduction <maximumf>, %170, %cst_95 [0] : vector<24x32xf32> to vector<32xf32>
    %172 = vector.shape_cast %171 : vector<32xf32> to vector<1x32xf32>
    %173 = vector.extract_strided_slice %162 {offsets = [24, 0], sizes = [24, 32], strides = [1, 1]} : vector<192x32xf32> to vector<24x32xf32>
    %cst_96 = arith.constant dense<0.000000e+00> : vector<32xf32>
    %174 = vector.multi_reduction <add>, %173, %cst_96 [0] : vector<24x32xf32> to vector<32xf32>
    %175 = vector.shape_cast %174 : vector<32xf32> to vector<1x32xf32>
    %176 = vector.extract_strided_slice %166 {offsets = [24, 0], sizes = [24, 32], strides = [1, 1]} : vector<192x32xf32> to vector<24x32xf32>
    %cst_97 = arith.constant dense<0xFF800000> : vector<32xf32>
    %177 = vector.multi_reduction <maximumf>, %176, %cst_97 [0] : vector<24x32xf32> to vector<32xf32>
    %178 = vector.shape_cast %177 : vector<32xf32> to vector<1x32xf32>
    %179 = vector.extract_strided_slice %162 {offsets = [48, 0], sizes = [24, 32], strides = [1, 1]} : vector<192x32xf32> to vector<24x32xf32>
    %cst_98 = arith.constant dense<0.000000e+00> : vector<32xf32>
    %180 = vector.multi_reduction <add>, %179, %cst_98 [0] : vector<24x32xf32> to vector<32xf32>
    %181 = vector.shape_cast %180 : vector<32xf32> to vector<1x32xf32>
    %182 = vector.extract_strided_slice %166 {offsets = [48, 0], sizes = [24, 32], strides = [1, 1]} : vector<192x32xf32> to vector<24x32xf32>
    %cst_99 = arith.constant dense<0xFF800000> : vector<32xf32>
    %183 = vector.multi_reduction <maximumf>, %182, %cst_99 [0] : vector<24x32xf32> to vector<32xf32>
    %184 = vector.shape_cast %183 : vector<32xf32> to vector<1x32xf32>
    %185 = vector.extract_strided_slice %162 {offsets = [72, 0], sizes = [24, 32], strides = [1, 1]} : vector<192x32xf32> to vector<24x32xf32>
    %cst_100 = arith.constant dense<0.000000e+00> : vector<32xf32>
    %186 = vector.multi_reduction <add>, %185, %cst_100 [0] : vector<24x32xf32> to vector<32xf32>
    %187 = vector.shape_cast %186 : vector<32xf32> to vector<1x32xf32>
    %188 = vector.extract_strided_slice %166 {offsets = [72, 0], sizes = [24, 32], strides = [1, 1]} : vector<192x32xf32> to vector<24x32xf32>
    %cst_101 = arith.constant dense<0xFF800000> : vector<32xf32>
    %189 = vector.multi_reduction <maximumf>, %188, %cst_101 [0] : vector<24x32xf32> to vector<32xf32>
    %190 = vector.shape_cast %189 : vector<32xf32> to vector<1x32xf32>
    %191 = vector.extract_strided_slice %162 {offsets = [96, 0], sizes = [24, 32], strides = [1, 1]} : vector<192x32xf32> to vector<24x32xf32>
    %cst_102 = arith.constant dense<0.000000e+00> : vector<32xf32>
    %192 = vector.multi_reduction <add>, %191, %cst_102 [0] : vector<24x32xf32> to vector<32xf32>
    %193 = vector.shape_cast %192 : vector<32xf32> to vector<1x32xf32>
    %194 = vector.extract_strided_slice %166 {offsets = [96, 0], sizes = [24, 32], strides = [1, 1]} : vector<192x32xf32> to vector<24x32xf32>
    %cst_103 = arith.constant dense<0xFF800000> : vector<32xf32>
    %195 = vector.multi_reduction <maximumf>, %194, %cst_103 [0] : vector<24x32xf32> to vector<32xf32>
    %196 = vector.shape_cast %195 : vector<32xf32> to vector<1x32xf32>
    %197 = vector.extract_strided_slice %162 {offsets = [120, 0], sizes = [24, 32], strides = [1, 1]} : vector<192x32xf32> to vector<24x32xf32>
    %cst_104 = arith.constant dense<0.000000e+00> : vector<32xf32>
    %198 = vector.multi_reduction <add>, %197, %cst_104 [0] : vector<24x32xf32> to vector<32xf32>
    %199 = vector.shape_cast %198 : vector<32xf32> to vector<1x32xf32>
    %200 = vector.extract_strided_slice %166 {offsets = [120, 0], sizes = [24, 32], strides = [1, 1]} : vector<192x32xf32> to vector<24x32xf32>
    %cst_105 = arith.constant dense<0xFF800000> : vector<32xf32>
    %201 = vector.multi_reduction <maximumf>, %200, %cst_105 [0] : vector<24x32xf32> to vector<32xf32>
    %202 = vector.shape_cast %201 : vector<32xf32> to vector<1x32xf32>
    %203 = vector.extract_strided_slice %162 {offsets = [144, 0], sizes = [24, 32], strides = [1, 1]} : vector<192x32xf32> to vector<24x32xf32>
    %cst_106 = arith.constant dense<0.000000e+00> : vector<32xf32>
    %204 = vector.multi_reduction <add>, %203, %cst_106 [0] : vector<24x32xf32> to vector<32xf32>
    %205 = vector.shape_cast %204 : vector<32xf32> to vector<1x32xf32>
    %206 = vector.extract_strided_slice %166 {offsets = [144, 0], sizes = [24, 32], strides = [1, 1]} : vector<192x32xf32> to vector<24x32xf32>
    %cst_107 = arith.constant dense<0xFF800000> : vector<32xf32>
    %207 = vector.multi_reduction <maximumf>, %206, %cst_107 [0] : vector<24x32xf32> to vector<32xf32>
    %208 = vector.shape_cast %207 : vector<32xf32> to vector<1x32xf32>
    %209 = vector.extract_strided_slice %162 {offsets = [168, 0], sizes = [24, 32], strides = [1, 1]} : vector<192x32xf32> to vector<24x32xf32>
    %cst_108 = arith.constant dense<0.000000e+00> : vector<32xf32>
    %210 = vector.multi_reduction <add>, %209, %cst_108 [0] : vector<24x32xf32> to vector<32xf32>
    %211 = vector.shape_cast %210 : vector<32xf32> to vector<1x32xf32>
    %212 = vector.extract_strided_slice %166 {offsets = [168, 0], sizes = [24, 32], strides = [1, 1]} : vector<192x32xf32> to vector<24x32xf32>
    %cst_109 = arith.constant dense<0xFF800000> : vector<32xf32>
    %213 = vector.multi_reduction <maximumf>, %212, %cst_109 [0] : vector<24x32xf32> to vector<32xf32>
    %214 = vector.shape_cast %213 : vector<32xf32> to vector<1x32xf32>
    %215 = tpu.concatenate %169, %175, %181, %187, %193, %199, %205, %211 in 0 : vector<1x32xf32>, vector<1x32xf32>, vector<1x32xf32>, vector<1x32xf32>, vector<1x32xf32>, vector<1x32xf32>, vector<1x32xf32>, vector<1x32xf32> -> vector<8x32xf32>
    %216 = tpu.concatenate %172, %178, %184, %190, %196, %202, %208, %214 in 0 : vector<1x32xf32>, vector<1x32xf32>, vector<1x32xf32>, vector<1x32xf32>, vector<1x32xf32>, vector<1x32xf32>, vector<1x32xf32>, vector<1x32xf32> -> vector<8x32xf32>
    %c0_110 = arith.constant 0 : index
    %c0_111 = arith.constant 0 : index
    %217 = vector.load %arg12[%c0_110, %c0_111] : memref<1x32xf32, #tpu.memory_space<vmem>>, vector<1x32xf32>
    %c0_112 = arith.constant 0 : index
    %c0_113 = arith.constant 0 : index
    %218 = vector.load %arg13[%c0_112, %c0_113] : memref<1x32xf32, #tpu.memory_space<vmem>>, vector<1x32xf32>
    %cst_114 = arith.constant dense<0.000000e+00> : vector<8xf32>
    %219 = vector.multi_reduction <add>, %215, %cst_114 [1] : vector<8x32xf32> to vector<8xf32>
    %220 = vector.shape_cast %219 : vector<8xf32> to vector<8x1xf32>
    %cst_115 = arith.constant 3.200000e+01 : f32
    %221 = vector.broadcast %cst_115 : f32 to vector<8x1xf32>
    %222 = arith.divf %220, %221 : vector<8x1xf32>
    %223 = vector.broadcast %222 : vector<8x1xf32> to vector<8x32xf32>
    %224 = arith.subf %215, %223 : vector<8x32xf32>
    %225 = arith.mulf %224, %224 : vector<8x32xf32>
    %cst_116 = arith.constant dense<0.000000e+00> : vector<8xf32>
    %226 = vector.multi_reduction <add>, %225, %cst_116 [1] : vector<8x32xf32> to vector<8xf32>
    %227 = vector.shape_cast %226 : vector<8xf32> to vector<8x1xf32>
    %cst_117 = arith.constant 3.200000e+01 : f32
    %228 = vector.broadcast %cst_117 : f32 to vector<8x1xf32>
    %229 = arith.divf %227, %228 : vector<8x1xf32>
    %230 = vector.broadcast %222 : vector<8x1xf32> to vector<8x32xf32>
    %231 = arith.subf %215, %230 : vector<8x32xf32>
    %cst_118 = arith.constant 9.99999974E-6 : f32
    %232 = vector.broadcast %cst_118 : f32 to vector<8x1xf32>
    %233 = arith.addf %229, %232 : vector<8x1xf32>
    %234 = math.rsqrt %233 : vector<8x1xf32>
    %235 = vector.broadcast %234 : vector<8x1xf32> to vector<8x32xf32>
    %236 = arith.mulf %231, %235 : vector<8x32xf32>
    %237 = vector.broadcast %217 : vector<1x32xf32> to vector<8x32xf32>
    %238 = arith.mulf %236, %237 : vector<8x32xf32>
    %239 = vector.broadcast %218 : vector<1x32xf32> to vector<8x32xf32>
    %240 = arith.addf %238, %239 : vector<8x32xf32>
    %cst_119 = arith.constant dense<0.000000e+00> : vector<8xf32>
    %241 = vector.multi_reduction <add>, %216, %cst_119 [1] : vector<8x32xf32> to vector<8xf32>
    %242 = vector.shape_cast %241 : vector<8xf32> to vector<8x1xf32>
    %cst_120 = arith.constant 3.200000e+01 : f32
    %243 = vector.broadcast %cst_120 : f32 to vector<8x1xf32>
    %244 = arith.divf %242, %243 : vector<8x1xf32>
    %245 = vector.broadcast %244 : vector<8x1xf32> to vector<8x32xf32>
    %246 = arith.subf %216, %245 : vector<8x32xf32>
    %247 = arith.mulf %246, %246 : vector<8x32xf32>
    %cst_121 = arith.constant dense<0.000000e+00> : vector<8xf32>
    %248 = vector.multi_reduction <add>, %247, %cst_121 [1] : vector<8x32xf32> to vector<8xf32>
    %249 = vector.shape_cast %248 : vector<8xf32> to vector<8x1xf32>
    %cst_122 = arith.constant 3.200000e+01 : f32
    %250 = vector.broadcast %cst_122 : f32 to vector<8x1xf32>
    %251 = arith.divf %249, %250 : vector<8x1xf32>
    %252 = vector.broadcast %244 : vector<8x1xf32> to vector<8x32xf32>
    %253 = arith.subf %216, %252 : vector<8x32xf32>
    %cst_123 = arith.constant 9.99999974E-6 : f32
    %254 = vector.broadcast %cst_123 : f32 to vector<8x1xf32>
    %255 = arith.addf %251, %254 : vector<8x1xf32>
    %256 = math.rsqrt %255 : vector<8x1xf32>
    %257 = vector.broadcast %256 : vector<8x1xf32> to vector<8x32xf32>
    %258 = arith.mulf %253, %257 : vector<8x32xf32>
    %259 = vector.broadcast %217 : vector<1x32xf32> to vector<8x32xf32>
    %260 = arith.mulf %258, %259 : vector<8x32xf32>
    %261 = vector.broadcast %218 : vector<1x32xf32> to vector<8x32xf32>
    %262 = arith.addf %260, %261 : vector<8x32xf32>
    %263 = tpu.concatenate %240, %262 in 1 : vector<8x32xf32>, vector<8x32xf32> -> vector<8x64xf32>
    %264 = arith.truncf %263 : vector<8x64xf32> to vector<8x64xbf16>
    %c0_124 = arith.constant 0 : index
    %c0_125 = arith.constant 0 : index
    %265 = vector.load %arg14[%c0_124, %c0_125] : memref<64x64xbf16, #tpu.memory_space<vmem>>, vector<64x64xbf16>
    %cst_126 = arith.constant dense<0.000000e+00> : vector<8x64xf32>
    %266 = tpu.matmul %264, %265, %cst_126 {dimension_numbers = #tpu.dot_dimension_numbers<[1], [0], [0], [1], [0, 0, 1, 1], [], []>} : vector<8x64xbf16>, vector<64x64xbf16>, vector<8x64xf32> -> vector<8x64xf32>
    %c0_127 = arith.constant 0 : index
    %c0_128 = arith.constant 0 : index
    %267 = vector.load %arg15[%c0_127, %c0_128] : memref<1x64xf32, #tpu.memory_space<vmem>>, vector<1x64xf32>
    %268 = vector.broadcast %267 : vector<1x64xf32> to vector<8x64xf32>
    %269 = arith.addf %266, %268 : vector<8x64xf32>
    %270 = math.tanh %269 : vector<8x64xf32>
    %271 = arith.truncf %270 : vector<8x64xf32> to vector<8x64xbf16>
    %c0_129 = arith.constant 0 : index
    %c0_130 = arith.constant 0 : index
    %272 = vector.load %arg16[%c0_129, %c0_130] : memref<64x128xbf16, #tpu.memory_space<vmem>>, vector<64x128xbf16>
    %cst_131 = arith.constant dense<0.000000e+00> : vector<8x128xf32>
    %273 = tpu.matmul %271, %272, %cst_131 {dimension_numbers = #tpu.dot_dimension_numbers<[1], [0], [0], [1], [0, 0, 1, 1], [], []>} : vector<8x64xbf16>, vector<64x128xbf16>, vector<8x128xf32> -> vector<8x128xf32>
    %c0_132 = arith.constant 0 : index
    %c0_133 = arith.constant 0 : index
    %274 = vector.load %arg17[%c0_132, %c0_133] : memref<1x128xf32, #tpu.memory_space<vmem>>, vector<1x128xf32>
    %275 = vector.broadcast %274 : vector<1x128xf32> to vector<8x128xf32>
    %276 = arith.addf %273, %275 : vector<8x128xf32>
    %c0_134 = arith.constant 0 : index
    %c0_135 = arith.constant 0 : index
    %277 = vector.load %arg18[%c0_134, %c0_135] : memref<8x128xf32, #tpu.memory_space<vmem>>, vector<8x128xf32>
    tpu.vector_store %arg18[%c0_134, %c0_135], %276 {strides = array<i32>} : memref<8x128xf32, #tpu.memory_space<vmem>>, vector<8x128xf32>,
    return
  }
  func.func @transform_0(%arg0: i32) -> (i32, i32) {
    %c0_i32 = arith.constant 0 : i32
    %c0_i32_0 = arith.constant 0 : i32
    return %arg0, %c0_i32 : i32, i32
  }
  func.func @transform_1(%arg0: i32) -> (i32, i32) {
    %c0_i32 = arith.constant 0 : i32
    %c0_i32_0 = arith.constant 0 : i32
    %c0_i32_1 = arith.constant 0 : i32
    return %c0_i32, %c0_i32_0 : i32, i32
  }
  func.func @transform_2(%arg0: i32) -> (i32, i32) {
    %c0_i32 = arith.constant 0 : i32
    %c0_i32_0 = arith.constant 0 : i32
    %c0_i32_1 = arith.constant 0 : i32
    return %c0_i32, %c0_i32_0 : i32, i32
  }
  func.func @transform_3(%arg0: i32) -> (i32, i32) {
    %c0_i32 = arith.constant 0 : i32
    %c0_i32_0 = arith.constant 0 : i32
    %c0_i32_1 = arith.constant 0 : i32
    return %c0_i32, %c0_i32_0 : i32, i32
  }
  func.func @transform_4(%arg0: i32) -> (i32, i32) {
    %c0_i32 = arith.constant 0 : i32
    %c0_i32_0 = arith.constant 0 : i32
    %c0_i32_1 = arith.constant 0 : i32
    return %c0_i32, %c0_i32_0 : i32, i32
  }
  func.func @transform_5(%arg0: i32) -> (i32, i32) {
    %c0_i32 = arith.constant 0 : i32
    %c0_i32_0 = arith.constant 0 : i32
    %c0_i32_1 = arith.constant 0 : i32
    return %c0_i32, %c0_i32_0 : i32, i32
  }
  func.func @transform_6(%arg0: i32) -> (i32, i32) {
    %c0_i32 = arith.constant 0 : i32
    %c0_i32_0 = arith.constant 0 : i32
    %c0_i32_1 = arith.constant 0 : i32
    return %c0_i32, %c0_i32_0 : i32, i32
  }
  func.func @transform_7(%arg0: i32) -> (i32, i32) {
    %c0_i32 = arith.constant 0 : i32
    %c0_i32_0 = arith.constant 0 : i32
    %c0_i32_1 = arith.constant 0 : i32
    return %c0_i32, %c0_i32_0 : i32, i32
  }
  func.func @transform_8(%arg0: i32) -> (i32, i32) {
    %c0_i32 = arith.constant 0 : i32
    %c0_i32_0 = arith.constant 0 : i32
    %c0_i32_1 = arith.constant 0 : i32
    return %c0_i32, %c0_i32_0 : i32, i32
  }
  func.func @transform_9(%arg0: i32) -> (i32, i32) {
    %c0_i32 = arith.constant 0 : i32
    %c0_i32_0 = arith.constant 0 : i32
    %c0_i32_1 = arith.constant 0 : i32
    return %c0_i32, %c0_i32_0 : i32, i32
  }
  func.func @transform_10(%arg0: i32) -> (i32, i32) {
    %c0_i32 = arith.constant 0 : i32
    %c0_i32_0 = arith.constant 0 : i32
    %c0_i32_1 = arith.constant 0 : i32
    return %c0_i32, %c0_i32_0 : i32, i32
  }
  func.func @transform_11(%arg0: i32) -> (i32, i32) {
    %c0_i32 = arith.constant 0 : i32
    %c0_i32_0 = arith.constant 0 : i32
    %c0_i32_1 = arith.constant 0 : i32
    return %c0_i32, %c0_i32_0 : i32, i32
  }
  func.func @transform_12(%arg0: i32) -> (i32, i32) {
    %c0_i32 = arith.constant 0 : i32
    %c0_i32_0 = arith.constant 0 : i32
    %c0_i32_1 = arith.constant 0 : i32
    return %c0_i32, %c0_i32_0 : i32, i32
  }
  func.func @transform_13(%arg0: i32) -> (i32, i32) {
    %c0_i32 = arith.constant 0 : i32
    %c0_i32_0 = arith.constant 0 : i32
    %c0_i32_1 = arith.constant 0 : i32
    return %c0_i32, %c0_i32_0 : i32, i32
  }
  func.func @transform_14(%arg0: i32) -> (i32, i32) {
    %c0_i32 = arith.constant 0 : i32
    %c0_i32_0 = arith.constant 0 : i32
    %c0_i32_1 = arith.constant 0 : i32
    return %c0_i32, %c0_i32_0 : i32, i32
  }
  func.func @transform_15(%arg0: i32) -> (i32, i32) {
    %c0_i32 = arith.constant 0 : i32
    %c0_i32_0 = arith.constant 0 : i32
    %c0_i32_1 = arith.constant 0 : i32
    return %c0_i32, %c0_i32_0 : i32, i32
  }
  func.func @transform_16(%arg0: i32) -> (i32, i32) {
    %c0_i32 = arith.constant 0 : i32
    %c0_i32_0 = arith.constant 0 : i32
    %c0_i32_1 = arith.constant 0 : i32
    return %c0_i32, %c0_i32_0 : i32, i32
  }
  func.func @transform_17(%arg0: i32) -> (i32, i32) {
    %c0_i32 = arith.constant 0 : i32
    %c0_i32_0 = arith.constant 0 : i32
    return %arg0, %c0_i32 : i32, i32
  }
}

</mosaic_0001>

<llo_original>
// kernel: tpu_custom_call.1
$region0: #{tpu_custom_call.1}
  #allocation0 [shape = 'u32[]', space=smem, size = 0x4, offset = 0x4, fixed_abs, tag = 'smem constant byte address 0x4 - core index']
  #allocation1 [shape = 'u32[144,128]{1,0:T(1,128)}', space=vmem, size = 0x12000, scoped, tag = 'internal scratch']
  #allocation2 [shape = 'f32[200,64]{1,0:T(8,128)}', space=vmem, size = 0x19000, scoped, tag = 'scratch operand']
  %s0 = inlined_call_operand.vmem [shape: f32[384,32], index: 0, kind: input, shape index: {}]
  %s1 = inlined_call_operand.vmem [shape: bf16[96,256], index: 1, kind: input, shape index: {}]
  %s2 = inlined_call_operand.vmem [shape: f32[1,256], index: 2, kind: input, shape index: {}]
  %s3 = inlined_call_operand.vmem [shape: bf16[320,128], index: 3, kind: input, shape index: {}]
  %s4 = inlined_call_operand.vmem [shape: f32[1,128], index: 4, kind: input, shape index: {}]
  %s5 = inlined_call_operand.vmem [shape: bf16[448,64], index: 5, kind: input, shape index: {}]
  %s6 = inlined_call_operand.vmem [shape: f32[1,64], index: 6, kind: input, shape index: {}]
  %s7 = inlined_call_operand.vmem [shape: bf16[320,128], index: 7, kind: input, shape index: {}]
  %s8 = inlined_call_operand.vmem [shape: f32[1,128], index: 8, kind: input, shape index: {}]
  %s9 = inlined_call_operand.vmem [shape: bf16[448,64], index: 9, kind: input, shape index: {}]
  %s10 = inlined_call_operand.vmem [shape: f32[1,64], index: 10, kind: input, shape index: {}]
  %s11 = inlined_call_operand.vmem [shape: f32[1,32], index: 11, kind: input, shape index: {}]
  %s12 = inlined_call_operand.vmem [shape: f32[1,32], index: 12, kind: input, shape index: {}]
  %s13 = inlined_call_operand.vmem [shape: bf16[64,64], index: 13, kind: input, shape index: {}]
  %s14 = inlined_call_operand.vmem [shape: f32[1,64], index: 14, kind: input, shape index: {}]
  %s15 = inlined_call_operand.vmem [shape: bf16[64,128], index: 15, kind: input, shape index: {}]
  %s16 = inlined_call_operand.vmem [shape: f32[1,128], index: 16, kind: input, shape index: {}]
  %s17 = inlined_call_operand.hbm [shape: f32[16,128], index: 17, kind: output, shape index: {}]
  %s18 = sld [smem:[#allocation0]]
  $region101: #{tpu_custom_call.1} parent=0
    _
  %s20 = ssub.s32 1, %s18
  %s21 = scalar_select 0, %s20, %s18
  $region1: #{tpu_custom_call.1} parent=0
    #allocation3 [shape = 'u8[8192]{0}', space=vmem, size = 0x2000, scoped, tag = 'output window, operand 0']
    #allocation4 [shape = 's32[2]{0}', space=sflag, size = 0x8, scoped, tag = 'scoped memory for tpu_custom_call.1']
    %22 = vsyncpa [#allocation4], 0
    %s23 = scalar_lea.sflag [#allocation4], 1
    %24 = vsyncpa %s23, 0
    loop: start=0, step=1, limit=4
    $region2: #{tpu_custom_call.1} parent=1 // loop_pre_header
      _
    $region3: #{tpu_custom_call.1} parent=1 // loop_header
      %s26 = sphi 0, %s30
      %p27 = scmp.ge.s32.totalorder %s26, 4
      %s36 = sphi 0, %s38
      %s39 = sphi 0, %s36
      %s40 = sphi 0, %s39
      %s56 = sphi 0, %s40
      %s60 = sphi 0, %s60
      %s62 = sphi 0, %s60
      %s63 = sphi 0, %s62
      %s77 = sphi 0, %s63
      %s81 = sphi 0, %s81
      %s83 = sphi 0, %s81
      %s84 = sphi 0, %s83
      %s98 = sphi 0, %s84
      %s102 = sphi 0, %s102
      %s104 = sphi 0, %s102
      %s105 = sphi 0, %s104
      %s119 = sphi 0, %s105
      %s123 = sphi 0, %s123
      %s125 = sphi 0, %s123
      %s126 = sphi 0, %s125
      %s140 = sphi 0, %s126
      %s144 = sphi 0, %s144
      %s146 = sphi 0, %s144
      %s147 = sphi 0, %s146
      %s161 = sphi 0, %s147
      %s165 = sphi 0, %s165
      %s167 = sphi 0, %s165
      %s168 = sphi 0, %s167
      %s182 = sphi 0, %s168
      %s186 = sphi 0, %s186
      %s188 = sphi 0, %s186
      %s189 = sphi 0, %s188
      %s203 = sphi 0, %s189
      %s207 = sphi 0, %s207
      %s209 = sphi 0, %s207
      %s210 = sphi 0, %s209
      %s224 = sphi 0, %s210
      %s228 = sphi 0, %s228
      %s230 = sphi 0, %s228
      %s231 = sphi 0, %s230
      %s245 = sphi 0, %s231
      %s249 = sphi 0, %s249
      %s251 = sphi 0, %s249
      %s252 = sphi 0, %s251
      %s266 = sphi 0, %s252
      %s270 = sphi 0, %s270
      %s272 = sphi 0, %s270
      %s273 = sphi 0, %s272
      %s287 = sphi 0, %s273
      %s291 = sphi 0, %s291
      %s293 = sphi 0, %s291
      %s294 = sphi 0, %s293
      %s308 = sphi 0, %s294
      %s312 = sphi 0, %s312
      %s314 = sphi 0, %s312
      %s315 = sphi 0, %s314
      %s329 = sphi 0, %s315
      %s333 = sphi 0, %s333
      %s335 = sphi 0, %s333
      %s336 = sphi 0, %s335
      %s350 = sphi 0, %s336
      %s354 = sphi 0, %s354
      %s356 = sphi 0, %s354
      %s357 = sphi 0, %s356
      %s371 = sphi 0, %s357
      %s375 = sphi 0, %s375
      %s377 = sphi 0, %s375
      %s378 = sphi 0, %s377
      %s392 = sphi 0, %s378
      %s398 = sphi 0, %s400
      %s401 = sphi 0, %s398
      %s402 = sphi 0, %s401
      %s418 = sphi 0, %s402
    $region4: #{tpu_custom_call.1} parent=1 // loop_header_branch
      %29 = sbr.rel (%p27) target = $region8
    $region5: #{tpu_custom_call.1} parent=1 // loop_body
      %s31 = ssub.s32 %s26, 1
      %s32 = ssub.s32 %s26, 2
      %s33 = sadd.s32 %s26, 1
      %s34 = ssub.s32 %s26, %s33
      %p35 = scmp.eq.s32.totalorder %s34, 0
      %s37 = sadd.s32 %s36, 1
      %s38 = scalar_select %p35, %s36, %s37
      %p41 = pneg %p35
      %p42 = scmp.eq.s32.totalorder %s26, 1
      %p43 = por %p41, %p42
      %p44 = scmp.ne.s32.totalorder %s36, %s39
      %p45 = scmp.eq.s32.totalorder %s26, 0
      %p46 = por %p44, %p45
      %p47 = scmp.ne.s32.totalorder %s36, %s39
      %p48 = scmp.eq.s32.totalorder %s31, 1
      %p49 = por %p47, %p48
      %p50 = scmp.ne.s32.totalorder %s39, %s40
      %p51 = scmp.eq.s32.totalorder %s31, 0
      %p52 = por %p50, %p51
      %p53 = scmp.ne.s32.totalorder %s39, %s40
      %p54 = scmp.eq.s32.totalorder %s32, 1
      %p55 = por %p53, %p54
      %p57 = scmp.ne.s32.totalorder %s40, %s56
      %p58 = scmp.eq.s32.totalorder %s32, 0
      %p59 = por %p57, %p58
      %s61 = sadd.s32 %s60, 1
      %p64 = scmp.eq.s32.totalorder %s26, 1
      %p65 = scmp.ne.s32.totalorder %s60, %s62
      %p66 = scmp.eq.s32.totalorder %s26, 0
      %p67 = por %p65, %p66
      %p68 = scmp.ne.s32.totalorder %s60, %s62
      %p69 = scmp.eq.s32.totalorder %s31, 1
      %p70 = por %p68, %p69
      %p71 = scmp.ne.s32.totalorder %s62, %s63
      %p72 = scmp.eq.s32.totalorder %s31, 0
      %p73 = por %p71, %p72
      %p74 = scmp.ne.s32.totalorder %s62, %s63
      %p75 = scmp.eq.s32.totalorder %s32, 1
      %p76 = por %p74, %p75
      %p78 = scmp.ne.s32.totalorder %s63, %s77
      %p79 = scmp.eq.s32.totalorder %s32, 0
      %p80 = por %p78, %p79
      %s82 = sadd.s32 %s81, 1
      %p85 = scmp.eq.s32.totalorder %s26, 1
      %p86 = scmp.ne.s32.totalorder %s81, %s83
      %p87 = scmp.eq.s32.totalorder %s26, 0
      %p88 = por %p86, %p87
      %p89 = scmp.ne.s32.totalorder %s81, %s83
      %p90 = scmp.eq.s32.totalorder %s31, 1
      %p91 = por %p89, %p90
      %p92 = scmp.ne.s32.totalorder %s83, %s84
      %p93 = scmp.eq.s32.totalorder %s31, 0
      %p94 = por %p92, %p93
      %p95 = scmp.ne.s32.totalorder %s83, %s84
      %p96 = scmp.eq.s32.totalorder %s32, 1
      %p97 = por %p95, %p96
      %p99 = scmp.ne.s32.totalorder %s84, %s98
      %p100 = scmp.eq.s32.totalorder %s32, 0
      %p101 = por %p99, %p100
      %s103 = sadd.s32 %s102, 1
      %p106 = scmp.eq.s32.totalorder %s26, 1
      %p107 = scmp.ne.s32.totalorder %s102, %s104
      %p108 = scmp.eq.s32.totalorder %s26, 0
      %p109 = por %p107, %p108
      %p110 = scmp.ne.s32.totalorder %s102, %s104
      %p111 = scmp.eq.s32.totalorder %s31, 1
      %p112 = por %p110, %p111
      %p113 = scmp.ne.s32.totalorder %s104, %s105
      %p114 = scmp.eq.s32.totalorder %s31, 0
      %p115 = por %p113, %p114
      %p116 = scmp.ne.s32.totalorder %s104, %s105
      %p117 = scmp.eq.s32.totalorder %s32, 1
      %p118 = por %p116, %p117
      %p120 = scmp.ne.s32.totalorder %s105, %s119
      %p121 = scmp.eq.s32.totalorder %s32, 0
      %p122 = por %p120, %p121
      %s124 = sadd.s32 %s123, 1
      %p127 = scmp.eq.s32.totalorder %s26, 1
      %p128 = scmp.ne.s32.totalorder %s123, %s125
      %p129 = scmp.eq.s32.totalorder %s26, 0
      %p130 = por %p128, %p129
      %p131 = scmp.ne.s32.totalorder %s123, %s125
      %p132 = scmp.eq.s32.totalorder %s31, 1
      %p133 = por %p131, %p132
      %p134 = scmp.ne.s32.totalorder %s125, %s126
      %p135 = scmp.eq.s32.totalorder %s31, 0
      %p136 = por %p134, %p135
      %p137 = scmp.ne.s32.totalorder %s125, %s126
      %p138 = scmp.eq.s32.totalorder %s32, 1
      %p139 = por %p137, %p138
      %p141 = scmp.ne.s32.totalorder %s126, %s140
      %p142 = scmp.eq.s32.totalorder %s32, 0
      %p143 = por %p141, %p142
      %s145 = sadd.s32 %s144, 1
      %p148 = scmp.eq.s32.totalorder %s26, 1
      %p149 = scmp.ne.s32.totalorder %s144, %s146
      %p150 = scmp.eq.s32.totalorder %s26, 0
      %p151 = por %p149, %p150
      %p152 = scmp.ne.s32.totalorder %s144, %s146
      %p153 = scmp.eq.s32.totalorder %s31, 1
      %p154 = por %p152, %p153
      %p155 = scmp.ne.s32.totalorder %s146, %s147
      %p156 = scmp.eq.s32.totalorder %s31, 0
      %p157 = por %p155, %p156
      %p158 = scmp.ne.s32.totalorder %s146, %s147
      %p159 = scmp.eq.s32.totalorder %s32, 1
      %p160 = por %p158, %p159
      %p162 = scmp.ne.s32.totalorder %s147, %s161
      %p163 = scmp.eq.s32.totalorder %s32, 0
      %p164 = por %p162, %p163
      %s166 = sadd.s32 %s165, 1
      %p169 = scmp.eq.s32.totalorder %s26, 1
      %p170 = scmp.ne.s32.totalorder %s165, %s167
      %p171 = scmp.eq.s32.totalorder %s26, 0
      %p172 = por %p170, %p171
      %p173 = scmp.ne.s32.totalorder %s165, %s167
      %p174 = scmp.eq.s32.totalorder %s31, 1
      %p175 = por %p173, %p174
      %p176 = scmp.ne.s32.totalorder %s167, %s168
      %p177 = scmp.eq.s32.totalorder %s31, 0
      %p178 = por %p176, %p177
      %p179 = scmp.ne.s32.totalorder %s167, %s168
      %p180 = scmp.eq.s32.totalorder %s32, 1
      %p181 = por %p179, %p180
      %p183 = scmp.ne.s32.totalorder %s168, %s182
      %p184 = scmp.eq.s32.totalorder %s32, 0
      %p185 = por %p183, %p184
      %s187 = sadd.s32 %s186, 1
      %p190 = scmp.eq.s32.totalorder %s26, 1
      %p191 = scmp.ne.s32.totalorder %s186, %s188
      %p192 = scmp.eq.s32.totalorder %s26, 0
      %p193 = por %p191, %p192
      %p194 = scmp.ne.s32.totalorder %s186, %s188
      %p195 = scmp.eq.s32.totalorder %s31, 1
      %p196 = por %p194, %p195
      %p197 = scmp.ne.s32.totalorder %s188, %s189
      %p198 = scmp.eq.s32.totalorder %s31, 0
      %p199 = por %p197, %p198
      %p200 = scmp.ne.s32.totalorder %s188, %s189
      %p201 = scmp.eq.s32.totalorder %s32, 1
      %p202 = por %p200, %p201
      %p204 = scmp.ne.s32.totalorder %s189, %s203
      %p205 = scmp.eq.s32.totalorder %s32, 0
      %p206 = por %p204, %p205
      %s208 = sadd.s32 %s207, 1
      %p211 = scmp.eq.s32.totalorder %s26, 1
      %p212 = scmp.ne.s32.totalorder %s207, %s209
      %p213 = scmp.eq.s32.totalorder %s26, 0
      %p214 = por %p212, %p213
      %p215 = scmp.ne.s32.totalorder %s207, %s209
      %p216 = scmp.eq.s32.totalorder %s31, 1
      %p217 = por %p215, %p216
      %p218 = scmp.ne.s32.totalorder %s209, %s210
      %p219 = scmp.eq.s32.totalorder %s31, 0
      %p220 = por %p218, %p219
      %p221 = scmp.ne.s32.totalorder %s209, %s210
      %p222 = scmp.eq.s32.totalorder %s32, 1
      %p223 = por %p221, %p222
      %p225 = scmp.ne.s32.totalorder %s210, %s224
      %p226 = scmp.eq.s32.totalorder %s32, 0
      %p227 = por %p225, %p226
      %s229 = sadd.s32 %s228, 1
      %p232 = scmp.eq.s32.totalorder %s26, 1
      %p233 = scmp.ne.s32.totalorder %s228, %s230
      %p234 = scmp.eq.s32.totalorder %s26, 0
      %p235 = por %p233, %p234
      %p236 = scmp.ne.s32.totalorder %s228, %s230
      %p237 = scmp.eq.s32.totalorder %s31, 1
      %p238 = por %p236, %p237
      %p239 = scmp.ne.s32.totalorder %s230, %s231
      %p240 = scmp.eq.s32.totalorder %s31, 0
      %p241 = por %p239, %p240
      %p242 = scmp.ne.s32.totalorder %s230, %s231
      %p243 = scmp.eq.s32.totalorder %s32, 1
      %p244 = por %p242, %p243
      %p246 = scmp.ne.s32.totalorder %s231, %s245
      %p247 = scmp.eq.s32.totalorder %s32, 0
      %p248 = por %p246, %p247
      %s250 = sadd.s32 %s249, 1
      %p253 = scmp.eq.s32.totalorder %s26, 1
      %p254 = scmp.ne.s32.totalorder %s249, %s251
      %p255 = scmp.eq.s32.totalorder %s26, 0
      %p256 = por %p254, %p255
      %p257 = scmp.ne.s32.totalorder %s249, %s251
      %p258 = scmp.eq.s32.totalorder %s31, 1
      %p259 = por %p257, %p258
      %p260 = scmp.ne.s32.totalorder %s251, %s252
      %p261 = scmp.eq.s32.totalorder %s31, 0
      %p262 = por %p260, %p261
      %p263 = scmp.ne.s32.totalorder %s251, %s252
      %p264 = scmp.eq.s32.totalorder %s32, 1
      %p265 = por %p263, %p264
      %p267 = scmp.ne.s32.totalorder %s252, %s266
      %p268 = scmp.eq.s32.totalorder %s32, 0
      %p269 = por %p267, %p268
      %s271 = sadd.s32 %s270, 1
      %p274 = scmp.eq.s32.totalorder %s26, 1
      %p275 = scmp.ne.s32.totalorder %s270, %s272
      %p276 = scmp.eq.s32.totalorder %s26, 0
      %p277 = por %p275, %p276
      %p278 = scmp.ne.s32.totalorder %s270, %s272
      %p279 = scmp.eq.s32.totalorder %s31, 1
      %p280 = por %p278, %p279
      %p281 = scmp.ne.s32.totalorder %s272, %s273
      %p282 = scmp.eq.s32.totalorder %s31, 0
      %p283 = por %p281, %p282
      %p284 = scmp.ne.s32.totalorder %s272, %s273
      %p285 = scmp.eq.s32.totalorder %s32, 1
      %p286 = por %p284, %p285
      %p288 = scmp.ne.s32.totalorder %s273, %s287
      %p289 = scmp.eq.s32.totalorder %s32, 0
      %p290 = por %p288, %p289
      %s292 = sadd.s32 %s291, 1
      %p295 = scmp.eq.s32.totalorder %s26, 1
      %p296 = scmp.ne.s32.totalorder %s291, %s293
      %p297 = scmp.eq.s32.totalorder %s26, 0
      %p298 = por %p296, %p297
      %p299 = scmp.ne.s32.totalorder %s291, %s293
      %p300 = scmp.eq.s32.totalorder %s31, 1
      %p301 = por %p299, %p300
      %p302 = scmp.ne.s32.totalorder %s293, %s294
      %p303 = scmp.eq.s32.totalorder %s31, 0
      %p304 = por %p302, %p303
      %p305 = scmp.ne.s32.totalorder %s293, %s294
      %p306 = scmp.eq.s32.totalorder %s32, 1
      %p307 = por %p305, %p306
      %p309 = scmp.ne.s32.totalorder %s294, %s308
      %p310 = scmp.eq.s32.totalorder %s32, 0
      %p311 = por %p309, %p310
      %s313 = sadd.s32 %s312, 1
      %p316 = scmp.eq.s32.totalorder %s26, 1
      %p317 = scmp.ne.s32.totalorder %s312, %s314
      %p318 = scmp.eq.s32.totalorder %s26, 0
      %p319 = por %p317, %p318
      %p320 = scmp.ne.s32.totalorder %s312, %s314
      %p321 = scmp.eq.s32.totalorder %s31, 1
      %p322 = por %p320, %p321
      %p323 = scmp.ne.s32.totalorder %s314, %s315
      %p324 = scmp.eq.s32.totalorder %s31, 0
      %p325 = por %p323, %p324
      %p326 = scmp.ne.s32.totalorder %s314, %s315
      %p327 = scmp.eq.s32.totalorder %s32, 1
      %p328 = por %p326, %p327
      %p330 = scmp.ne.s32.totalorder %s315, %s329
      %p331 = scmp.eq.s32.totalorder %s32, 0
      %p332 = por %p330, %p331
      %s334 = sadd.s32 %s333, 1
      %p337 = scmp.eq.s32.totalorder %s26, 1
      %p338 = scmp.ne.s32.totalorder %s333, %s335
      %p339 = scmp.eq.s32.totalorder %s26, 0
      %p340 = por %p338, %p339
      %p341 = scmp.ne.s32.totalorder %s333, %s335
      %p342 = scmp.eq.s32.totalorder %s31, 1
      %p343 = por %p341, %p342
      %p344 = scmp.ne.s32.totalorder %s335, %s336
      %p345 = scmp.eq.s32.totalorder %s31, 0
      %p346 = por %p344, %p345
      %p347 = scmp.ne.s32.totalorder %s335, %s336
      %p348 = scmp.eq.s32.totalorder %s32, 1
      %p349 = por %p347, %p348
      %p351 = scmp.ne.s32.totalorder %s336, %s350
      %p352 = scmp.eq.s32.totalorder %s32, 0
      %p353 = por %p351, %p352
      %s355 = sadd.s32 %s354, 1
      %p358 = scmp.eq.s32.totalorder %s26, 1
      %p359 = scmp.ne.s32.totalorder %s354, %s356
      %p360 = scmp.eq.s32.totalorder %s26, 0
      %p361 = por %p359, %p360
      %p362 = scmp.ne.s32.totalorder %s354, %s356
      %p363 = scmp.eq.s32.totalorder %s31, 1
      %p364 = por %p362, %p363
      %p365 = scmp.ne.s32.totalorder %s356, %s357
      %p366 = scmp.eq.s32.totalorder %s31, 0
      %p367 = por %p365, %p366
      %p368 = scmp.ne.s32.totalorder %s356, %s357
      %p369 = scmp.eq.s32.totalorder %s32, 1
      %p370 = por %p368, %p369
      %p372 = scmp.ne.s32.totalorder %s357, %s371
      %p373 = scmp.eq.s32.totalorder %s32, 0
      %p374 = por %p372, %p373
      %s376 = sadd.s32 %s375, 1
      %p379 = scmp.eq.s32.totalorder %s26, 1
      %p380 = scmp.ne.s32.totalorder %s375, %s377
      %p381 = scmp.eq.s32.totalorder %s26, 0
      %p382 = por %p380, %p381
      %p383 = scmp.ne.s32.totalorder %s375, %s377
      %p384 = scmp.eq.s32.totalorder %s31, 1
      %p385 = por %p383, %p384
      %p386 = scmp.ne.s32.totalorder %s377, %s378
      %p387 = scmp.eq.s32.totalorder %s31, 0
      %p388 = por %p386, %p387
      %p389 = scmp.ne.s32.totalorder %s377, %s378
      %p390 = scmp.eq.s32.totalorder %s32, 1
      %p391 = por %p389, %p390
      %p393 = scmp.ne.s32.totalorder %s378, %s392
      %p394 = scmp.eq.s32.totalorder %s32, 0
      %p395 = por %p393, %p394
      %s396 = ssub.s32 %s26, %s33
      %p397 = scmp.eq.s32.totalorder %s396, 0
      %s399 = sadd.s32 %s398, 1
      %s400 = scalar_select %p397, %s398, %s399
      %p403 = pneg %p397
      %p404 = scmp.eq.s32.totalorder %s26, 1
      %p405 = por %p403, %p404
      %p406 = scmp.ne.s32.totalorder %s398, %s401
      %p407 = scmp.eq.s32.totalorder %s26, 0
      %p408 = por %p406, %p407
      %p409 = scmp.ne.s32.totalorder %s398, %s401
      %p410 = scmp.eq.s32.totalorder %s31, 1
      %p411 = por %p409, %p410
      %p412 = scmp.ne.s32.totalorder %s401, %s402
      %p413 = scmp.eq.s32.totalorder %s31, 0
      %p414 = por %p412, %p413
      %p415 = scmp.ne.s32.totalorder %s401, %s402
      %p416 = scmp.eq.s32.totalorder %s32, 1
      %p417 = por %p415, %p416
      %p419 = scmp.ne.s32.totalorder %s402, %s418
      %p420 = scmp.eq.s32.totalorder %s32, 0
      %p421 = por %p419, %p420
      %p422 = scmp.le.s32.totalorder 1, %s26
      %p423 = scmp.lt.s32.totalorder %s26, 3
      %p424 = pnand %p422, %p423
      %p425 = pneg %p424
      // Predicated region
      $region9: #{tpu_custom_call.1} parent=5 // pred_check
        _
      $region10: #{tpu_custom_call.1} parent=5 // pred_check_branch
        %427 = sbr.rel (%p424) target = $region12
      $region11: #{tpu_custom_call.1} parent=5 // pred_region
        %s428 = ssub.s32 %s26, 1
        // Predicated region
        $region13: #{tpu_custom_call.1} parent=11 // pred_check
          %p429 = pneg %p73
        $region14: #{tpu_custom_call.1} parent=11 // pred_check_branch
          %431 = sbr.rel (%p429) target = $region16
        $region15: #{tpu_custom_call.1} parent=11 // pred_region
          _
        $region16: #{tpu_custom_call.1} parent=11 // pred_fallthru
          _
        // Predicated region
        $region17: #{tpu_custom_call.1} parent=11 // pred_check
          %p432 = pneg %p94
        $region18: #{tpu_custom_call.1} parent=11 // pred_check_branch
          %434 = sbr.rel (%p432) target = $region20
        $region19: #{tpu_custom_call.1} parent=11 // pred_region
          _
        $region20: #{tpu_custom_call.1} parent=11 // pred_fallthru
          _
        // Predicated region
        $region21: #{tpu_custom_call.1} parent=11 // pred_check
          %p435 = pneg %p115
        $region22: #{tpu_custom_call.1} parent=11 // pred_check_branch
          %437 = sbr.rel (%p435) target = $region24
        $region23: #{tpu_custom_call.1} parent=11 // pred_region
          _
        $region24: #{tpu_custom_call.1} parent=11 // pred_fallthru
          _
        // Predicated region
        $region25: #{tpu_custom_call.1} parent=11 // pred_check
          %p438 = pneg %p136
        $region26: #{tpu_custom_call.1} parent=11 // pred_check_branch
          %440 = sbr.rel (%p438) target = $region28
        $region27: #{tpu_custom_call.1} parent=11 // pred_region
          _
        $region28: #{tpu_custom_call.1} parent=11 // pred_fallthru
          _
        // Predicated region
        $region29: #{tpu_custom_call.1} parent=11 // pred_check
          %p441 = pneg %p157
        $region30: #{tpu_custom_call.1} parent=11 // pred_check_branch
          %443 = sbr.rel (%p441) target = $region32
        $region31: #{tpu_custom_call.1} parent=11 // pred_region
          _
        $region32: #{tpu_custom_call.1} parent=11 // pred_fallthru
          _
        // Predicated region
        $region33: #{tpu_custom_call.1} parent=11 // pred_check
          %p444 = pneg %p178
        $region34: #{tpu_custom_call.1} parent=11 // pred_check_branch
          %446 = sbr.rel (%p444) target = $region36
        $region35: #{tpu_custom_call.1} parent=11 // pred_region
          _
        $region36: #{tpu_custom_call.1} parent=11 // pred_fallthru
          _
        // Predicated region
        $region37: #{tpu_custom_call.1} parent=11 // pred_check
          %p447 = pneg %p199
        $region38: #{tpu_custom_call.1} parent=11 // pred_check_branch
          %449 = sbr.rel (%p447) target = $region40
        $region39: #{tpu_custom_call.1} parent=11 // pred_region
          _
        $region40: #{tpu_custom_call.1} parent=11 // pred_fallthru
          _
        // Predicated region
        $region41: #{tpu_custom_call.1} parent=11 // pred_check
          %p450 = pneg %p220
        $region42: #{tpu_custom_call.1} parent=11 // pred_check_branch
          %452 = sbr.rel (%p450) target = $region44
        $region43: #{tpu_custom_call.1} parent=11 // pred_region
          _
        $region44: #{tpu_custom_call.1} parent=11 // pred_fallthru
          _
        // Predicated region
        $region45: #{tpu_custom_call.1} parent=11 // pred_check
          %p453 = pneg %p241
        $region46: #{tpu_custom_call.1} parent=11 // pred_check_branch
          %455 = sbr.rel (%p453) target = $region48
        $region47: #{tpu_custom_call.1} parent=11 // pred_region
          _
        $region48: #{tpu_custom_call.1} parent=11 // pred_fallthru
          _
        // Predicated region
        $region49: #{tpu_custom_call.1} parent=11 // pred_check
          %p456 = pneg %p262
        $region50: #{tpu_custom_call.1} parent=11 // pred_check_branch
          %458 = sbr.rel (%p456) target = $region52
        $region51: #{tpu_custom_call.1} parent=11 // pred_region
          _
        $region52: #{tpu_custom_call.1} parent=11 // pred_fallthru
          _
        // Predicated region
        $region53: #{tpu_custom_call.1} parent=11 // pred_check
          %p459 = pneg %p283
        $region54: #{tpu_custom_call.1} parent=11 // pred_check_branch
          %461 = sbr.rel (%p459) target = $region56
        $region55: #{tpu_custom_call.1} parent=11 // pred_region
          _
        $region56: #{tpu_custom_call.1} parent=11 // pred_fallthru
          _
        // Predicated region
        $region57: #{tpu_custom_call.1} parent=11 // pred_check
          %p462 = pneg %p304
        $region58: #{tpu_custom_call.1} parent=11 // pred_check_branch
          %464 = sbr.rel (%p462) target = $region60
        $region59: #{tpu_custom_call.1} parent=11 // pred_region
          _
        $region60: #{tpu_custom_call.1} parent=11 // pred_fallthru
          _
        // Predicated region
        $region61: #{tpu_custom_call.1} parent=11 // pred_check
          %p465 = pneg %p325
        $region62: #{tpu_custom_call.1} parent=11 // pred_check_branch
          %467 = sbr.rel (%p465) target = $region64
        $region63: #{tpu_custom_call.1} parent=11 // pred_region
          _
        $region64: #{tpu_custom_call.1} parent=11 // pred_fallthru
          _
        // Predicated region
        $region65: #{tpu_custom_call.1} parent=11 // pred_check
          %p468 = pneg %p346
        $region66: #{tpu_custom_call.1} parent=11 // pred_check_branch
          %470 = sbr.rel (%p468) target = $region68
        $region67: #{tpu_custom_call.1} parent=11 // pred_region
          _
        $region68: #{tpu_custom_call.1} parent=11 // pred_fallthru
          _
        // Predicated region
        $region69: #{tpu_custom_call.1} parent=11 // pred_check
          %p471 = pneg %p367
        $region70: #{tpu_custom_call.1} parent=11 // pred_check_branch
          %473 = sbr.rel (%p471) target = $region72
        $region71: #{tpu_custom_call.1} parent=11 // pred_region
          _
        $region72: #{tpu_custom_call.1} parent=11 // pred_fallthru
          _
        // Predicated region
        $region73: #{tpu_custom_call.1} parent=11 // pred_check
          %p474 = pneg %p388
        $region74: #{tpu_custom_call.1} parent=11 // pred_check_branch
          %476 = sbr.rel (%p474) target = $region76
        $region75: #{tpu_custom_call.1} parent=11 // pred_region
          _
        $region76: #{tpu_custom_call.1} parent=11 // pred_fallthru
          _
      $region12: #{tpu_custom_call.1} parent=5 // pred_fallthru
        _
      %p477 = scmp.lt.s32.totalorder %s26, 2
      // Predicated region
      $region77: #{tpu_custom_call.1} parent=5 // pred_check
        %p478 = pneg %p477
      $region78: #{tpu_custom_call.1} parent=5 // pred_check_branch
        %480 = sbr.rel (%p478) target = $region80
      $region79: #{tpu_custom_call.1} parent=5 // pred_region
        // Predicated region
        $region81: #{tpu_custom_call.1} parent=79 // pred_check
          %p481 = pneg %p46
        $region82: #{tpu_custom_call.1} parent=79 // pred_check_branch
          %483 = sbr.rel (%p481) target = $region84
        $region83: #{tpu_custom_call.1} parent=79 // pred_region
          %s484 = smul.u32 24, %s26
          %p485 = scmp.lt.s32.totalorder %s484, 47
          %s486 = scalar_select %p485, %s484, 47
          %s487 = smul.addr %s486, 8
          %s488 = scalar_lea.vmem %s0, %s487
          %s489 = smul.u32 24, %s26
        $region84: #{tpu_custom_call.1} parent=79 // pred_fallthru
          _
      $region80: #{tpu_custom_call.1} parent=5 // pred_fallthru
        _
      %p490 = scmp.le.s32.totalorder 1, %s26
      %p491 = scmp.lt.s32.totalorder %s26, 3
      %p492 = pnand %p490, %p491
      %p493 = pneg %p492
      // Predicated region
      $region85: #{tpu_custom_call.1} parent=5 // pred_check
        _
      $region86: #{tpu_custom_call.1} parent=5 // pred_check_branch
        %495 = sbr.rel (%p492) target = $region88
      $region87: #{tpu_custom_call.1} parent=5 // pred_region
        %s496 = ssub.s32 %s26, 1
        %s497 = smul.u32 24, %s31
        %p498 = scmp.lt.s32.totalorder %s497, 47
        %s499 = scalar_select %p498, %s497, 47
        %s500 = smul.addr %s499, 8
        %s501 = scalar_lea.vmem %s0, %s500
        %p502 = pneg %p52
        %p503 = pneg %p49
        %p504 = pneg %p73
        %p505 = pneg %p70
        %p506 = pneg %p94
        %p507 = pneg %p91
        %p508 = pneg %p115
        %p509 = pneg %p112
        %p510 = pneg %p136
        %p511 = pneg %p133
        %p512 = pneg %p157
        %p513 = pneg %p154
        %p514 = pneg %p178
        %p515 = pneg %p175
        %p516 = pneg %p199
        %p517 = pneg %p196
        %p518 = pneg %p220
        %p519 = pneg %p217
        %p520 = pneg %p241
        %p521 = pneg %p238
        %p522 = pneg %p262
        %p523 = pneg %p259
        %p524 = pneg %p283
        %p525 = pneg %p280
        %p526 = pneg %p304
        %p527 = pneg %p301
        %p528 = pneg %p325
        %p529 = pneg %p322
        %p530 = pneg %p346
        %p531 = pneg %p343
        %p532 = pneg %p367
        %p533 = pneg %p364
        %p534 = pneg %p388
        %p535 = pneg %p385
        %p536 = pneg %p414
        %p537 = pneg %p411
        %s538 = sand.u32 %s401, 1
        %s539 = scalar_lea.sflag [#allocation4], %s538
        %s540 = sand.u32 %s401, 1
        %s541 = smul.addr %s540, 8
        %s542 = scalar_lea.vmem [#allocation3], %s541
        %s543 = smul.u32 24, %s31
        %p544 = scmp.lt.s32.totalorder %s543, 47
        %s545 = scalar_select %p544, %s543, 47
        %s546 = smul.addr %s545, 8
        %s547 = scalar_lea.vmem %s0, %s546
        %s548 = smul.u32 24, %s31
        %v550 = vlaneseq
        %v551 = vshrl.u32 %v550, 7
        %v552 = vadd.s32 %v551, 8
        %v553 = vadd.s32 %v551, 16
        %v554 = vadd.s32 %v551, 24
        %v555 = vadd.s32 %v551, 32
        %v556 = vadd.s32 %v551, 40
        %v557 = vadd.s32 %v551, 48
        %v558 = vadd.s32 %v551, 56
        %v559 = vadd.s32 %v551, 64
        %v560 = vadd.s32 %v551, 72
        %v561 = vadd.s32 %v551, 80
        %v562 = vadd.s32 %v551, 88
        %v563 = vadd.s32 %v551, 96
        %v564 = vadd.s32 %v551, 104
        %v565 = vadd.s32 %v551, 112
        %v566 = vadd.s32 %v551, 120
        %v567 = vadd.s32 %v551, 128
        %v568 = vadd.s32 %v551, 136
        %v569 = vadd.s32 %v551, 144
        %v570 = vadd.s32 %v551, 152
        %v571 = vadd.s32 %v551, 160
        %v572 = vadd.s32 %v551, 168
        %v573 = vadd.s32 %v551, 176
        %v574 = vadd.s32 %v551, 184
        %vm575 = vcmp.ge.s32.totalorder %v551, 4
        %vm576 = vcmp.ge.s32.totalorder %v552, 4
        %vm577 = vcmp.ge.s32.totalorder %v553, 4
        %vm578 = vcmp.ge.s32.totalorder %v554, 4
        %vm579 = vcmp.ge.s32.totalorder %v555, 4
        %vm580 = vcmp.ge.s32.totalorder %v556, 4
        %vm581 = vcmp.ge.s32.totalorder %v557, 4
        %vm582 = vcmp.ge.s32.totalorder %v558, 4
        %vm583 = vcmp.ge.s32.totalorder %v559, 4
        %vm584 = vcmp.ge.s32.totalorder %v560, 4
        %vm585 = vcmp.ge.s32.totalorder %v561, 4
        %vm586 = vcmp.ge.s32.totalorder %v562, 4
        %vm587 = vcmp.ge.s32.totalorder %v563, 4
        %vm588 = vcmp.ge.s32.totalorder %v564, 4
        %vm589 = vcmp.ge.s32.totalorder %v565, 4
        %vm590 = vcmp.ge.s32.totalorder %v566, 4
        %vm591 = vcmp.ge.s32.totalorder %v567, 4
        %vm592 = vcmp.ge.s32.totalorder %v568, 4
        %vm593 = vcmp.ge.s32.totalorder %v569, 4
        %vm594 = vcmp.ge.s32.totalorder %v570, 4
        %vm595 = vcmp.ge.s32.totalorder %v571, 4
        %vm596 = vcmp.ge.s32.totalorder %v572, 4
        %vm597 = vcmp.ge.s32.totalorder %v573, 4
        %vm598 = vcmp.ge.s32.totalorder %v574, 4
        %vm599 = vcmp.lt.s32.totalorder %v551, 20
        %vm600 = vcmp.lt.s32.totalorder %v552, 20
        %vm601 = vcmp.lt.s32.totalorder %v553, 20
        %vm602 = vcmp.lt.s32.totalorder %v554, 20
        %vm603 = vcmp.lt.s32.totalorder %v555, 20
        %vm604 = vcmp.lt.s32.totalorder %v556, 20
        %vm605 = vcmp.lt.s32.totalorder %v557, 20
        %vm606 = vcmp.lt.s32.totalorder %v558, 20
        %vm607 = vcmp.lt.s32.totalorder %v559, 20
        %vm608 = vcmp.lt.s32.totalorder %v560, 20
        %vm609 = vcmp.lt.s32.totalorder %v561, 20
        %vm610 = vcmp.lt.s32.totalorder %v562, 20
        %vm611 = vcmp.lt.s32.totalorder %v563, 20
        %vm612 = vcmp.lt.s32.totalorder %v564, 20
        %vm613 = vcmp.lt.s32.totalorder %v565, 20
        %vm614 = vcmp.lt.s32.totalorder %v566, 20
        %vm615 = vcmp.lt.s32.totalorder %v567, 20
        %vm616 = vcmp.lt.s32.totalorder %v568, 20
        %vm617 = vcmp.lt.s32.totalorder %v569, 20
        %vm618 = vcmp.lt.s32.totalorder %v570, 20
        %vm619 = vcmp.lt.s32.totalorder %v571, 20
        %vm620 = vcmp.lt.s32.totalorder %v572, 20
        %vm621 = vcmp.lt.s32.totalorder %v573, 20
        %vm622 = vcmp.lt.s32.totalorder %v574, 20
        %vm623 = vmand %vm575, %vm599
        %vm624 = vmand %vm576, %vm600
        %vm625 = vmand %vm577, %vm601
        %vm626 = vmand %vm578, %vm602
        %vm627 = vmand %vm579, %vm603
        %vm628 = vmand %vm580, %vm604
        %vm629 = vmand %vm581, %vm605
        %vm630 = vmand %vm582, %vm606
        %vm631 = vmand %vm583, %vm607
        %vm632 = vmand %vm584, %vm608
        %vm633 = vmand %vm585, %vm609
        %vm634 = vmand %vm586, %vm610
        %vm635 = vmand %vm587, %vm611
        %vm636 = vmand %vm588, %vm612
        %vm637 = vmand %vm589, %vm613
        %vm638 = vmand %vm590, %vm614
        %vm639 = vmand %vm591, %vm615
        %vm640 = vmand %vm592, %vm616
        %vm641 = vmand %vm593, %vm617
        %vm642 = vmand %vm594, %vm618
        %vm643 = vmand %vm595, %vm619
        %vm644 = vmand %vm596, %vm620
        %vm645 = vmand %vm597, %vm621
        %vm646 = vmand %vm598, %vm622
        %vm647 = vcmp.ge.s32.totalorder %v551, 28
        %vm648 = vcmp.ge.s32.totalorder %v552, 28
        %vm649 = vcmp.ge.s32.totalorder %v553, 28
        %vm650 = vcmp.ge.s32.totalorder %v554, 28
        %vm651 = vcmp.ge.s32.totalorder %v555, 28
        %vm652 = vcmp.ge.s32.totalorder %v556, 28
        %vm653 = vcmp.ge.s32.totalorder %v557, 28
        %vm654 = vcmp.ge.s32.totalorder %v558, 28
        %vm655 = vcmp.ge.s32.totalorder %v559, 28
        %vm656 = vcmp.ge.s32.totalorder %v560, 28
        %vm657 = vcmp.ge.s32.totalorder %v561, 28
        %vm658 = vcmp.ge.s32.totalorder %v562, 28
        %vm659 = vcmp.ge.s32.totalorder %v563, 28
        %vm660 = vcmp.ge.s32.totalorder %v564, 28
        %vm661 = vcmp.ge.s32.totalorder %v565, 28
        %vm662 = vcmp.ge.s32.totalorder %v566, 28
        %vm663 = vcmp.ge.s32.totalorder %v567, 28
        %vm664 = vcmp.ge.s32.totalorder %v568, 28
        %vm665 = vcmp.ge.s32.totalorder %v569, 28
        %vm666 = vcmp.ge.s32.totalorder %v570, 28
        %vm667 = vcmp.ge.s32.totalorder %v571, 28
        %vm668 = vcmp.ge.s32.totalorder %v572, 28
        %vm669 = vcmp.ge.s32.totalorder %v573, 28
        %vm670 = vcmp.ge.s32.totalorder %v574, 28
        %vm671 = vcmp.lt.s32.totalorder %v551, 44
        %vm672 = vcmp.lt.s32.totalorder %v552, 44
        %vm673 = vcmp.lt.s32.totalorder %v553, 44
        %vm674 = vcmp.lt.s32.totalorder %v554, 44
        %vm675 = vcmp.lt.s32.totalorder %v555, 44
        %vm676 = vcmp.lt.s32.totalorder %v556, 44
        %vm677 = vcmp.lt.s32.totalorder %v557, 44
        %vm678 = vcmp.lt.s32.totalorder %v558, 44
        %vm679 = vcmp.lt.s32.totalorder %v559, 44
        %vm680 = vcmp.lt.s32.totalorder %v560, 44
        %vm681 = vcmp.lt.s32.totalorder %v561, 44
        %vm682 = vcmp.lt.s32.totalorder %v562, 44
        %vm683 = vcmp.lt.s32.totalorder %v563, 44
        %vm684 = vcmp.lt.s32.totalorder %v564, 44
        %vm685 = vcmp.lt.s32.totalorder %v565, 44
        %vm686 = vcmp.lt.s32.totalorder %v566, 44
        %vm687 = vcmp.lt.s32.totalorder %v567, 44
        %vm688 = vcmp.lt.s32.totalorder %v568, 44
        %vm689 = vcmp.lt.s32.totalorder %v569, 44
        %vm690 = vcmp.lt.s32.totalorder %v570, 44
        %vm691 = vcmp.lt.s32.totalorder %v571, 44
        %vm692 = vcmp.lt.s32.totalorder %v572, 44
        %vm693 = vcmp.lt.s32.totalorder %v573, 44
        %vm694 = vcmp.lt.s32.totalorder %v574, 44
        %vm695 = vmand %vm647, %vm671
        %vm696 = vmand %vm648, %vm672
        %vm697 = vmand %vm649, %vm673
        %vm698 = vmand %vm650, %vm674
        %vm699 = vmand %vm651, %vm675
        %vm700 = vmand %vm652, %vm676
        %vm701 = vmand %vm653, %vm677
        %vm702 = vmand %vm654, %vm678
        %vm703 = vmand %vm655, %vm679
        %vm704 = vmand %vm656, %vm680
        %vm705 = vmand %vm657, %vm681
        %vm706 = vmand %vm658, %vm682
        %vm707 = vmand %vm659, %vm683
        %vm708 = vmand %vm660, %vm684
        %vm709 = vmand %vm661, %vm685
        %vm710 = vmand %vm662, %vm686
        %vm711 = vmand %vm663, %vm687
        %vm712 = vmand %vm664, %vm688
        %vm713 = vmand %vm665, %vm689
        %vm714 = vmand %vm666, %vm690
        %vm715 = vmand %vm667, %vm691
        %vm716 = vmand %vm668, %vm692
        %vm717 = vmand %vm669, %vm693
        %vm718 = vmand %vm670, %vm694
        %vm719 = vmor %vm623, %vm695
        %vm720 = vmor %vm624, %vm696
        %vm721 = vmor %vm625, %vm697
        %vm722 = vmor %vm626, %vm698
        %vm723 = vmor %vm627, %vm699
        %vm724 = vmor %vm628, %vm700
        %vm725 = vmor %vm629, %vm701
        %vm726 = vmor %vm630, %vm702
        %vm727 = vmor %vm631, %vm703
        %vm728 = vmor %vm632, %vm704
        %vm729 = vmor %vm633, %vm705
        %vm730 = vmor %vm634, %vm706
        %vm731 = vmor %vm635, %vm707
        %vm732 = vmor %vm636, %vm708
        %vm733 = vmor %vm637, %vm709
        %vm734 = vmor %vm638, %vm710
        %vm735 = vmor %vm639, %vm711
        %vm736 = vmor %vm640, %vm712
        %vm737 = vmor %vm641, %vm713
        %vm738 = vmor %vm642, %vm714
        %vm739 = vmor %vm643, %vm715
        %vm740 = vmor %vm644, %vm716
        %vm741 = vmor %vm645, %vm717
        %vm742 = vmor %vm646, %vm718
        %vm743 = vcmp.ge.s32.totalorder %v551, 52
        %vm744 = vcmp.ge.s32.totalorder %v552, 52
        %vm745 = vcmp.ge.s32.totalorder %v553, 52
        %vm746 = vcmp.ge.s32.totalorder %v554, 52
        %vm747 = vcmp.ge.s32.totalorder %v555, 52
        %vm748 = vcmp.ge.s32.totalorder %v556, 52
        %vm749 = vcmp.ge.s32.totalorder %v557, 52
        %vm750 = vcmp.ge.s32.totalorder %v558, 52
        %vm751 = vcmp.ge.s32.totalorder %v559, 52
        %vm752 = vcmp.ge.s32.totalorder %v560, 52
        %vm753 = vcmp.ge.s32.totalorder %v561, 52
        %vm754 = vcmp.ge.s32.totalorder %v562, 52
        %vm755 = vcmp.ge.s32.totalorder %v563, 52
        %vm756 = vcmp.ge.s32.totalorder %v564, 52
        %vm757 = vcmp.ge.s32.totalorder %v565, 52
        %vm758 = vcmp.ge.s32.totalorder %v566, 52
        %vm759 = vcmp.ge.s32.totalorder %v567, 52
        %vm760 = vcmp.ge.s32.totalorder %v568, 52
        %vm761 = vcmp.ge.s32.totalorder %v569, 52
        %vm762 = vcmp.ge.s32.totalorder %v570, 52
        %vm763 = vcmp.ge.s32.totalorder %v571, 52
        %vm764 = vcmp.ge.s32.totalorder %v572, 52
        %vm765 = vcmp.ge.s32.totalorder %v573, 52
        %vm766 = vcmp.ge.s32.totalorder %v574, 52
        %vm767 = vcmp.lt.s32.totalorder %v551, 68
        %vm768 = vcmp.lt.s32.totalorder %v552, 68
        %vm769 = vcmp.lt.s32.totalorder %v553, 68
        %vm770 = vcmp.lt.s32.totalorder %v554, 68
        %vm771 = vcmp.lt.s32.totalorder %v555, 68
        %vm772 = vcmp.lt.s32.totalorder %v556, 68
        %vm773 = vcmp.lt.s32.totalorder %v557, 68
        %vm774 = vcmp.lt.s32.totalorder %v558, 68
        %vm775 = vcmp.lt.s32.totalorder %v559, 68
        %vm776 = vcmp.lt.s32.totalorder %v560, 68
        %vm777 = vcmp.lt.s32.totalorder %v561, 68
        %vm778 = vcmp.lt.s32.totalorder %v562, 68
        %vm779 = vcmp.lt.s32.totalorder %v563, 68
        %vm780 = vcmp.lt.s32.totalorder %v564, 68
        %vm781 = vcmp.lt.s32.totalorder %v565, 68
        %vm782 = vcmp.lt.s32.totalorder %v566, 68
        %vm783 = vcmp.lt.s32.totalorder %v567, 68
        %vm784 = vcmp.lt.s32.totalorder %v568, 68
        %vm785 = vcmp.lt.s32.totalorder %v569, 68
        %vm786 = vcmp.lt.s32.totalorder %v570, 68
        %vm787 = vcmp.lt.s32.totalorder %v571, 68
        %vm788 = vcmp.lt.s32.totalorder %v572, 68
        %vm789 = vcmp.lt.s32.totalorder %v573, 68
        %vm790 = vcmp.lt.s32.totalorder %v574, 68
        %vm791 = vmand %vm743, %vm767
        %vm792 = vmand %vm744, %vm768
        %vm793 = vmand %vm745, %vm769
        %vm794 = vmand %vm746, %vm770
        %vm795 = vmand %vm747, %vm771
        %vm796 = vmand %vm748, %vm772
        %vm797 = vmand %vm749, %vm773
        %vm798 = vmand %vm750, %vm774
        %vm799 = vmand %vm751, %vm775
        %vm800 = vmand %vm752, %vm776
        %vm801 = vmand %vm753, %vm777
        %vm802 = vmand %vm754, %vm778
        %vm803 = vmand %vm755, %vm779
        %vm804 = vmand %vm756, %vm780
        %vm805 = vmand %vm757, %vm781
        %vm806 = vmand %vm758, %vm782
        %vm807 = vmand %vm759, %vm783
        %vm808 = vmand %vm760, %vm784
        %vm809 = vmand %vm761, %vm785
        %vm810 = vmand %vm762, %vm786
        %vm811 = vmand %vm763, %vm787
        %vm812 = vmand %vm764, %vm788
        %vm813 = vmand %vm765, %vm789
        %vm814 = vmand %vm766, %vm790
        %vm815 = vmor %vm719, %vm791
        %vm816 = vmor %vm720, %vm792
        %vm817 = vmor %vm721, %vm793
        %vm818 = vmor %vm722, %vm794
        %vm819 = vmor %vm723, %vm795
        %vm820 = vmor %vm724, %vm796
        %vm821 = vmor %vm725, %vm797
        %vm822 = vmor %vm726, %vm798
        %vm823 = vmor %vm727, %vm799
        %vm824 = vmor %vm728, %vm800
        %vm825 = vmor %vm729, %vm801
        %vm826 = vmor %vm730, %vm802
        %vm827 = vmor %vm731, %vm803
        %vm828 = vmor %vm732, %vm804
        %vm829 = vmor %vm733, %vm805
        %vm830 = vmor %vm734, %vm806
        %vm831 = vmor %vm735, %vm807
        %vm832 = vmor %vm736, %vm808
        %vm833 = vmor %vm737, %vm809
        %vm834 = vmor %vm738, %vm810
        %vm835 = vmor %vm739, %vm811
        %vm836 = vmor %vm740, %vm812
        %vm837 = vmor %vm741, %vm813
        %vm838 = vmor %vm742, %vm814
        %vm839 = vcmp.ge.s32.totalorder %v551, 76
        %vm840 = vcmp.ge.s32.totalorder %v552, 76
        %vm841 = vcmp.ge.s32.totalorder %v553, 76
        %vm842 = vcmp.ge.s32.totalorder %v554, 76
        %vm843 = vcmp.ge.s32.totalorder %v555, 76
        %vm844 = vcmp.ge.s32.totalorder %v556, 76
        %vm845 = vcmp.ge.s32.totalorder %v557, 76
        %vm846 = vcmp.ge.s32.totalorder %v558, 76
        %vm847 = vcmp.ge.s32.totalorder %v559, 76
        %vm848 = vcmp.ge.s32.totalorder %v560, 76
        %vm849 = vcmp.ge.s32.totalorder %v561, 76
        %vm850 = vcmp.ge.s32.totalorder %v562, 76
        %vm851 = vcmp.ge.s32.totalorder %v563, 76
        %vm852 = vcmp.ge.s32.totalorder %v564, 76
        %vm853 = vcmp.ge.s32.totalorder %v565, 76
        %vm854 = vcmp.ge.s32.totalorder %v566, 76
        %vm855 = vcmp.ge.s32.totalorder %v567, 76
        %vm856 = vcmp.ge.s32.totalorder %v568, 76
        %vm857 = vcmp.ge.s32.totalorder %v569, 76
        %vm858 = vcmp.ge.s32.totalorder %v570, 76
        %vm859 = vcmp.ge.s32.totalorder %v571, 76
        %vm860 = vcmp.ge.s32.totalorder %v572, 76
        %vm861 = vcmp.ge.s32.totalorder %v573, 76
        %vm862 = vcmp.ge.s32.totalorder %v574, 76
        %vm863 = vcmp.lt.s32.totalorder %v551, 92
        %vm864 = vcmp.lt.s32.totalorder %v552, 92
        %vm865 = vcmp.lt.s32.totalorder %v553, 92
        %vm866 = vcmp.lt.s32.totalorder %v554, 92
        %vm867 = vcmp.lt.s32.totalorder %v555, 92
        %vm868 = vcmp.lt.s32.totalorder %v556, 92
        %vm869 = vcmp.lt.s32.totalorder %v557, 92
        %vm870 = vcmp.lt.s32.totalorder %v558, 92
        %vm871 = vcmp.lt.s32.totalorder %v559, 92
        %vm872 = vcmp.lt.s32.totalorder %v560, 92
        %vm873 = vcmp.lt.s32.totalorder %v561, 92
        %vm874 = vcmp.lt.s32.totalorder %v562, 92
        %vm875 = vcmp.lt.s32.totalorder %v563, 92
        %vm876 = vcmp.lt.s32.totalorder %v564, 92
        %vm877 = vcmp.lt.s32.totalorder %v565, 92
        %vm878 = vcmp.lt.s32.totalorder %v566, 92
        %vm879 = vcmp.lt.s32.totalorder %v567, 92
        %vm880 = vcmp.lt.s32.totalorder %v568, 92
        %vm881 = vcmp.lt.s32.totalorder %v569, 92
        %vm882 = vcmp.lt.s32.totalorder %v570, 92
        %vm883 = vcmp.lt.s32.totalorder %v571, 92
        %vm884 = vcmp.lt.s32.totalorder %v572, 92
        %vm885 = vcmp.lt.s32.totalorder %v573, 92
        %vm886 = vcmp.lt.s32.totalorder %v574, 92
        %vm887 = vmand %vm839, %vm863
        %vm888 = vmand %vm840, %vm864
        %vm889 = vmand %vm841, %vm865
        %vm890 = vmand %vm842, %vm866
        %vm891 = vmand %vm843, %vm867
        %vm892 = vmand %vm844, %vm868
        %vm893 = vmand %vm845, %vm869
        %vm894 = vmand %vm846, %vm870
        %vm895 = vmand %vm847, %vm871
        %vm896 = vmand %vm848, %vm872
        %vm897 = vmand %vm849, %vm873
        %vm898 = vmand %vm850, %vm874
        %vm899 = vmand %vm851, %vm875
        %vm900 = vmand %vm852, %vm876
        %vm901 = vmand %vm853, %vm877
        %vm902 = vmand %vm854, %vm878
        %vm903 = vmand %vm855, %vm879
        %vm904 = vmand %vm856, %vm880
        %vm905 = vmand %vm857, %vm881
        %vm906 = vmand %vm858, %vm882
        %vm907 = vmand %vm859, %vm883
        %vm908 = vmand %vm860, %vm884
        %vm909 = vmand %vm861, %vm885
        %vm910 = vmand %vm862, %vm886
        %vm911 = vmor %vm815, %vm887
        %vm912 = vmor %vm816, %vm888
        %vm913 = vmor %vm817, %vm889
        %vm914 = vmor %vm818, %vm890
        %vm915 = vmor %vm819, %vm891
        %vm916 = vmor %vm820, %vm892
        %vm917 = vmor %vm821, %vm893
        %vm918 = vmor %vm822, %vm894
        %vm919 = vmor %vm823, %vm895
        %vm920 = vmor %vm824, %vm896
        %vm921 = vmor %vm825, %vm897
        %vm922 = vmor %vm826, %vm898
        %vm923 = vmor %vm827, %vm899
        %vm924 = vmor %vm828, %vm900
        %vm925 = vmor %vm829, %vm901
        %vm926 = vmor %vm830, %vm902
        %vm927 = vmor %vm831, %vm903
        %vm928 = vmor %vm832, %vm904
        %vm929 = vmor %vm833, %vm905
        %vm930 = vmor %vm834, %vm906
        %vm931 = vmor %vm835, %vm907
        %vm932 = vmor %vm836, %vm908
        %vm933 = vmor %vm837, %vm909
        %vm934 = vmor %vm838, %vm910
        %vm935 = vcmp.ge.s32.totalorder %v551, 100
        %vm936 = vcmp.ge.s32.totalorder %v552, 100
        %vm937 = vcmp.ge.s32.totalorder %v553, 100
        %vm938 = vcmp.ge.s32.totalorder %v554, 100
        %vm939 = vcmp.ge.s32.totalorder %v555, 100
        %vm940 = vcmp.ge.s32.totalorder %v556, 100
        %vm941 = vcmp.ge.s32.totalorder %v557, 100
        %vm942 = vcmp.ge.s32.totalorder %v558, 100
        %vm943 = vcmp.ge.s32.totalorder %v559, 100
        %vm944 = vcmp.ge.s32.totalorder %v560, 100
        %vm945 = vcmp.ge.s32.totalorder %v561, 100
        %vm946 = vcmp.ge.s32.totalorder %v562, 100
        %vm947 = vcmp.ge.s32.totalorder %v563, 100
        %vm948 = vcmp.ge.s32.totalorder %v564, 100
        %vm949 = vcmp.ge.s32.totalorder %v565, 100
        %vm950 = vcmp.ge.s32.totalorder %v566, 100
        %vm951 = vcmp.ge.s32.totalorder %v567, 100
        %vm952 = vcmp.ge.s32.totalorder %v568, 100
        %vm953 = vcmp.ge.s32.totalorder %v569, 100
        %vm954 = vcmp.ge.s32.totalorder %v570, 100
        %vm955 = vcmp.ge.s32.totalorder %v571, 100
        %vm956 = vcmp.ge.s32.totalorder %v572, 100
        %vm957 = vcmp.ge.s32.totalorder %v573, 100
        %vm958 = vcmp.ge.s32.totalorder %v574, 100
        %vm959 = vcmp.lt.s32.totalorder %v551, 116
        %vm960 = vcmp.lt.s32.totalorder %v552, 116
        %vm961 = vcmp.lt.s32.totalorder %v553, 116
        %vm962 = vcmp.lt.s32.totalorder %v554, 116
        %vm963 = vcmp.lt.s32.totalorder %v555, 116
        %vm964 = vcmp.lt.s32.totalorder %v556, 116
        %vm965 = vcmp.lt.s32.totalorder %v557, 116
        %vm966 = vcmp.lt.s32.totalorder %v558, 116
        %vm967 = vcmp.lt.s32.totalorder %v559, 116
        %vm968 = vcmp.lt.s32.totalorder %v560, 116
        %vm969 = vcmp.lt.s32.totalorder %v561, 116
        %vm970 = vcmp.lt.s32.totalorder %v562, 116
        %vm971 = vcmp.lt.s32.totalorder %v563, 116
        %vm972 = vcmp.lt.s32.totalorder %v564, 116
        %vm973 = vcmp.lt.s32.totalorder %v565, 116
        %vm974 = vcmp.lt.s32.totalorder %v566, 116
        %vm975 = vcmp.lt.s32.totalorder %v567, 116
        %vm976 = vcmp.lt.s32.totalorder %v568, 116
        %vm977 = vcmp.lt.s32.totalorder %v569, 116
        %vm978 = vcmp.lt.s32.totalorder %v570, 116
        %vm979 = vcmp.lt.s32.totalorder %v571, 116
        %vm980 = vcmp.lt.s32.totalorder %v572, 116
        %vm981 = vcmp.lt.s32.totalorder %v573, 116
        %vm982 = vcmp.lt.s32.totalorder %v574, 116
        %vm983 = vmand %vm935, %vm959
        %vm984 = vmand %vm936, %vm960
        %vm985 = vmand %vm937, %vm961
        %vm986 = vmand %vm938, %vm962
        %vm987 = vmand %vm939, %vm963
        %vm988 = vmand %vm940, %vm964
        %vm989 = vmand %vm941, %vm965
        %vm990 = vmand %vm942, %vm966
        %vm991 = vmand %vm943, %vm967
        %vm992 = vmand %vm944, %vm968
        %vm993 = vmand %vm945, %vm969
        %vm994 = vmand %vm946, %vm970
        %vm995 = vmand %vm947, %vm971
        %vm996 = vmand %vm948, %vm972
        %vm997 = vmand %vm949, %vm973
        %vm998 = vmand %vm950, %vm974
        %vm999 = vmand %vm951, %vm975
        %vm1000 = vmand %vm952, %vm976
        %vm1001 = vmand %vm953, %vm977
        %vm1002 = vmand %vm954, %vm978
        %vm1003 = vmand %vm955, %vm979
        %vm1004 = vmand %vm956, %vm980
        %vm1005 = vmand %vm957, %vm981
        %vm1006 = vmand %vm958, %vm982
        %vm1007 = vmor %vm911, %vm983
        %vm1008 = vmor %vm912, %vm984
        %vm1009 = vmor %vm913, %vm985
        %vm1010 = vmor %vm914, %vm986
        %vm1011 = vmor %vm915, %vm987
        %vm1012 = vmor %vm916, %vm988
        %vm1013 = vmor %vm917, %vm989
        %vm1014 = vmor %vm918, %vm990
        %vm1015 = vmor %vm919, %vm991
        %vm1016 = vmor %vm920, %vm992
        %vm1017 = vmor %vm921, %vm993
        %vm1018 = vmor %vm922, %vm994
        %vm1019 = vmor %vm923, %vm995
        %vm1020 = vmor %vm924, %vm996
        %vm1021 = vmor %vm925, %vm997
        %vm1022 = vmor %vm926, %vm998
        %vm1023 = vmor %vm927, %vm999
        %vm1024 = vmor %vm928, %vm1000
        %vm1025 = vmor %vm929, %vm1001
        %vm1026 = vmor %vm930, %vm1002
        %vm1027 = vmor %vm931, %vm1003
        %vm1028 = vmor %vm932, %vm1004
        %vm1029 = vmor %vm933, %vm1005
        %vm1030 = vmor %vm934, %vm1006
        %vm1031 = vcmp.ge.s32.totalorder %v551, 124
        %vm1032 = vcmp.ge.s32.totalorder %v552, 124
        %vm1033 = vcmp.ge.s32.totalorder %v553, 124
        %vm1034 = vcmp.ge.s32.totalorder %v554, 124
        %vm1035 = vcmp.ge.s32.totalorder %v555, 124
        %vm1036 = vcmp.ge.s32.totalorder %v556, 124
        %vm1037 = vcmp.ge.s32.totalorder %v557, 124
        %vm1038 = vcmp.ge.s32.totalorder %v558, 124
        %vm1039 = vcmp.ge.s32.totalorder %v559, 124
        %vm1040 = vcmp.ge.s32.totalorder %v560, 124
        %vm1041 = vcmp.ge.s32.totalorder %v561, 124
        %vm1042 = vcmp.ge.s32.totalorder %v562, 124
        %vm1043 = vcmp.ge.s32.totalorder %v563, 124
        %vm1044 = vcmp.ge.s32.totalorder %v564, 124
        %vm1045 = vcmp.ge.s32.totalorder %v565, 124
        %vm1046 = vcmp.ge.s32.totalorder %v566, 124
        %vm1047 = vcmp.ge.s32.totalorder %v567, 124
        %vm1048 = vcmp.ge.s32.totalorder %v568, 124
        %vm1049 = vcmp.ge.s32.totalorder %v569, 124
        %vm1050 = vcmp.ge.s32.totalorder %v570, 124
        %vm1051 = vcmp.ge.s32.totalorder %v571, 124
        %vm1052 = vcmp.ge.s32.totalorder %v572, 124
        %vm1053 = vcmp.ge.s32.totalorder %v573, 124
        %vm1054 = vcmp.ge.s32.totalorder %v574, 124
        %vm1055 = vcmp.lt.s32.totalorder %v551, 140
        %vm1056 = vcmp.lt.s32.totalorder %v552, 140
        %vm1057 = vcmp.lt.s32.totalorder %v553, 140
        %vm1058 = vcmp.lt.s32.totalorder %v554, 140
        %vm1059 = vcmp.lt.s32.totalorder %v555, 140
        %vm1060 = vcmp.lt.s32.totalorder %v556, 140
        %vm1061 = vcmp.lt.s32.totalorder %v557, 140
        %vm1062 = vcmp.lt.s32.totalorder %v558, 140
        %vm1063 = vcmp.lt.s32.totalorder %v559, 140
        %vm1064 = vcmp.lt.s32.totalorder %v560, 140
        %vm1065 = vcmp.lt.s32.totalorder %v561, 140
        %vm1066 = vcmp.lt.s32.totalorder %v562, 140
        %vm1067 = vcmp.lt.s32.totalorder %v563, 140
        %vm1068 = vcmp.lt.s32.totalorder %v564, 140
        %vm1069 = vcmp.lt.s32.totalorder %v565, 140
        %vm1070 = vcmp.lt.s32.totalorder %v566, 140
        %vm1071 = vcmp.lt.s32.totalorder %v567, 140
        %vm1072 = vcmp.lt.s32.totalorder %v568, 140
        %vm1073 = vcmp.lt.s32.totalorder %v569, 140
        %vm1074 = vcmp.lt.s32.totalorder %v570, 140
        %vm1075 = vcmp.lt.s32.totalorder %v571, 140
        %vm1076 = vcmp.lt.s32.totalorder %v572, 140
        %vm1077 = vcmp.lt.s32.totalorder %v573, 140
        %vm1078 = vcmp.lt.s32.totalorder %v574, 140
        %vm1079 = vmand %vm1031, %vm1055
        %vm1080 = vmand %vm1032, %vm1056
        %vm1081 = vmand %vm1033, %vm1057
        %vm1082 = vmand %vm1034, %vm1058
        %vm1083 = vmand %vm1035, %vm1059
        %vm1084 = vmand %vm1036, %vm1060
        %vm1085 = vmand %vm1037, %vm1061
        %vm1086 = vmand %vm1038, %vm1062
        %vm1087 = vmand %vm1039, %vm1063
        %vm1088 = vmand %vm1040, %vm1064
        %vm1089 = vmand %vm1041, %vm1065
        %vm1090 = vmand %vm1042, %vm1066
        %vm1091 = vmand %vm1043, %vm1067
        %vm1092 = vmand %vm1044, %vm1068
        %vm1093 = vmand %vm1045, %vm1069
        %vm1094 = vmand %vm1046, %vm1070
        %vm1095 = vmand %vm1047, %vm1071
        %vm1096 = vmand %vm1048, %vm1072
        %vm1097 = vmand %vm1049, %vm1073
        %vm1098 = vmand %vm1050, %vm1074
        %vm1099 = vmand %vm1051, %vm1075
        %vm1100 = vmand %vm1052, %vm1076
        %vm1101 = vmand %vm1053, %vm1077
        %vm1102 = vmand %vm1054, %vm1078
        %vm1103 = vmor %vm1007, %vm1079
        %vm1104 = vmor %vm1008, %vm1080
        %vm1105 = vmor %vm1009, %vm1081
        %vm1106 = vmor %vm1010, %vm1082
        %vm1107 = vmor %vm1011, %vm1083
        %vm1108 = vmor %vm1012, %vm1084
        %vm1109 = vmor %vm1013, %vm1085
        %vm1110 = vmor %vm1014, %vm1086
        %vm1111 = vmor %vm1015, %vm1087
        %vm1112 = vmor %vm1016, %vm1088
        %vm1113 = vmor %vm1017, %vm1089
        %vm1114 = vmor %vm1018, %vm1090
        %vm1115 = vmor %vm1019, %vm1091
        %vm1116 = vmor %vm1020, %vm1092
        %vm1117 = vmor %vm1021, %vm1093
        %vm1118 = vmor %vm1022, %vm1094
        %vm1119 = vmor %vm1023, %vm1095
        %vm1120 = vmor %vm1024, %vm1096
        %vm1121 = vmor %vm1025, %vm1097
        %vm1122 = vmor %vm1026, %vm1098
        %vm1123 = vmor %vm1027, %vm1099
        %vm1124 = vmor %vm1028, %vm1100
        %vm1125 = vmor %vm1029, %vm1101
        %vm1126 = vmor %vm1030, %vm1102
        %vm1127 = vcmp.ge.s32.totalorder %v551, 148
        %vm1128 = vcmp.ge.s32.totalorder %v552, 148
        %vm1129 = vcmp.ge.s32.totalorder %v553, 148
        %vm1130 = vcmp.ge.s32.totalorder %v554, 148
        %vm1131 = vcmp.ge.s32.totalorder %v555, 148
        %vm1132 = vcmp.ge.s32.totalorder %v556, 148
        %vm1133 = vcmp.ge.s32.totalorder %v557, 148
        %vm1134 = vcmp.ge.s32.totalorder %v558, 148
        %vm1135 = vcmp.ge.s32.totalorder %v559, 148
        %vm1136 = vcmp.ge.s32.totalorder %v560, 148
        %vm1137 = vcmp.ge.s32.totalorder %v561, 148
        %vm1138 = vcmp.ge.s32.totalorder %v562, 148
        %vm1139 = vcmp.ge.s32.totalorder %v563, 148
        %vm1140 = vcmp.ge.s32.totalorder %v564, 148
        %vm1141 = vcmp.ge.s32.totalorder %v565, 148
        %vm1142 = vcmp.ge.s32.totalorder %v566, 148
        %vm1143 = vcmp.ge.s32.totalorder %v567, 148
        %vm1144 = vcmp.ge.s32.totalorder %v568, 148
        %vm1145 = vcmp.ge.s32.totalorder %v569, 148
        %vm1146 = vcmp.ge.s32.totalorder %v570, 148
        %vm1147 = vcmp.ge.s32.totalorder %v571, 148
        %vm1148 = vcmp.ge.s32.totalorder %v572, 148
        %vm1149 = vcmp.ge.s32.totalorder %v573, 148
        %vm1150 = vcmp.ge.s32.totalorder %v574, 148
        %vm1151 = vcmp.lt.s32.totalorder %v551, 164
        %vm1152 = vcmp.lt.s32.totalorder %v552, 164
        %vm1153 = vcmp.lt.s32.totalorder %v553, 164
        %vm1154 = vcmp.lt.s32.totalorder %v554, 164
        %vm1155 = vcmp.lt.s32.totalorder %v555, 164
        %vm1156 = vcmp.lt.s32.totalorder %v556, 164
        %vm1157 = vcmp.lt.s32.totalorder %v557, 164
        %vm1158 = vcmp.lt.s32.totalorder %v558, 164
        %vm1159 = vcmp.lt.s32.totalorder %v559, 164
        %vm1160 = vcmp.lt.s32.totalorder %v560, 164
        %vm1161 = vcmp.lt.s32.totalorder %v561, 164
        %vm1162 = vcmp.lt.s32.totalorder %v562, 164
        %vm1163 = vcmp.lt.s32.totalorder %v563, 164
        %vm1164 = vcmp.lt.s32.totalorder %v564, 164
        %vm1165 = vcmp.lt.s32.totalorder %v565, 164
        %vm1166 = vcmp.lt.s32.totalorder %v566, 164
        %vm1167 = vcmp.lt.s32.totalorder %v567, 164
        %vm1168 = vcmp.lt.s32.totalorder %v568, 164
        %vm1169 = vcmp.lt.s32.totalorder %v569, 164
        %vm1170 = vcmp.lt.s32.totalorder %v570, 164
        %vm1171 = vcmp.lt.s32.totalorder %v571, 164
        %vm1172 = vcmp.lt.s32.totalorder %v572, 164
        %vm1173 = vcmp.lt.s32.totalorder %v573, 164
        %vm1174 = vcmp.lt.s32.totalorder %v574, 164
        %vm1175 = vmand %vm1127, %vm1151
        %vm1176 = vmand %vm1128, %vm1152
        %vm1177 = vmand %vm1129, %vm1153
        %vm1178 = vmand %vm1130, %vm1154
        %vm1179 = vmand %vm1131, %vm1155
        %vm1180 = vmand %vm1132, %vm1156
        %vm1181 = vmand %vm1133, %vm1157
        %vm1182 = vmand %vm1134, %vm1158
        %vm1183 = vmand %vm1135, %vm1159
        %vm1184 = vmand %vm1136, %vm1160
        %vm1185 = vmand %vm1137, %vm1161
        %vm1186 = vmand %vm1138, %vm1162
        %vm1187 = vmand %vm1139, %vm1163
        %vm1188 = vmand %vm1140, %vm1164
        %vm1189 = vmand %vm1141, %vm1165
        %vm1190 = vmand %vm1142, %vm1166
        %vm1191 = vmand %vm1143, %vm1167
        %vm1192 = vmand %vm1144, %vm1168
        %vm1193 = vmand %vm1145, %vm1169
        %vm1194 = vmand %vm1146, %vm1170
        %vm1195 = vmand %vm1147, %vm1171
        %vm1196 = vmand %vm1148, %vm1172
        %vm1197 = vmand %vm1149, %vm1173
        %vm1198 = vmand %vm1150, %vm1174
        %vm1199 = vmor %vm1103, %vm1175
        %vm1200 = vmor %vm1104, %vm1176
        %vm1201 = vmor %vm1105, %vm1177
        %vm1202 = vmor %vm1106, %vm1178
        %vm1203 = vmor %vm1107, %vm1179
        %vm1204 = vmor %vm1108, %vm1180
        %vm1205 = vmor %vm1109, %vm1181
        %vm1206 = vmor %vm1110, %vm1182
        %vm1207 = vmor %vm1111, %vm1183
        %vm1208 = vmor %vm1112, %vm1184
        %vm1209 = vmor %vm1113, %vm1185
        %vm1210 = vmor %vm1114, %vm1186
        %vm1211 = vmor %vm1115, %vm1187
        %vm1212 = vmor %vm1116, %vm1188
        %vm1213 = vmor %vm1117, %vm1189
        %vm1214 = vmor %vm1118, %vm1190
        %vm1215 = vmor %vm1119, %vm1191
        %vm1216 = vmor %vm1120, %vm1192
        %vm1217 = vmor %vm1121, %vm1193
        %vm1218 = vmor %vm1122, %vm1194
        %vm1219 = vmor %vm1123, %vm1195
        %vm1220 = vmor %vm1124, %vm1196
        %vm1221 = vmor %vm1125, %vm1197
        %vm1222 = vmor %vm1126, %vm1198
        %vm1223 = vcmp.ge.s32.totalorder %v551, 172
        %vm1224 = vcmp.ge.s32.totalorder %v552, 172
        %vm1225 = vcmp.ge.s32.totalorder %v553, 172
        %vm1226 = vcmp.ge.s32.totalorder %v554, 172
        %vm1227 = vcmp.ge.s32.totalorder %v555, 172
        %vm1228 = vcmp.ge.s32.totalorder %v556, 172
        %vm1229 = vcmp.ge.s32.totalorder %v557, 172
        %vm1230 = vcmp.ge.s32.totalorder %v558, 172
        %vm1231 = vcmp.ge.s32.totalorder %v559, 172
        %vm1232 = vcmp.ge.s32.totalorder %v560, 172
        %vm1233 = vcmp.ge.s32.totalorder %v561, 172
        %vm1234 = vcmp.ge.s32.totalorder %v562, 172
        %vm1235 = vcmp.ge.s32.totalorder %v563, 172
        %vm1236 = vcmp.ge.s32.totalorder %v564, 172
        %vm1237 = vcmp.ge.s32.totalorder %v565, 172
        %vm1238 = vcmp.ge.s32.totalorder %v566, 172
        %vm1239 = vcmp.ge.s32.totalorder %v567, 172
        %vm1240 = vcmp.ge.s32.totalorder %v568, 172
        %vm1241 = vcmp.ge.s32.totalorder %v569, 172
        %vm1242 = vcmp.ge.s32.totalorder %v570, 172
        %vm1243 = vcmp.ge.s32.totalorder %v571, 172
        %vm1244 = vcmp.ge.s32.totalorder %v572, 172
        %vm1245 = vcmp.ge.s32.totalorder %v573, 172
        %vm1246 = vcmp.ge.s32.totalorder %v574, 172
        %vm1247 = vcmp.lt.s32.totalorder %v551, 188
        %vm1248 = vcmp.lt.s32.totalorder %v552, 188
        %vm1249 = vcmp.lt.s32.totalorder %v553, 188
        %vm1250 = vcmp.lt.s32.totalorder %v554, 188
        %vm1251 = vcmp.lt.s32.totalorder %v555, 188
        %vm1252 = vcmp.lt.s32.totalorder %v556, 188
        %vm1253 = vcmp.lt.s32.totalorder %v557, 188
        %vm1254 = vcmp.lt.s32.totalorder %v558, 188
        %vm1255 = vcmp.lt.s32.totalorder %v559, 188
        %vm1256 = vcmp.lt.s32.totalorder %v560, 188
        %vm1257 = vcmp.lt.s32.totalorder %v561, 188
        %vm1258 = vcmp.lt.s32.totalorder %v562, 188
        %vm1259 = vcmp.lt.s32.totalorder %v563, 188
        %vm1260 = vcmp.lt.s32.totalorder %v564, 188
        %vm1261 = vcmp.lt.s32.totalorder %v565, 188
        %vm1262 = vcmp.lt.s32.totalorder %v566, 188
        %vm1263 = vcmp.lt.s32.totalorder %v567, 188
        %vm1264 = vcmp.lt.s32.totalorder %v568, 188
        %vm1265 = vcmp.lt.s32.totalorder %v569, 188
        %vm1266 = vcmp.lt.s32.totalorder %v570, 188
        %vm1267 = vcmp.lt.s32.totalorder %v571, 188
        %vm1268 = vcmp.lt.s32.totalorder %v572, 188
        %vm1269 = vcmp.lt.s32.totalorder %v573, 188
        %vm1270 = vcmp.lt.s32.totalorder %v574, 188
        %vm1271 = vmand %vm1223, %vm1247
        %vm1272 = vmand %vm1224, %vm1248
        %vm1273 = vmand %vm1225, %vm1249
        %vm1274 = vmand %vm1226, %vm1250
        %vm1275 = vmand %vm1227, %vm1251
        %vm1276 = vmand %vm1228, %vm1252
        %vm1277 = vmand %vm1229, %vm1253
        %vm1278 = vmand %vm1230, %vm1254
        %vm1279 = vmand %vm1231, %vm1255
        %vm1280 = vmand %vm1232, %vm1256
        %vm1281 = vmand %vm1233, %vm1257
        %vm1282 = vmand %vm1234, %vm1258
        %vm1283 = vmand %vm1235, %vm1259
        %vm1284 = vmand %vm1236, %vm1260
        %vm1285 = vmand %vm1237, %vm1261
        %vm1286 = vmand %vm1238, %vm1262
        %vm1287 = vmand %vm1239, %vm1263
        %vm1288 = vmand %vm1240, %vm1264
        %vm1289 = vmand %vm1241, %vm1265
        %vm1290 = vmand %vm1242, %vm1266
        %vm1291 = vmand %vm1243, %vm1267
        %vm1292 = vmand %vm1244, %vm1268
        %vm1293 = vmand %vm1245, %vm1269
        %vm1294 = vmand %vm1246, %vm1270
        %vm1295 = vmor %vm1199, %vm1271
        %vm1296 = vmor %vm1200, %vm1272
        %vm1297 = vmor %vm1201, %vm1273
        %vm1298 = vmor %vm1202, %vm1274
        %vm1299 = vmor %vm1203, %vm1275
        %vm1300 = vmor %vm1204, %vm1276
        %vm1301 = vmor %vm1205, %vm1277
        %vm1302 = vmor %vm1206, %vm1278
        %vm1303 = vmor %vm1207, %vm1279
        %vm1304 = vmor %vm1208, %vm1280
        %vm1305 = vmor %vm1209, %vm1281
        %vm1306 = vmor %vm1210, %vm1282
        %vm1307 = vmor %vm1211, %vm1283
        %vm1308 = vmor %vm1212, %vm1284
        %vm1309 = vmor %vm1213, %vm1285
        %vm1310 = vmor %vm1214, %vm1286
        %vm1311 = vmor %vm1215, %vm1287
        %vm1312 = vmor %vm1216, %vm1288
        %vm1313 = vmor %vm1217, %vm1289
        %vm1314 = vmor %vm1218, %vm1290
        %vm1315 = vmor %vm1219, %vm1291
        %vm1316 = vmor %vm1220, %vm1292
        %vm1317 = vmor %vm1221, %vm1293
        %vm1318 = vmor %vm1222, %vm1294
        %v1319 = vsel %vm1295, 1, 0
        %v1320 = vsel %vm1296, 1, 0
        %v1321 = vsel %vm1297, 1, 0
        %v1322 = vsel %vm1298, 1, 0
        %v1323 = vsel %vm1299, 1, 0
        %v1324 = vsel %vm1300, 1, 0
        %v1325 = vsel %vm1301, 1, 0
        %v1326 = vsel %vm1302, 1, 0
        %v1327 = vsel %vm1303, 1, 0
        %v1328 = vsel %vm1304, 1, 0
        %v1329 = vsel %vm1305, 1, 0
        %v1330 = vsel %vm1306, 1, 0
        %v1331 = vsel %vm1307, 1, 0
        %v1332 = vsel %vm1308, 1, 0
        %v1333 = vsel %vm1309, 1, 0
        %v1334 = vsel %vm1310, 1, 0
        %v1335 = vsel %vm1311, 1, 0
        %v1336 = vsel %vm1312, 1, 0
        %v1337 = vsel %vm1313, 1, 0
        %v1338 = vsel %vm1314, 1, 0
        %v1339 = vsel %vm1315, 1, 0
        %v1340 = vsel %vm1316, 1, 0
        %v1341 = vsel %vm1317, 1, 0
        %v1342 = vsel %vm1318, 1, 0
        %v1343 = vcvt.s32.f32 %v1319
        %v1344 = vcvt.s32.f32 %v1320
        %v1345 = vcvt.s32.f32 %v1321
        %v1346 = vcvt.s32.f32 %v1322
        %v1347 = vcvt.s32.f32 %v1323
        %v1348 = vcvt.s32.f32 %v1324
        %v1349 = vcvt.s32.f32 %v1325
        %v1350 = vcvt.s32.f32 %v1326
        %v1351 = vcvt.s32.f32 %v1327
        %v1352 = vcvt.s32.f32 %v1328
        %v1353 = vcvt.s32.f32 %v1329
        %v1354 = vcvt.s32.f32 %v1330
        %v1355 = vcvt.s32.f32 %v1331
        %v1356 = vcvt.s32.f32 %v1332
        %v1357 = vcvt.s32.f32 %v1333
        %v1358 = vcvt.s32.f32 %v1334
        %v1359 = vcvt.s32.f32 %v1335
        %v1360 = vcvt.s32.f32 %v1336
        %v1361 = vcvt.s32.f32 %v1337
        %v1362 = vcvt.s32.f32 %v1338
        %v1363 = vcvt.s32.f32 %v1339
        %v1364 = vcvt.s32.f32 %v1340
        %v1365 = vcvt.s32.f32 %v1341
        %v1366 = vcvt.s32.f32 %v1342
        %vm1367 = vcmask 519168
        %1368 = vst.msk [vmem:[#allocation2] sm:$0xf] %vm1367, 0.0
        %1369 = vst.msk [vmem:[#allocation2 + $0xc4] sm:$0xf] %vm1367, 0.0
        %v1370 = vld [vmem:[%s547] sm:$0xff]
        %v1371 = vld [vmem:[%s547 + $0x8] sm:$0xff]
        %v1372 = vld [vmem:[%s547 + $0x10] sm:$0xff]
        %v1373 = vld [vmem:[%s547 + $0x18] sm:$0xff]
        %v1374 = vld [vmem:[%s547 + $0x20] sm:$0xff]
        %v1375 = vld [vmem:[%s547 + $0x28] sm:$0xff]
        %v1376 = vld [vmem:[%s547 + $0x30] sm:$0xff]
        %v1377 = vld [vmem:[%s547 + $0x38] sm:$0xff]
        %v1378 = vld [vmem:[%s547 + $0x40] sm:$0xff]
        %v1379 = vld [vmem:[%s547 + $0x48] sm:$0xff]
        %v1380 = vld [vmem:[%s547 + $0x50] sm:$0xff]
        %v1381 = vld [vmem:[%s547 + $0x58] sm:$0xff]
        %v1382 = vld [vmem:[%s547 + $0x60] sm:$0xff]
        %v1383 = vld [vmem:[%s547 + $0x68] sm:$0xff]
        %v1384 = vld [vmem:[%s547 + $0x70] sm:$0xff]
        %v1385 = vld [vmem:[%s547 + $0x78] sm:$0xff]
        %v1386 = vld [vmem:[%s547 + $0x80] sm:$0xff]
        %v1387 = vld [vmem:[%s547 + $0x88] sm:$0xff]
        %v1388 = vld [vmem:[%s547 + $0x90] sm:$0xff]
        %v1389 = vld [vmem:[%s547 + $0x98] sm:$0xff]
        %v1390 = vld [vmem:[%s547 + $0xa0] sm:$0xff]
        %v1391 = vld [vmem:[%s547 + $0xa8] sm:$0xff]
        %v1392 = vld [vmem:[%s547 + $0xb0] sm:$0xff]
        %v1393 = vld [vmem:[%s547 + $0xb8] sm:$0xff]
        %vm1394 = vcmask 261120
        %1395 = vst.msk [vmem:[#allocation2 + $0x4] sm:$0xff] %vm1394, %v1370
        %1396 = vst.msk [vmem:[#allocation2 + $0xc] sm:$0xff] %vm1394, %v1371
        %1397 = vst.msk [vmem:[#allocation2 + $0x14] sm:$0xff] %vm1394, %v1372
        %1398 = vst.msk [vmem:[#allocation2 + $0x1c] sm:$0xff] %vm1394, %v1373
        %1399 = vst.msk [vmem:[#allocation2 + $0x24] sm:$0xff] %vm1394, %v1374
        %1400 = vst.msk [vmem:[#allocation2 + $0x2c] sm:$0xff] %vm1394, %v1375
        %1401 = vst.msk [vmem:[#allocation2 + $0x34] sm:$0xff] %vm1394, %v1376
        %1402 = vst.msk [vmem:[#allocation2 + $0x3c] sm:$0xff] %vm1394, %v1377
        %1403 = vst.msk [vmem:[#allocation2 + $0x44] sm:$0xff] %vm1394, %v1378
        %1404 = vst.msk [vmem:[#allocation2 + $0x4c] sm:$0xff] %vm1394, %v1379
        %1405 = vst.msk [vmem:[#allocation2 + $0x54] sm:$0xff] %vm1394, %v1380
        %1406 = vst.msk [vmem:[#allocation2 + $0x5c] sm:$0xff] %vm1394, %v1381
        %1407 = vst.msk [vmem:[#allocation2 + $0x64] sm:$0xff] %vm1394, %v1382
        %1408 = vst.msk [vmem:[#allocation2 + $0x6c] sm:$0xff] %vm1394, %v1383
        %1409 = vst.msk [vmem:[#allocation2 + $0x74] sm:$0xff] %vm1394, %v1384
        %1410 = vst.msk [vmem:[#allocation2 + $0x7c] sm:$0xff] %vm1394, %v1385
        %1411 = vst.msk [vmem:[#allocation2 + $0x84] sm:$0xff] %vm1394, %v1386
        %1412 = vst.msk [vmem:[#allocation2 + $0x8c] sm:$0xff] %vm1394, %v1387
        %1413 = vst.msk [vmem:[#allocation2 + $0x94] sm:$0xff] %vm1394, %v1388
        %1414 = vst.msk [vmem:[#allocation2 + $0x9c] sm:$0xff] %vm1394, %v1389
        %1415 = vst.msk [vmem:[#allocation2 + $0xa4] sm:$0xff] %vm1394, %v1390
        %1416 = vst.msk [vmem:[#allocation2 + $0xac] sm:$0xff] %vm1394, %v1391
        %1417 = vst.msk [vmem:[#allocation2 + $0xb4] sm:$0xff] %vm1394, %v1392
        %1418 = vst.msk [vmem:[#allocation2 + $0xbc] sm:$0xff] %vm1394, %v1393
        %v1419 = vld [vmem:[#allocation2 + $0x3] sm:$0xff]
        %v1420 = vld [vmem:[#allocation2 + $0xb] sm:$0xff]
        %v1421 = vld [vmem:[#allocation2 + $0x13] sm:$0xff]
        %v1422 = vld [vmem:[#allocation2 + $0x1b] sm:$0xff]
        %v1423 = vld [vmem:[#allocation2 + $0x23] sm:$0xff]
        %v1424 = vld [vmem:[#allocation2 + $0x2b] sm:$0xff]
        %v1425 = vld [vmem:[#allocation2 + $0x33] sm:$0xff]
        %v1426 = vld [vmem:[#allocation2 + $0x3b] sm:$0xff]
        %v1427 = vld [vmem:[#allocation2 + $0x43] sm:$0xff]
        %v1428 = vld [vmem:[#allocation2 + $0x4b] sm:$0xff]
        %v1429 = vld [vmem:[#allocation2 + $0x53] sm:$0xff]
        %v1430 = vld [vmem:[#allocation2 + $0x5b] sm:$0xff]
        %v1431 = vld [vmem:[#allocation2 + $0x63] sm:$0xff]
        %v1432 = vld [vmem:[#allocation2 + $0x6b] sm:$0xff]
        %v1433 = vld [vmem:[#allocation2 + $0x73] sm:$0xff]
        %v1434 = vld [vmem:[#allocation2 + $0x7b] sm:$0xff]
        %v1435 = vld [vmem:[#allocation2 + $0x83] sm:$0xff]
        %v1436 = vld [vmem:[#allocation2 + $0x8b] sm:$0xff]
        %v1437 = vld [vmem:[#allocation2 + $0x93] sm:$0xff]
        %v1438 = vld [vmem:[#allocation2 + $0x9b] sm:$0xff]
        %v1439 = vld [vmem:[#allocation2 + $0xa3] sm:$0xff]
        %v1440 = vld [vmem:[#allocation2 + $0xab] sm:$0xff]
        %v1441 = vld [vmem:[#allocation2 + $0xb3] sm:$0xff]
        %v1442 = vld [vmem:[#allocation2 + $0xbb] sm:$0xff]
        %v1443 = vld [vmem:[#allocation2 + $0x4] sm:$0xff]
        %v1444 = vld [vmem:[#allocation2 + $0xc] sm:$0xff]
        %v1445 = vld [vmem:[#allocation2 + $0x14] sm:$0xff]
        %v1446 = vld [vmem:[#allocation2 + $0x1c] sm:$0xff]
        %v1447 = vld [vmem:[#allocation2 + $0x24] sm:$0xff]
        %v1448 = vld [vmem:[#allocation2 + $0x2c] sm:$0xff]
        %v1449 = vld [vmem:[#allocation2 + $0x34] sm:$0xff]
        %v1450 = vld [vmem:[#allocation2 + $0x3c] sm:$0xff]
        %v1451 = vld [vmem:[#allocation2 + $0x44] sm:$0xff]
        %v1452 = vld [vmem:[#allocation2 + $0x4c] sm:$0xff]
        %v1453 = vld [vmem:[#allocation2 + $0x54] sm:$0xff]
        %v1454 = vld [vmem:[#allocation2 + $0x5c] sm:$0xff]
        %v1455 = vld [vmem:[#allocation2 + $0x64] sm:$0xff]
        %v1456 = vld [vmem:[#allocation2 + $0x6c] sm:$0xff]
        %v1457 = vld [vmem:[#allocation2 + $0x74] sm:$0xff]
        %v1458 = vld [vmem:[#allocation2 + $0x7c] sm:$0xff]
        %v1459 = vld [vmem:[#allocation2 + $0x84] sm:$0xff]
        %v1460 = vld [vmem:[#allocation2 + $0x8c] sm:$0xff]
        %v1461 = vld [vmem:[#allocation2 + $0x94] sm:$0xff]
        %v1462 = vld [vmem:[#allocation2 + $0x9c] sm:$0xff]
        %v1463 = vld [vmem:[#allocation2 + $0xa4] sm:$0xff]
        %v1464 = vld [vmem:[#allocation2 + $0xac] sm:$0xff]
        %v1465 = vld [vmem:[#allocation2 + $0xb4] sm:$0xff]
        %v1466 = vld [vmem:[#allocation2 + $0xbc] sm:$0xff]
        %v1467 = vld [vmem:[#allocation2 + $0x5] sm:$0xff]
        %v1468 = vld [vmem:[#allocation2 + $0xd] sm:$0xff]
        %v1469 = vld [vmem:[#allocation2 + $0x15] sm:$0xff]
        %v1470 = vld [vmem:[#allocation2 + $0x1d] sm:$0xff]
        %v1471 = vld [vmem:[#allocation2 + $0x25] sm:$0xff]
        %v1472 = vld [vmem:[#allocation2 + $0x2d] sm:$0xff]
        %v1473 = vld [vmem:[#allocation2 + $0x35] sm:$0xff]
        %v1474 = vld [vmem:[#allocation2 + $0x3d] sm:$0xff]
        %v1475 = vld [vmem:[#allocation2 + $0x45] sm:$0xff]
        %v1476 = vld [vmem:[#allocation2 + $0x4d] sm:$0xff]
        %v1477 = vld [vmem:[#allocation2 + $0x55] sm:$0xff]
        %v1478 = vld [vmem:[#allocation2 + $0x5d] sm:$0xff]
        %v1479 = vld [vmem:[#allocation2 + $0x65] sm:$0xff]
        %v1480 = vld [vmem:[#allocation2 + $0x6d] sm:$0xff]
        %v1481 = vld [vmem:[#allocation2 + $0x75] sm:$0xff]
        %v1482 = vld [vmem:[#allocation2 + $0x7d] sm:$0xff]
        %v1483 = vld [vmem:[#allocation2 + $0x85] sm:$0xff]
        %v1484 = vld [vmem:[#allocation2 + $0x8d] sm:$0xff]
        %v1485 = vld [vmem:[#allocation2 + $0x95] sm:$0xff]
        %v1486 = vld [vmem:[#allocation2 + $0x9d] sm:$0xff]
        %v1487 = vld [vmem:[#allocation2 + $0xa5] sm:$0xff]
        %v1488 = vld [vmem:[#allocation2 + $0xad] sm:$0xff]
        %v1489 = vld [vmem:[#allocation2 + $0xb5] sm:$0xff]
        %v1490 = vld [vmem:[#allocation2 + $0xbd] sm:$0xff]
        %1515 = vrot.lane.b32.xlu0 %v1443, 32
        %v1516 = vpop.permute.xlu0 %1515
        %1517 = vrot.lane.b32.xlu0 %v1444, 32
        %v1518 = vpop.permute.xlu0 %1517
        %1519 = vrot.lane.b32.xlu0 %v1445, 32
        %v1520 = vpop.permute.xlu0 %1519
        %1521 = vrot.lane.b32.xlu0 %v1446, 32
        %v1522 = vpop.permute.xlu0 %1521
        %1523 = vrot.lane.b32.xlu0 %v1447, 32
        %v1524 = vpop.permute.xlu0 %1523
        %1525 = vrot.lane.b32.xlu0 %v1448, 32
        %v1526 = vpop.permute.xlu0 %1525
        %1527 = vrot.lane.b32.xlu0 %v1449, 32
        %v1528 = vpop.permute.xlu0 %1527
        %1529 = vrot.lane.b32.xlu0 %v1450, 32
        %v1530 = vpop.permute.xlu0 %1529
        %1531 = vrot.lane.b32.xlu0 %v1451, 32
        %v1532 = vpop.permute.xlu0 %1531
        %1533 = vrot.lane.b32.xlu0 %v1452, 32
        %v1534 = vpop.permute.xlu0 %1533
        %1535 = vrot.lane.b32.xlu0 %v1453, 32
        %v1536 = vpop.permute.xlu0 %1535
        %1537 = vrot.lane.b32.xlu0 %v1454, 32
        %v1538 = vpop.permute.xlu0 %1537
        %1539 = vrot.lane.b32.xlu0 %v1455, 32
        %v1540 = vpop.permute.xlu0 %1539
        %1541 = vrot.lane.b32.xlu0 %v1456, 32
        %v1542 = vpop.permute.xlu0 %1541
        %1543 = vrot.lane.b32.xlu0 %v1457, 32
        %v1544 = vpop.permute.xlu0 %1543
        %1545 = vrot.lane.b32.xlu0 %v1458, 32
        %v1546 = vpop.permute.xlu0 %1545
        %1547 = vrot.lane.b32.xlu0 %v1459, 32
        %v1548 = vpop.permute.xlu0 %1547
        %1549 = vrot.lane.b32.xlu0 %v1460, 32
        %v1550 = vpop.permute.xlu0 %1549
        %1551 = vrot.lane.b32.xlu0 %v1461, 32
        %v1552 = vpop.permute.xlu0 %1551
        %1553 = vrot.lane.b32.xlu0 %v1462, 32
        %v1554 = vpop.permute.xlu0 %1553
        %1555 = vrot.lane.b32.xlu0 %v1463, 32
        %v1556 = vpop.permute.xlu0 %1555
        %1557 = vrot.lane.b32.xlu0 %v1464, 32
        %v1558 = vpop.permute.xlu0 %1557
        %1559 = vrot.lane.b32.xlu0 %v1465, 32
        %v1560 = vpop.permute.xlu0 %1559
        %1561 = vrot.lane.b32.xlu0 %v1466, 32
        %v1562 = vpop.permute.xlu0 %1561
        %1611 = vrot.lane.b32.xlu0 %v1467, 64
        %v1612 = vpop.permute.xlu0 %1611
        %1613 = vrot.lane.b32.xlu0 %v1468, 64
        %v1614 = vpop.permute.xlu0 %1613
        %1615 = vrot.lane.b32.xlu0 %v1469, 64
        %v1616 = vpop.permute.xlu0 %1615
        %1617 = vrot.lane.b32.xlu0 %v1470, 64
        %v1618 = vpop.permute.xlu0 %1617
        %1619 = vrot.lane.b32.xlu0 %v1471, 64
        %v1620 = vpop.permute.xlu0 %1619
        %1621 = vrot.lane.b32.xlu0 %v1472, 64
        %v1622 = vpop.permute.xlu0 %1621
        %1623 = vrot.lane.b32.xlu0 %v1473, 64
        %v1624 = vpop.permute.xlu0 %1623
        %1625 = vrot.lane.b32.xlu0 %v1474, 64
        %v1626 = vpop.permute.xlu0 %1625
        %1627 = vrot.lane.b32.xlu0 %v1475, 64
        %v1628 = vpop.permute.xlu0 %1627
        %1629 = vrot.lane.b32.xlu0 %v1476, 64
        %v1630 = vpop.permute.xlu0 %1629
        %1631 = vrot.lane.b32.xlu0 %v1477, 64
        %v1632 = vpop.permute.xlu0 %1631
        %1633 = vrot.lane.b32.xlu0 %v1478, 64
        %v1634 = vpop.permute.xlu0 %1633
        %1635 = vrot.lane.b32.xlu0 %v1479, 64
        %v1636 = vpop.permute.xlu0 %1635
        %1637 = vrot.lane.b32.xlu0 %v1480, 64
        %v1638 = vpop.permute.xlu0 %1637
        %1639 = vrot.lane.b32.xlu0 %v1481, 64
        %v1640 = vpop.permute.xlu0 %1639
        %1641 = vrot.lane.b32.xlu0 %v1482, 64
        %v1642 = vpop.permute.xlu0 %1641
        %1643 = vrot.lane.b32.xlu0 %v1483, 64
        %v1644 = vpop.permute.xlu0 %1643
        %1645 = vrot.lane.b32.xlu0 %v1484, 64
        %v1646 = vpop.permute.xlu0 %1645
        %1647 = vrot.lane.b32.xlu0 %v1485, 64
        %v1648 = vpop.permute.xlu0 %1647
        %1649 = vrot.lane.b32.xlu0 %v1486, 64
        %v1650 = vpop.permute.xlu0 %1649
        %1651 = vrot.lane.b32.xlu0 %v1487, 64
        %v1652 = vpop.permute.xlu0 %1651
        %1653 = vrot.lane.b32.xlu0 %v1488, 64
        %v1654 = vpop.permute.xlu0 %1653
        %1655 = vrot.lane.b32.xlu0 %v1489, 64
        %v1656 = vpop.permute.xlu0 %1655
        %1657 = vrot.lane.b32.xlu0 %v1490, 64
        %v1658 = vpop.permute.xlu0 %1657
        %v1683 = vsel %vm1394, %v1419, %v1516
        %v1684 = vsel %vm1394, %v1420, %v1518
        %v1685 = vsel %vm1394, %v1421, %v1520
        %v1686 = vsel %vm1394, %v1422, %v1522
        %v1687 = vsel %vm1394, %v1423, %v1524
        %v1688 = vsel %vm1394, %v1424, %v1526
        %v1689 = vsel %vm1394, %v1425, %v1528
        %v1690 = vsel %vm1394, %v1426, %v1530
        %v1691 = vsel %vm1394, %v1427, %v1532
        %v1692 = vsel %vm1394, %v1428, %v1534
        %v1693 = vsel %vm1394, %v1429, %v1536
        %v1694 = vsel %vm1394, %v1430, %v1538
        %v1695 = vsel %vm1394, %v1431, %v1540
        %v1696 = vsel %vm1394, %v1432, %v1542
        %v1697 = vsel %vm1394, %v1433, %v1544
        %v1698 = vsel %vm1394, %v1434, %v1546
        %v1699 = vsel %vm1394, %v1435, %v1548
        %v1700 = vsel %vm1394, %v1436, %v1550
        %v1701 = vsel %vm1394, %v1437, %v1552
        %v1702 = vsel %vm1394, %v1438, %v1554
        %v1703 = vsel %vm1394, %v1439, %v1556
        %v1704 = vsel %vm1394, %v1440, %v1558
        %v1705 = vsel %vm1394, %v1441, %v1560
        %v1706 = vsel %vm1394, %v1442, %v1562
        %vm1707 = vcmask 523264
        %v1708 = vsel %vm1707, %v1683, %v1612
        %v1709 = vsel %vm1707, %v1684, %v1614
        %v1710 = vsel %vm1707, %v1685, %v1616
        %v1711 = vsel %vm1707, %v1686, %v1618
        %v1712 = vsel %vm1707, %v1687, %v1620
        %v1713 = vsel %vm1707, %v1688, %v1622
        %v1714 = vsel %vm1707, %v1689, %v1624
        %v1715 = vsel %vm1707, %v1690, %v1626
        %v1716 = vsel %vm1707, %v1691, %v1628
        %v1717 = vsel %vm1707, %v1692, %v1630
        %v1718 = vsel %vm1707, %v1693, %v1632
        %v1719 = vsel %vm1707, %v1694, %v1634
        %v1720 = vsel %vm1707, %v1695, %v1636
        %v1721 = vsel %vm1707, %v1696, %v1638
        %v1722 = vsel %vm1707, %v1697, %v1640
        %v1723 = vsel %vm1707, %v1698, %v1642
        %v1724 = vsel %vm1707, %v1699, %v1644
        %v1725 = vsel %vm1707, %v1700, %v1646
        %v1726 = vsel %vm1707, %v1701, %v1648
        %v1727 = vsel %vm1707, %v1702, %v1650
        %v1728 = vsel %vm1707, %v1703, %v1652
        %v1729 = vsel %vm1707, %v1704, %v1654
        %v1730 = vsel %vm1707, %v1705, %v1656
        %v1731 = vsel %vm1707, %v1706, %v1658
        %v1732 = vpack.c.bf16 %v1709, %v1708
        %v1733 = vpack.c.bf16 %v1711, %v1710
        %v1734 = vpack.c.bf16 %v1713, %v1712
        %v1735 = vpack.c.bf16 %v1715, %v1714
        %v1736 = vpack.c.bf16 %v1717, %v1716
        %v1737 = vpack.c.bf16 %v1719, %v1718
        %v1738 = vpack.c.bf16 %v1721, %v1720
        %v1739 = vpack.c.bf16 %v1723, %v1722
        %v1740 = vpack.c.bf16 %v1725, %v1724
        %v1741 = vpack.c.bf16 %v1727, %v1726
        %v1742 = vpack.c.bf16 %v1729, %v1728
        %v1743 = vpack.c.bf16 %v1731, %v1730
        %v1744 = vld [vmem:[%s1] sm:$0xff]
        %v1745 = vld [vmem:[%s1 + $0x8] sm:$0xff]
        %v1746 = vld [vmem:[%s1 + $0x10] sm:$0xff]
        %v1747 = vld [vmem:[%s1 + $0x18] sm:$0xff]
        %v1748 = vld [vmem:[%s1 + $0x20] sm:$0xff]
        %v1749 = vld [vmem:[%s1 + $0x28] sm:$0xff]
        %v1750 = vld [vmem:[%s1 + $0x30] sm:$0xff]
        %v1751 = vld [vmem:[%s1 + $0x38] sm:$0xff]
        %v1752 = vld [vmem:[%s1 + $0x40] sm:$0xff]
        %v1753 = vld [vmem:[%s1 + $0x48] sm:$0xff]
        %v1754 = vld [vmem:[%s1 + $0x50] sm:$0xff]
        %v1755 = vld [vmem:[%s1 + $0x58] sm:$0xff]
        %v1756 = vld [vmem:[%s2] sm:$0x3]
        %v1758 = vlaneseq
        %v1759 = vshrl.u32 %v1758, 7
        %v1760 = vsub.s32 0, %v1759
        %v1761 = vrot.slane %v1756, %v1760
        %v1762 = vlaneseq
        %v1763 = vshrl.u32 %v1762, 7
        %v1764 = vsub.s32 1, %v1763
        %v1765 = vrot.slane %v1756, %v1764
        %v1780 = vunpack.c.l.b16 %v1744
        %v1781 = vunpack.c.h.b16 %v1744
        %v1782 = vunpack.c.l.b16 %v1745
        %v1783 = vunpack.c.h.b16 %v1745
        %v1784 = vunpack.c.l.b16 %v1746
        %v1785 = vunpack.c.h.b16 %v1746
        %v1786 = vunpack.c.l.b16 %v1747
        %v1787 = vunpack.c.h.b16 %v1747
        %v1788 = vunpack.c.l.b16 %v1748
        %v1789 = vunpack.c.h.b16 %v1748
        %v1790 = vunpack.c.l.b16 %v1749
        %v1791 = vunpack.c.h.b16 %v1749
        %v1792 = vunpack.c.l.b16 %v1750
        %v1793 = vunpack.c.h.b16 %v1750
        %v1794 = vunpack.c.l.b16 %v1751
        %v1795 = vunpack.c.h.b16 %v1751
        %v1796 = vunpack.c.l.b16 %v1752
        %v1797 = vunpack.c.h.b16 %v1752
        %v1798 = vunpack.c.l.b16 %v1753
        %v1799 = vunpack.c.h.b16 %v1753
        %v1800 = vunpack.c.l.b16 %v1754
        %v1801 = vunpack.c.h.b16 %v1754
        %v1802 = vunpack.c.l.b16 %v1755
        %v1803 = vunpack.c.h.b16 %v1755
        %v1804 = vpack.c.b16 %v1782, %v1780
        %v1805 = vpack.c.b16 %v1783, %v1781
        %v1806 = vpack.c.b16 %v1786, %v1784
        %v1807 = vpack.c.b16 %v1787, %v1785
        %v1808 = vpack.c.b16 %v1790, %v1788
        %v1809 = vpack.c.b16 %v1791, %v1789
        %v1810 = vpack.c.b16 %v1794, %v1792
        %v1811 = vpack.c.b16 %v1795, %v1793
        %v1812 = vpack.c.b16 %v1798, %v1796
        %v1813 = vpack.c.b16 %v1799, %v1797
        %v1814 = vpack.c.b16 %v1802, %v1800
        %v1815 = vpack.c.b16 %v1803, %v1801
        %vm1828 = vcmask 785408
        %v1830 = vsel %vm1828, %v1732, 0
        %v1833 = vsel %vm1828, %v1733, 0
        %v1836 = vsel %vm1828, %v1734, 0
        %v1839 = vsel %vm1828, %v1735, 0
        %v1842 = vsel %vm1828, %v1736, 0
        %v1845 = vsel %vm1828, %v1737, 0
        %v1848 = vsel %vm1828, %v1738, 0
        %v1851 = vsel %vm1828, %v1739, 0
        %v1854 = vsel %vm1828, %v1740, 0
        %v1857 = vsel %vm1828, %v1741, 0
        %v1860 = vsel %vm1828, %v1742, 0
        %v1863 = vsel %vm1828, %v1743, 0
        %1865 = vmatprep.subr.bf16.mxu0 %v1805
        %1866 = vmatpush1.bf16.msra.mxu0 %v1804
        %1867 = vmatprep.subr.bf16.mxu0 %v1807
        %1868 = vmatpush1.bf16.msra.mxu0 %v1806
        %1869 = vmatprep.subr.bf16.mxu0 %v1809
        %1870 = vmatpush1.bf16.msra.mxu0 %v1808
        %1871 = vmatprep.subr.bf16.mxu0 %v1811
        %1872 = vmatpush1.bf16.msra.mxu0 %v1810
        %1873 = vmatprep.subr.bf16.mxu0 %v1813
        %1874 = vmatpush1.bf16.msra.mxu0 %v1812
        %1875 = vmatprep.subr.bf16.mxu0 %v1815
        %1876 = vmatpush1.bf16.msra.mxu0 %v1814
        %1877 = vmatprep.subr.bf16.mxu0 0
        %1878 = vmatpush1.bf16.msra.mxu0 0
        %1879 = vmatprep.subr.bf16.mxu0 0
        %1880 = vmatpush1.bf16.msra.mxu0 0
        %1881 = vmatprep.subr.bf16.mxu0 0
        %1882 = vmatpush1.bf16.msra.mxu0 0
        %1883 = vmatprep.subr.bf16.mxu0 0
        %1884 = vmatpush1.bf16.msra.mxu0 0
        %1885 = vmatprep.subr.bf16.mxu0 0
        %1886 = vmatpush1.bf16.msra.mxu0 0
        %1887 = vmatprep.subr.bf16.mxu0 0
        %1888 = vmatpush1.bf16.msra.mxu0 0
        %1889 = vmatprep.subr.bf16.mxu0 0
        %1890 = vmatpush1.bf16.msra.mxu0 0
        %1891 = vmatprep.subr.bf16.mxu0 0
        %1892 = vmatpush1.bf16.msra.mxu0 0
        %1893 = vmatprep.subr.bf16.mxu0 0
        %1894 = vmatpush1.bf16.msra.mxu0 0
        %1895 = vmatprep.subr.bf16.mxu0 0
        %1896 = vmatpush1.bf16.msra.mxu0 0
        %1897 = vmatprep.mubr.bf16.mxu0 0
        %1898 = vmatmul.mubr.bf16.gmra.mrb[0].mxu0 %v1830
        %v1899 = vpop.f32.mrb[0].mxu0
        %v1900 = vadd.f32 %v1761, %v1899
        %v1901 = vpop.f32.mrb[0].mxu0
        %v1902 = vadd.f32 %v1765, %v1901
        %v1903 = vpop.f32.mrb[0].mxu0
        %v1904 = vadd.f32 %v1761, %v1903
        %v1905 = vpop.f32.mrb[0].mxu0
        %v1906 = vadd.f32 %v1765, %v1905
        %1907 = vmatprep.mubr.bf16.mxu0 0
        %1908 = vmatmul.mubr.bf16.gmra.mrb[0].mxu0 %v1833
        %v1909 = vpop.f32.mrb[0].mxu0
        %v1910 = vadd.f32 %v1761, %v1909
        %v1911 = vpop.f32.mrb[0].mxu0
        %v1912 = vadd.f32 %v1765, %v1911
        %v1913 = vpop.f32.mrb[0].mxu0
        %v1914 = vadd.f32 %v1761, %v1913
        %v1915 = vpop.f32.mrb[0].mxu0
        %v1916 = vadd.f32 %v1765, %v1915
        %1917 = vmatprep.mubr.bf16.mxu0 0
        %1918 = vmatmul.mubr.bf16.gmra.mrb[0].mxu0 %v1836
        %v1919 = vpop.f32.mrb[0].mxu0
        %v1920 = vadd.f32 %v1761, %v1919
        %v1921 = vpop.f32.mrb[0].mxu0
        %v1922 = vadd.f32 %v1765, %v1921
        %v1923 = vpop.f32.mrb[0].mxu0
        %v1924 = vadd.f32 %v1761, %v1923
        %v1925 = vpop.f32.mrb[0].mxu0
        %v1926 = vadd.f32 %v1765, %v1925
        %1927 = vmatprep.mubr.bf16.mxu0 0
        %1928 = vmatmul.mubr.bf16.gmra.mrb[0].mxu0 %v1839
        %v1929 = vpop.f32.mrb[0].mxu0
        %v1930 = vadd.f32 %v1761, %v1929
        %v1931 = vpop.f32.mrb[0].mxu0
        %v1932 = vadd.f32 %v1765, %v1931
        %v1933 = vpop.f32.mrb[0].mxu0
        %v1934 = vadd.f32 %v1761, %v1933
        %v1935 = vpop.f32.mrb[0].mxu0
        %v1936 = vadd.f32 %v1765, %v1935
        %1937 = vmatprep.mubr.bf16.mxu0 0
        %1938 = vmatmul.mubr.bf16.gmra.mrb[0].mxu0 %v1842
        %v1939 = vpop.f32.mrb[0].mxu0
        %v1940 = vadd.f32 %v1761, %v1939
        %v1941 = vpop.f32.mrb[0].mxu0
        %v1942 = vadd.f32 %v1765, %v1941
        %v1943 = vpop.f32.mrb[0].mxu0
        %v1944 = vadd.f32 %v1761, %v1943
        %v1945 = vpop.f32.mrb[0].mxu0
        %v1946 = vadd.f32 %v1765, %v1945
        %1947 = vmatprep.mubr.bf16.mxu0 0
        %1948 = vmatmul.mubr.bf16.gmra.mrb[0].mxu0 %v1845
        %v1949 = vpop.f32.mrb[0].mxu0
        %v1950 = vadd.f32 %v1761, %v1949
        %v1951 = vpop.f32.mrb[0].mxu0
        %v1952 = vadd.f32 %v1765, %v1951
        %v1953 = vpop.f32.mrb[0].mxu0
        %v1954 = vadd.f32 %v1761, %v1953
        %v1955 = vpop.f32.mrb[0].mxu0
        %v1956 = vadd.f32 %v1765, %v1955
        %1957 = vmatprep.mubr.bf16.mxu0 0
        %1958 = vmatmul.mubr.bf16.gmra.mrb[0].mxu0 %v1848
        %v1959 = vpop.f32.mrb[0].mxu0
        %v1960 = vadd.f32 %v1761, %v1959
        %v1961 = vpop.f32.mrb[0].mxu0
        %v1962 = vadd.f32 %v1765, %v1961
        %v1963 = vpop.f32.mrb[0].mxu0
        %v1964 = vadd.f32 %v1761, %v1963
        %v1965 = vpop.f32.mrb[0].mxu0
        %v1966 = vadd.f32 %v1765, %v1965
        %1967 = vmatprep.mubr.bf16.mxu0 0
        %1968 = vmatmul.mubr.bf16.gmra.mrb[0].mxu0 %v1851
        %v1969 = vpop.f32.mrb[0].mxu0
        %v1970 = vadd.f32 %v1761, %v1969
        %v1971 = vpop.f32.mrb[0].mxu0
        %v1972 = vadd.f32 %v1765, %v1971
        %v1973 = vpop.f32.mrb[0].mxu0
        %v1974 = vadd.f32 %v1761, %v1973
        %v1975 = vpop.f32.mrb[0].mxu0
        %v1976 = vadd.f32 %v1765, %v1975
        %1977 = vmatprep.mubr.bf16.mxu0 0
        %1978 = vmatmul.mubr.bf16.gmra.mrb[0].mxu0 %v1854
        %v1979 = vpop.f32.mrb[0].mxu0
        %v1980 = vadd.f32 %v1761, %v1979
        %v1981 = vpop.f32.mrb[0].mxu0
        %v1982 = vadd.f32 %v1765, %v1981
        %v1983 = vpop.f32.mrb[0].mxu0
        %v1984 = vadd.f32 %v1761, %v1983
        %v1985 = vpop.f32.mrb[0].mxu0
        %v1986 = vadd.f32 %v1765, %v1985
        %1987 = vmatprep.mubr.bf16.mxu0 0
        %1988 = vmatmul.mubr.bf16.gmra.mrb[0].mxu0 %v1857
        %v1989 = vpop.f32.mrb[0].mxu0
        %v1990 = vadd.f32 %v1761, %v1989
        %v1991 = vpop.f32.mrb[0].mxu0
        %v1992 = vadd.f32 %v1765, %v1991
        %v1993 = vpop.f32.mrb[0].mxu0
        %v1994 = vadd.f32 %v1761, %v1993
        %v1995 = vpop.f32.mrb[0].mxu0
        %v1996 = vadd.f32 %v1765, %v1995
        %1997 = vmatprep.mubr.bf16.mxu0 0
        %1998 = vmatmul.mubr.bf16.gmra.mrb[0].mxu0 %v1860
        %v1999 = vpop.f32.mrb[0].mxu0
        %v2000 = vadd.f32 %v1761, %v1999
        %v2001 = vpop.f32.mrb[0].mxu0
        %v2002 = vadd.f32 %v1765, %v2001
        %v2003 = vpop.f32.mrb[0].mxu0
        %v2004 = vadd.f32 %v1761, %v2003
        %v2005 = vpop.f32.mrb[0].mxu0
        %v2006 = vadd.f32 %v1765, %v2005
        %2007 = vmatprep.mubr.bf16.mxu0 0
        %2008 = vmatmul.mubr.bf16.gmra.mrb[0].mxu0 %v1863
        %v2009 = vpop.f32.mrb[0].mxu0
        %v2010 = vadd.f32 %v1761, %v2009
        %v2011 = vpop.f32.mrb[0].mxu0
        %v2012 = vadd.f32 %v1765, %v2011
        %v2013 = vpop.f32.mrb[0].mxu0
        %v2014 = vadd.f32 %v1761, %v2013
        %v2015 = vpop.f32.mrb[0].mxu0
        %v2016 = vadd.f32 %v1765, %v2015
        %2017 = vdwg.mxu0
        %v2018 = vmax.f32 %v1900, 0.0
        %v2019 = vmax.f32 %v1904, 0.0
        %v2020 = vmax.f32 %v1910, 0.0
        %v2021 = vmax.f32 %v1914, 0.0
        %v2022 = vmax.f32 %v1920, 0.0
        %v2023 = vmax.f32 %v1924, 0.0
        %v2024 = vmax.f32 %v1930, 0.0
        %v2025 = vmax.f32 %v1934, 0.0
        %v2026 = vmax.f32 %v1940, 0.0
        %v2027 = vmax.f32 %v1944, 0.0
        %v2028 = vmax.f32 %v1950, 0.0
        %v2029 = vmax.f32 %v1954, 0.0
        %v2030 = vmax.f32 %v1960, 0.0
        %v2031 = vmax.f32 %v1964, 0.0
        %v2032 = vmax.f32 %v1970, 0.0
        %v2033 = vmax.f32 %v1974, 0.0
        %v2034 = vmax.f32 %v1980, 0.0
        %v2035 = vmax.f32 %v1984, 0.0
        %v2036 = vmax.f32 %v1990, 0.0
        %v2037 = vmax.f32 %v1994, 0.0
        %v2038 = vmax.f32 %v2000, 0.0
        %v2039 = vmax.f32 %v2004, 0.0
        %v2040 = vmax.f32 %v2010, 0.0
        %v2041 = vmax.f32 %v2014, 0.0
        %2066 = vrot.lane.b32.xlu0 %v1900, 64
        %v2067 = vpop.permute.xlu0 %2066
        %2068 = vrot.lane.b32.xlu0 %v1904, 64
        %v2069 = vpop.permute.xlu0 %2068
        %2070 = vrot.lane.b32.xlu0 %v1910, 64
        %v2071 = vpop.permute.xlu0 %2070
        %2072 = vrot.lane.b32.xlu0 %v1914, 64
        %v2073 = vpop.permute.xlu0 %2072
        %2074 = vrot.lane.b32.xlu0 %v1920, 64
        %v2075 = vpop.permute.xlu0 %2074
        %2076 = vrot.lane.b32.xlu0 %v1924, 64
        %v2077 = vpop.permute.xlu0 %2076
        %2078 = vrot.lane.b32.xlu0 %v1930, 64
        %v2079 = vpop.permute.xlu0 %2078
        %2080 = vrot.lane.b32.xlu0 %v1934, 64
        %v2081 = vpop.permute.xlu0 %2080
        %2082 = vrot.lane.b32.xlu0 %v1940, 64
        %v2083 = vpop.permute.xlu0 %2082
        %2084 = vrot.lane.b32.xlu0 %v1944, 64
        %v2085 = vpop.permute.xlu0 %2084
        %2086 = vrot.lane.b32.xlu0 %v1950, 64
        %v2087 = vpop.permute.xlu0 %2086
        %2088 = vrot.lane.b32.xlu0 %v1954, 64
        %v2089 = vpop.permute.xlu0 %2088
        %2090 = vrot.lane.b32.xlu0 %v1960, 64
        %v2091 = vpop.permute.xlu0 %2090
        %2092 = vrot.lane.b32.xlu0 %v1964, 64
        %v2093 = vpop.permute.xlu0 %2092
        %2094 = vrot.lane.b32.xlu0 %v1970, 64
        %v2095 = vpop.permute.xlu0 %2094
        %2096 = vrot.lane.b32.xlu0 %v1974, 64
        %v2097 = vpop.permute.xlu0 %2096
        %2098 = vrot.lane.b32.xlu0 %v1980, 64
        %v2099 = vpop.permute.xlu0 %2098
        %2100 = vrot.lane.b32.xlu0 %v1984, 64
        %v2101 = vpop.permute.xlu0 %2100
        %2102 = vrot.lane.b32.xlu0 %v1990, 64
        %v2103 = vpop.permute.xlu0 %2102
        %2104 = vrot.lane.b32.xlu0 %v1994, 64
        %v2105 = vpop.permute.xlu0 %2104
        %2106 = vrot.lane.b32.xlu0 %v2000, 64
        %v2107 = vpop.permute.xlu0 %2106
        %2108 = vrot.lane.b32.xlu0 %v2004, 64
        %v2109 = vpop.permute.xlu0 %2108
        %2110 = vrot.lane.b32.xlu0 %v2010, 64
        %v2111 = vpop.permute.xlu0 %2110
        %2112 = vrot.lane.b32.xlu0 %v2014, 64
        %v2113 = vpop.permute.xlu0 %2112
        %v2138 = vadd.f32 %v2018, %v2067
        %v2139 = vadd.f32 %v2019, %v2069
        %v2140 = vadd.f32 %v2020, %v2071
        %v2141 = vadd.f32 %v2021, %v2073
        %v2142 = vadd.f32 %v2022, %v2075
        %v2143 = vadd.f32 %v2023, %v2077
        %v2144 = vadd.f32 %v2024, %v2079
        %v2145 = vadd.f32 %v2025, %v2081
        %v2146 = vadd.f32 %v2026, %v2083
        %v2147 = vadd.f32 %v2027, %v2085
        %v2148 = vadd.f32 %v2028, %v2087
        %v2149 = vadd.f32 %v2029, %v2089
        %v2150 = vadd.f32 %v2030, %v2091
        %v2151 = vadd.f32 %v2031, %v2093
        %v2152 = vadd.f32 %v2032, %v2095
        %v2153 = vadd.f32 %v2033, %v2097
        %v2154 = vadd.f32 %v2034, %v2099
        %v2155 = vadd.f32 %v2035, %v2101
        %v2156 = vadd.f32 %v2036, %v2103
        %v2157 = vadd.f32 %v2037, %v2105
        %v2158 = vadd.f32 %v2038, %v2107
        %v2159 = vadd.f32 %v2039, %v2109
        %v2160 = vadd.f32 %v2040, %v2111
        %v2161 = vadd.f32 %v2041, %v2113
        %v2162 = vmax.f32 %v1902, 0.0
        %v2163 = vmax.f32 %v1906, 0.0
        %v2164 = vmax.f32 %v1912, 0.0
        %v2165 = vmax.f32 %v1916, 0.0
        %v2166 = vmax.f32 %v1922, 0.0
        %v2167 = vmax.f32 %v1926, 0.0
        %v2168 = vmax.f32 %v1932, 0.0
        %v2169 = vmax.f32 %v1936, 0.0
        %v2170 = vmax.f32 %v1942, 0.0
        %v2171 = vmax.f32 %v1946, 0.0
        %v2172 = vmax.f32 %v1952, 0.0
        %v2173 = vmax.f32 %v1956, 0.0
        %v2174 = vmax.f32 %v1962, 0.0
        %v2175 = vmax.f32 %v1966, 0.0
        %v2176 = vmax.f32 %v1972, 0.0
        %v2177 = vmax.f32 %v1976, 0.0
        %v2178 = vmax.f32 %v1982, 0.0
        %v2179 = vmax.f32 %v1986, 0.0
        %v2180 = vmax.f32 %v1992, 0.0
        %v2181 = vmax.f32 %v1996, 0.0
        %v2182 = vmax.f32 %v2002, 0.0
        %v2183 = vmax.f32 %v2006, 0.0
        %v2184 = vmax.f32 %v2012, 0.0
        %v2185 = vmax.f32 %v2016, 0.0
        %2210 = vrot.lane.b32.xlu0 %v1902, 64
        %v2211 = vpop.permute.xlu0 %2210
        %2212 = vrot.lane.b32.xlu0 %v1906, 64
        %v2213 = vpop.permute.xlu0 %2212
        %2214 = vrot.lane.b32.xlu0 %v1912, 64
        %v2215 = vpop.permute.xlu0 %2214
        %2216 = vrot.lane.b32.xlu0 %v1916, 64
        %v2217 = vpop.permute.xlu0 %2216
        %2218 = vrot.lane.b32.xlu0 %v1922, 64
        %v2219 = vpop.permute.xlu0 %2218
        %2220 = vrot.lane.b32.xlu0 %v1926, 64
        %v2221 = vpop.permute.xlu0 %2220
        %2222 = vrot.lane.b32.xlu0 %v1932, 64
        %v2223 = vpop.permute.xlu0 %2222
        %2224 = vrot.lane.b32.xlu0 %v1936, 64
        %v2225 = vpop.permute.xlu0 %2224
        %2226 = vrot.lane.b32.xlu0 %v1942, 64
        %v2227 = vpop.permute.xlu0 %2226
        %2228 = vrot.lane.b32.xlu0 %v1946, 64
        %v2229 = vpop.permute.xlu0 %2228
        %2230 = vrot.lane.b32.xlu0 %v1952, 64
        %v2231 = vpop.permute.xlu0 %2230
        %2232 = vrot.lane.b32.xlu0 %v1956, 64
        %v2233 = vpop.permute.xlu0 %2232
        %2234 = vrot.lane.b32.xlu0 %v1962, 64
        %v2235 = vpop.permute.xlu0 %2234
        %2236 = vrot.lane.b32.xlu0 %v1966, 64
        %v2237 = vpop.permute.xlu0 %2236
        %2238 = vrot.lane.b32.xlu0 %v1972, 64
        %v2239 = vpop.permute.xlu0 %2238
        %2240 = vrot.lane.b32.xlu0 %v1976, 64
        %v2241 = vpop.permute.xlu0 %2240
        %2242 = vrot.lane.b32.xlu0 %v1982, 64
        %v2243 = vpop.permute.xlu0 %2242
        %2244 = vrot.lane.b32.xlu0 %v1986, 64
        %v2245 = vpop.permute.xlu0 %2244
        %2246 = vrot.lane.b32.xlu0 %v1992, 64
        %v2247 = vpop.permute.xlu0 %2246
        %2248 = vrot.lane.b32.xlu0 %v1996, 64
        %v2249 = vpop.permute.xlu0 %2248
        %2250 = vrot.lane.b32.xlu0 %v2002, 64
        %v2251 = vpop.permute.xlu0 %2250
        %2252 = vrot.lane.b32.xlu0 %v2006, 64
        %v2253 = vpop.permute.xlu0 %2252
        %2254 = vrot.lane.b32.xlu0 %v2012, 64
        %v2255 = vpop.permute.xlu0 %2254
        %2256 = vrot.lane.b32.xlu0 %v2016, 64
        %v2257 = vpop.permute.xlu0 %2256
        %v2282 = vadd.f32 %v2162, %v2211
        %v2283 = vadd.f32 %v2163, %v2213
        %v2284 = vadd.f32 %v2164, %v2215
        %v2285 = vadd.f32 %v2165, %v2217
        %v2286 = vadd.f32 %v2166, %v2219
        %v2287 = vadd.f32 %v2167, %v2221
        %v2288 = vadd.f32 %v2168, %v2223
        %v2289 = vadd.f32 %v2169, %v2225
        %v2290 = vadd.f32 %v2170, %v2227
        %v2291 = vadd.f32 %v2171, %v2229
        %v2292 = vadd.f32 %v2172, %v2231
        %v2293 = vadd.f32 %v2173, %v2233
        %v2294 = vadd.f32 %v2174, %v2235
        %v2295 = vadd.f32 %v2175, %v2237
        %v2296 = vadd.f32 %v2176, %v2239
        %v2297 = vadd.f32 %v2177, %v2241
        %v2298 = vadd.f32 %v2178, %v2243
        %v2299 = vadd.f32 %v2179, %v2245
        %v2300 = vadd.f32 %v2180, %v2247
        %v2301 = vadd.f32 %v2181, %v2249
        %v2302 = vadd.f32 %v2182, %v2251
        %v2303 = vadd.f32 %v2183, %v2253
        %v2304 = vadd.f32 %v2184, %v2255
        %v2305 = vadd.f32 %v2185, %v2257
        %v2306 = vmul.f32 %v2138, %v1343
        %v2307 = vmul.f32 %v2139, %v1344
        %v2308 = vmul.f32 %v2140, %v1345
        %v2309 = vmul.f32 %v2141, %v1346
        %v2310 = vmul.f32 %v2142, %v1347
        %v2311 = vmul.f32 %v2143, %v1348
        %v2312 = vmul.f32 %v2144, %v1349
        %v2313 = vmul.f32 %v2145, %v1350
        %v2314 = vmul.f32 %v2146, %v1351
        %v2315 = vmul.f32 %v2147, %v1352
        %v2316 = vmul.f32 %v2148, %v1353
        %v2317 = vmul.f32 %v2149, %v1354
        %v2318 = vmul.f32 %v2150, %v1355
        %v2319 = vmul.f32 %v2151, %v1356
        %v2320 = vmul.f32 %v2152, %v1357
        %v2321 = vmul.f32 %v2153, %v1358
        %v2322 = vmul.f32 %v2154, %v1359
        %v2323 = vmul.f32 %v2155, %v1360
        %v2324 = vmul.f32 %v2156, %v1361
        %v2325 = vmul.f32 %v2157, %v1362
        %v2326 = vmul.f32 %v2158, %v1363
        %v2327 = vmul.f32 %v2159, %v1364
        %v2328 = vmul.f32 %v2160, %v1365
        %v2329 = vmul.f32 %v2161, %v1366
        %2330 = vst.msk [vmem:[#allocation2 + $0x4] sm:$0xff] %vm1707, %v2306
        %2331 = vst.msk [vmem:[#allocation2 + $0xc] sm:$0xff] %vm1707, %v2307
        %2332 = vst.msk [vmem:[#allocation2 + $0x14] sm:$0xff] %vm1707, %v2308
        %2333 = vst.msk [vmem:[#allocation2 + $0x1c] sm:$0xff] %vm1707, %v2309
        %2334 = vst.msk [vmem:[#allocation2 + $0x24] sm:$0xff] %vm1707, %v2310
        %2335 = vst.msk [vmem:[#allocation2 + $0x2c] sm:$0xff] %vm1707, %v2311
        %2336 = vst.msk [vmem:[#allocation2 + $0x34] sm:$0xff] %vm1707, %v2312
        %2337 = vst.msk [vmem:[#allocation2 + $0x3c] sm:$0xff] %vm1707, %v2313
        %2338 = vst.msk [vmem:[#allocation2 + $0x44] sm:$0xff] %vm1707, %v2314
        %2339 = vst.msk [vmem:[#allocation2 + $0x4c] sm:$0xff] %vm1707, %v2315
        %2340 = vst.msk [vmem:[#allocation2 + $0x54] sm:$0xff] %vm1707, %v2316
        %2341 = vst.msk [vmem:[#allocation2 + $0x5c] sm:$0xff] %vm1707, %v2317
        %2342 = vst.msk [vmem:[#allocation2 + $0x64] sm:$0xff] %vm1707, %v2318
        %2343 = vst.msk [vmem:[#allocation2 + $0x6c] sm:$0xff] %vm1707, %v2319
        %2344 = vst.msk [vmem:[#allocation2 + $0x74] sm:$0xff] %vm1707, %v2320
        %2345 = vst.msk [vmem:[#allocation2 + $0x7c] sm:$0xff] %vm1707, %v2321
        %2346 = vst.msk [vmem:[#allocation2 + $0x84] sm:$0xff] %vm1707, %v2322
        %2347 = vst.msk [vmem:[#allocation2 + $0x8c] sm:$0xff] %vm1707, %v2323
        %2348 = vst.msk [vmem:[#allocation2 + $0x94] sm:$0xff] %vm1707, %v2324
        %2349 = vst.msk [vmem:[#allocation2 + $0x9c] sm:$0xff] %vm1707, %v2325
        %2350 = vst.msk [vmem:[#allocation2 + $0xa4] sm:$0xff] %vm1707, %v2326
        %2351 = vst.msk [vmem:[#allocation2 + $0xac] sm:$0xff] %vm1707, %v2327
        %2352 = vst.msk [vmem:[#allocation2 + $0xb4] sm:$0xff] %vm1707, %v2328
        %2353 = vst.msk [vmem:[#allocation2 + $0xbc] sm:$0xff] %vm1707, %v2329
        %v2354 = vld [vmem:[#allocation2 + $0x2] sm:$0xff]
        %v2355 = vld [vmem:[#allocation2 + $0xa] sm:$0xff]
        %v2356 = vld [vmem:[#allocation2 + $0x12] sm:$0xff]
        %v2357 = vld [vmem:[#allocation2 + $0x1a] sm:$0xff]
        %v2358 = vld [vmem:[#allocation2 + $0x22] sm:$0xff]
        %v2359 = vld [vmem:[#allocation2 + $0x2a] sm:$0xff]
        %v2360 = vld [vmem:[#allocation2 + $0x32] sm:$0xff]
        %v2361 = vld [vmem:[#allocation2 + $0x3a] sm:$0xff]
        %v2362 = vld [vmem:[#allocation2 + $0x42] sm:$0xff]
        %v2363 = vld [vmem:[#allocation2 + $0x4a] sm:$0xff]
        %v2364 = vld [vmem:[#allocation2 + $0x52] sm:$0xff]
        %v2365 = vld [vmem:[#allocation2 + $0x5a] sm:$0xff]
        %v2366 = vld [vmem:[#allocation2 + $0x62] sm:$0xff]
        %v2367 = vld [vmem:[#allocation2 + $0x6a] sm:$0xff]
        %v2368 = vld [vmem:[#allocation2 + $0x72] sm:$0xff]
        %v2369 = vld [vmem:[#allocation2 + $0x7a] sm:$0xff]
        %v2370 = vld [vmem:[#allocation2 + $0x82] sm:$0xff]
        %v2371 = vld [vmem:[#allocation2 + $0x8a] sm:$0xff]
        %v2372 = vld [vmem:[#allocation2 + $0x92] sm:$0xff]
        %v2373 = vld [vmem:[#allocation2 + $0x9a] sm:$0xff]
        %v2374 = vld [vmem:[#allocation2 + $0xa2] sm:$0xff]
        %v2375 = vld [vmem:[#allocation2 + $0xaa] sm:$0xff]
        %v2376 = vld [vmem:[#allocation2 + $0xb2] sm:$0xff]
        %v2377 = vld [vmem:[#allocation2 + $0xba] sm:$0xff]
        %v2378 = vld [vmem:[#allocation2 + $0x3] sm:$0xff]
        %v2379 = vld [vmem:[#allocation2 + $0xb] sm:$0xff]
        %v2380 = vld [vmem:[#allocation2 + $0x13] sm:$0xff]
        %v2381 = vld [vmem:[#allocation2 + $0x1b] sm:$0xff]
        %v2382 = vld [vmem:[#allocation2 + $0x23] sm:$0xff]
        %v2383 = vld [vmem:[#allocation2 + $0x2b] sm:$0xff]
        %v2384 = vld [vmem:[#allocation2 + $0x33] sm:$0xff]
        %v2385 = vld [vmem:[#allocation2 + $0x3b] sm:$0xff]
        %v2386 = vld [vmem:[#allocation2 + $0x43] sm:$0xff]
        %v2387 = vld [vmem:[#allocation2 + $0x4b] sm:$0xff]
        %v2388 = vld [vmem:[#allocation2 + $0x53] sm:$0xff]
        %v2389 = vld [vmem:[#allocation2 + $0x5b] sm:$0xff]
        %v2390 = vld [vmem:[#allocation2 + $0x63] sm:$0xff]
        %v2391 = vld [vmem:[#allocation2 + $0x6b] sm:$0xff]
        %v2392 = vld [vmem:[#allocation2 + $0x73] sm:$0xff]
        %v2393 = vld [vmem:[#allocation2 + $0x7b] sm:$0xff]
        %v2394 = vld [vmem:[#allocation2 + $0x83] sm:$0xff]
        %v2395 = vld [vmem:[#allocation2 + $0x8b] sm:$0xff]
        %v2396 = vld [vmem:[#allocation2 + $0x93] sm:$0xff]
        %v2397 = vld [vmem:[#allocation2 + $0x9b] sm:$0xff]
        %v2398 = vld [vmem:[#allocation2 + $0xa3] sm:$0xff]
        %v2399 = vld [vmem:[#allocation2 + $0xab] sm:$0xff]
        %v2400 = vld [vmem:[#allocation2 + $0xb3] sm:$0xff]
        %v2401 = vld [vmem:[#allocation2 + $0xbb] sm:$0xff]
        %v2402 = vld [vmem:[#allocation2 + $0x4] sm:$0xff]
        %v2403 = vld [vmem:[#allocation2 + $0xc] sm:$0xff]
        %v2404 = vld [vmem:[#allocation2 + $0x14] sm:$0xff]
        %v2405 = vld [vmem:[#allocation2 + $0x1c] sm:$0xff]
        %v2406 = vld [vmem:[#allocation2 + $0x24] sm:$0xff]
        %v2407 = vld [vmem:[#allocation2 + $0x2c] sm:$0xff]
        %v2408 = vld [vmem:[#allocation2 + $0x34] sm:$0xff]
        %v2409 = vld [vmem:[#allocation2 + $0x3c] sm:$0xff]
        %v2410 = vld [vmem:[#allocation2 + $0x44] sm:$0xff]
        %v2411 = vld [vmem:[#allocation2 + $0x4c] sm:$0xff]
        %v2412 = vld [vmem:[#allocation2 + $0x54] sm:$0xff]
        %v2413 = vld [vmem:[#allocation2 + $0x5c] sm:$0xff]
        %v2414 = vld [vmem:[#allocation2 + $0x64] sm:$0xff]
        %v2415 = vld [vmem:[#allocation2 + $0x6c] sm:$0xff]
        %v2416 = vld [vmem:[#allocation2 + $0x74] sm:$0xff]
        %v2417 = vld [vmem:[#allocation2 + $0x7c] sm:$0xff]
        %v2418 = vld [vmem:[#allocation2 + $0x84] sm:$0xff]
        %v2419 = vld [vmem:[#allocation2 + $0x8c] sm:$0xff]
        %v2420 = vld [vmem:[#allocation2 + $0x94] sm:$0xff]
        %v2421 = vld [vmem:[#allocation2 + $0x9c] sm:$0xff]
        %v2422 = vld [vmem:[#allocation2 + $0xa4] sm:$0xff]
        %v2423 = vld [vmem:[#allocation2 + $0xac] sm:$0xff]
        %v2424 = vld [vmem:[#allocation2 + $0xb4] sm:$0xff]
        %v2425 = vld [vmem:[#allocation2 + $0xbc] sm:$0xff]
        %v2426 = vld [vmem:[#allocation2 + $0x5] sm:$0xff]
        %v2427 = vld [vmem:[#allocation2 + $0xd] sm:$0xff]
        %v2428 = vld [vmem:[#allocation2 + $0x15] sm:$0xff]
        %v2429 = vld [vmem:[#allocation2 + $0x1d] sm:$0xff]
        %v2430 = vld [vmem:[#allocation2 + $0x25] sm:$0xff]
        %v2431 = vld [vmem:[#allocation2 + $0x2d] sm:$0xff]
        %v2432 = vld [vmem:[#allocation2 + $0x35] sm:$0xff]
        %v2433 = vld [vmem:[#allocation2 + $0x3d] sm:$0xff]
        %v2434 = vld [vmem:[#allocation2 + $0x45] sm:$0xff]
        %v2435 = vld [vmem:[#allocation2 + $0x4d] sm:$0xff]
        %v2436 = vld [vmem:[#allocation2 + $0x55] sm:$0xff]
        %v2437 = vld [vmem:[#allocation2 + $0x5d] sm:$0xff]
        %v2438 = vld [vmem:[#allocation2 + $0x65] sm:$0xff]
        %v2439 = vld [vmem:[#allocation2 + $0x6d] sm:$0xff]
        %v2440 = vld [vmem:[#allocation2 + $0x75] sm:$0xff]
        %v2441 = vld [vmem:[#allocation2 + $0x7d] sm:$0xff]
        %v2442 = vld [vmem:[#allocation2 + $0x85] sm:$0xff]
        %v2443 = vld [vmem:[#allocation2 + $0x8d] sm:$0xff]
        %v2444 = vld [vmem:[#allocation2 + $0x95] sm:$0xff]
        %v2445 = vld [vmem:[#allocation2 + $0x9d] sm:$0xff]
        %v2446 = vld [vmem:[#allocation2 + $0xa5] sm:$0xff]
        %v2447 = vld [vmem:[#allocation2 + $0xad] sm:$0xff]
        %v2448 = vld [vmem:[#allocation2 + $0xb5] sm:$0xff]
        %v2449 = vld [vmem:[#allocation2 + $0xbd] sm:$0xff]
        %v2450 = vld [vmem:[#allocation2 + $0x6] sm:$0xff]
        %v2451 = vld [vmem:[#allocation2 + $0xe] sm:$0xff]
        %v2452 = vld [vmem:[#allocation2 + $0x16] sm:$0xff]
        %v2453 = vld [vmem:[#allocation2 + $0x1e] sm:$0xff]
        %v2454 = vld [vmem:[#allocation2 + $0x26] sm:$0xff]
        %v2455 = vld [vmem:[#allocation2 + $0x2e] sm:$0xff]
        %v2456 = vld [vmem:[#allocation2 + $0x36] sm:$0xff]
        %v2457 = vld [vmem:[#allocation2 + $0x3e] sm:$0xff]
        %v2458 = vld [vmem:[#allocation2 + $0x46] sm:$0xff]
        %v2459 = vld [vmem:[#allocation2 + $0x4e] sm:$0xff]
        %v2460 = vld [vmem:[#allocation2 + $0x56] sm:$0xff]
        %v2461 = vld [vmem:[#allocation2 + $0x5e] sm:$0xff]
        %v2462 = vld [vmem:[#allocation2 + $0x66] sm:$0xff]
        %v2463 = vld [vmem:[#allocation2 + $0x6e] sm:$0xff]
        %v2464 = vld [vmem:[#allocation2 + $0x76] sm:$0xff]
        %v2465 = vld [vmem:[#allocation2 + $0x7e] sm:$0xff]
        %v2466 = vld [vmem:[#allocation2 + $0x86] sm:$0xff]
        %v2467 = vld [vmem:[#allocation2 + $0x8e] sm:$0xff]
        %v2468 = vld [vmem:[#allocation2 + $0x96] sm:$0xff]
        %v2469 = vld [vmem:[#allocation2 + $0x9e] sm:$0xff]
        %v2470 = vld [vmem:[#allocation2 + $0xa6] sm:$0xff]
        %v2471 = vld [vmem:[#allocation2 + $0xae] sm:$0xff]
        %v2472 = vld [vmem:[#allocation2 + $0xb6] sm:$0xff]
        %v2473 = vld [vmem:[#allocation2 + $0xbe] sm:$0xff]
        %2498 = vrot.lane.b32.xlu0 %v2378, 64
        %v2499 = vpop.permute.xlu0 %2498
        %2500 = vrot.lane.b32.xlu0 %v2379, 64
        %v2501 = vpop.permute.xlu0 %2500
        %2502 = vrot.lane.b32.xlu0 %v2380, 64
        %v2503 = vpop.permute.xlu0 %2502
        %2504 = vrot.lane.b32.xlu0 %v2381, 64
        %v2505 = vpop.permute.xlu0 %2504
        %2506 = vrot.lane.b32.xlu0 %v2382, 64
        %v2507 = vpop.permute.xlu0 %2506
        %2508 = vrot.lane.b32.xlu0 %v2383, 64
        %v2509 = vpop.permute.xlu0 %2508
        %2510 = vrot.lane.b32.xlu0 %v2384, 64
        %v2511 = vpop.permute.xlu0 %2510
        %2512 = vrot.lane.b32.xlu0 %v2385, 64
        %v2513 = vpop.permute.xlu0 %2512
        %2514 = vrot.lane.b32.xlu0 %v2386, 64
        %v2515 = vpop.permute.xlu0 %2514
        %2516 = vrot.lane.b32.xlu0 %v2387, 64
        %v2517 = vpop.permute.xlu0 %2516
        %2518 = vrot.lane.b32.xlu0 %v2388, 64
        %v2519 = vpop.permute.xlu0 %2518
        %2520 = vrot.lane.b32.xlu0 %v2389, 64
        %v2521 = vpop.permute.xlu0 %2520
        %2522 = vrot.lane.b32.xlu0 %v2390, 64
        %v2523 = vpop.permute.xlu0 %2522
        %2524 = vrot.lane.b32.xlu0 %v2391, 64
        %v2525 = vpop.permute.xlu0 %2524
        %2526 = vrot.lane.b32.xlu0 %v2392, 64
        %v2527 = vpop.permute.xlu0 %2526
        %2528 = vrot.lane.b32.xlu0 %v2393, 64
        %v2529 = vpop.permute.xlu0 %2528
        %2530 = vrot.lane.b32.xlu0 %v2394, 64
        %v2531 = vpop.permute.xlu0 %2530
        %2532 = vrot.lane.b32.xlu0 %v2395, 64
        %v2533 = vpop.permute.xlu0 %2532
        %2534 = vrot.lane.b32.xlu0 %v2396, 64
        %v2535 = vpop.permute.xlu0 %2534
        %2536 = vrot.lane.b32.xlu0 %v2397, 64
        %v2537 = vpop.permute.xlu0 %2536
        %2538 = vrot.lane.b32.xlu0 %v2398, 64
        %v2539 = vpop.permute.xlu0 %2538
        %2540 = vrot.lane.b32.xlu0 %v2399, 64
        %v2541 = vpop.permute.xlu0 %2540
        %2542 = vrot.lane.b32.xlu0 %v2400, 64
        %v2543 = vpop.permute.xlu0 %2542
        %2544 = vrot.lane.b32.xlu0 %v2401, 64
        %v2545 = vpop.permute.xlu0 %2544
        %2594 = vrot.lane.b32.xlu0 %v2426, 64
        %v2595 = vpop.permute.xlu0 %2594
        %2596 = vrot.lane.b32.xlu0 %v2427, 64
        %v2597 = vpop.permute.xlu0 %2596
        %2598 = vrot.lane.b32.xlu0 %v2428, 64
        %v2599 = vpop.permute.xlu0 %2598
        %2600 = vrot.lane.b32.xlu0 %v2429, 64
        %v2601 = vpop.permute.xlu0 %2600
        %2602 = vrot.lane.b32.xlu0 %v2430, 64
        %v2603 = vpop.permute.xlu0 %2602
        %2604 = vrot.lane.b32.xlu0 %v2431, 64
        %v2605 = vpop.permute.xlu0 %2604
        %2606 = vrot.lane.b32.xlu0 %v2432, 64
        %v2607 = vpop.permute.xlu0 %2606
        %2608 = vrot.lane.b32.xlu0 %v2433, 64
        %v2609 = vpop.permute.xlu0 %2608
        %2610 = vrot.lane.b32.xlu0 %v2434, 64
        %v2611 = vpop.permute.xlu0 %2610
        %2612 = vrot.lane.b32.xlu0 %v2435, 64
        %v2613 = vpop.permute.xlu0 %2612
        %2614 = vrot.lane.b32.xlu0 %v2436, 64
        %v2615 = vpop.permute.xlu0 %2614
        %2616 = vrot.lane.b32.xlu0 %v2437, 64
        %v2617 = vpop.permute.xlu0 %2616
        %2618 = vrot.lane.b32.xlu0 %v2438, 64
        %v2619 = vpop.permute.xlu0 %2618
        %2620 = vrot.lane.b32.xlu0 %v2439, 64
        %v2621 = vpop.permute.xlu0 %2620
        %2622 = vrot.lane.b32.xlu0 %v2440, 64
        %v2623 = vpop.permute.xlu0 %2622
        %2624 = vrot.lane.b32.xlu0 %v2441, 64
        %v2625 = vpop.permute.xlu0 %2624
        %2626 = vrot.lane.b32.xlu0 %v2442, 64
        %v2627 = vpop.permute.xlu0 %2626
        %2628 = vrot.lane.b32.xlu0 %v2443, 64
        %v2629 = vpop.permute.xlu0 %2628
        %2630 = vrot.lane.b32.xlu0 %v2444, 64
        %v2631 = vpop.permute.xlu0 %2630
        %2632 = vrot.lane.b32.xlu0 %v2445, 64
        %v2633 = vpop.permute.xlu0 %2632
        %2634 = vrot.lane.b32.xlu0 %v2446, 64
        %v2635 = vpop.permute.xlu0 %2634
        %2636 = vrot.lane.b32.xlu0 %v2447, 64
        %v2637 = vpop.permute.xlu0 %2636
        %2638 = vrot.lane.b32.xlu0 %v2448, 64
        %v2639 = vpop.permute.xlu0 %2638
        %2640 = vrot.lane.b32.xlu0 %v2449, 64
        %v2641 = vpop.permute.xlu0 %2640
        %v2666 = vsel %vm1707, %v2354, %v2499
        %v2667 = vsel %vm1707, %v2355, %v2501
        %v2668 = vsel %vm1707, %v2356, %v2503
        %v2669 = vsel %vm1707, %v2357, %v2505
        %v2670 = vsel %vm1707, %v2358, %v2507
        %v2671 = vsel %vm1707, %v2359, %v2509
        %v2672 = vsel %vm1707, %v2360, %v2511
        %v2673 = vsel %vm1707, %v2361, %v2513
        %v2674 = vsel %vm1707, %v2362, %v2515
        %v2675 = vsel %vm1707, %v2363, %v2517
        %v2676 = vsel %vm1707, %v2364, %v2519
        %v2677 = vsel %vm1707, %v2365, %v2521
        %v2678 = vsel %vm1707, %v2366, %v2523
        %v2679 = vsel %vm1707, %v2367, %v2525
        %v2680 = vsel %vm1707, %v2368, %v2527
        %v2681 = vsel %vm1707, %v2369, %v2529
        %v2682 = vsel %vm1707, %v2370, %v2531
        %v2683 = vsel %vm1707, %v2371, %v2533
        %v2684 = vsel %vm1707, %v2372, %v2535
        %v2685 = vsel %vm1707, %v2373, %v2537
        %v2686 = vsel %vm1707, %v2374, %v2539
        %v2687 = vsel %vm1707, %v2375, %v2541
        %v2688 = vsel %vm1707, %v2376, %v2543
        %v2689 = vsel %vm1707, %v2377, %v2545
        %v2690 = vsel %vm1707, %v2402, %v2595
        %v2691 = vsel %vm1707, %v2403, %v2597
        %v2692 = vsel %vm1707, %v2404, %v2599
        %v2693 = vsel %vm1707, %v2405, %v2601
        %v2694 = vsel %vm1707, %v2406, %v2603
        %v2695 = vsel %vm1707, %v2407, %v2605
        %v2696 = vsel %vm1707, %v2408, %v2607
        %v2697 = vsel %vm1707, %v2409, %v2609
        %v2698 = vsel %vm1707, %v2410, %v2611
        %v2699 = vsel %vm1707, %v2411, %v2613
        %v2700 = vsel %vm1707, %v2412, %v2615
        %v2701 = vsel %vm1707, %v2413, %v2617
        %v2702 = vsel %vm1707, %v2414, %v2619
        %v2703 = vsel %vm1707, %v2415, %v2621
        %v2704 = vsel %vm1707, %v2416, %v2623
        %v2705 = vsel %vm1707, %v2417, %v2625
        %v2706 = vsel %vm1707, %v2418, %v2627
        %v2707 = vsel %vm1707, %v2419, %v2629
        %v2708 = vsel %vm1707, %v2420, %v2631
        %v2709 = vsel %vm1707, %v2421, %v2633
        %v2710 = vsel %vm1707, %v2422, %v2635
        %v2711 = vsel %vm1707, %v2423, %v2637
        %v2712 = vsel %vm1707, %v2424, %v2639
        %v2713 = vsel %vm1707, %v2425, %v2641
        %v2714 = vpack.c.bf16 %v2667, %v2666
        %v2715 = vpack.c.bf16 %v2691, %v2690
        %v2716 = vpack.c.bf16 %v2451, %v2450
        %v2717 = vpack.c.bf16 %v2669, %v2668
        %v2718 = vpack.c.bf16 %v2693, %v2692
        %v2719 = vpack.c.bf16 %v2453, %v2452
        %v2720 = vpack.c.bf16 %v2671, %v2670
        %v2721 = vpack.c.bf16 %v2695, %v2694
        %v2722 = vpack.c.bf16 %v2455, %v2454
        %v2723 = vpack.c.bf16 %v2673, %v2672
        %v2724 = vpack.c.bf16 %v2697, %v2696
        %v2725 = vpack.c.bf16 %v2457, %v2456
        %v2726 = vpack.c.bf16 %v2675, %v2674
        %v2727 = vpack.c.bf16 %v2699, %v2698
        %v2728 = vpack.c.bf16 %v2459, %v2458
        %v2729 = vpack.c.bf16 %v2677, %v2676
        %v2730 = vpack.c.bf16 %v2701, %v2700
        %v2731 = vpack.c.bf16 %v2461, %v2460
        %v2732 = vpack.c.bf16 %v2679, %v2678
        %v2733 = vpack.c.bf16 %v2703, %v2702
        %v2734 = vpack.c.bf16 %v2463, %v2462
        %v2735 = vpack.c.bf16 %v2681, %v2680
        %v2736 = vpack.c.bf16 %v2705, %v2704
        %v2737 = vpack.c.bf16 %v2465, %v2464
        %v2738 = vpack.c.bf16 %v2683, %v2682
        %v2739 = vpack.c.bf16 %v2707, %v2706
        %v2740 = vpack.c.bf16 %v2467, %v2466
        %v2741 = vpack.c.bf16 %v2685, %v2684
        %v2742 = vpack.c.bf16 %v2709, %v2708
        %v2743 = vpack.c.bf16 %v2469, %v2468
        %v2744 = vpack.c.bf16 %v2687, %v2686
        %v2745 = vpack.c.bf16 %v2711, %v2710
        %v2746 = vpack.c.bf16 %v2471, %v2470
        %v2747 = vpack.c.bf16 %v2689, %v2688
        %v2748 = vpack.c.bf16 %v2713, %v2712
        %v2749 = vpack.c.bf16 %v2473, %v2472
        %v2750 = vld [vmem:[%s3] sm:$0xf]
        %v2751 = vld [vmem:[%s3 + $0x4] sm:$0xf]
        %v2752 = vld [vmem:[%s3 + $0x8] sm:$0xf]
        %v2753 = vld [vmem:[%s3 + $0xc] sm:$0xf]
        %v2754 = vld [vmem:[%s3 + $0x10] sm:$0xf]
        %v2755 = vld [vmem:[%s3 + $0x14] sm:$0xf]
        %v2756 = vld [vmem:[%s3 + $0x18] sm:$0xf]
        %v2757 = vld [vmem:[%s3 + $0x1c] sm:$0xf]
        %v2758 = vld [vmem:[%s3 + $0x20] sm:$0xf]
        %v2759 = vld [vmem:[%s3 + $0x24] sm:$0xf]
        %v2760 = vld [vmem:[%s3 + $0x28] sm:$0xf]
        %v2761 = vld [vmem:[%s3 + $0x2c] sm:$0xf]
        %v2762 = vld [vmem:[%s3 + $0x30] sm:$0xf]
        %v2763 = vld [vmem:[%s3 + $0x34] sm:$0xf]
        %v2764 = vld [vmem:[%s3 + $0x38] sm:$0xf]
        %v2765 = vld [vmem:[%s3 + $0x3c] sm:$0xf]
        %v2766 = vld [vmem:[%s3 + $0x40] sm:$0xf]
        %v2767 = vld [vmem:[%s3 + $0x44] sm:$0xf]
        %v2768 = vld [vmem:[%s3 + $0x48] sm:$0xf]
        %v2769 = vld [vmem:[%s3 + $0x4c] sm:$0xf]
        %v2770 = vld [vmem:[%s3 + $0x50] sm:$0xf]
        %v2771 = vld [vmem:[%s3 + $0x54] sm:$0xf]
        %v2772 = vld [vmem:[%s3 + $0x58] sm:$0xf]
        %v2773 = vld [vmem:[%s3 + $0x5c] sm:$0xf]
        %v2774 = vld [vmem:[%s3 + $0x60] sm:$0xf]
        %v2775 = vld [vmem:[%s3 + $0x64] sm:$0xf]
        %v2776 = vld [vmem:[%s3 + $0x68] sm:$0xf]
        %v2777 = vld [vmem:[%s3 + $0x6c] sm:$0xf]
        %v2778 = vld [vmem:[%s3 + $0x70] sm:$0xf]
        %v2779 = vld [vmem:[%s3 + $0x74] sm:$0xf]
        %v2780 = vld [vmem:[%s3 + $0x78] sm:$0xf]
        %v2781 = vld [vmem:[%s3 + $0x7c] sm:$0xf]
        %v2782 = vld [vmem:[%s3 + $0x80] sm:$0xf]
        %v2783 = vld [vmem:[%s3 + $0x84] sm:$0xf]
        %v2784 = vld [vmem:[%s3 + $0x88] sm:$0xf]
        %v2785 = vld [vmem:[%s3 + $0x8c] sm:$0xf]
        %v2786 = vld [vmem:[%s3 + $0x90] sm:$0xf]
        %v2787 = vld [vmem:[%s3 + $0x94] sm:$0xf]
        %v2788 = vld [vmem:[%s3 + $0x98] sm:$0xf]
        %v2789 = vld [vmem:[%s3 + $0x9c] sm:$0xf]
        %v2790 = vld [vmem:[%s4] sm:$0x1]
        %v2792 = vlaneseq
        %v2793 = vshrl.u32 %v2792, 7
        %v2794 = vsub.s32 0, %v2793
        %v2795 = vrot.slane %v2790, %v2794
        %v2837 = vunpack.c.l.b16 %v2750
        %v2838 = vunpack.c.l.b16 %v2751
        %v2839 = vunpack.c.l.b16 %v2752
        %v2840 = vunpack.c.l.b16 %v2753
        %v2841 = vunpack.c.l.b16 %v2754
        %v2842 = vunpack.c.l.b16 %v2755
        %v2843 = vunpack.c.l.b16 %v2756
        %v2844 = vunpack.c.l.b16 %v2757
        %v2845 = vunpack.c.l.b16 %v2758
        %v2846 = vunpack.c.l.b16 %v2759
        %v2847 = vunpack.c.l.b16 %v2760
        %v2848 = vunpack.c.l.b16 %v2761
        %v2849 = vunpack.c.l.b16 %v2762
        %v2850 = vunpack.c.l.b16 %v2763
        %v2851 = vunpack.c.l.b16 %v2764
        %v2852 = vunpack.c.l.b16 %v2765
        %v2853 = vunpack.c.l.b16 %v2766
        %v2854 = vunpack.c.l.b16 %v2767
        %v2855 = vunpack.c.l.b16 %v2768
        %v2856 = vunpack.c.l.b16 %v2769
        %v2857 = vunpack.c.l.b16 %v2770
        %v2858 = vunpack.c.l.b16 %v2771
        %v2859 = vunpack.c.l.b16 %v2772
        %v2860 = vunpack.c.l.b16 %v2773
        %v2861 = vunpack.c.l.b16 %v2774
        %v2862 = vunpack.c.l.b16 %v2775
        %v2863 = vunpack.c.l.b16 %v2776
        %v2864 = vunpack.c.l.b16 %v2777
        %v2865 = vunpack.c.l.b16 %v2778
        %v2866 = vunpack.c.l.b16 %v2779
        %v2867 = vunpack.c.l.b16 %v2780
        %v2868 = vunpack.c.l.b16 %v2781
        %v2869 = vunpack.c.l.b16 %v2782
        %v2870 = vunpack.c.l.b16 %v2783
        %v2871 = vunpack.c.l.b16 %v2784
        %v2872 = vunpack.c.l.b16 %v2785
        %v2873 = vunpack.c.l.b16 %v2786
        %v2874 = vunpack.c.l.b16 %v2787
        %v2875 = vunpack.c.l.b16 %v2788
        %v2876 = vunpack.c.l.b16 %v2789
        %v2877 = vpack.c.b16 %v2838, %v2837
        %v2878 = vpack.c.b16 %v2840, %v2839
        %v2879 = vpack.c.b16 %v2842, %v2841
        %v2880 = vpack.c.b16 %v2844, %v2843
        %v2881 = vpack.c.b16 %v2846, %v2845
        %v2882 = vpack.c.b16 %v2848, %v2847
        %v2883 = vpack.c.b16 %v2850, %v2849
        %v2884 = vpack.c.b16 %v2852, %v2851
        %v2885 = vpack.c.b16 %v2854, %v2853
        %v2886 = vpack.c.b16 %v2856, %v2855
        %v2887 = vpack.c.b16 %v2858, %v2857
        %v2888 = vpack.c.b16 %v2860, %v2859
        %v2889 = vpack.c.b16 %v2862, %v2861
        %v2890 = vpack.c.b16 %v2864, %v2863
        %v2891 = vpack.c.b16 %v2866, %v2865
        %v2892 = vpack.c.b16 %v2868, %v2867
        %v2893 = vpack.c.b16 %v2870, %v2869
        %v2894 = vpack.c.b16 %v2872, %v2871
        %v2895 = vpack.c.b16 %v2874, %v2873
        %v2896 = vpack.c.b16 %v2876, %v2875
        %v2918 = vsel %vm1707, %v2716, 0
        %v2921 = vsel %vm1707, %v2719, 0
        %v2924 = vsel %vm1707, %v2722, 0
        %v2927 = vsel %vm1707, %v2725, 0
        %v2930 = vsel %vm1707, %v2728, 0
        %v2933 = vsel %vm1707, %v2731, 0
        %v2936 = vsel %vm1707, %v2734, 0
        %v2939 = vsel %vm1707, %v2737, 0
        %v2942 = vsel %vm1707, %v2740, 0
        %v2945 = vsel %vm1707, %v2743, 0
        %v2948 = vsel %vm1707, %v2746, 0
        %v2951 = vsel %vm1707, %v2749, 0
        %2953 = vmatprep.subr.bf16.mxu0 0
        %2954 = vmatpush1.bf16.msra.mxu0 %v2877
        %2955 = vmatprep.subr.bf16.mxu0 0
        %2956 = vmatpush1.bf16.msra.mxu0 %v2878
        %2957 = vmatprep.subr.bf16.mxu0 0
        %2958 = vmatpush1.bf16.msra.mxu0 %v2879
        %2959 = vmatprep.subr.bf16.mxu0 0
        %2960 = vmatpush1.bf16.msra.mxu0 %v2880
        %2961 = vmatprep.subr.bf16.mxu0 0
        %2962 = vmatpush1.bf16.msra.mxu0 %v2881
        %2963 = vmatprep.subr.bf16.mxu0 0
        %2964 = vmatpush1.bf16.msra.mxu0 %v2882
        %2965 = vmatprep.subr.bf16.mxu0 0
        %2966 = vmatpush1.bf16.msra.mxu0 %v2883
        %2967 = vmatprep.subr.bf16.mxu0 0
        %2968 = vmatpush1.bf16.msra.mxu0 %v2884
        %2969 = vmatprep.subr.bf16.mxu0 0
        %2970 = vmatpush1.bf16.msra.mxu0 %v2885
        %2971 = vmatprep.subr.bf16.mxu0 0
        %2972 = vmatpush1.bf16.msra.mxu0 %v2886
        %2973 = vmatprep.subr.bf16.mxu0 0
        %2974 = vmatpush1.bf16.msra.mxu0 %v2887
        %2975 = vmatprep.subr.bf16.mxu0 0
        %2976 = vmatpush1.bf16.msra.mxu0 %v2888
        %2977 = vmatprep.subr.bf16.mxu0 0
        %2978 = vmatpush1.bf16.msra.mxu0 %v2889
        %2979 = vmatprep.subr.bf16.mxu0 0
        %2980 = vmatpush1.bf16.msra.mxu0 %v2890
        %2981 = vmatprep.subr.bf16.mxu0 0
        %2982 = vmatpush1.bf16.msra.mxu0 %v2891
        %2983 = vmatprep.subr.bf16.mxu0 0
        %2984 = vmatpush1.bf16.msra.mxu0 %v2892
        %2985 = vmatprep.mubr.bf16.mxu0 %v2715
        %2986 = vmatmul.mubr.bf16.gmra.mrb[0].mxu0 %v2714
        %v2987 = vpop.f32.mrb[0].mxu0
        %v2988 = vadd.f32 %v2795, %v2987
        %v2989 = vpop.f32.mrb[0].mxu0
        %v2990 = vpop.f32.mrb[0].mxu0
        %v2991 = vadd.f32 %v2795, %v2990
        %v2992 = vpop.f32.mrb[0].mxu0
        %2993 = vmatprep.mubr.bf16.mxu0 %v2718
        %2994 = vmatmul.mubr.bf16.gmra.mrb[0].mxu0 %v2717
        %v2995 = vpop.f32.mrb[0].mxu0
        %v2996 = vadd.f32 %v2795, %v2995
        %v2997 = vpop.f32.mrb[0].mxu0
        %v2998 = vpop.f32.mrb[0].mxu0
        %v2999 = vadd.f32 %v2795, %v2998
        %v3000 = vpop.f32.mrb[0].mxu0
        %3001 = vmatprep.mubr.bf16.mxu0 %v2721
        %3002 = vmatmul.mubr.bf16.gmra.mrb[0].mxu0 %v2720
        %v3003 = vpop.f32.mrb[0].mxu0
        %v3004 = vadd.f32 %v2795, %v3003
        %v3005 = vpop.f32.mrb[0].mxu0
        %v3006 = vpop.f32.mrb[0].mxu0
        %v3007 = vadd.f32 %v2795, %v3006
        %v3008 = vpop.f32.mrb[0].mxu0
        %3009 = vmatprep.mubr.bf16.mxu0 %v2724
        %3010 = vmatmul.mubr.bf16.gmra.mrb[0].mxu0 %v2723
        %v3011 = vpop.f32.mrb[0].mxu0
        %v3012 = vadd.f32 %v2795, %v3011
        %v3013 = vpop.f32.mrb[0].mxu0
        %v3014 = vpop.f32.mrb[0].mxu0
        %v3015 = vadd.f32 %v2795, %v3014
        %v3016 = vpop.f32.mrb[0].mxu0
        %3017 = vmatprep.mubr.bf16.mxu0 %v2727
        %3018 = vmatmul.mubr.bf16.gmra.mrb[0].mxu0 %v2726
        %v3019 = vpop.f32.mrb[0].mxu0
        %v3020 = vadd.f32 %v2795, %v3019
        %v3021 = vpop.f32.mrb[0].mxu0
        %v3022 = vpop.f32.mrb[0].mxu0
        %v3023 = vadd.f32 %v2795, %v3022
        %v3024 = vpop.f32.mrb[0].mxu0
        %3025 = vmatprep.mubr.bf16.mxu0 %v2730
        %3026 = vmatmul.mubr.bf16.gmra.mrb[0].mxu0 %v2729
        %v3027 = vpop.f32.mrb[0].mxu0
        %v3028 = vadd.f32 %v2795, %v3027
        %v3029 = vpop.f32.mrb[0].mxu0
        %v3030 = vpop.f32.mrb[0].mxu0
        %v3031 = vadd.f32 %v2795, %v3030
        %v3032 = vpop.f32.mrb[0].mxu0
        %3033 = vmatprep.mubr.bf16.mxu0 %v2733
        %3034 = vmatmul.mubr.bf16.gmra.mrb[0].mxu0 %v2732
        %v3035 = vpop.f32.mrb[0].mxu0
        %v3036 = vadd.f32 %v2795, %v3035
        %v3037 = vpop.f32.mrb[0].mxu0
        %v3038 = vpop.f32.mrb[0].mxu0
        %v3039 = vadd.f32 %v2795, %v3038
        %v3040 = vpop.f32.mrb[0].mxu0
        %3041 = vmatprep.mubr.bf16.mxu0 %v2736
        %3042 = vmatmul.mubr.bf16.gmra.mrb[0].mxu0 %v2735
        %v3043 = vpop.f32.mrb[0].mxu0
        %v3044 = vadd.f32 %v2795, %v3043
        %v3045 = vpop.f32.mrb[0].mxu0
        %v3046 = vpop.f32.mrb[0].mxu0
        %v3047 = vadd.f32 %v2795, %v3046
        %v3048 = vpop.f32.mrb[0].mxu0
        %3049 = vmatprep.mubr.bf16.mxu0 %v2739
        %3050 = vmatmul.mubr.bf16.gmra.mrb[0].mxu0 %v2738
        %v3051 = vpop.f32.mrb[0].mxu0
        %v3052 = vadd.f32 %v2795, %v3051
        %v3053 = vpop.f32.mrb[0].mxu0
        %v3054 = vpop.f32.mrb[0].mxu0
        %v3055 = vadd.f32 %v2795, %v3054
        %v3056 = vpop.f32.mrb[0].mxu0
        %3057 = vmatprep.mubr.bf16.mxu0 %v2742
        %3058 = vmatmul.mubr.bf16.gmra.mrb[0].mxu0 %v2741
        %v3059 = vpop.f32.mrb[0].mxu0
        %v3060 = vadd.f32 %v2795, %v3059
        %v3061 = vpop.f32.mrb[0].mxu0
        %v3062 = vpop.f32.mrb[0].mxu0
        %v3063 = vadd.f32 %v2795, %v3062
        %v3064 = vpop.f32.mrb[0].mxu0
        %3065 = vmatprep.mubr.bf16.mxu0 %v2745
        %3066 = vmatmul.mubr.bf16.gmra.mrb[0].mxu0 %v2744
        %v3067 = vpop.f32.mrb[0].mxu0
        %v3068 = vadd.f32 %v2795, %v3067
        %v3069 = vpop.f32.mrb[0].mxu0
        %v3070 = vpop.f32.mrb[0].mxu0
        %v3071 = vadd.f32 %v2795, %v3070
        %v3072 = vpop.f32.mrb[0].mxu0
        %3073 = vmatprep.mubr.bf16.mxu0 %v2748
        %3074 = vmatmul.mubr.bf16.gmra.mrb[0].mxu0 %v2747
        %v3075 = vpop.f32.mrb[0].mxu0
        %v3076 = vadd.f32 %v2795, %v3075
        %v3077 = vpop.f32.mrb[0].mxu0
        %v3078 = vpop.f32.mrb[0].mxu0
        %v3079 = vadd.f32 %v2795, %v3078
        %v3080 = vpop.f32.mrb[0].mxu0
        %3081 = vdwg.mxu0
        %3082 = vmatprep.subr.bf16.mxu0 0
        %3083 = vmatpush1.bf16.msra.mxu0 %v2893
        %3084 = vmatprep.subr.bf16.mxu0 0
        %3085 = vmatpush1.bf16.msra.mxu0 %v2894
        %3086 = vmatprep.subr.bf16.mxu0 0
        %3087 = vmatpush1.bf16.msra.mxu0 %v2895
        %3088 = vmatprep.subr.bf16.mxu0 0
        %3089 = vmatpush1.bf16.msra.mxu0 %v2896
        %3090 = vmatprep.subr.bf16.mxu0 0
        %3091 = vmatpush1.bf16.msra.mxu0 0
        %3092 = vmatprep.subr.bf16.mxu0 0
        %3093 = vmatpush1.bf16.msra.mxu0 0
        %3094 = vmatprep.subr.bf16.mxu0 0
        %3095 = vmatpush1.bf16.msra.mxu0 0
        %3096 = vmatprep.subr.bf16.mxu0 0
        %3097 = vmatpush1.bf16.msra.mxu0 0
        %3098 = vmatprep.subr.bf16.mxu0 0
        %3099 = vmatpush1.bf16.msra.mxu0 0
        %3100 = vmatprep.subr.bf16.mxu0 0
        %3101 = vmatpush1.bf16.msra.mxu0 0
        %3102 = vmatprep.subr.bf16.mxu0 0
        %3103 = vmatpush1.bf16.msra.mxu0 0
        %3104 = vmatprep.subr.bf16.mxu0 0
        %3105 = vmatpush1.bf16.msra.mxu0 0
        %3106 = vmatprep.subr.bf16.mxu0 0
        %3107 = vmatpush1.bf16.msra.mxu0 0
        %3108 = vmatprep.subr.bf16.mxu0 0
        %3109 = vmatpush1.bf16.msra.mxu0 0
        %3110 = vmatprep.subr.bf16.mxu0 0
        %3111 = vmatpush1.bf16.msra.mxu0 0
        %3112 = vmatprep.subr.bf16.mxu0 0
        %3113 = vmatpush1.bf16.msra.mxu0 0
        %3114 = vmatprep.mubr.bf16.mxu0 0
        %3115 = vmatmul.mubr.bf16.gmra.mrb[0].mxu0 %v2918
        %v3116 = vpop.f32.mrb[0].mxu0
        %v3117 = vadd.f32 %v2988, %v3116
        %v3118 = vpop.f32.mrb[0].mxu0
        %v3119 = vpop.f32.mrb[0].mxu0
        %v3120 = vadd.f32 %v2991, %v3119
        %v3121 = vpop.f32.mrb[0].mxu0
        %3122 = vmatprep.mubr.bf16.mxu0 0
        %3123 = vmatmul.mubr.bf16.gmra.mrb[0].mxu0 %v2921
        %v3124 = vpop.f32.mrb[0].mxu0
        %v3125 = vadd.f32 %v2996, %v3124
        %v3126 = vpop.f32.mrb[0].mxu0
        %v3127 = vpop.f32.mrb[0].mxu0
        %v3128 = vadd.f32 %v2999, %v3127
        %v3129 = vpop.f32.mrb[0].mxu0
        %3130 = vmatprep.mubr.bf16.mxu0 0
        %3131 = vmatmul.mubr.bf16.gmra.mrb[0].mxu0 %v2924
        %v3132 = vpop.f32.mrb[0].mxu0
        %v3133 = vadd.f32 %v3004, %v3132
        %v3134 = vpop.f32.mrb[0].mxu0
        %v3135 = vpop.f32.mrb[0].mxu0
        %v3136 = vadd.f32 %v3007, %v3135
        %v3137 = vpop.f32.mrb[0].mxu0
        %3138 = vmatprep.mubr.bf16.mxu0 0
        %3139 = vmatmul.mubr.bf16.gmra.mrb[0].mxu0 %v2927
        %v3140 = vpop.f32.mrb[0].mxu0
        %v3141 = vadd.f32 %v3012, %v3140
        %v3142 = vpop.f32.mrb[0].mxu0
        %v3143 = vpop.f32.mrb[0].mxu0
        %v3144 = vadd.f32 %v3015, %v3143
        %v3145 = vpop.f32.mrb[0].mxu0
        %3146 = vmatprep.mubr.bf16.mxu0 0
        %3147 = vmatmul.mubr.bf16.gmra.mrb[0].mxu0 %v2930
        %v3148 = vpop.f32.mrb[0].mxu0
        %v3149 = vadd.f32 %v3020, %v3148
        %v3150 = vpop.f32.mrb[0].mxu0
        %v3151 = vpop.f32.mrb[0].mxu0
        %v3152 = vadd.f32 %v3023, %v3151
        %v3153 = vpop.f32.mrb[0].mxu0
        %3154 = vmatprep.mubr.bf16.mxu0 0
        %3155 = vmatmul.mubr.bf16.gmra.mrb[0].mxu0 %v2933
        %v3156 = vpop.f32.mrb[0].mxu0
        %v3157 = vadd.f32 %v3028, %v3156
        %v3158 = vpop.f32.mrb[0].mxu0
        %v3159 = vpop.f32.mrb[0].mxu0
        %v3160 = vadd.f32 %v3031, %v3159
        %v3161 = vpop.f32.mrb[0].mxu0
        %3162 = vmatprep.mubr.bf16.mxu0 0
        %3163 = vmatmul.mubr.bf16.gmra.mrb[0].mxu0 %v2936
        %v3164 = vpop.f32.mrb[0].mxu0
        %v3165 = vadd.f32 %v3036, %v3164
        %v3166 = vpop.f32.mrb[0].mxu0
        %v3167 = vpop.f32.mrb[0].mxu0
        %v3168 = vadd.f32 %v3039, %v3167
        %v3169 = vpop.f32.mrb[0].mxu0
        %3170 = vmatprep.mubr.bf16.mxu0 0
        %3171 = vmatmul.mubr.bf16.gmra.mrb[0].mxu0 %v2939
        %v3172 = vpop.f32.mrb[0].mxu0
        %v3173 = vadd.f32 %v3044, %v3172
        %v3174 = vpop.f32.mrb[0].mxu0
        %v3175 = vpop.f32.mrb[0].mxu0
        %v3176 = vadd.f32 %v3047, %v3175
        %v3177 = vpop.f32.mrb[0].mxu0
        %3178 = vmatprep.mubr.bf16.mxu0 0
        %3179 = vmatmul.mubr.bf16.gmra.mrb[0].mxu0 %v2942
        %v3180 = vpop.f32.mrb[0].mxu0
        %v3181 = vadd.f32 %v3052, %v3180
        %v3182 = vpop.f32.mrb[0].mxu0
        %v3183 = vpop.f32.mrb[0].mxu0
        %v3184 = vadd.f32 %v3055, %v3183
        %v3185 = vpop.f32.mrb[0].mxu0
        %3186 = vmatprep.mubr.bf16.mxu0 0
        %3187 = vmatmul.mubr.bf16.gmra.mrb[0].mxu0 %v2945
        %v3188 = vpop.f32.mrb[0].mxu0
        %v3189 = vadd.f32 %v3060, %v3188
        %v3190 = vpop.f32.mrb[0].mxu0
        %v3191 = vpop.f32.mrb[0].mxu0
        %v3192 = vadd.f32 %v3063, %v3191
        %v3193 = vpop.f32.mrb[0].mxu0
        %3194 = vmatprep.mubr.bf16.mxu0 0
        %3195 = vmatmul.mubr.bf16.gmra.mrb[0].mxu0 %v2948
        %v3196 = vpop.f32.mrb[0].mxu0
        %v3197 = vadd.f32 %v3068, %v3196
        %v3198 = vpop.f32.mrb[0].mxu0
        %v3199 = vpop.f32.mrb[0].mxu0
        %v3200 = vadd.f32 %v3071, %v3199
        %v3201 = vpop.f32.mrb[0].mxu0
        %3202 = vmatprep.mubr.bf16.mxu0 0
        %3203 = vmatmul.mubr.bf16.gmra.mrb[0].mxu0 %v2951
        %v3204 = vpop.f32.mrb[0].mxu0
        %v3205 = vadd.f32 %v3076, %v3204
        %v3206 = vpop.f32.mrb[0].mxu0
        %v3207 = vpop.f32.mrb[0].mxu0
        %v3208 = vadd.f32 %v3079, %v3207
        %v3209 = vpop.f32.mrb[0].mxu0
        %3210 = vdwg.mxu0
        %v3211 = vmax.f32 %v3117, 0.0
        %v3212 = vmax.f32 %v3120, 0.0
        %v3213 = vmax.f32 %v3125, 0.0
        %v3214 = vmax.f32 %v3128, 0.0
        %v3215 = vmax.f32 %v3133, 0.0
        %v3216 = vmax.f32 %v3136, 0.0
        %v3217 = vmax.f32 %v3141, 0.0
        %v3218 = vmax.f32 %v3144, 0.0
        %v3219 = vmax.f32 %v3149, 0.0
        %v3220 = vmax.f32 %v3152, 0.0
        %v3221 = vmax.f32 %v3157, 0.0
        %v3222 = vmax.f32 %v3160, 0.0
        %v3223 = vmax.f32 %v3165, 0.0
        %v3224 = vmax.f32 %v3168, 0.0
        %v3225 = vmax.f32 %v3173, 0.0
        %v3226 = vmax.f32 %v3176, 0.0
        %v3227 = vmax.f32 %v3181, 0.0
        %v3228 = vmax.f32 %v3184, 0.0
        %v3229 = vmax.f32 %v3189, 0.0
        %v3230 = vmax.f32 %v3192, 0.0
        %v3231 = vmax.f32 %v3197, 0.0
        %v3232 = vmax.f32 %v3200, 0.0
        %v3233 = vmax.f32 %v3205, 0.0
        %v3234 = vmax.f32 %v3208, 0.0
        %3259 = vrot.lane.b32.xlu0 %v3117, 64
        %v3260 = vpop.permute.xlu0 %3259
        %3261 = vrot.lane.b32.xlu0 %v3120, 64
        %v3262 = vpop.permute.xlu0 %3261
        %3263 = vrot.lane.b32.xlu0 %v3125, 64
        %v3264 = vpop.permute.xlu0 %3263
        %3265 = vrot.lane.b32.xlu0 %v3128, 64
        %v3266 = vpop.permute.xlu0 %3265
        %3267 = vrot.lane.b32.xlu0 %v3133, 64
        %v3268 = vpop.permute.xlu0 %3267
        %3269 = vrot.lane.b32.xlu0 %v3136, 64
        %v3270 = vpop.permute.xlu0 %3269
        %3271 = vrot.lane.b32.xlu0 %v3141, 64
        %v3272 = vpop.permute.xlu0 %3271
        %3273 = vrot.lane.b32.xlu0 %v3144, 64
        %v3274 = vpop.permute.xlu0 %3273
        %3275 = vrot.lane.b32.xlu0 %v3149, 64
        %v3276 = vpop.permute.xlu0 %3275
        %3277 = vrot.lane.b32.xlu0 %v3152, 64
        %v3278 = vpop.permute.xlu0 %3277
        %3279 = vrot.lane.b32.xlu0 %v3157, 64
        %v3280 = vpop.permute.xlu0 %3279
        %3281 = vrot.lane.b32.xlu0 %v3160, 64
        %v3282 = vpop.permute.xlu0 %3281
        %3283 = vrot.lane.b32.xlu0 %v3165, 64
        %v3284 = vpop.permute.xlu0 %3283
        %3285 = vrot.lane.b32.xlu0 %v3168, 64
        %v3286 = vpop.permute.xlu0 %3285
        %3287 = vrot.lane.b32.xlu0 %v3173, 64
        %v3288 = vpop.permute.xlu0 %3287
        %3289 = vrot.lane.b32.xlu0 %v3176, 64
        %v3290 = vpop.permute.xlu0 %3289
        %3291 = vrot.lane.b32.xlu0 %v3181, 64
        %v3292 = vpop.permute.xlu0 %3291
        %3293 = vrot.lane.b32.xlu0 %v3184, 64
        %v3294 = vpop.permute.xlu0 %3293
        %3295 = vrot.lane.b32.xlu0 %v3189, 64
        %v3296 = vpop.permute.xlu0 %3295
        %3297 = vrot.lane.b32.xlu0 %v3192, 64
        %v3298 = vpop.permute.xlu0 %3297
        %3299 = vrot.lane.b32.xlu0 %v3197, 64
        %v3300 = vpop.permute.xlu0 %3299
        %3301 = vrot.lane.b32.xlu0 %v3200, 64
        %v3302 = vpop.permute.xlu0 %3301
        %3303 = vrot.lane.b32.xlu0 %v3205, 64
        %v3304 = vpop.permute.xlu0 %3303
        %3305 = vrot.lane.b32.xlu0 %v3208, 64
        %v3306 = vpop.permute.xlu0 %3305
        %v3331 = vadd.f32 %v3211, %v3260
        %v3332 = vadd.f32 %v3212, %v3262
        %v3333 = vadd.f32 %v3213, %v3264
        %v3334 = vadd.f32 %v3214, %v3266
        %v3335 = vadd.f32 %v3215, %v3268
        %v3336 = vadd.f32 %v3216, %v3270
        %v3337 = vadd.f32 %v3217, %v3272
        %v3338 = vadd.f32 %v3218, %v3274
        %v3339 = vadd.f32 %v3219, %v3276
        %v3340 = vadd.f32 %v3220, %v3278
        %v3341 = vadd.f32 %v3221, %v3280
        %v3342 = vadd.f32 %v3222, %v3282
        %v3343 = vadd.f32 %v3223, %v3284
        %v3344 = vadd.f32 %v3224, %v3286
        %v3345 = vadd.f32 %v3225, %v3288
        %v3346 = vadd.f32 %v3226, %v3290
        %v3347 = vadd.f32 %v3227, %v3292
        %v3348 = vadd.f32 %v3228, %v3294
        %v3349 = vadd.f32 %v3229, %v3296
        %v3350 = vadd.f32 %v3230, %v3298
        %v3351 = vadd.f32 %v3231, %v3300
        %v3352 = vadd.f32 %v3232, %v3302
        %v3353 = vadd.f32 %v3233, %v3304
        %v3354 = vadd.f32 %v3234, %v3306
        %v3355 = vmul.f32 %v3331, %v1343
        %v3356 = vmul.f32 %v3332, %v1344
        %v3357 = vmul.f32 %v3333, %v1345
        %v3358 = vmul.f32 %v3334, %v1346
        %v3359 = vmul.f32 %v3335, %v1347
        %v3360 = vmul.f32 %v3336, %v1348
        %v3361 = vmul.f32 %v3337, %v1349
        %v3362 = vmul.f32 %v3338, %v1350
        %v3363 = vmul.f32 %v3339, %v1351
        %v3364 = vmul.f32 %v3340, %v1352
        %v3365 = vmul.f32 %v3341, %v1353
        %v3366 = vmul.f32 %v3342, %v1354
        %v3367 = vmul.f32 %v3343, %v1355
        %v3368 = vmul.f32 %v3344, %v1356
        %v3369 = vmul.f32 %v3345, %v1357
        %v3370 = vmul.f32 %v3346, %v1358
        %v3371 = vmul.f32 %v3347, %v1359
        %v3372 = vmul.f32 %v3348, %v1360
        %v3373 = vmul.f32 %v3349, %v1361
        %v3374 = vmul.f32 %v3350, %v1362
        %v3375 = vmul.f32 %v3351, %v1363
        %v3376 = vmul.f32 %v3352, %v1364
        %v3377 = vmul.f32 %v3353, %v1365
        %v3378 = vmul.f32 %v3354, %v1366
        %3379 = vst.msk [vmem:[#allocation2 + $0x4] sm:$0xff] %vm1707, %v3355
        %3380 = vst.msk [vmem:[#allocation2 + $0xc] sm:$0xff] %vm1707, %v3356
        %3381 = vst.msk [vmem:[#allocation2 + $0x14] sm:$0xff] %vm1707, %v3357
        %3382 = vst.msk [vmem:[#allocation2 + $0x1c] sm:$0xff] %vm1707, %v3358
        %3383 = vst.msk [vmem:[#allocation2 + $0x24] sm:$0xff] %vm1707, %v3359
        %3384 = vst.msk [vmem:[#allocation2 + $0x2c] sm:$0xff] %vm1707, %v3360
        %3385 = vst.msk [vmem:[#allocation2 + $0x34] sm:$0xff] %vm1707, %v3361
        %3386 = vst.msk [vmem:[#allocation2 + $0x3c] sm:$0xff] %vm1707, %v3362
        %3387 = vst.msk [vmem:[#allocation2 + $0x44] sm:$0xff] %vm1707, %v3363
        %3388 = vst.msk [vmem:[#allocation2 + $0x4c] sm:$0xff] %vm1707, %v3364
        %3389 = vst.msk [vmem:[#allocation2 + $0x54] sm:$0xff] %vm1707, %v3365
        %3390 = vst.msk [vmem:[#allocation2 + $0x5c] sm:$0xff] %vm1707, %v3366
        %3391 = vst.msk [vmem:[#allocation2 + $0x64] sm:$0xff] %vm1707, %v3367
        %3392 = vst.msk [vmem:[#allocation2 + $0x6c] sm:$0xff] %vm1707, %v3368
        %3393 = vst.msk [vmem:[#allocation2 + $0x74] sm:$0xff] %vm1707, %v3369
        %3394 = vst.msk [vmem:[#allocation2 + $0x7c] sm:$0xff] %vm1707, %v3370
        %3395 = vst.msk [vmem:[#allocation2 + $0x84] sm:$0xff] %vm1707, %v3371
        %3396 = vst.msk [vmem:[#allocation2 + $0x8c] sm:$0xff] %vm1707, %v3372
        %3397 = vst.msk [vmem:[#allocation2 + $0x94] sm:$0xff] %vm1707, %v3373
        %3398 = vst.msk [vmem:[#allocation2 + $0x9c] sm:$0xff] %vm1707, %v3374
        %3399 = vst.msk [vmem:[#allocation2 + $0xa4] sm:$0xff] %vm1707, %v3375
        %3400 = vst.msk [vmem:[#allocation2 + $0xac] sm:$0xff] %vm1707, %v3376
        %3401 = vst.msk [vmem:[#allocation2 + $0xb4] sm:$0xff] %vm1707, %v3377
        %3402 = vst.msk [vmem:[#allocation2 + $0xbc] sm:$0xff] %vm1707, %v3378
        %v3403 = vld [vmem:[#allocation2 + $0x1] sm:$0xff]
        %v3404 = vld [vmem:[#allocation2 + $0x9] sm:$0xff]
        %v3405 = vld [vmem:[#allocation2 + $0x11] sm:$0xff]
        %v3406 = vld [vmem:[#allocation2 + $0x19] sm:$0xff]
        %v3407 = vld [vmem:[#allocation2 + $0x21] sm:$0xff]
        %v3408 = vld [vmem:[#allocation2 + $0x29] sm:$0xff]
        %v3409 = vld [vmem:[#allocation2 + $0x31] sm:$0xff]
        %v3410 = vld [vmem:[#allocation2 + $0x39] sm:$0xff]
        %v3411 = vld [vmem:[#allocation2 + $0x41] sm:$0xff]
        %v3412 = vld [vmem:[#allocation2 + $0x49] sm:$0xff]
        %v3413 = vld [vmem:[#allocation2 + $0x51] sm:$0xff]
        %v3414 = vld [vmem:[#allocation2 + $0x59] sm:$0xff]
        %v3415 = vld [vmem:[#allocation2 + $0x61] sm:$0xff]
        %v3416 = vld [vmem:[#allocation2 + $0x69] sm:$0xff]
        %v3417 = vld [vmem:[#allocation2 + $0x71] sm:$0xff]
        %v3418 = vld [vmem:[#allocation2 + $0x79] sm:$0xff]
        %v3419 = vld [vmem:[#allocation2 + $0x81] sm:$0xff]
        %v3420 = vld [vmem:[#allocation2 + $0x89] sm:$0xff]
        %v3421 = vld [vmem:[#allocation2 + $0x91] sm:$0xff]
        %v3422 = vld [vmem:[#allocation2 + $0x99] sm:$0xff]
        %v3423 = vld [vmem:[#allocation2 + $0xa1] sm:$0xff]
        %v3424 = vld [vmem:[#allocation2 + $0xa9] sm:$0xff]
        %v3425 = vld [vmem:[#allocation2 + $0xb1] sm:$0xff]
        %v3426 = vld [vmem:[#allocation2 + $0xb9] sm:$0xff]
        %v3427 = vld [vmem:[#allocation2 + $0x2] sm:$0xff]
        %v3428 = vld [vmem:[#allocation2 + $0xa] sm:$0xff]
        %v3429 = vld [vmem:[#allocation2 + $0x12] sm:$0xff]
        %v3430 = vld [vmem:[#allocation2 + $0x1a] sm:$0xff]
        %v3431 = vld [vmem:[#allocation2 + $0x22] sm:$0xff]
        %v3432 = vld [vmem:[#allocation2 + $0x2a] sm:$0xff]
        %v3433 = vld [vmem:[#allocation2 + $0x32] sm:$0xff]
        %v3434 = vld [vmem:[#allocation2 + $0x3a] sm:$0xff]
        %v3435 = vld [vmem:[#allocation2 + $0x42] sm:$0xff]
        %v3436 = vld [vmem:[#allocation2 + $0x4a] sm:$0xff]
        %v3437 = vld [vmem:[#allocation2 + $0x52] sm:$0xff]
        %v3438 = vld [vmem:[#allocation2 + $0x5a] sm:$0xff]
        %v3439 = vld [vmem:[#allocation2 + $0x62] sm:$0xff]
        %v3440 = vld [vmem:[#allocation2 + $0x6a] sm:$0xff]
        %v3441 = vld [vmem:[#allocation2 + $0x72] sm:$0xff]
        %v3442 = vld [vmem:[#allocation2 + $0x7a] sm:$0xff]
        %v3443 = vld [vmem:[#allocation2 + $0x82] sm:$0xff]
        %v3444 = vld [vmem:[#allocation2 + $0x8a] sm:$0xff]
        %v3445 = vld [vmem:[#allocation2 + $0x92] sm:$0xff]
        %v3446 = vld [vmem:[#allocation2 + $0x9a] sm:$0xff]
        %v3447 = vld [vmem:[#allocation2 + $0xa2] sm:$0xff]
        %v3448 = vld [vmem:[#allocation2 + $0xaa] sm:$0xff]
        %v3449 = vld [vmem:[#allocation2 + $0xb2] sm:$0xff]
        %v3450 = vld [vmem:[#allocation2 + $0xba] sm:$0xff]
        %v3451 = vld [vmem:[#allocation2 + $0x3] sm:$0xff]
        %v3452 = vld [vmem:[#allocation2 + $0xb] sm:$0xff]
        %v3453 = vld [vmem:[#allocation2 + $0x13] sm:$0xff]
        %v3454 = vld [vmem:[#allocation2 + $0x1b] sm:$0xff]
        %v3455 = vld [vmem:[#allocation2 + $0x23] sm:$0xff]
        %v3456 = vld [vmem:[#allocation2 + $0x2b] sm:$0xff]
        %v3457 = vld [vmem:[#allocation2 + $0x33] sm:$0xff]
        %v3458 = vld [vmem:[#allocation2 + $0x3b] sm:$0xff]
        %v3459 = vld [vmem:[#allocation2 + $0x43] sm:$0xff]
        %v3460 = vld [vmem:[#allocation2 + $0x4b] sm:$0xff]
        %v3461 = vld [vmem:[#allocation2 + $0x53] sm:$0xff]
        %v3462 = vld [vmem:[#allocation2 + $0x5b] sm:$0xff]
        %v3463 = vld [vmem:[#allocation2 + $0x63] sm:$0xff]
        %v3464 = vld [vmem:[#allocation2 + $0x6b] sm:$0xff]
        %v3465 = vld [vmem:[#allocation2 + $0x73] sm:$0xff]
        %v3466 = vld [vmem:[#allocation2 + $0x7b] sm:$0xff]
        %v3467 = vld [vmem:[#allocation2 + $0x83] sm:$0xff]
        %v3468 = vld [vmem:[#allocation2 + $0x8b] sm:$0xff]
        %v3469 = vld [vmem:[#allocation2 + $0x93] sm:$0xff]
        %v3470 = vld [vmem:[#allocation2 + $0x9b] sm:$0xff]
        %v3471 = vld [vmem:[#allocation2 + $0xa3] sm:$0xff]
        %v3472 = vld [vmem:[#allocation2 + $0xab] sm:$0xff]
        %v3473 = vld [vmem:[#allocation2 + $0xb3] sm:$0xff]
        %v3474 = vld [vmem:[#allocation2 + $0xbb] sm:$0xff]
        %v3475 = vld [vmem:[#allocation2 + $0x4] sm:$0xff]
        %v3476 = vld [vmem:[#allocation2 + $0xc] sm:$0xff]
        %v3477 = vld [vmem:[#allocation2 + $0x14] sm:$0xff]
        %v3478 = vld [vmem:[#allocation2 + $0x1c] sm:$0xff]
        %v3479 = vld [vmem:[#allocation2 + $0x24] sm:$0xff]
        %v3480 = vld [vmem:[#allocation2 + $0x2c] sm:$0xff]
        %v3481 = vld [vmem:[#allocation2 + $0x34] sm:$0xff]
        %v3482 = vld [vmem:[#allocation2 + $0x3c] sm:$0xff]
        %v3483 = vld [vmem:[#allocation2 + $0x44] sm:$0xff]
        %v3484 = vld [vmem:[#allocation2 + $0x4c] sm:$0xff]
        %v3485 = vld [vmem:[#allocation2 + $0x54] sm:$0xff]
        %v3486 = vld [vmem:[#allocation2 + $0x5c] sm:$0xff]
        %v3487 = vld [vmem:[#allocation2 + $0x64] sm:$0xff]
        %v3488 = vld [vmem:[#allocation2 + $0x6c] sm:$0xff]
        %v3489 = vld [vmem:[#allocation2 + $0x74] sm:$0xff]
        %v3490 = vld [vmem:[#allocation2 + $0x7c] sm:$0xff]
        %v3491 = vld [vmem:[#allocation2 + $0x84] sm:$0xff]
        %v3492 = vld [vmem:[#allocation2 + $0x8c] sm:$0xff]
        %v3493 = vld [vmem:[#allocation2 + $0x94] sm:$0xff]
        %v3494 = vld [vmem:[#allocation2 + $0x9c] sm:$0xff]
        %v3495 = vld [vmem:[#allocation2 + $0xa4] sm:$0xff]
        %v3496 = vld [vmem:[#allocation2 + $0xac] sm:$0xff]
        %v3497 = vld [vmem:[#allocation2 + $0xb4] sm:$0xff]
        %v3498 = vld [vmem:[#allocation2 + $0xbc] sm:$0xff]
        %v3499 = vld [vmem:[#allocation2 + $0x5] sm:$0xff]
        %v3500 = vld [vmem:[#allocation2 + $0xd] sm:$0xff]
        %v3501 = vld [vmem:[#allocation2 + $0x15] sm:$0xff]
        %v3502 = vld [vmem:[#allocation2 + $0x1d] sm:$0xff]
        %v3503 = vld [vmem:[#allocation2 + $0x25] sm:$0xff]
        %v3504 = vld [vmem:[#allocation2 + $0x2d] sm:$0xff]
        %v3505 = vld [vmem:[#allocation2 + $0x35] sm:$0xff]
        %v3506 = vld [vmem:[#allocation2 + $0x3d] sm:$0xff]
        %v3507 = vld [vmem:[#allocation2 + $0x45] sm:$0xff]
        %v3508 = vld [vmem:[#allocation2 + $0x4d] sm:$0xff]
        %v3509 = vld [vmem:[#allocation2 + $0x55] sm:$0xff]
        %v3510 = vld [vmem:[#allocation2 + $0x5d] sm:$0xff]
        %v3511 = vld [vmem:[#allocation2 + $0x65] sm:$0xff]
        %v3512 = vld [vmem:[#allocation2 + $0x6d] sm:$0xff]
        %v3513 = vld [vmem:[#allocation2 + $0x75] sm:$0xff]
        %v3514 = vld [vmem:[#allocation2 + $0x7d] sm:$0xff]
        %v3515 = vld [vmem:[#allocation2 + $0x85] sm:$0xff]
        %v3516 = vld [vmem:[#allocation2 + $0x8d] sm:$0xff]
        %v3517 = vld [vmem:[#allocation2 + $0x95] sm:$0xff]
        %v3518 = vld [vmem:[#allocation2 + $0x9d] sm:$0xff]
        %v3519 = vld [vmem:[#allocation2 + $0xa5] sm:$0xff]
        %v3520 = vld [vmem:[#allocation2 + $0xad] sm:$0xff]
        %v3521 = vld [vmem:[#allocation2 + $0xb5] sm:$0xff]
        %v3522 = vld [vmem:[#allocation2 + $0xbd] sm:$0xff]
        %v3523 = vld [vmem:[#allocation2 + $0x6] sm:$0xff]
        %v3524 = vld [vmem:[#allocation2 + $0xe] sm:$0xff]
        %v3525 = vld [vmem:[#allocation2 + $0x16] sm:$0xff]
        %v3526 = vld [vmem:[#allocation2 + $0x1e] sm:$0xff]
        %v3527 = vld [vmem:[#allocation2 + $0x26] sm:$0xff]
        %v3528 = vld [vmem:[#allocation2 + $0x2e] sm:$0xff]
        %v3529 = vld [vmem:[#allocation2 + $0x36] sm:$0xff]
        %v3530 = vld [vmem:[#allocation2 + $0x3e] sm:$0xff]
        %v3531 = vld [vmem:[#allocation2 + $0x46] sm:$0xff]
        %v3532 = vld [vmem:[#allocation2 + $0x4e] sm:$0xff]
        %v3533 = vld [vmem:[#allocation2 + $0x56] sm:$0xff]
        %v3534 = vld [vmem:[#allocation2 + $0x5e] sm:$0xff]
        %v3535 = vld [vmem:[#allocation2 + $0x66] sm:$0xff]
        %v3536 = vld [vmem:[#allocation2 + $0x6e] sm:$0xff]
        %v3537 = vld [vmem:[#allocation2 + $0x76] sm:$0xff]
        %v3538 = vld [vmem:[#allocation2 + $0x7e] sm:$0xff]
        %v3539 = vld [vmem:[#allocation2 + $0x86] sm:$0xff]
        %v3540 = vld [vmem:[#allocation2 + $0x8e] sm:$0xff]
        %v3541 = vld [vmem:[#allocation2 + $0x96] sm:$0xff]
        %v3542 = vld [vmem:[#allocation2 + $0x9e] sm:$0xff]
        %v3543 = vld [vmem:[#allocation2 + $0xa6] sm:$0xff]
        %v3544 = vld [vmem:[#allocation2 + $0xae] sm:$0xff]
        %v3545 = vld [vmem:[#allocation2 + $0xb6] sm:$0xff]
        %v3546 = vld [vmem:[#allocation2 + $0xbe] sm:$0xff]
        %v3547 = vld [vmem:[#allocation2 + $0x7] sm:$0xff]
        %v3548 = vld [vmem:[#allocation2 + $0xf] sm:$0xff]
        %v3549 = vld [vmem:[#allocation2 + $0x17] sm:$0xff]
        %v3550 = vld [vmem:[#allocation2 + $0x1f] sm:$0xff]
        %v3551 = vld [vmem:[#allocation2 + $0x27] sm:$0xff]
        %v3552 = vld [vmem:[#allocation2 + $0x2f] sm:$0xff]
        %v3553 = vld [vmem:[#allocation2 + $0x37] sm:$0xff]
        %v3554 = vld [vmem:[#allocation2 + $0x3f] sm:$0xff]
        %v3555 = vld [vmem:[#allocation2 + $0x47] sm:$0xff]
        %v3556 = vld [vmem:[#allocation2 + $0x4f] sm:$0xff]
        %v3557 = vld [vmem:[#allocation2 + $0x57] sm:$0xff]
        %v3558 = vld [vmem:[#allocation2 + $0x5f] sm:$0xff]
        %v3559 = vld [vmem:[#allocation2 + $0x67] sm:$0xff]
        %v3560 = vld [vmem:[#allocation2 + $0x6f] sm:$0xff]
        %v3561 = vld [vmem:[#allocation2 + $0x77] sm:$0xff]
        %v3562 = vld [vmem:[#allocation2 + $0x7f] sm:$0xff]
        %v3563 = vld [vmem:[#allocation2 + $0x87] sm:$0xff]
        %v3564 = vld [vmem:[#allocation2 + $0x8f] sm:$0xff]
        %v3565 = vld [vmem:[#allocation2 + $0x97] sm:$0xff]
        %v3566 = vld [vmem:[#allocation2 + $0x9f] sm:$0xff]
        %v3567 = vld [vmem:[#allocation2 + $0xa7] sm:$0xff]
        %v3568 = vld [vmem:[#allocation2 + $0xaf] sm:$0xff]
        %v3569 = vld [vmem:[#allocation2 + $0xb7] sm:$0xff]
        %v3570 = vld [vmem:[#allocation2 + $0xbf] sm:$0xff]
        %3595 = vrot.lane.b32.xlu0 %v3427, 64
        %v3596 = vpop.permute.xlu0 %3595
        %3597 = vrot.lane.b32.xlu0 %v3428, 64
        %v3598 = vpop.permute.xlu0 %3597
        %3599 = vrot.lane.b32.xlu0 %v3429, 64
        %v3600 = vpop.permute.xlu0 %3599
        %3601 = vrot.lane.b32.xlu0 %v3430, 64
        %v3602 = vpop.permute.xlu0 %3601
        %3603 = vrot.lane.b32.xlu0 %v3431, 64
        %v3604 = vpop.permute.xlu0 %3603
        %3605 = vrot.lane.b32.xlu0 %v3432, 64
        %v3606 = vpop.permute.xlu0 %3605
        %3607 = vrot.lane.b32.xlu0 %v3433, 64
        %v3608 = vpop.permute.xlu0 %3607
        %3609 = vrot.lane.b32.xlu0 %v3434, 64
        %v3610 = vpop.permute.xlu0 %3609
        %3611 = vrot.lane.b32.xlu0 %v3435, 64
        %v3612 = vpop.permute.xlu0 %3611
        %3613 = vrot.lane.b32.xlu0 %v3436, 64
        %v3614 = vpop.permute.xlu0 %3613
        %3615 = vrot.lane.b32.xlu0 %v3437, 64
        %v3616 = vpop.permute.xlu0 %3615
        %3617 = vrot.lane.b32.xlu0 %v3438, 64
        %v3618 = vpop.permute.xlu0 %3617
        %3619 = vrot.lane.b32.xlu0 %v3439, 64
        %v3620 = vpop.permute.xlu0 %3619
        %3621 = vrot.lane.b32.xlu0 %v3440, 64
        %v3622 = vpop.permute.xlu0 %3621
        %3623 = vrot.lane.b32.xlu0 %v3441, 64
        %v3624 = vpop.permute.xlu0 %3623
        %3625 = vrot.lane.b32.xlu0 %v3442, 64
        %v3626 = vpop.permute.xlu0 %3625
        %3627 = vrot.lane.b32.xlu0 %v3443, 64
        %v3628 = vpop.permute.xlu0 %3627
        %3629 = vrot.lane.b32.xlu0 %v3444, 64
        %v3630 = vpop.permute.xlu0 %3629
        %3631 = vrot.lane.b32.xlu0 %v3445, 64
        %v3632 = vpop.permute.xlu0 %3631
        %3633 = vrot.lane.b32.xlu0 %v3446, 64
        %v3634 = vpop.permute.xlu0 %3633
        %3635 = vrot.lane.b32.xlu0 %v3447, 64
        %v3636 = vpop.permute.xlu0 %3635
        %3637 = vrot.lane.b32.xlu0 %v3448, 64
        %v3638 = vpop.permute.xlu0 %3637
        %3639 = vrot.lane.b32.xlu0 %v3449, 64
        %v3640 = vpop.permute.xlu0 %3639
        %3641 = vrot.lane.b32.xlu0 %v3450, 64
        %v3642 = vpop.permute.xlu0 %3641
        %3691 = vrot.lane.b32.xlu0 %v3475, 64
        %v3692 = vpop.permute.xlu0 %3691
        %3693 = vrot.lane.b32.xlu0 %v3476, 64
        %v3694 = vpop.permute.xlu0 %3693
        %3695 = vrot.lane.b32.xlu0 %v3477, 64
        %v3696 = vpop.permute.xlu0 %3695
        %3697 = vrot.lane.b32.xlu0 %v3478, 64
        %v3698 = vpop.permute.xlu0 %3697
        %3699 = vrot.lane.b32.xlu0 %v3479, 64
        %v3700 = vpop.permute.xlu0 %3699
        %3701 = vrot.lane.b32.xlu0 %v3480, 64
        %v3702 = vpop.permute.xlu0 %3701
        %3703 = vrot.lane.b32.xlu0 %v3481, 64
        %v3704 = vpop.permute.xlu0 %3703
        %3705 = vrot.lane.b32.xlu0 %v3482, 64
        %v3706 = vpop.permute.xlu0 %3705
        %3707 = vrot.lane.b32.xlu0 %v3483, 64
        %v3708 = vpop.permute.xlu0 %3707
        %3709 = vrot.lane.b32.xlu0 %v3484, 64
        %v3710 = vpop.permute.xlu0 %3709
        %3711 = vrot.lane.b32.xlu0 %v3485, 64
        %v3712 = vpop.permute.xlu0 %3711
        %3713 = vrot.lane.b32.xlu0 %v3486, 64
        %v3714 = vpop.permute.xlu0 %3713
        %3715 = vrot.lane.b32.xlu0 %v3487, 64
        %v3716 = vpop.permute.xlu0 %3715
        %3717 = vrot.lane.b32.xlu0 %v3488, 64
        %v3718 = vpop.permute.xlu0 %3717
        %3719 = vrot.lane.b32.xlu0 %v3489, 64
        %v3720 = vpop.permute.xlu0 %3719
        %3721 = vrot.lane.b32.xlu0 %v3490, 64
        %v3722 = vpop.permute.xlu0 %3721
        %3723 = vrot.lane.b32.xlu0 %v3491, 64
        %v3724 = vpop.permute.xlu0 %3723
        %3725 = vrot.lane.b32.xlu0 %v3492, 64
        %v3726 = vpop.permute.xlu0 %3725
        %3727 = vrot.lane.b32.xlu0 %v3493, 64
        %v3728 = vpop.permute.xlu0 %3727
        %3729 = vrot.lane.b32.xlu0 %v3494, 64
        %v3730 = vpop.permute.xlu0 %3729
        %3731 = vrot.lane.b32.xlu0 %v3495, 64
        %v3732 = vpop.permute.xlu0 %3731
        %3733 = vrot.lane.b32.xlu0 %v3496, 64
        %v3734 = vpop.permute.xlu0 %3733
        %3735 = vrot.lane.b32.xlu0 %v3497, 64
        %v3736 = vpop.permute.xlu0 %3735
        %3737 = vrot.lane.b32.xlu0 %v3498, 64
        %v3738 = vpop.permute.xlu0 %3737
        %3787 = vrot.lane.b32.xlu0 %v3523, 64
        %v3788 = vpop.permute.xlu0 %3787
        %3789 = vrot.lane.b32.xlu0 %v3524, 64
        %v3790 = vpop.permute.xlu0 %3789
        %3791 = vrot.lane.b32.xlu0 %v3525, 64
        %v3792 = vpop.permute.xlu0 %3791
        %3793 = vrot.lane.b32.xlu0 %v3526, 64
        %v3794 = vpop.permute.xlu0 %3793
        %3795 = vrot.lane.b32.xlu0 %v3527, 64
        %v3796 = vpop.permute.xlu0 %3795
        %3797 = vrot.lane.b32.xlu0 %v3528, 64
        %v3798 = vpop.permute.xlu0 %3797
        %3799 = vrot.lane.b32.xlu0 %v3529, 64
        %v3800 = vpop.permute.xlu0 %3799
        %3801 = vrot.lane.b32.xlu0 %v3530, 64
        %v3802 = vpop.permute.xlu0 %3801
        %3803 = vrot.lane.b32.xlu0 %v3531, 64
        %v3804 = vpop.permute.xlu0 %3803
        %3805 = vrot.lane.b32.xlu0 %v3532, 64
        %v3806 = vpop.permute.xlu0 %3805
        %3807 = vrot.lane.b32.xlu0 %v3533, 64
        %v3808 = vpop.permute.xlu0 %3807
        %3809 = vrot.lane.b32.xlu0 %v3534, 64
        %v3810 = vpop.permute.xlu0 %3809
        %3811 = vrot.lane.b32.xlu0 %v3535, 64
        %v3812 = vpop.permute.xlu0 %3811
        %3813 = vrot.lane.b32.xlu0 %v3536, 64
        %v3814 = vpop.permute.xlu0 %3813
        %3815 = vrot.lane.b32.xlu0 %v3537, 64
        %v3816 = vpop.permute.xlu0 %3815
        %3817 = vrot.lane.b32.xlu0 %v3538, 64
        %v3818 = vpop.permute.xlu0 %3817
        %3819 = vrot.lane.b32.xlu0 %v3539, 64
        %v3820 = vpop.permute.xlu0 %3819
        %3821 = vrot.lane.b32.xlu0 %v3540, 64
        %v3822 = vpop.permute.xlu0 %3821
        %3823 = vrot.lane.b32.xlu0 %v3541, 64
        %v3824 = vpop.permute.xlu0 %3823
        %3825 = vrot.lane.b32.xlu0 %v3542, 64
        %v3826 = vpop.permute.xlu0 %3825
        %3827 = vrot.lane.b32.xlu0 %v3543, 64
        %v3828 = vpop.permute.xlu0 %3827
        %3829 = vrot.lane.b32.xlu0 %v3544, 64
        %v3830 = vpop.permute.xlu0 %3829
        %3831 = vrot.lane.b32.xlu0 %v3545, 64
        %v3832 = vpop.permute.xlu0 %3831
        %3833 = vrot.lane.b32.xlu0 %v3546, 64
        %v3834 = vpop.permute.xlu0 %3833
        %v3859 = vsel %vm1707, %v3403, %v3596
        %v3860 = vsel %vm1707, %v3404, %v3598
        %v3861 = vsel %vm1707, %v3405, %v3600
        %v3862 = vsel %vm1707, %v3406, %v3602
        %v3863 = vsel %vm1707, %v3407, %v3604
        %v3864 = vsel %vm1707, %v3408, %v3606
        %v3865 = vsel %vm1707, %v3409, %v3608
        %v3866 = vsel %vm1707, %v3410, %v3610
        %v3867 = vsel %vm1707, %v3411, %v3612
        %v3868 = vsel %vm1707, %v3412, %v3614
        %v3869 = vsel %vm1707, %v3413, %v3616
        %v3870 = vsel %vm1707, %v3414, %v3618
        %v3871 = vsel %vm1707, %v3415, %v3620
        %v3872 = vsel %vm1707, %v3416, %v3622
        %v3873 = vsel %vm1707, %v3417, %v3624
        %v3874 = vsel %vm1707, %v3418, %v3626
        %v3875 = vsel %vm1707, %v3419, %v3628
        %v3876 = vsel %vm1707, %v3420, %v3630
        %v3877 = vsel %vm1707, %v3421, %v3632
        %v3878 = vsel %vm1707, %v3422, %v3634
        %v3879 = vsel %vm1707, %v3423, %v3636
        %v3880 = vsel %vm1707, %v3424, %v3638
        %v3881 = vsel %vm1707, %v3425, %v3640
        %v3882 = vsel %vm1707, %v3426, %v3642
        %v3883 = vsel %vm1707, %v3451, %v3692
        %v3884 = vsel %vm1707, %v3452, %v3694
        %v3885 = vsel %vm1707, %v3453, %v3696
        %v3886 = vsel %vm1707, %v3454, %v3698
        %v3887 = vsel %vm1707, %v3455, %v3700
        %v3888 = vsel %vm1707, %v3456, %v3702
        %v3889 = vsel %vm1707, %v3457, %v3704
        %v3890 = vsel %vm1707, %v3458, %v3706
        %v3891 = vsel %vm1707, %v3459, %v3708
        %v3892 = vsel %vm1707, %v3460, %v3710
        %v3893 = vsel %vm1707, %v3461, %v3712
        %v3894 = vsel %vm1707, %v3462, %v3714
        %v3895 = vsel %vm1707, %v3463, %v3716
        %v3896 = vsel %vm1707, %v3464, %v3718
        %v3897 = vsel %vm1707, %v3465, %v3720
        %v3898 = vsel %vm1707, %v3466, %v3722
        %v3899 = vsel %vm1707, %v3467, %v3724
        %v3900 = vsel %vm1707, %v3468, %v3726
        %v3901 = vsel %vm1707, %v3469, %v3728
        %v3902 = vsel %vm1707, %v3470, %v3730
        %v3903 = vsel %vm1707, %v3471, %v3732
        %v3904 = vsel %vm1707, %v3472, %v3734
        %v3905 = vsel %vm1707, %v3473, %v3736
        %v3906 = vsel %vm1707, %v3474, %v3738
        %v3907 = vsel %vm1707, %v3499, %v3788
        %v3908 = vsel %vm1707, %v3500, %v3790
        %v3909 = vsel %vm1707, %v3501, %v3792
        %v3910 = vsel %vm1707, %v3502, %v3794
        %v3911 = vsel %vm1707, %v3503, %v3796
        %v3912 = vsel %vm1707, %v3504, %v3798
        %v3913 = vsel %vm1707, %v3505, %v3800
        %v3914 = vsel %vm1707, %v3506, %v3802
        %v3915 = vsel %vm1707, %v3507, %v3804
        %v3916 = vsel %vm1707, %v3508, %v3806
        %v3917 = vsel %vm1707, %v3509, %v3808
        %v3918 = vsel %vm1707, %v3510, %v3810
        %v3919 = vsel %vm1707, %v3511, %v3812
        %v3920 = vsel %vm1707, %v3512, %v3814
        %v3921 = vsel %vm1707, %v3513, %v3816
        %v3922 = vsel %vm1707, %v3514, %v3818
        %v3923 = vsel %vm1707, %v3515, %v3820
        %v3924 = vsel %vm1707, %v3516, %v3822
        %v3925 = vsel %vm1707, %v3517, %v3824
        %v3926 = vsel %vm1707, %v3518, %v3826
        %v3927 = vsel %vm1707, %v3519, %v3828
        %v3928 = vsel %vm1707, %v3520, %v3830
        %v3929 = vsel %vm1707, %v3521, %v3832
        %v3930 = vsel %vm1707, %v3522, %v3834
        %v3931 = vpack.c.bf16 %v3860, %v3859
        %v3932 = vpack.c.bf16 %v3884, %v3883
        %v3933 = vpack.c.bf16 %v3908, %v3907
        %v3934 = vpack.c.bf16 %v3548, %v3547
        %v3935 = vpack.c.bf16 %v3862, %v3861
        %v3936 = vpack.c.bf16 %v3886, %v3885
        %v3937 = vpack.c.bf16 %v3910, %v3909
        %v3938 = vpack.c.bf16 %v3550, %v3549
        %v3939 = vpack.c.bf16 %v3864, %v3863
        %v3940 = vpack.c.bf16 %v3888, %v3887
        %v3941 = vpack.c.bf16 %v3912, %v3911
        %v3942 = vpack.c.bf16 %v3552, %v3551
        %v3943 = vpack.c.bf16 %v3866, %v3865
        %v3944 = vpack.c.bf16 %v3890, %v3889
        %v3945 = vpack.c.bf16 %v3914, %v3913
        %v3946 = vpack.c.bf16 %v3554, %v3553
        %v3947 = vpack.c.bf16 %v3868, %v3867
        %v3948 = vpack.c.bf16 %v3892, %v3891
        %v3949 = vpack.c.bf16 %v3916, %v3915
        %v3950 = vpack.c.bf16 %v3556, %v3555
        %v3951 = vpack.c.bf16 %v3870, %v3869
        %v3952 = vpack.c.bf16 %v3894, %v3893
        %v3953 = vpack.c.bf16 %v3918, %v3917
        %v3954 = vpack.c.bf16 %v3558, %v3557
        %v3955 = vpack.c.bf16 %v3872, %v3871
        %v3956 = vpack.c.bf16 %v3896, %v3895
        %v3957 = vpack.c.bf16 %v3920, %v3919
        %v3958 = vpack.c.bf16 %v3560, %v3559
        %v3959 = vpack.c.bf16 %v3874, %v3873
        %v3960 = vpack.c.bf16 %v3898, %v3897
        %v3961 = vpack.c.bf16 %v3922, %v3921
        %v3962 = vpack.c.bf16 %v3562, %v3561
        %v3963 = vpack.c.bf16 %v3876, %v3875
        %v3964 = vpack.c.bf16 %v3900, %v3899
        %v3965 = vpack.c.bf16 %v3924, %v3923
        %v3966 = vpack.c.bf16 %v3564, %v3563
        %v3967 = vpack.c.bf16 %v3878, %v3877
        %v3968 = vpack.c.bf16 %v3902, %v3901
        %v3969 = vpack.c.bf16 %v3926, %v3925
        %v3970 = vpack.c.bf16 %v3566, %v3565
        %v3971 = vpack.c.bf16 %v3880, %v3879
        %v3972 = vpack.c.bf16 %v3904, %v3903
        %v3973 = vpack.c.bf16 %v3928, %v3927
        %v3974 = vpack.c.bf16 %v3568, %v3567
        %v3975 = vpack.c.bf16 %v3882, %v3881
        %v3976 = vpack.c.bf16 %v3906, %v3905
        %v3977 = vpack.c.bf16 %v3930, %v3929
        %v3978 = vpack.c.bf16 %v3570, %v3569
        %v3979 = vld [vmem:[%s5] sm:$0xf]
        %v3980 = vld [vmem:[%s5 + $0x4] sm:$0xf]
        %v3981 = vld [vmem:[%s5 + $0x8] sm:$0xf]
        %v3982 = vld [vmem:[%s5 + $0xc] sm:$0xf]
        %v3983 = vld [vmem:[%s5 + $0x10] sm:$0xf]
        %v3984 = vld [vmem:[%s5 + $0x14] sm:$0xf]
        %v3985 = vld [vmem:[%s5 + $0x18] sm:$0xf]
        %v3986 = vld [vmem:[%s5 + $0x1c] sm:$0xf]
        %v3987 = vld [vmem:[%s5 + $0x20] sm:$0xf]
        %v3988 = vld [vmem:[%s5 + $0x24] sm:$0xf]
        %v3989 = vld [vmem:[%s5 + $0x28] sm:$0xf]
        %v3990 = vld [vmem:[%s5 + $0x2c] sm:$0xf]
        %v3991 = vld [vmem:[%s5 + $0x30] sm:$0xf]
        %v3992 = vld [vmem:[%s5 + $0x34] sm:$0xf]
        %v3993 = vld [vmem:[%s5 + $0x38] sm:$0xf]
        %v3994 = vld [vmem:[%s5 + $0x3c] sm:$0xf]
        %v3995 = vld [vmem:[%s5 + $0x40] sm:$0xf]
        %v3996 = vld [vmem:[%s5 + $0x44] sm:$0xf]
        %v3997 = vld [vmem:[%s5 + $0x48] sm:$0xf]
        %v3998 = vld [vmem:[%s5 + $0x4c] sm:$0xf]
        %v3999 = vld [vmem:[%s5 + $0x50] sm:$0xf]
        %v4000 = vld [vmem:[%s5 + $0x54] sm:$0xf]
        %v4001 = vld [vmem:[%s5 + $0x58] sm:$0xf]
        %v4002 = vld [vmem:[%s5 + $0x5c] sm:$0xf]
        %v4003 = vld [vmem:[%s5 + $0x60] sm:$0xf]
        %v4004 = vld [vmem:[%s5 + $0x64] sm:$0xf]
        %v4005 = vld [vmem:[%s5 + $0x68] sm:$0xf]
        %v4006 = vld [vmem:[%s5 + $0x6c] sm:$0xf]
        %v4007 = vld [vmem:[%s5 + $0x70] sm:$0xf]
        %v4008 = vld [vmem:[%s5 + $0x74] sm:$0xf]
        %v4009 = vld [vmem:[%s5 + $0x78] sm:$0xf]
        %v4010 = vld [vmem:[%s5 + $0x7c] sm:$0xf]
        %v4011 = vld [vmem:[%s5 + $0x80] sm:$0xf]
        %v4012 = vld [vmem:[%s5 + $0x84] sm:$0xf]
        %v4013 = vld [vmem:[%s5 + $0x88] sm:$0xf]
        %v4014 = vld [vmem:[%s5 + $0x8c] sm:$0xf]
        %v4015 = vld [vmem:[%s5 + $0x90] sm:$0xf]
        %v4016 = vld [vmem:[%s5 + $0x94] sm:$0xf]
        %v4017 = vld [vmem:[%s5 + $0x98] sm:$0xf]
        %v4018 = vld [vmem:[%s5 + $0x9c] sm:$0xf]
        %v4019 = vld [vmem:[%s5 + $0xa0] sm:$0xf]
        %v4020 = vld [vmem:[%s5 + $0xa4] sm:$0xf]
        %v4021 = vld [vmem:[%s5 + $0xa8] sm:$0xf]
        %v4022 = vld [vmem:[%s5 + $0xac] sm:$0xf]
        %v4023 = vld [vmem:[%s5 + $0xb0] sm:$0xf]
        %v4024 = vld [vmem:[%s5 + $0xb4] sm:$0xf]
        %v4025 = vld [vmem:[%s5 + $0xb8] sm:$0xf]
        %v4026 = vld [vmem:[%s5 + $0xbc] sm:$0xf]
        %v4027 = vld [vmem:[%s5 + $0xc0] sm:$0xf]
        %v4028 = vld [vmem:[%s5 + $0xc4] sm:$0xf]
        %v4029 = vld [vmem:[%s5 + $0xc8] sm:$0xf]
        %v4030 = vld [vmem:[%s5 + $0xcc] sm:$0xf]
        %v4031 = vld [vmem:[%s5 + $0xd0] sm:$0xf]
        %v4032 = vld [vmem:[%s5 + $0xd4] sm:$0xf]
        %v4033 = vld [vmem:[%s5 + $0xd8] sm:$0xf]
        %v4034 = vld [vmem:[%s5 + $0xdc] sm:$0xf]
        %v4035 = vld [vmem:[%s6] sm:$0x1]
        %v4037 = vlaneseq
        %v4038 = vshrl.u32 %v4037, 7
        %v4039 = vsub.s32 0, %v4038
        %v4040 = vrot.slane %v4035, %v4039
        %v4098 = vunpack.c.l.b16 %v3979
        %v4099 = vunpack.c.l.b16 %v3980
        %v4100 = vunpack.c.l.b16 %v3981
        %v4101 = vunpack.c.l.b16 %v3982
        %v4102 = vunpack.c.l.b16 %v3983
        %v4103 = vunpack.c.l.b16 %v3984
        %v4104 = vunpack.c.l.b16 %v3985
        %v4105 = vunpack.c.l.b16 %v3986
        %v4106 = vunpack.c.l.b16 %v3987
        %v4107 = vunpack.c.l.b16 %v3988
        %v4108 = vunpack.c.l.b16 %v3989
        %v4109 = vunpack.c.l.b16 %v3990
        %v4110 = vunpack.c.l.b16 %v3991
        %v4111 = vunpack.c.l.b16 %v3992
        %v4112 = vunpack.c.l.b16 %v3993
        %v4113 = vunpack.c.l.b16 %v3994
        %v4114 = vunpack.c.l.b16 %v3995
        %v4115 = vunpack.c.l.b16 %v3996
        %v4116 = vunpack.c.l.b16 %v3997
        %v4117 = vunpack.c.l.b16 %v3998
        %v4118 = vunpack.c.l.b16 %v3999
        %v4119 = vunpack.c.l.b16 %v4000
        %v4120 = vunpack.c.l.b16 %v4001
        %v4121 = vunpack.c.l.b16 %v4002
        %v4122 = vunpack.c.l.b16 %v4003
        %v4123 = vunpack.c.l.b16 %v4004
        %v4124 = vunpack.c.l.b16 %v4005
        %v4125 = vunpack.c.l.b16 %v4006
        %v4126 = vunpack.c.l.b16 %v4007
        %v4127 = vunpack.c.l.b16 %v4008
        %v4128 = vunpack.c.l.b16 %v4009
        %v4129 = vunpack.c.l.b16 %v4010
        %v4130 = vunpack.c.l.b16 %v4011
        %v4131 = vunpack.c.l.b16 %v4012
        %v4132 = vunpack.c.l.b16 %v4013
        %v4133 = vunpack.c.l.b16 %v4014
        %v4134 = vunpack.c.l.b16 %v4015
        %v4135 = vunpack.c.l.b16 %v4016
        %v4136 = vunpack.c.l.b16 %v4017
        %v4137 = vunpack.c.l.b16 %v4018
        %v4138 = vunpack.c.l.b16 %v4019
        %v4139 = vunpack.c.l.b16 %v4020
        %v4140 = vunpack.c.l.b16 %v4021
        %v4141 = vunpack.c.l.b16 %v4022
        %v4142 = vunpack.c.l.b16 %v4023
        %v4143 = vunpack.c.l.b16 %v4024
        %v4144 = vunpack.c.l.b16 %v4025
        %v4145 = vunpack.c.l.b16 %v4026
        %v4146 = vunpack.c.l.b16 %v4027
        %v4147 = vunpack.c.l.b16 %v4028
        %v4148 = vunpack.c.l.b16 %v4029
        %v4149 = vunpack.c.l.b16 %v4030
        %v4150 = vunpack.c.l.b16 %v4031
        %v4151 = vunpack.c.l.b16 %v4032
        %v4152 = vunpack.c.l.b16 %v4033
        %v4153 = vunpack.c.l.b16 %v4034
        %v4154 = vpack.c.b16 %v4099, %v4098
        %v4155 = vpack.c.b16 %v4101, %v4100
        %v4156 = vpack.c.b16 %v4103, %v4102
        %v4157 = vpack.c.b16 %v4105, %v4104
        %v4158 = vpack.c.b16 %v4107, %v4106
        %v4159 = vpack.c.b16 %v4109, %v4108
        %v4160 = vpack.c.b16 %v4111, %v4110
        %v4161 = vpack.c.b16 %v4113, %v4112
        %v4162 = vpack.c.b16 %v4115, %v4114
        %v4163 = vpack.c.b16 %v4117, %v4116
        %v4164 = vpack.c.b16 %v4119, %v4118
        %v4165 = vpack.c.b16 %v4121, %v4120
        %v4166 = vpack.c.b16 %v4123, %v4122
        %v4167 = vpack.c.b16 %v4125, %v4124
        %v4168 = vpack.c.b16 %v4127, %v4126
        %v4169 = vpack.c.b16 %v4129, %v4128
        %v4170 = vpack.c.b16 %v4131, %v4130
        %v4171 = vpack.c.b16 %v4133, %v4132
        %v4172 = vpack.c.b16 %v4135, %v4134
        %v4173 = vpack.c.b16 %v4137, %v4136
        %v4174 = vpack.c.b16 %v4139, %v4138
        %v4175 = vpack.c.b16 %v4141, %v4140
        %v4176 = vpack.c.b16 %v4143, %v4142
        %v4177 = vpack.c.b16 %v4145, %v4144
        %v4178 = vpack.c.b16 %v4147, %v4146
        %v4179 = vpack.c.b16 %v4149, %v4148
        %v4180 = vpack.c.b16 %v4151, %v4150
        %v4181 = vpack.c.b16 %v4153, %v4152
        %v4211 = vsel %vm1707, %v3934, 0
        %v4214 = vsel %vm1707, %v3938, 0
        %v4217 = vsel %vm1707, %v3942, 0
        %v4220 = vsel %vm1707, %v3946, 0
        %v4223 = vsel %vm1707, %v3950, 0
        %v4226 = vsel %vm1707, %v3954, 0
        %v4229 = vsel %vm1707, %v3958, 0
        %v4232 = vsel %vm1707, %v3962, 0
        %v4235 = vsel %vm1707, %v3966, 0
        %v4238 = vsel %vm1707, %v3970, 0
        %v4241 = vsel %vm1707, %v3974, 0
        %v4244 = vsel %vm1707, %v3978, 0
        %4246 = vmatprep.subr.bf16.mxu0 0
        %4247 = vmatpush1.bf16.msra.mxu0 %v4154
        %4248 = vmatprep.subr.bf16.mxu0 0
        %4249 = vmatpush1.bf16.msra.mxu0 %v4155
        %4250 = vmatprep.subr.bf16.mxu0 0
        %4251 = vmatpush1.bf16.msra.mxu0 %v4156
        %4252 = vmatprep.subr.bf16.mxu0 0
        %4253 = vmatpush1.bf16.msra.mxu0 %v4157
        %4254 = vmatprep.subr.bf16.mxu0 0
        %4255 = vmatpush1.bf16.msra.mxu0 %v4158
        %4256 = vmatprep.subr.bf16.mxu0 0
        %4257 = vmatpush1.bf16.msra.mxu0 %v4159
        %4258 = vmatprep.subr.bf16.mxu0 0
        %4259 = vmatpush1.bf16.msra.mxu0 %v4160
        %4260 = vmatprep.subr.bf16.mxu0 0
        %4261 = vmatpush1.bf16.msra.mxu0 %v4161
        %4262 = vmatprep.subr.bf16.mxu0 0
        %4263 = vmatpush1.bf16.msra.mxu0 %v4162
        %4264 = vmatprep.subr.bf16.mxu0 0
        %4265 = vmatpush1.bf16.msra.mxu0 %v4163
        %4266 = vmatprep.subr.bf16.mxu0 0
        %4267 = vmatpush1.bf16.msra.mxu0 %v4164
        %4268 = vmatprep.subr.bf16.mxu0 0
        %4269 = vmatpush1.bf16.msra.mxu0 %v4165
        %4270 = vmatprep.subr.bf16.mxu0 0
        %4271 = vmatpush1.bf16.msra.mxu0 %v4166
        %4272 = vmatprep.subr.bf16.mxu0 0
        %4273 = vmatpush1.bf16.msra.mxu0 %v4167
        %4274 = vmatprep.subr.bf16.mxu0 0
        %4275 = vmatpush1.bf16.msra.mxu0 %v4168
        %4276 = vmatprep.subr.bf16.mxu0 0
        %4277 = vmatpush1.bf16.msra.mxu0 %v4169
        %4278 = vmatprep.mubr.bf16.mxu0 %v3932
        %4279 = vmatmul.mubr.bf16.gmra.mrb[0].mxu0 %v3931
        %v4280 = vpop.f32.mrb[0].mxu0
        %v4281 = vadd.f32 %v4040, %v4280
        %v4282 = vpop.f32.mrb[0].mxu0
        %v4283 = vpop.f32.mrb[0].mxu0
        %v4284 = vadd.f32 %v4040, %v4283
        %v4285 = vpop.f32.mrb[0].mxu0
        %4286 = vmatprep.mubr.bf16.mxu0 %v3936
        %4287 = vmatmul.mubr.bf16.gmra.mrb[0].mxu0 %v3935
        %v4288 = vpop.f32.mrb[0].mxu0
        %v4289 = vadd.f32 %v4040, %v4288
        %v4290 = vpop.f32.mrb[0].mxu0
        %v4291 = vpop.f32.mrb[0].mxu0
        %v4292 = vadd.f32 %v4040, %v4291
        %v4293 = vpop.f32.mrb[0].mxu0
        %4294 = vmatprep.mubr.bf16.mxu0 %v3940
        %4295 = vmatmul.mubr.bf16.gmra.mrb[0].mxu0 %v3939
        %v4296 = vpop.f32.mrb[0].mxu0
        %v4297 = vadd.f32 %v4040, %v4296
        %v4298 = vpop.f32.mrb[0].mxu0
        %v4299 = vpop.f32.mrb[0].mxu0
        %v4300 = vadd.f32 %v4040, %v4299
        %v4301 = vpop.f32.mrb[0].mxu0
        %4302 = vmatprep.mubr.bf16.mxu0 %v3944
        %4303 = vmatmul.mubr.bf16.gmra.mrb[0].mxu0 %v3943
        %v4304 = vpop.f32.mrb[0].mxu0
        %v4305 = vadd.f32 %v4040, %v4304
        %v4306 = vpop.f32.mrb[0].mxu0
        %v4307 = vpop.f32.mrb[0].mxu0
        %v4308 = vadd.f32 %v4040, %v4307
        %v4309 = vpop.f32.mrb[0].mxu0
        %4310 = vmatprep.mubr.bf16.mxu0 %v3948
        %4311 = vmatmul.mubr.bf16.gmra.mrb[0].mxu0 %v3947
        %v4312 = vpop.f32.mrb[0].mxu0
        %v4313 = vadd.f32 %v4040, %v4312
        %v4314 = vpop.f32.mrb[0].mxu0
        %v4315 = vpop.f32.mrb[0].mxu0
        %v4316 = vadd.f32 %v4040, %v4315
        %v4317 = vpop.f32.mrb[0].mxu0
        %4318 = vmatprep.mubr.bf16.mxu0 %v3952
        %4319 = vmatmul.mubr.bf16.gmra.mrb[0].mxu0 %v3951
        %v4320 = vpop.f32.mrb[0].mxu0
        %v4321 = vadd.f32 %v4040, %v4320
        %v4322 = vpop.f32.mrb[0].mxu0
        %v4323 = vpop.f32.mrb[0].mxu0
        %v4324 = vadd.f32 %v4040, %v4323
        %v4325 = vpop.f32.mrb[0].mxu0
        %4326 = vmatprep.mubr.bf16.mxu0 %v3956
        %4327 = vmatmul.mubr.bf16.gmra.mrb[0].mxu0 %v3955
        %v4328 = vpop.f32.mrb[0].mxu0
        %v4329 = vadd.f32 %v4040, %v4328
        %v4330 = vpop.f32.mrb[0].mxu0
        %v4331 = vpop.f32.mrb[0].mxu0
        %v4332 = vadd.f32 %v4040, %v4331
        %v4333 = vpop.f32.mrb[0].mxu0
        %4334 = vmatprep.mubr.bf16.mxu0 %v3960
        %4335 = vmatmul.mubr.bf16.gmra.mrb[0].mxu0 %v3959
        %v4336 = vpop.f32.mrb[0].mxu0
        %v4337 = vadd.f32 %v4040, %v4336
        %v4338 = vpop.f32.mrb[0].mxu0
        %v4339 = vpop.f32.mrb[0].mxu0
        %v4340 = vadd.f32 %v4040, %v4339
        %v4341 = vpop.f32.mrb[0].mxu0
        %4342 = vmatprep.mubr.bf16.mxu0 %v3964
        %4343 = vmatmul.mubr.bf16.gmra.mrb[0].mxu0 %v3963
        %v4344 = vpop.f32.mrb[0].mxu0
        %v4345 = vadd.f32 %v4040, %v4344
        %v4346 = vpop.f32.mrb[0].mxu0
        %v4347 = vpop.f32.mrb[0].mxu0
        %v4348 = vadd.f32 %v4040, %v4347
        %v4349 = vpop.f32.mrb[0].mxu0
        %4350 = vmatprep.mubr.bf16.mxu0 %v3968
        %4351 = vmatmul.mubr.bf16.gmra.mrb[0].mxu0 %v3967
        %v4352 = vpop.f32.mrb[0].mxu0
        %v4353 = vadd.f32 %v4040, %v4352
        %v4354 = vpop.f32.mrb[0].mxu0
        %v4355 = vpop.f32.mrb[0].mxu0
        %v4356 = vadd.f32 %v4040, %v4355
        %v4357 = vpop.f32.mrb[0].mxu0
        %4358 = vmatprep.mubr.bf16.mxu0 %v3972
        %4359 = vmatmul.mubr.bf16.gmra.mrb[0].mxu0 %v3971
        %v4360 = vpop.f32.mrb[0].mxu0
        %v4361 = vadd.f32 %v4040, %v4360
        %v4362 = vpop.f32.mrb[0].mxu0
        %v4363 = vpop.f32.mrb[0].mxu0
        %v4364 = vadd.f32 %v4040, %v4363
        %v4365 = vpop.f32.mrb[0].mxu0
        %4366 = vmatprep.mubr.bf16.mxu0 %v3976
        %4367 = vmatmul.mubr.bf16.gmra.mrb[0].mxu0 %v3975
        %v4368 = vpop.f32.mrb[0].mxu0
        %v4369 = vadd.f32 %v4040, %v4368
        %v4370 = vpop.f32.mrb[0].mxu0
        %v4371 = vpop.f32.mrb[0].mxu0
        %v4372 = vadd.f32 %v4040, %v4371
        %v4373 = vpop.f32.mrb[0].mxu0
        %4374 = vdwg.mxu0
        %4375 = vmatprep.subr.bf16.mxu0 0
        %4376 = vmatpush1.bf16.msra.mxu0 %v4170
        %4377 = vmatprep.subr.bf16.mxu0 0
        %4378 = vmatpush1.bf16.msra.mxu0 %v4171
        %4379 = vmatprep.subr.bf16.mxu0 0
        %4380 = vmatpush1.bf16.msra.mxu0 %v4172
        %4381 = vmatprep.subr.bf16.mxu0 0
        %4382 = vmatpush1.bf16.msra.mxu0 %v4173
        %4383 = vmatprep.subr.bf16.mxu0 0
        %4384 = vmatpush1.bf16.msra.mxu0 %v4174
        %4385 = vmatprep.subr.bf16.mxu0 0
        %4386 = vmatpush1.bf16.msra.mxu0 %v4175
        %4387 = vmatprep.subr.bf16.mxu0 0
        %4388 = vmatpush1.bf16.msra.mxu0 %v4176
        %4389 = vmatprep.subr.bf16.mxu0 0
        %4390 = vmatpush1.bf16.msra.mxu0 %v4177
        %4391 = vmatprep.subr.bf16.mxu0 0
        %4392 = vmatpush1.bf16.msra.mxu0 %v4178
        %4393 = vmatprep.subr.bf16.mxu0 0
        %4394 = vmatpush1.bf16.msra.mxu0 %v4179
        %4395 = vmatprep.subr.bf16.mxu0 0
        %4396 = vmatpush1.bf16.msra.mxu0 %v4180
        %4397 = vmatprep.subr.bf16.mxu0 0
        %4398 = vmatpush1.bf16.msra.mxu0 %v4181
        %4399 = vmatprep.subr.bf16.mxu0 0
        %4400 = vmatpush1.bf16.msra.mxu0 0
        %4401 = vmatprep.subr.bf16.mxu0 0
        %4402 = vmatpush1.bf16.msra.mxu0 0
        %4403 = vmatprep.subr.bf16.mxu0 0
        %4404 = vmatpush1.bf16.msra.mxu0 0
        %4405 = vmatprep.subr.bf16.mxu0 0
        %4406 = vmatpush1.bf16.msra.mxu0 0
        %4407 = vmatprep.mubr.bf16.mxu0 %v4211
        %4408 = vmatmul.mubr.bf16.gmra.mrb[0].mxu0 %v3933
        %v4409 = vpop.f32.mrb[0].mxu0
        %v4410 = vadd.f32 %v4281, %v4409
        %v4411 = vpop.f32.mrb[0].mxu0
        %v4412 = vpop.f32.mrb[0].mxu0
        %v4413 = vadd.f32 %v4284, %v4412
        %v4414 = vpop.f32.mrb[0].mxu0
        %4415 = vmatprep.mubr.bf16.mxu0 %v4214
        %4416 = vmatmul.mubr.bf16.gmra.mrb[0].mxu0 %v3937
        %v4417 = vpop.f32.mrb[0].mxu0
        %v4418 = vadd.f32 %v4289, %v4417
        %v4419 = vpop.f32.mrb[0].mxu0
        %v4420 = vpop.f32.mrb[0].mxu0
        %v4421 = vadd.f32 %v4292, %v4420
        %v4422 = vpop.f32.mrb[0].mxu0
        %4423 = vmatprep.mubr.bf16.mxu0 %v4217
        %4424 = vmatmul.mubr.bf16.gmra.mrb[0].mxu0 %v3941
        %v4425 = vpop.f32.mrb[0].mxu0
        %v4426 = vadd.f32 %v4297, %v4425
        %v4427 = vpop.f32.mrb[0].mxu0
        %v4428 = vpop.f32.mrb[0].mxu0
        %v4429 = vadd.f32 %v4300, %v4428
        %v4430 = vpop.f32.mrb[0].mxu0
        %4431 = vmatprep.mubr.bf16.mxu0 %v4220
        %4432 = vmatmul.mubr.bf16.gmra.mrb[0].mxu0 %v3945
        %v4433 = vpop.f32.mrb[0].mxu0
        %v4434 = vadd.f32 %v4305, %v4433
        %v4435 = vpop.f32.mrb[0].mxu0
        %v4436 = vpop.f32.mrb[0].mxu0
        %v4437 = vadd.f32 %v4308, %v4436
        %v4438 = vpop.f32.mrb[0].mxu0
        %4439 = vmatprep.mubr.bf16.mxu0 %v4223
        %4440 = vmatmul.mubr.bf16.gmra.mrb[0].mxu0 %v3949
        %v4441 = vpop.f32.mrb[0].mxu0
        %v4442 = vadd.f32 %v4313, %v4441
        %v4443 = vpop.f32.mrb[0].mxu0
        %v4444 = vpop.f32.mrb[0].mxu0
        %v4445 = vadd.f32 %v4316, %v4444
        %v4446 = vpop.f32.mrb[0].mxu0
        %4447 = vmatprep.mubr.bf16.mxu0 %v4226
        %4448 = vmatmul.mubr.bf16.gmra.mrb[0].mxu0 %v3953
        %v4449 = vpop.f32.mrb[0].mxu0
        %v4450 = vadd.f32 %v4321, %v4449
        %v4451 = vpop.f32.mrb[0].mxu0
        %v4452 = vpop.f32.mrb[0].mxu0
        %v4453 = vadd.f32 %v4324, %v4452
        %v4454 = vpop.f32.mrb[0].mxu0
        %4455 = vmatprep.mubr.bf16.mxu0 %v4229
        %4456 = vmatmul.mubr.bf16.gmra.mrb[0].mxu0 %v3957
        %v4457 = vpop.f32.mrb[0].mxu0
        %v4458 = vadd.f32 %v4329, %v4457
        %v4459 = vpop.f32.mrb[0].mxu0
        %v4460 = vpop.f32.mrb[0].mxu0
        %v4461 = vadd.f32 %v4332, %v4460
        %v4462 = vpop.f32.mrb[0].mxu0
        %4463 = vmatprep.mubr.bf16.mxu0 %v4232
        %4464 = vmatmul.mubr.bf16.gmra.mrb[0].mxu0 %v3961
        %v4465 = vpop.f32.mrb[0].mxu0
        %v4466 = vadd.f32 %v4337, %v4465
        %v4467 = vpop.f32.mrb[0].mxu0
        %v4468 = vpop.f32.mrb[0].mxu0
        %v4469 = vadd.f32 %v4340, %v4468
        %v4470 = vpop.f32.mrb[0].mxu0
        %4471 = vmatprep.mubr.bf16.mxu0 %v4235
        %4472 = vmatmul.mubr.bf16.gmra.mrb[0].mxu0 %v3965
        %v4473 = vpop.f32.mrb[0].mxu0
        %v4474 = vadd.f32 %v4345, %v4473
        %v4475 = vpop.f32.mrb[0].mxu0
        %v4476 = vpop.f32.mrb[0].mxu0
        %v4477 = vadd.f32 %v4348, %v4476
        %v4478 = vpop.f32.mrb[0].mxu0
        %4479 = vmatprep.mubr.bf16.mxu0 %v4238
        %4480 = vmatmul.mubr.bf16.gmra.mrb[0].mxu0 %v3969
        %v4481 = vpop.f32.mrb[0].mxu0
        %v4482 = vadd.f32 %v4353, %v4481
        %v4483 = vpop.f32.mrb[0].mxu0
        %v4484 = vpop.f32.mrb[0].mxu0
        %v4485 = vadd.f32 %v4356, %v4484
        %v4486 = vpop.f32.mrb[0].mxu0
        %4487 = vmatprep.mubr.bf16.mxu0 %v4241
        %4488 = vmatmul.mubr.bf16.gmra.mrb[0].mxu0 %v3973
        %v4489 = vpop.f32.mrb[0].mxu0
        %v4490 = vadd.f32 %v4361, %v4489
        %v4491 = vpop.f32.mrb[0].mxu0
        %v4492 = vpop.f32.mrb[0].mxu0
        %v4493 = vadd.f32 %v4364, %v4492
        %v4494 = vpop.f32.mrb[0].mxu0
        %4495 = vmatprep.mubr.bf16.mxu0 %v4244
        %4496 = vmatmul.mubr.bf16.gmra.mrb[0].mxu0 %v3977
        %v4497 = vpop.f32.mrb[0].mxu0
        %v4498 = vadd.f32 %v4369, %v4497
        %v4499 = vpop.f32.mrb[0].mxu0
        %v4500 = vpop.f32.mrb[0].mxu0
        %v4501 = vadd.f32 %v4372, %v4500
        %v4502 = vpop.f32.mrb[0].mxu0
        %4503 = vdwg.mxu0
        %v4504 = vmax.f32 %v4410, 0.0
        %v4505 = vmax.f32 %v4413, 0.0
        %v4506 = vmax.f32 %v4418, 0.0
        %v4507 = vmax.f32 %v4421, 0.0
        %v4508 = vmax.f32 %v4426, 0.0
        %v4509 = vmax.f32 %v4429, 0.0
        %v4510 = vmax.f32 %v4434, 0.0
        %v4511 = vmax.f32 %v4437, 0.0
        %v4512 = vmax.f32 %v4442, 0.0
        %v4513 = vmax.f32 %v4445, 0.0
        %v4514 = vmax.f32 %v4450, 0.0
        %v4515 = vmax.f32 %v4453, 0.0
        %v4516 = vmax.f32 %v4458, 0.0
        %v4517 = vmax.f32 %v4461, 0.0
        %v4518 = vmax.f32 %v4466, 0.0
        %v4519 = vmax.f32 %v4469, 0.0
        %v4520 = vmax.f32 %v4474, 0.0
        %v4521 = vmax.f32 %v4477, 0.0
        %v4522 = vmax.f32 %v4482, 0.0
        %v4523 = vmax.f32 %v4485, 0.0
        %v4524 = vmax.f32 %v4490, 0.0
        %v4525 = vmax.f32 %v4493, 0.0
        %v4526 = vmax.f32 %v4498, 0.0
        %v4527 = vmax.f32 %v4501, 0.0
        %4552 = vrot.lane.b32.xlu0 %v4410, 96
        %v4553 = vpop.permute.xlu0 %4552
        %4554 = vrot.lane.b32.xlu0 %v4413, 96
        %v4555 = vpop.permute.xlu0 %4554
        %4556 = vrot.lane.b32.xlu0 %v4418, 96
        %v4557 = vpop.permute.xlu0 %4556
        %4558 = vrot.lane.b32.xlu0 %v4421, 96
        %v4559 = vpop.permute.xlu0 %4558
        %4560 = vrot.lane.b32.xlu0 %v4426, 96
        %v4561 = vpop.permute.xlu0 %4560
        %4562 = vrot.lane.b32.xlu0 %v4429, 96
        %v4563 = vpop.permute.xlu0 %4562
        %4564 = vrot.lane.b32.xlu0 %v4434, 96
        %v4565 = vpop.permute.xlu0 %4564
        %4566 = vrot.lane.b32.xlu0 %v4437, 96
        %v4567 = vpop.permute.xlu0 %4566
        %4568 = vrot.lane.b32.xlu0 %v4442, 96
        %v4569 = vpop.permute.xlu0 %4568
        %4570 = vrot.lane.b32.xlu0 %v4445, 96
        %v4571 = vpop.permute.xlu0 %4570
        %4572 = vrot.lane.b32.xlu0 %v4450, 96
        %v4573 = vpop.permute.xlu0 %4572
        %4574 = vrot.lane.b32.xlu0 %v4453, 96
        %v4575 = vpop.permute.xlu0 %4574
        %4576 = vrot.lane.b32.xlu0 %v4458, 96
        %v4577 = vpop.permute.xlu0 %4576
        %4578 = vrot.lane.b32.xlu0 %v4461, 96
        %v4579 = vpop.permute.xlu0 %4578
        %4580 = vrot.lane.b32.xlu0 %v4466, 96
        %v4581 = vpop.permute.xlu0 %4580
        %4582 = vrot.lane.b32.xlu0 %v4469, 96
        %v4583 = vpop.permute.xlu0 %4582
        %4584 = vrot.lane.b32.xlu0 %v4474, 96
        %v4585 = vpop.permute.xlu0 %4584
        %4586 = vrot.lane.b32.xlu0 %v4477, 96
        %v4587 = vpop.permute.xlu0 %4586
        %4588 = vrot.lane.b32.xlu0 %v4482, 96
        %v4589 = vpop.permute.xlu0 %4588
        %4590 = vrot.lane.b32.xlu0 %v4485, 96
        %v4591 = vpop.permute.xlu0 %4590
        %4592 = vrot.lane.b32.xlu0 %v4490, 96
        %v4593 = vpop.permute.xlu0 %4592
        %4594 = vrot.lane.b32.xlu0 %v4493, 96
        %v4595 = vpop.permute.xlu0 %4594
        %4596 = vrot.lane.b32.xlu0 %v4498, 96
        %v4597 = vpop.permute.xlu0 %4596
        %4598 = vrot.lane.b32.xlu0 %v4501, 96
        %v4599 = vpop.permute.xlu0 %4598
        %v4624 = vadd.f32 %v4504, %v4553
        %v4625 = vadd.f32 %v4505, %v4555
        %v4626 = vadd.f32 %v4506, %v4557
        %v4627 = vadd.f32 %v4507, %v4559
        %v4628 = vadd.f32 %v4508, %v4561
        %v4629 = vadd.f32 %v4509, %v4563
        %v4630 = vadd.f32 %v4510, %v4565
        %v4631 = vadd.f32 %v4511, %v4567
        %v4632 = vadd.f32 %v4512, %v4569
        %v4633 = vadd.f32 %v4513, %v4571
        %v4634 = vadd.f32 %v4514, %v4573
        %v4635 = vadd.f32 %v4515, %v4575
        %v4636 = vadd.f32 %v4516, %v4577
        %v4637 = vadd.f32 %v4517, %v4579
        %v4638 = vadd.f32 %v4518, %v4581
        %v4639 = vadd.f32 %v4519, %v4583
        %v4640 = vadd.f32 %v4520, %v4585
        %v4641 = vadd.f32 %v4521, %v4587
        %v4642 = vadd.f32 %v4522, %v4589
        %v4643 = vadd.f32 %v4523, %v4591
        %v4644 = vadd.f32 %v4524, %v4593
        %v4645 = vadd.f32 %v4525, %v4595
        %v4646 = vadd.f32 %v4526, %v4597
        %v4647 = vadd.f32 %v4527, %v4599
        %v4648 = vmul.f32 %v2282, %v1343
        %v4649 = vmul.f32 %v2283, %v1344
        %v4650 = vmul.f32 %v2284, %v1345
        %v4651 = vmul.f32 %v2285, %v1346
        %v4652 = vmul.f32 %v2286, %v1347
        %v4653 = vmul.f32 %v2287, %v1348
        %v4654 = vmul.f32 %v2288, %v1349
        %v4655 = vmul.f32 %v2289, %v1350
        %v4656 = vmul.f32 %v2290, %v1351
        %v4657 = vmul.f32 %v2291, %v1352
        %v4658 = vmul.f32 %v2292, %v1353
        %v4659 = vmul.f32 %v2293, %v1354
        %v4660 = vmul.f32 %v2294, %v1355
        %v4661 = vmul.f32 %v2295, %v1356
        %v4662 = vmul.f32 %v2296, %v1357
        %v4663 = vmul.f32 %v2297, %v1358
        %v4664 = vmul.f32 %v2298, %v1359
        %v4665 = vmul.f32 %v2299, %v1360
        %v4666 = vmul.f32 %v2300, %v1361
        %v4667 = vmul.f32 %v2301, %v1362
        %v4668 = vmul.f32 %v2302, %v1363
        %v4669 = vmul.f32 %v2303, %v1364
        %v4670 = vmul.f32 %v2304, %v1365
        %v4671 = vmul.f32 %v2305, %v1366
        %4672 = vst.msk [vmem:[#allocation2 + $0x4] sm:$0xff] %vm1707, %v4648
        %4673 = vst.msk [vmem:[#allocation2 + $0xc] sm:$0xff] %vm1707, %v4649
        %4674 = vst.msk [vmem:[#allocation2 + $0x14] sm:$0xff] %vm1707, %v4650
        %4675 = vst.msk [vmem:[#allocation2 + $0x1c] sm:$0xff] %vm1707, %v4651
        %4676 = vst.msk [vmem:[#allocation2 + $0x24] sm:$0xff] %vm1707, %v4652
        %4677 = vst.msk [vmem:[#allocation2 + $0x2c] sm:$0xff] %vm1707, %v4653
        %4678 = vst.msk [vmem:[#allocation2 + $0x34] sm:$0xff] %vm1707, %v4654
        %4679 = vst.msk [vmem:[#allocation2 + $0x3c] sm:$0xff] %vm1707, %v4655
        %4680 = vst.msk [vmem:[#allocation2 + $0x44] sm:$0xff] %vm1707, %v4656
        %4681 = vst.msk [vmem:[#allocation2 + $0x4c] sm:$0xff] %vm1707, %v4657
        %4682 = vst.msk [vmem:[#allocation2 + $0x54] sm:$0xff] %vm1707, %v4658
        %4683 = vst.msk [vmem:[#allocation2 + $0x5c] sm:$0xff] %vm1707, %v4659
        %4684 = vst.msk [vmem:[#allocation2 + $0x64] sm:$0xff] %vm1707, %v4660
        %4685 = vst.msk [vmem:[#allocation2 + $0x6c] sm:$0xff] %vm1707, %v4661
        %4686 = vst.msk [vmem:[#allocation2 + $0x74] sm:$0xff] %vm1707, %v4662
        %4687 = vst.msk [vmem:[#allocation2 + $0x7c] sm:$0xff] %vm1707, %v4663
        %4688 = vst.msk [vmem:[#allocation2 + $0x84] sm:$0xff] %vm1707, %v4664
        %4689 = vst.msk [vmem:[#allocation2 + $0x8c] sm:$0xff] %vm1707, %v4665
        %4690 = vst.msk [vmem:[#allocation2 + $0x94] sm:$0xff] %vm1707, %v4666
        %4691 = vst.msk [vmem:[#allocation2 + $0x9c] sm:$0xff] %vm1707, %v4667
        %4692 = vst.msk [vmem:[#allocation2 + $0xa4] sm:$0xff] %vm1707, %v4668
        %4693 = vst.msk [vmem:[#allocation2 + $0xac] sm:$0xff] %vm1707, %v4669
        %4694 = vst.msk [vmem:[#allocation2 + $0xb4] sm:$0xff] %vm1707, %v4670
        %4695 = vst.msk [vmem:[#allocation2 + $0xbc] sm:$0xff] %vm1707, %v4671
        %v4696 = vld [vmem:[#allocation2 + $0x2] sm:$0xff]
        %v4697 = vld [vmem:[#allocation2 + $0xa] sm:$0xff]
        %v4698 = vld [vmem:[#allocation2 + $0x12] sm:$0xff]
        %v4699 = vld [vmem:[#allocation2 + $0x1a] sm:$0xff]
        %v4700 = vld [vmem:[#allocation2 + $0x22] sm:$0xff]
        %v4701 = vld [vmem:[#allocation2 + $0x2a] sm:$0xff]
        %v4702 = vld [vmem:[#allocation2 + $0x32] sm:$0xff]
        %v4703 = vld [vmem:[#allocation2 + $0x3a] sm:$0xff]
        %v4704 = vld [vmem:[#allocation2 + $0x42] sm:$0xff]
        %v4705 = vld [vmem:[#allocation2 + $0x4a] sm:$0xff]
        %v4706 = vld [vmem:[#allocation2 + $0x52] sm:$0xff]
        %v4707 = vld [vmem:[#allocation2 + $0x5a] sm:$0xff]
        %v4708 = vld [vmem:[#allocation2 + $0x62] sm:$0xff]
        %v4709 = vld [vmem:[#allocation2 + $0x6a] sm:$0xff]
        %v4710 = vld [vmem:[#allocation2 + $0x72] sm:$0xff]
        %v4711 = vld [vmem:[#allocation2 + $0x7a] sm:$0xff]
        %v4712 = vld [vmem:[#allocation2 + $0x82] sm:$0xff]
        %v4713 = vld [vmem:[#allocation2 + $0x8a] sm:$0xff]
        %v4714 = vld [vmem:[#allocation2 + $0x92] sm:$0xff]
        %v4715 = vld [vmem:[#allocation2 + $0x9a] sm:$0xff]
        %v4716 = vld [vmem:[#allocation2 + $0xa2] sm:$0xff]
        %v4717 = vld [vmem:[#allocation2 + $0xaa] sm:$0xff]
        %v4718 = vld [vmem:[#allocation2 + $0xb2] sm:$0xff]
        %v4719 = vld [vmem:[#allocation2 + $0xba] sm:$0xff]
        %v4720 = vld [vmem:[#allocation2 + $0x3] sm:$0xff]
        %v4721 = vld [vmem:[#allocation2 + $0xb] sm:$0xff]
        %v4722 = vld [vmem:[#allocation2 + $0x13] sm:$0xff]
        %v4723 = vld [vmem:[#allocation2 + $0x1b] sm:$0xff]
        %v4724 = vld [vmem:[#allocation2 + $0x23] sm:$0xff]
        %v4725 = vld [vmem:[#allocation2 + $0x2b] sm:$0xff]
        %v4726 = vld [vmem:[#allocation2 + $0x33] sm:$0xff]
        %v4727 = vld [vmem:[#allocation2 + $0x3b] sm:$0xff]
        %v4728 = vld [vmem:[#allocation2 + $0x43] sm:$0xff]
        %v4729 = vld [vmem:[#allocation2 + $0x4b] sm:$0xff]
        %v4730 = vld [vmem:[#allocation2 + $0x53] sm:$0xff]
        %v4731 = vld [vmem:[#allocation2 + $0x5b] sm:$0xff]
        %v4732 = vld [vmem:[#allocation2 + $0x63] sm:$0xff]
        %v4733 = vld [vmem:[#allocation2 + $0x6b] sm:$0xff]
        %v4734 = vld [vmem:[#allocation2 + $0x73] sm:$0xff]
        %v4735 = vld [vmem:[#allocation2 + $0x7b] sm:$0xff]
        %v4736 = vld [vmem:[#allocation2 + $0x83] sm:$0xff]
        %v4737 = vld [vmem:[#allocation2 + $0x8b] sm:$0xff]
        %v4738 = vld [vmem:[#allocation2 + $0x93] sm:$0xff]
        %v4739 = vld [vmem:[#allocation2 + $0x9b] sm:$0xff]
        %v4740 = vld [vmem:[#allocation2 + $0xa3] sm:$0xff]
        %v4741 = vld [vmem:[#allocation2 + $0xab] sm:$0xff]
        %v4742 = vld [vmem:[#allocation2 + $0xb3] sm:$0xff]
        %v4743 = vld [vmem:[#allocation2 + $0xbb] sm:$0xff]
        %v4744 = vld [vmem:[#allocation2 + $0x4] sm:$0xff]
        %v4745 = vld [vmem:[#allocation2 + $0xc] sm:$0xff]
        %v4746 = vld [vmem:[#allocation2 + $0x14] sm:$0xff]
        %v4747 = vld [vmem:[#allocation2 + $0x1c] sm:$0xff]
        %v4748 = vld [vmem:[#allocation2 + $0x24] sm:$0xff]
        %v4749 = vld [vmem:[#allocation2 + $0x2c] sm:$0xff]
        %v4750 = vld [vmem:[#allocation2 + $0x34] sm:$0xff]
        %v4751 = vld [vmem:[#allocation2 + $0x3c] sm:$0xff]
        %v4752 = vld [vmem:[#allocation2 + $0x44] sm:$0xff]
        %v4753 = vld [vmem:[#allocation2 + $0x4c] sm:$0xff]
        %v4754 = vld [vmem:[#allocation2 + $0x54] sm:$0xff]
        %v4755 = vld [vmem:[#allocation2 + $0x5c] sm:$0xff]
        %v4756 = vld [vmem:[#allocation2 + $0x64] sm:$0xff]
        %v4757 = vld [vmem:[#allocation2 + $0x6c] sm:$0xff]
        %v4758 = vld [vmem:[#allocation2 + $0x74] sm:$0xff]
        %v4759 = vld [vmem:[#allocation2 + $0x7c] sm:$0xff]
        %v4760 = vld [vmem:[#allocation2 + $0x84] sm:$0xff]
        %v4761 = vld [vmem:[#allocation2 + $0x8c] sm:$0xff]
        %v4762 = vld [vmem:[#allocation2 + $0x94] sm:$0xff]
        %v4763 = vld [vmem:[#allocation2 + $0x9c] sm:$0xff]
        %v4764 = vld [vmem:[#allocation2 + $0xa4] sm:$0xff]
        %v4765 = vld [vmem:[#allocation2 + $0xac] sm:$0xff]
        %v4766 = vld [vmem:[#allocation2 + $0xb4] sm:$0xff]
        %v4767 = vld [vmem:[#allocation2 + $0xbc] sm:$0xff]
        %v4768 = vld [vmem:[#allocation2 + $0x5] sm:$0xff]
        %v4769 = vld [vmem:[#allocation2 + $0xd] sm:$0xff]
        %v4770 = vld [vmem:[#allocation2 + $0x15] sm:$0xff]
        %v4771 = vld [vmem:[#allocation2 + $0x1d] sm:$0xff]
        %v4772 = vld [vmem:[#allocation2 + $0x25] sm:$0xff]
        %v4773 = vld [vmem:[#allocation2 + $0x2d] sm:$0xff]
        %v4774 = vld [vmem:[#allocation2 + $0x35] sm:$0xff]
        %v4775 = vld [vmem:[#allocation2 + $0x3d] sm:$0xff]
        %v4776 = vld [vmem:[#allocation2 + $0x45] sm:$0xff]
        %v4777 = vld [vmem:[#allocation2 + $0x4d] sm:$0xff]
        %v4778 = vld [vmem:[#allocation2 + $0x55] sm:$0xff]
        %v4779 = vld [vmem:[#allocation2 + $0x5d] sm:$0xff]
        %v4780 = vld [vmem:[#allocation2 + $0x65] sm:$0xff]
        %v4781 = vld [vmem:[#allocation2 + $0x6d] sm:$0xff]
        %v4782 = vld [vmem:[#allocation2 + $0x75] sm:$0xff]
        %v4783 = vld [vmem:[#allocation2 + $0x7d] sm:$0xff]
        %v4784 = vld [vmem:[#allocation2 + $0x85] sm:$0xff]
        %v4785 = vld [vmem:[#allocation2 + $0x8d] sm:$0xff]
        %v4786 = vld [vmem:[#allocation2 + $0x95] sm:$0xff]
        %v4787 = vld [vmem:[#allocation2 + $0x9d] sm:$0xff]
        %v4788 = vld [vmem:[#allocation2 + $0xa5] sm:$0xff]
        %v4789 = vld [vmem:[#allocation2 + $0xad] sm:$0xff]
        %v4790 = vld [vmem:[#allocation2 + $0xb5] sm:$0xff]
        %v4791 = vld [vmem:[#allocation2 + $0xbd] sm:$0xff]
        %v4792 = vld [vmem:[#allocation2 + $0x6] sm:$0xff]
        %v4793 = vld [vmem:[#allocation2 + $0xe] sm:$0xff]
        %v4794 = vld [vmem:[#allocation2 + $0x16] sm:$0xff]
        %v4795 = vld [vmem:[#allocation2 + $0x1e] sm:$0xff]
        %v4796 = vld [vmem:[#allocation2 + $0x26] sm:$0xff]
        %v4797 = vld [vmem:[#allocation2 + $0x2e] sm:$0xff]
        %v4798 = vld [vmem:[#allocation2 + $0x36] sm:$0xff]
        %v4799 = vld [vmem:[#allocation2 + $0x3e] sm:$0xff]
        %v4800 = vld [vmem:[#allocation2 + $0x46] sm:$0xff]
        %v4801 = vld [vmem:[#allocation2 + $0x4e] sm:$0xff]
        %v4802 = vld [vmem:[#allocation2 + $0x56] sm:$0xff]
        %v4803 = vld [vmem:[#allocation2 + $0x5e] sm:$0xff]
        %v4804 = vld [vmem:[#allocation2 + $0x66] sm:$0xff]
        %v4805 = vld [vmem:[#allocation2 + $0x6e] sm:$0xff]
        %v4806 = vld [vmem:[#allocation2 + $0x76] sm:$0xff]
        %v4807 = vld [vmem:[#allocation2 + $0x7e] sm:$0xff]
        %v4808 = vld [vmem:[#allocation2 + $0x86] sm:$0xff]
        %v4809 = vld [vmem:[#allocation2 + $0x8e] sm:$0xff]
        %v4810 = vld [vmem:[#allocation2 + $0x96] sm:$0xff]
        %v4811 = vld [vmem:[#allocation2 + $0x9e] sm:$0xff]
        %v4812 = vld [vmem:[#allocation2 + $0xa6] sm:$0xff]
        %v4813 = vld [vmem:[#allocation2 + $0xae] sm:$0xff]
        %v4814 = vld [vmem:[#allocation2 + $0xb6] sm:$0xff]
        %v4815 = vld [vmem:[#allocation2 + $0xbe] sm:$0xff]
        %4840 = vrot.lane.b32.xlu0 %v4720, 64
        %v4841 = vpop.permute.xlu0 %4840
        %4842 = vrot.lane.b32.xlu0 %v4721, 64
        %v4843 = vpop.permute.xlu0 %4842
        %4844 = vrot.lane.b32.xlu0 %v4722, 64
        %v4845 = vpop.permute.xlu0 %4844
        %4846 = vrot.lane.b32.xlu0 %v4723, 64
        %v4847 = vpop.permute.xlu0 %4846
        %4848 = vrot.lane.b32.xlu0 %v4724, 64
        %v4849 = vpop.permute.xlu0 %4848
        %4850 = vrot.lane.b32.xlu0 %v4725, 64
        %v4851 = vpop.permute.xlu0 %4850
        %4852 = vrot.lane.b32.xlu0 %v4726, 64
        %v4853 = vpop.permute.xlu0 %4852
        %4854 = vrot.lane.b32.xlu0 %v4727, 64
        %v4855 = vpop.permute.xlu0 %4854
        %4856 = vrot.lane.b32.xlu0 %v4728, 64
        %v4857 = vpop.permute.xlu0 %4856
        %4858 = vrot.lane.b32.xlu0 %v4729, 64
        %v4859 = vpop.permute.xlu0 %4858
        %4860 = vrot.lane.b32.xlu0 %v4730, 64
        %v4861 = vpop.permute.xlu0 %4860
        %4862 = vrot.lane.b32.xlu0 %v4731, 64
        %v4863 = vpop.permute.xlu0 %4862
        %4864 = vrot.lane.b32.xlu0 %v4732, 64
        %v4865 = vpop.permute.xlu0 %4864
        %4866 = vrot.lane.b32.xlu0 %v4733, 64
        %v4867 = vpop.permute.xlu0 %4866
        %4868 = vrot.lane.b32.xlu0 %v4734, 64
        %v4869 = vpop.permute.xlu0 %4868
        %4870 = vrot.lane.b32.xlu0 %v4735, 64
        %v4871 = vpop.permute.xlu0 %4870
        %4872 = vrot.lane.b32.xlu0 %v4736, 64
        %v4873 = vpop.permute.xlu0 %4872
        %4874 = vrot.lane.b32.xlu0 %v4737, 64
        %v4875 = vpop.permute.xlu0 %4874
        %4876 = vrot.lane.b32.xlu0 %v4738, 64
        %v4877 = vpop.permute.xlu0 %4876
        %4878 = vrot.lane.b32.xlu0 %v4739, 64
        %v4879 = vpop.permute.xlu0 %4878
        %4880 = vrot.lane.b32.xlu0 %v4740, 64
        %v4881 = vpop.permute.xlu0 %4880
        %4882 = vrot.lane.b32.xlu0 %v4741, 64
        %v4883 = vpop.permute.xlu0 %4882
        %4884 = vrot.lane.b32.xlu0 %v4742, 64
        %v4885 = vpop.permute.xlu0 %4884
        %4886 = vrot.lane.b32.xlu0 %v4743, 64
        %v4887 = vpop.permute.xlu0 %4886
        %4936 = vrot.lane.b32.xlu0 %v4768, 64
        %v4937 = vpop.permute.xlu0 %4936
        %4938 = vrot.lane.b32.xlu0 %v4769, 64
        %v4939 = vpop.permute.xlu0 %4938
        %4940 = vrot.lane.b32.xlu0 %v4770, 64
        %v4941 = vpop.permute.xlu0 %4940
        %4942 = vrot.lane.b32.xlu0 %v4771, 64
        %v4943 = vpop.permute.xlu0 %4942
        %4944 = vrot.lane.b32.xlu0 %v4772, 64
        %v4945 = vpop.permute.xlu0 %4944
        %4946 = vrot.lane.b32.xlu0 %v4773, 64
        %v4947 = vpop.permute.xlu0 %4946
        %4948 = vrot.lane.b32.xlu0 %v4774, 64
        %v4949 = vpop.permute.xlu0 %4948
        %4950 = vrot.lane.b32.xlu0 %v4775, 64
        %v4951 = vpop.permute.xlu0 %4950
        %4952 = vrot.lane.b32.xlu0 %v4776, 64
        %v4953 = vpop.permute.xlu0 %4952
        %4954 = vrot.lane.b32.xlu0 %v4777, 64
        %v4955 = vpop.permute.xlu0 %4954
        %4956 = vrot.lane.b32.xlu0 %v4778, 64
        %v4957 = vpop.permute.xlu0 %4956
        %4958 = vrot.lane.b32.xlu0 %v4779, 64
        %v4959 = vpop.permute.xlu0 %4958
        %4960 = vrot.lane.b32.xlu0 %v4780, 64
        %v4961 = vpop.permute.xlu0 %4960
        %4962 = vrot.lane.b32.xlu0 %v4781, 64
        %v4963 = vpop.permute.xlu0 %4962
        %4964 = vrot.lane.b32.xlu0 %v4782, 64
        %v4965 = vpop.permute.xlu0 %4964
        %4966 = vrot.lane.b32.xlu0 %v4783, 64
        %v4967 = vpop.permute.xlu0 %4966
        %4968 = vrot.lane.b32.xlu0 %v4784, 64
        %v4969 = vpop.permute.xlu0 %4968
        %4970 = vrot.lane.b32.xlu0 %v4785, 64
        %v4971 = vpop.permute.xlu0 %4970
        %4972 = vrot.lane.b32.xlu0 %v4786, 64
        %v4973 = vpop.permute.xlu0 %4972
        %4974 = vrot.lane.b32.xlu0 %v4787, 64
        %v4975 = vpop.permute.xlu0 %4974
        %4976 = vrot.lane.b32.xlu0 %v4788, 64
        %v4977 = vpop.permute.xlu0 %4976
        %4978 = vrot.lane.b32.xlu0 %v4789, 64
        %v4979 = vpop.permute.xlu0 %4978
        %4980 = vrot.lane.b32.xlu0 %v4790, 64
        %v4981 = vpop.permute.xlu0 %4980
        %4982 = vrot.lane.b32.xlu0 %v4791, 64
        %v4983 = vpop.permute.xlu0 %4982
        %v5008 = vsel %vm1707, %v4696, %v4841
        %v5009 = vsel %vm1707, %v4697, %v4843
        %v5010 = vsel %vm1707, %v4698, %v4845
        %v5011 = vsel %vm1707, %v4699, %v4847
        %v5012 = vsel %vm1707, %v4700, %v4849
        %v5013 = vsel %vm1707, %v4701, %v4851
        %v5014 = vsel %vm1707, %v4702, %v4853
        %v5015 = vsel %vm1707, %v4703, %v4855
        %v5016 = vsel %vm1707, %v4704, %v4857
        %v5017 = vsel %vm1707, %v4705, %v4859
        %v5018 = vsel %vm1707, %v4706, %v4861
        %v5019 = vsel %vm1707, %v4707, %v4863
        %v5020 = vsel %vm1707, %v4708, %v4865
        %v5021 = vsel %vm1707, %v4709, %v4867
        %v5022 = vsel %vm1707, %v4710, %v4869
        %v5023 = vsel %vm1707, %v4711, %v4871
        %v5024 = vsel %vm1707, %v4712, %v4873
        %v5025 = vsel %vm1707, %v4713, %v4875
        %v5026 = vsel %vm1707, %v4714, %v4877
        %v5027 = vsel %vm1707, %v4715, %v4879
        %v5028 = vsel %vm1707, %v4716, %v4881
        %v5029 = vsel %vm1707, %v4717, %v4883
        %v5030 = vsel %vm1707, %v4718, %v4885
        %v5031 = vsel %vm1707, %v4719, %v4887
        %v5032 = vsel %vm1707, %v4744, %v4937
        %v5033 = vsel %vm1707, %v4745, %v4939
        %v5034 = vsel %vm1707, %v4746, %v4941
        %v5035 = vsel %vm1707, %v4747, %v4943
        %v5036 = vsel %vm1707, %v4748, %v4945
        %v5037 = vsel %vm1707, %v4749, %v4947
        %v5038 = vsel %vm1707, %v4750, %v4949
        %v5039 = vsel %vm1707, %v4751, %v4951
        %v5040 = vsel %vm1707, %v4752, %v4953
        %v5041 = vsel %vm1707, %v4753, %v4955
        %v5042 = vsel %vm1707, %v4754, %v4957
        %v5043 = vsel %vm1707, %v4755, %v4959
        %v5044 = vsel %vm1707, %v4756, %v4961
        %v5045 = vsel %vm1707, %v4757, %v4963
        %v5046 = vsel %vm1707, %v4758, %v4965
        %v5047 = vsel %vm1707, %v4759, %v4967
        %v5048 = vsel %vm1707, %v4760, %v4969
        %v5049 = vsel %vm1707, %v4761, %v4971
        %v5050 = vsel %vm1707, %v4762, %v4973
        %v5051 = vsel %vm1707, %v4763, %v4975
        %v5052 = vsel %vm1707, %v4764, %v4977
        %v5053 = vsel %vm1707, %v4765, %v4979
        %v5054 = vsel %vm1707, %v4766, %v4981
        %v5055 = vsel %vm1707, %v4767, %v4983
        %v5056 = vpack.c.bf16 %v5009, %v5008
        %v5057 = vpack.c.bf16 %v5033, %v5032
        %v5058 = vpack.c.bf16 %v4793, %v4792
        %v5059 = vpack.c.bf16 %v5011, %v5010
        %v5060 = vpack.c.bf16 %v5035, %v5034
        %v5061 = vpack.c.bf16 %v4795, %v4794
        %v5062 = vpack.c.bf16 %v5013, %v5012
        %v5063 = vpack.c.bf16 %v5037, %v5036
        %v5064 = vpack.c.bf16 %v4797, %v4796
        %v5065 = vpack.c.bf16 %v5015, %v5014
        %v5066 = vpack.c.bf16 %v5039, %v5038
        %v5067 = vpack.c.bf16 %v4799, %v4798
        %v5068 = vpack.c.bf16 %v5017, %v5016
        %v5069 = vpack.c.bf16 %v5041, %v5040
        %v5070 = vpack.c.bf16 %v4801, %v4800
        %v5071 = vpack.c.bf16 %v5019, %v5018
        %v5072 = vpack.c.bf16 %v5043, %v5042
        %v5073 = vpack.c.bf16 %v4803, %v4802
        %v5074 = vpack.c.bf16 %v5021, %v5020
        %v5075 = vpack.c.bf16 %v5045, %v5044
        %v5076 = vpack.c.bf16 %v4805, %v4804
        %v5077 = vpack.c.bf16 %v5023, %v5022
        %v5078 = vpack.c.bf16 %v5047, %v5046
        %v5079 = vpack.c.bf16 %v4807, %v4806
        %v5080 = vpack.c.bf16 %v5025, %v5024
        %v5081 = vpack.c.bf16 %v5049, %v5048
        %v5082 = vpack.c.bf16 %v4809, %v4808
        %v5083 = vpack.c.bf16 %v5027, %v5026
        %v5084 = vpack.c.bf16 %v5051, %v5050
        %v5085 = vpack.c.bf16 %v4811, %v4810
        %v5086 = vpack.c.bf16 %v5029, %v5028
        %v5087 = vpack.c.bf16 %v5053, %v5052
        %v5088 = vpack.c.bf16 %v4813, %v4812
        %v5089 = vpack.c.bf16 %v5031, %v5030
        %v5090 = vpack.c.bf16 %v5055, %v5054
        %v5091 = vpack.c.bf16 %v4815, %v4814
        %v5092 = vld [vmem:[%s7] sm:$0xf]
        %v5093 = vld [vmem:[%s7 + $0x4] sm:$0xf]
        %v5094 = vld [vmem:[%s7 + $0x8] sm:$0xf]
        %v5095 = vld [vmem:[%s7 + $0xc] sm:$0xf]
        %v5096 = vld [vmem:[%s7 + $0x10] sm:$0xf]
        %v5097 = vld [vmem:[%s7 + $0x14] sm:$0xf]
        %v5098 = vld [vmem:[%s7 + $0x18] sm:$0xf]
        %v5099 = vld [vmem:[%s7 + $0x1c] sm:$0xf]
        %v5100 = vld [vmem:[%s7 + $0x20] sm:$0xf]
        %v5101 = vld [vmem:[%s7 + $0x24] sm:$0xf]
        %v5102 = vld [vmem:[%s7 + $0x28] sm:$0xf]
        %v5103 = vld [vmem:[%s7 + $0x2c] sm:$0xf]
        %v5104 = vld [vmem:[%s7 + $0x30] sm:$0xf]
        %v5105 = vld [vmem:[%s7 + $0x34] sm:$0xf]
        %v5106 = vld [vmem:[%s7 + $0x38] sm:$0xf]
        %v5107 = vld [vmem:[%s7 + $0x3c] sm:$0xf]
        %v5108 = vld [vmem:[%s7 + $0x40] sm:$0xf]
        %v5109 = vld [vmem:[%s7 + $0x44] sm:$0xf]
        %v5110 = vld [vmem:[%s7 + $0x48] sm:$0xf]
        %v5111 = vld [vmem:[%s7 + $0x4c] sm:$0xf]
        %v5112 = vld [vmem:[%s7 + $0x50] sm:$0xf]
        %v5113 = vld [vmem:[%s7 + $0x54] sm:$0xf]
        %v5114 = vld [vmem:[%s7 + $0x58] sm:$0xf]
        %v5115 = vld [vmem:[%s7 + $0x5c] sm:$0xf]
        %v5116 = vld [vmem:[%s7 + $0x60] sm:$0xf]
        %v5117 = vld [vmem:[%s7 + $0x64] sm:$0xf]
        %v5118 = vld [vmem:[%s7 + $0x68] sm:$0xf]
        %v5119 = vld [vmem:[%s7 + $0x6c] sm:$0xf]
        %v5120 = vld [vmem:[%s7 + $0x70] sm:$0xf]
        %v5121 = vld [vmem:[%s7 + $0x74] sm:$0xf]
        %v5122 = vld [vmem:[%s7 + $0x78] sm:$0xf]
        %v5123 = vld [vmem:[%s7 + $0x7c] sm:$0xf]
        %v5124 = vld [vmem:[%s7 + $0x80] sm:$0xf]
        %v5125 = vld [vmem:[%s7 + $0x84] sm:$0xf]
        %v5126 = vld [vmem:[%s7 + $0x88] sm:$0xf]
        %v5127 = vld [vmem:[%s7 + $0x8c] sm:$0xf]
        %v5128 = vld [vmem:[%s7 + $0x90] sm:$0xf]
        %v5129 = vld [vmem:[%s7 + $0x94] sm:$0xf]
        %v5130 = vld [vmem:[%s7 + $0x98] sm:$0xf]
        %v5131 = vld [vmem:[%s7 + $0x9c] sm:$0xf]
        %v5132 = vld [vmem:[%s8] sm:$0x1]
        %v5134 = vlaneseq
        %v5135 = vshrl.u32 %v5134, 7
        %v5136 = vsub.s32 0, %v5135
        %v5137 = vrot.slane %v5132, %v5136
        %v5179 = vunpack.c.l.b16 %v5092
        %v5180 = vunpack.c.l.b16 %v5093
        %v5181 = vunpack.c.l.b16 %v5094
        %v5182 = vunpack.c.l.b16 %v5095
        %v5183 = vunpack.c.l.b16 %v5096
        %v5184 = vunpack.c.l.b16 %v5097
        %v5185 = vunpack.c.l.b16 %v5098
        %v5186 = vunpack.c.l.b16 %v5099
        %v5187 = vunpack.c.l.b16 %v5100
        %v5188 = vunpack.c.l.b16 %v5101
        %v5189 = vunpack.c.l.b16 %v5102
        %v5190 = vunpack.c.l.b16 %v5103
        %v5191 = vunpack.c.l.b16 %v5104
        %v5192 = vunpack.c.l.b16 %v5105
        %v5193 = vunpack.c.l.b16 %v5106
        %v5194 = vunpack.c.l.b16 %v5107
        %v5195 = vunpack.c.l.b16 %v5108
        %v5196 = vunpack.c.l.b16 %v5109
        %v5197 = vunpack.c.l.b16 %v5110
        %v5198 = vunpack.c.l.b16 %v5111
        %v5199 = vunpack.c.l.b16 %v5112
        %v5200 = vunpack.c.l.b16 %v5113
        %v5201 = vunpack.c.l.b16 %v5114
        %v5202 = vunpack.c.l.b16 %v5115
        %v5203 = vunpack.c.l.b16 %v5116
        %v5204 = vunpack.c.l.b16 %v5117
        %v5205 = vunpack.c.l.b16 %v5118
        %v5206 = vunpack.c.l.b16 %v5119
        %v5207 = vunpack.c.l.b16 %v5120
        %v5208 = vunpack.c.l.b16 %v5121
        %v5209 = vunpack.c.l.b16 %v5122
        %v5210 = vunpack.c.l.b16 %v5123
        %v5211 = vunpack.c.l.b16 %v5124
        %v5212 = vunpack.c.l.b16 %v5125
        %v5213 = vunpack.c.l.b16 %v5126
        %v5214 = vunpack.c.l.b16 %v5127
        %v5215 = vunpack.c.l.b16 %v5128
        %v5216 = vunpack.c.l.b16 %v5129
        %v5217 = vunpack.c.l.b16 %v5130
        %v5218 = vunpack.c.l.b16 %v5131
        %v5219 = vpack.c.b16 %v5180, %v5179
        %v5220 = vpack.c.b16 %v5182, %v5181
        %v5221 = vpack.c.b16 %v5184, %v5183
        %v5222 = vpack.c.b16 %v5186, %v5185
        %v5223 = vpack.c.b16 %v5188, %v5187
        %v5224 = vpack.c.b16 %v5190, %v5189
        %v5225 = vpack.c.b16 %v5192, %v5191
        %v5226 = vpack.c.b16 %v5194, %v5193
        %v5227 = vpack.c.b16 %v5196, %v5195
        %v5228 = vpack.c.b16 %v5198, %v5197
        %v5229 = vpack.c.b16 %v5200, %v5199
        %v5230 = vpack.c.b16 %v5202, %v5201
        %v5231 = vpack.c.b16 %v5204, %v5203
        %v5232 = vpack.c.b16 %v5206, %v5205
        %v5233 = vpack.c.b16 %v5208, %v5207
        %v5234 = vpack.c.b16 %v5210, %v5209
        %v5235 = vpack.c.b16 %v5212, %v5211
        %v5236 = vpack.c.b16 %v5214, %v5213
        %v5237 = vpack.c.b16 %v5216, %v5215
        %v5238 = vpack.c.b16 %v5218, %v5217
        %v5260 = vsel %vm1707, %v5058, 0
        %v5263 = vsel %vm1707, %v5061, 0
        %v5266 = vsel %vm1707, %v5064, 0
        %v5269 = vsel %vm1707, %v5067, 0
        %v5272 = vsel %vm1707, %v5070, 0
        %v5275 = vsel %vm1707, %v5073, 0
        %v5278 = vsel %vm1707, %v5076, 0
        %v5281 = vsel %vm1707, %v5079, 0
        %v5284 = vsel %vm1707, %v5082, 0
        %v5287 = vsel %vm1707, %v5085, 0
        %v5290 = vsel %vm1707, %v5088, 0
        %v5293 = vsel %vm1707, %v5091, 0
        %5295 = vmatprep.subr.bf16.mxu0 0
        %5296 = vmatpush1.bf16.msra.mxu0 %v5219
        %5297 = vmatprep.subr.bf16.mxu0 0
        %5298 = vmatpush1.bf16.msra.mxu0 %v5220
        %5299 = vmatprep.subr.bf16.mxu0 0
        %5300 = vmatpush1.bf16.msra.mxu0 %v5221
        %5301 = vmatprep.subr.bf16.mxu0 0
        %5302 = vmatpush1.bf16.msra.mxu0 %v5222
        %5303 = vmatprep.subr.bf16.mxu0 0
        %5304 = vmatpush1.bf16.msra.mxu0 %v5223
        %5305 = vmatprep.subr.bf16.mxu0 0
        %5306 = vmatpush1.bf16.msra.mxu0 %v5224
        %5307 = vmatprep.subr.bf16.mxu0 0
        %5308 = vmatpush1.bf16.msra.mxu0 %v5225
        %5309 = vmatprep.subr.bf16.mxu0 0
        %5310 = vmatpush1.bf16.msra.mxu0 %v5226
        %5311 = vmatprep.subr.bf16.mxu0 0
        %5312 = vmatpush1.bf16.msra.mxu0 %v5227
        %5313 = vmatprep.subr.bf16.mxu0 0
        %5314 = vmatpush1.bf16.msra.mxu0 %v5228
        %5315 = vmatprep.subr.bf16.mxu0 0
        %5316 = vmatpush1.bf16.msra.mxu0 %v5229
        %5317 = vmatprep.subr.bf16.mxu0 0
        %5318 = vmatpush1.bf16.msra.mxu0 %v5230
        %5319 = vmatprep.subr.bf16.mxu0 0
        %5320 = vmatpush1.bf16.msra.mxu0 %v5231
        %5321 = vmatprep.subr.bf16.mxu0 0
        %5322 = vmatpush1.bf16.msra.mxu0 %v5232
        %5323 = vmatprep.subr.bf16.mxu0 0
        %5324 = vmatpush1.bf16.msra.mxu0 %v5233
        %5325 = vmatprep.subr.bf16.mxu0 0
        %5326 = vmatpush1.bf16.msra.mxu0 %v5234
        %5327 = vmatprep.mubr.bf16.mxu0 %v5057
        %5328 = vmatmul.mubr.bf16.gmra.mrb[0].mxu0 %v5056
        %v5329 = vpop.f32.mrb[0].mxu0
        %v5330 = vadd.f32 %v5137, %v5329
        %v5331 = vpop.f32.mrb[0].mxu0
        %v5332 = vpop.f32.mrb[0].mxu0
        %v5333 = vadd.f32 %v5137, %v5332
        %v5334 = vpop.f32.mrb[0].mxu0
        %5335 = vmatprep.mubr.bf16.mxu0 %v5060
        %5336 = vmatmul.mubr.bf16.gmra.mrb[0].mxu0 %v5059
        %v5337 = vpop.f32.mrb[0].mxu0
        %v5338 = vadd.f32 %v5137, %v5337
        %v5339 = vpop.f32.mrb[0].mxu0
        %v5340 = vpop.f32.mrb[0].mxu0
        %v5341 = vadd.f32 %v5137, %v5340
        %v5342 = vpop.f32.mrb[0].mxu0
        %5343 = vmatprep.mubr.bf16.mxu0 %v5063
        %5344 = vmatmul.mubr.bf16.gmra.mrb[0].mxu0 %v5062
        %v5345 = vpop.f32.mrb[0].mxu0
        %v5346 = vadd.f32 %v5137, %v5345
        %v5347 = vpop.f32.mrb[0].mxu0
        %v5348 = vpop.f32.mrb[0].mxu0
        %v5349 = vadd.f32 %v5137, %v5348
        %v5350 = vpop.f32.mrb[0].mxu0
        %5351 = vmatprep.mubr.bf16.mxu0 %v5066
        %5352 = vmatmul.mubr.bf16.gmra.mrb[0].mxu0 %v5065
        %v5353 = vpop.f32.mrb[0].mxu0
        %v5354 = vadd.f32 %v5137, %v5353
        %v5355 = vpop.f32.mrb[0].mxu0
        %v5356 = vpop.f32.mrb[0].mxu0
        %v5357 = vadd.f32 %v5137, %v5356
        %v5358 = vpop.f32.mrb[0].mxu0
        %5359 = vmatprep.mubr.bf16.mxu0 %v5069
        %5360 = vmatmul.mubr.bf16.gmra.mrb[0].mxu0 %v5068
        %v5361 = vpop.f32.mrb[0].mxu0
        %v5362 = vadd.f32 %v5137, %v5361
        %v5363 = vpop.f32.mrb[0].mxu0
        %v5364 = vpop.f32.mrb[0].mxu0
        %v5365 = vadd.f32 %v5137, %v5364
        %v5366 = vpop.f32.mrb[0].mxu0
        %5367 = vmatprep.mubr.bf16.mxu0 %v5072
        %5368 = vmatmul.mubr.bf16.gmra.mrb[0].mxu0 %v5071
        %v5369 = vpop.f32.mrb[0].mxu0
        %v5370 = vadd.f32 %v5137, %v5369
        %v5371 = vpop.f32.mrb[0].mxu0
        %v5372 = vpop.f32.mrb[0].mxu0
        %v5373 = vadd.f32 %v5137, %v5372
        %v5374 = vpop.f32.mrb[0].mxu0
        %5375 = vmatprep.mubr.bf16.mxu0 %v5075
        %5376 = vmatmul.mubr.bf16.gmra.mrb[0].mxu0 %v5074
        %v5377 = vpop.f32.mrb[0].mxu0
        %v5378 = vadd.f32 %v5137, %v5377
        %v5379 = vpop.f32.mrb[0].mxu0
        %v5380 = vpop.f32.mrb[0].mxu0
        %v5381 = vadd.f32 %v5137, %v5380
        %v5382 = vpop.f32.mrb[0].mxu0
        %5383 = vmatprep.mubr.bf16.mxu0 %v5078
        %5384 = vmatmul.mubr.bf16.gmra.mrb[0].mxu0 %v5077
        %v5385 = vpop.f32.mrb[0].mxu0
        %v5386 = vadd.f32 %v5137, %v5385
        %v5387 = vpop.f32.mrb[0].mxu0
        %v5388 = vpop.f32.mrb[0].mxu0
        %v5389 = vadd.f32 %v5137, %v5388
        %v5390 = vpop.f32.mrb[0].mxu0
        %5391 = vmatprep.mubr.bf16.mxu0 %v5081
        %5392 = vmatmul.mubr.bf16.gmra.mrb[0].mxu0 %v5080
        %v5393 = vpop.f32.mrb[0].mxu0
        %v5394 = vadd.f32 %v5137, %v5393
        %v5395 = vpop.f32.mrb[0].mxu0
        %v5396 = vpop.f32.mrb[0].mxu0
        %v5397 = vadd.f32 %v5137, %v5396
        %v5398 = vpop.f32.mrb[0].mxu0
        %5399 = vmatprep.mubr.bf16.mxu0 %v5084
        %5400 = vmatmul.mubr.bf16.gmra.mrb[0].mxu0 %v5083
        %v5401 = vpop.f32.mrb[0].mxu0
        %v5402 = vadd.f32 %v5137, %v5401
        %v5403 = vpop.f32.mrb[0].mxu0
        %v5404 = vpop.f32.mrb[0].mxu0
        %v5405 = vadd.f32 %v5137, %v5404
        %v5406 = vpop.f32.mrb[0].mxu0
        %5407 = vmatprep.mubr.bf16.mxu0 %v5087
        %5408 = vmatmul.mubr.bf16.gmra.mrb[0].mxu0 %v5086
        %v5409 = vpop.f32.mrb[0].mxu0
        %v5410 = vadd.f32 %v5137, %v5409
        %v5411 = vpop.f32.mrb[0].mxu0
        %v5412 = vpop.f32.mrb[0].mxu0
        %v5413 = vadd.f32 %v5137, %v5412
        %v5414 = vpop.f32.mrb[0].mxu0
        %5415 = vmatprep.mubr.bf16.mxu0 %v5090
        %5416 = vmatmul.mubr.bf16.gmra.mrb[0].mxu0 %v5089
        %v5417 = vpop.f32.mrb[0].mxu0
        %v5418 = vadd.f32 %v5137, %v5417
        %v5419 = vpop.f32.mrb[0].mxu0
        %v5420 = vpop.f32.mrb[0].mxu0
        %v5421 = vadd.f32 %v5137, %v5420
        %v5422 = vpop.f32.mrb[0].mxu0
        %5423 = vdwg.mxu0
        %5424 = vmatprep.subr.bf16.mxu0 0
        %5425 = vmatpush1.bf16.msra.mxu0 %v5235
        %5426 = vmatprep.subr.bf16.mxu0 0
        %5427 = vmatpush1.bf16.msra.mxu0 %v5236
        %5428 = vmatprep.subr.bf16.mxu0 0
        %5429 = vmatpush1.bf16.msra.mxu0 %v5237
        %5430 = vmatprep.subr.bf16.mxu0 0
        %5431 = vmatpush1.bf16.msra.mxu0 %v5238
        %5432 = vmatprep.subr.bf16.mxu0 0
        %5433 = vmatpush1.bf16.msra.mxu0 0
        %5434 = vmatprep.subr.bf16.mxu0 0
        %5435 = vmatpush1.bf16.msra.mxu0 0
        %5436 = vmatprep.subr.bf16.mxu0 0
        %5437 = vmatpush1.bf16.msra.mxu0 0
        %5438 = vmatprep.subr.bf16.mxu0 0
        %5439 = vmatpush1.bf16.msra.mxu0 0
        %5440 = vmatprep.subr.bf16.mxu0 0
        %5441 = vmatpush1.bf16.msra.mxu0 0
        %5442 = vmatprep.subr.bf16.mxu0 0
        %5443 = vmatpush1.bf16.msra.mxu0 0
        %5444 = vmatprep.subr.bf16.mxu0 0
        %5445 = vmatpush1.bf16.msra.mxu0 0
        %5446 = vmatprep.subr.bf16.mxu0 0
        %5447 = vmatpush1.bf16.msra.mxu0 0
        %5448 = vmatprep.subr.bf16.mxu0 0
        %5449 = vmatpush1.bf16.msra.mxu0 0
        %5450 = vmatprep.subr.bf16.mxu0 0
        %5451 = vmatpush1.bf16.msra.mxu0 0
        %5452 = vmatprep.subr.bf16.mxu0 0
        %5453 = vmatpush1.bf16.msra.mxu0 0
        %5454 = vmatprep.subr.bf16.mxu0 0
        %5455 = vmatpush1.bf16.msra.mxu0 0
        %5456 = vmatprep.mubr.bf16.mxu0 0
        %5457 = vmatmul.mubr.bf16.gmra.mrb[0].mxu0 %v5260
        %v5458 = vpop.f32.mrb[0].mxu0
        %v5459 = vadd.f32 %v5330, %v5458
        %v5460 = vpop.f32.mrb[0].mxu0
        %v5461 = vpop.f32.mrb[0].mxu0
        %v5462 = vadd.f32 %v5333, %v5461
        %v5463 = vpop.f32.mrb[0].mxu0
        %5464 = vmatprep.mubr.bf16.mxu0 0
        %5465 = vmatmul.mubr.bf16.gmra.mrb[0].mxu0 %v5263
        %v5466 = vpop.f32.mrb[0].mxu0
        %v5467 = vadd.f32 %v5338, %v5466
        %v5468 = vpop.f32.mrb[0].mxu0
        %v5469 = vpop.f32.mrb[0].mxu0
        %v5470 = vadd.f32 %v5341, %v5469
        %v5471 = vpop.f32.mrb[0].mxu0
        %5472 = vmatprep.mubr.bf16.mxu0 0
        %5473 = vmatmul.mubr.bf16.gmra.mrb[0].mxu0 %v5266
        %v5474 = vpop.f32.mrb[0].mxu0
        %v5475 = vadd.f32 %v5346, %v5474
        %v5476 = vpop.f32.mrb[0].mxu0
        %v5477 = vpop.f32.mrb[0].mxu0
        %v5478 = vadd.f32 %v5349, %v5477
        %v5479 = vpop.f32.mrb[0].mxu0
        %5480 = vmatprep.mubr.bf16.mxu0 0
        %5481 = vmatmul.mubr.bf16.gmra.mrb[0].mxu0 %v5269
        %v5482 = vpop.f32.mrb[0].mxu0
        %v5483 = vadd.f32 %v5354, %v5482
        %v5484 = vpop.f32.mrb[0].mxu0
        %v5485 = vpop.f32.mrb[0].mxu0
        %v5486 = vadd.f32 %v5357, %v5485
        %v5487 = vpop.f32.mrb[0].mxu0
        %5488 = vmatprep.mubr.bf16.mxu0 0
        %5489 = vmatmul.mubr.bf16.gmra.mrb[0].mxu0 %v5272
        %v5490 = vpop.f32.mrb[0].mxu0
        %v5491 = vadd.f32 %v5362, %v5490
        %v5492 = vpop.f32.mrb[0].mxu0
        %v5493 = vpop.f32.mrb[0].mxu0
        %v5494 = vadd.f32 %v5365, %v5493
        %v5495 = vpop.f32.mrb[0].mxu0
        %5496 = vmatprep.mubr.bf16.mxu0 0
        %5497 = vmatmul.mubr.bf16.gmra.mrb[0].mxu0 %v5275
        %v5498 = vpop.f32.mrb[0].mxu0
        %v5499 = vadd.f32 %v5370, %v5498
        %v5500 = vpop.f32.mrb[0].mxu0
        %v5501 = vpop.f32.mrb[0].mxu0
        %v5502 = vadd.f32 %v5373, %v5501
        %v5503 = vpop.f32.mrb[0].mxu0
        %5504 = vmatprep.mubr.bf16.mxu0 0
        %5505 = vmatmul.mubr.bf16.gmra.mrb[0].mxu0 %v5278
        %v5506 = vpop.f32.mrb[0].mxu0
        %v5507 = vadd.f32 %v5378, %v5506
        %v5508 = vpop.f32.mrb[0].mxu0
        %v5509 = vpop.f32.mrb[0].mxu0
        %v5510 = vadd.f32 %v5381, %v5509
        %v5511 = vpop.f32.mrb[0].mxu0
        %5512 = vmatprep.mubr.bf16.mxu0 0
        %5513 = vmatmul.mubr.bf16.gmra.mrb[0].mxu0 %v5281
        %v5514 = vpop.f32.mrb[0].mxu0
        %v5515 = vadd.f32 %v5386, %v5514
        %v5516 = vpop.f32.mrb[0].mxu0
        %v5517 = vpop.f32.mrb[0].mxu0
        %v5518 = vadd.f32 %v5389, %v5517
        %v5519 = vpop.f32.mrb[0].mxu0
        %5520 = vmatprep.mubr.bf16.mxu0 0
        %5521 = vmatmul.mubr.bf16.gmra.mrb[0].mxu0 %v5284
        %v5522 = vpop.f32.mrb[0].mxu0
        %v5523 = vadd.f32 %v5394, %v5522
        %v5524 = vpop.f32.mrb[0].mxu0
        %v5525 = vpop.f32.mrb[0].mxu0
        %v5526 = vadd.f32 %v5397, %v5525
        %v5527 = vpop.f32.mrb[0].mxu0
        %5528 = vmatprep.mubr.bf16.mxu0 0
        %5529 = vmatmul.mubr.bf16.gmra.mrb[0].mxu0 %v5287
        %v5530 = vpop.f32.mrb[0].mxu0
        %v5531 = vadd.f32 %v5402, %v5530
        %v5532 = vpop.f32.mrb[0].mxu0
        %v5533 = vpop.f32.mrb[0].mxu0
        %v5534 = vadd.f32 %v5405, %v5533
        %v5535 = vpop.f32.mrb[0].mxu0
        %5536 = vmatprep.mubr.bf16.mxu0 0
        %5537 = vmatmul.mubr.bf16.gmra.mrb[0].mxu0 %v5290
        %v5538 = vpop.f32.mrb[0].mxu0
        %v5539 = vadd.f32 %v5410, %v5538
        %v5540 = vpop.f32.mrb[0].mxu0
        %v5541 = vpop.f32.mrb[0].mxu0
        %v5542 = vadd.f32 %v5413, %v5541
        %v5543 = vpop.f32.mrb[0].mxu0
        %5544 = vmatprep.mubr.bf16.mxu0 0
        %5545 = vmatmul.mubr.bf16.gmra.mrb[0].mxu0 %v5293
        %v5546 = vpop.f32.mrb[0].mxu0
        %v5547 = vadd.f32 %v5418, %v5546
        %v5548 = vpop.f32.mrb[0].mxu0
        %v5549 = vpop.f32.mrb[0].mxu0
        %v5550 = vadd.f32 %v5421, %v5549
        %v5551 = vpop.f32.mrb[0].mxu0
        %5552 = vdwg.mxu0
        %v5553 = vmax.f32 %v5459, 0.0
        %v5554 = vmax.f32 %v5462, 0.0
        %v5555 = vmax.f32 %v5467, 0.0
        %v5556 = vmax.f32 %v5470, 0.0
        %v5557 = vmax.f32 %v5475, 0.0
        %v5558 = vmax.f32 %v5478, 0.0
        %v5559 = vmax.f32 %v5483, 0.0
        %v5560 = vmax.f32 %v5486, 0.0
        %v5561 = vmax.f32 %v5491, 0.0
        %v5562 = vmax.f32 %v5494, 0.0
        %v5563 = vmax.f32 %v5499, 0.0
        %v5564 = vmax.f32 %v5502, 0.0
        %v5565 = vmax.f32 %v5507, 0.0
        %v5566 = vmax.f32 %v5510, 0.0
        %v5567 = vmax.f32 %v5515, 0.0
        %v5568 = vmax.f32 %v5518, 0.0
        %v5569 = vmax.f32 %v5523, 0.0
        %v5570 = vmax.f32 %v5526, 0.0
        %v5571 = vmax.f32 %v5531, 0.0
        %v5572 = vmax.f32 %v5534, 0.0
        %v5573 = vmax.f32 %v5539, 0.0
        %v5574 = vmax.f32 %v5542, 0.0
        %v5575 = vmax.f32 %v5547, 0.0
        %v5576 = vmax.f32 %v5550, 0.0
        %5601 = vrot.lane.b32.xlu0 %v5459, 64
        %v5602 = vpop.permute.xlu0 %5601
        %5603 = vrot.lane.b32.xlu0 %v5462, 64
        %v5604 = vpop.permute.xlu0 %5603
        %5605 = vrot.lane.b32.xlu0 %v5467, 64
        %v5606 = vpop.permute.xlu0 %5605
        %5607 = vrot.lane.b32.xlu0 %v5470, 64
        %v5608 = vpop.permute.xlu0 %5607
        %5609 = vrot.lane.b32.xlu0 %v5475, 64
        %v5610 = vpop.permute.xlu0 %5609
        %5611 = vrot.lane.b32.xlu0 %v5478, 64
        %v5612 = vpop.permute.xlu0 %5611
        %5613 = vrot.lane.b32.xlu0 %v5483, 64
        %v5614 = vpop.permute.xlu0 %5613
        %5615 = vrot.lane.b32.xlu0 %v5486, 64
        %v5616 = vpop.permute.xlu0 %5615
        %5617 = vrot.lane.b32.xlu0 %v5491, 64
        %v5618 = vpop.permute.xlu0 %5617
        %5619 = vrot.lane.b32.xlu0 %v5494, 64
        %v5620 = vpop.permute.xlu0 %5619
        %5621 = vrot.lane.b32.xlu0 %v5499, 64
        %v5622 = vpop.permute.xlu0 %5621
        %5623 = vrot.lane.b32.xlu0 %v5502, 64
        %v5624 = vpop.permute.xlu0 %5623
        %5625 = vrot.lane.b32.xlu0 %v5507, 64
        %v5626 = vpop.permute.xlu0 %5625
        %5627 = vrot.lane.b32.xlu0 %v5510, 64
        %v5628 = vpop.permute.xlu0 %5627
        %5629 = vrot.lane.b32.xlu0 %v5515, 64
        %v5630 = vpop.permute.xlu0 %5629
        %5631 = vrot.lane.b32.xlu0 %v5518, 64
        %v5632 = vpop.permute.xlu0 %5631
        %5633 = vrot.lane.b32.xlu0 %v5523, 64
        %v5634 = vpop.permute.xlu0 %5633
        %5635 = vrot.lane.b32.xlu0 %v5526, 64
        %v5636 = vpop.permute.xlu0 %5635
        %5637 = vrot.lane.b32.xlu0 %v5531, 64
        %v5638 = vpop.permute.xlu0 %5637
        %5639 = vrot.lane.b32.xlu0 %v5534, 64
        %v5640 = vpop.permute.xlu0 %5639
        %5641 = vrot.lane.b32.xlu0 %v5539, 64
        %v5642 = vpop.permute.xlu0 %5641
        %5643 = vrot.lane.b32.xlu0 %v5542, 64
        %v5644 = vpop.permute.xlu0 %5643
        %5645 = vrot.lane.b32.xlu0 %v5547, 64
        %v5646 = vpop.permute.xlu0 %5645
        %5647 = vrot.lane.b32.xlu0 %v5550, 64
        %v5648 = vpop.permute.xlu0 %5647
        %v5673 = vadd.f32 %v5553, %v5602
        %v5674 = vadd.f32 %v5554, %v5604
        %v5675 = vadd.f32 %v5555, %v5606
        %v5676 = vadd.f32 %v5556, %v5608
        %v5677 = vadd.f32 %v5557, %v5610
        %v5678 = vadd.f32 %v5558, %v5612
        %v5679 = vadd.f32 %v5559, %v5614
        %v5680 = vadd.f32 %v5560, %v5616
        %v5681 = vadd.f32 %v5561, %v5618
        %v5682 = vadd.f32 %v5562, %v5620
        %v5683 = vadd.f32 %v5563, %v5622
        %v5684 = vadd.f32 %v5564, %v5624
        %v5685 = vadd.f32 %v5565, %v5626
        %v5686 = vadd.f32 %v5566, %v5628
        %v5687 = vadd.f32 %v5567, %v5630
        %v5688 = vadd.f32 %v5568, %v5632
        %v5689 = vadd.f32 %v5569, %v5634
        %v5690 = vadd.f32 %v5570, %v5636
        %v5691 = vadd.f32 %v5571, %v5638
        %v5692 = vadd.f32 %v5572, %v5640
        %v5693 = vadd.f32 %v5573, %v5642
        %v5694 = vadd.f32 %v5574, %v5644
        %v5695 = vadd.f32 %v5575, %v5646
        %v5696 = vadd.f32 %v5576, %v5648
        %v5697 = vmul.f32 %v5673, %v1343
        %v5698 = vmul.f32 %v5674, %v1344
        %v5699 = vmul.f32 %v5675, %v1345
        %v5700 = vmul.f32 %v5676, %v1346
        %v5701 = vmul.f32 %v5677, %v1347
        %v5702 = vmul.f32 %v5678, %v1348
        %v5703 = vmul.f32 %v5679, %v1349
        %v5704 = vmul.f32 %v5680, %v1350
        %v5705 = vmul.f32 %v5681, %v1351
        %v5706 = vmul.f32 %v5682, %v1352
        %v5707 = vmul.f32 %v5683, %v1353
        %v5708 = vmul.f32 %v5684, %v1354
        %v5709 = vmul.f32 %v5685, %v1355
        %v5710 = vmul.f32 %v5686, %v1356
        %v5711 = vmul.f32 %v5687, %v1357
        %v5712 = vmul.f32 %v5688, %v1358
        %v5713 = vmul.f32 %v5689, %v1359
        %v5714 = vmul.f32 %v5690, %v1360
        %v5715 = vmul.f32 %v5691, %v1361
        %v5716 = vmul.f32 %v5692, %v1362
        %v5717 = vmul.f32 %v5693, %v1363
        %v5718 = vmul.f32 %v5694, %v1364
        %v5719 = vmul.f32 %v5695, %v1365
        %v5720 = vmul.f32 %v5696, %v1366
        %5721 = vst.msk [vmem:[#allocation2 + $0x4] sm:$0xff] %vm1707, %v5697
        %5722 = vst.msk [vmem:[#allocation2 + $0xc] sm:$0xff] %vm1707, %v5698
        %5723 = vst.msk [vmem:[#allocation2 + $0x14] sm:$0xff] %vm1707, %v5699
        %5724 = vst.msk [vmem:[#allocation2 + $0x1c] sm:$0xff] %vm1707, %v5700
        %5725 = vst.msk [vmem:[#allocation2 + $0x24] sm:$0xff] %vm1707, %v5701
        %5726 = vst.msk [vmem:[#allocation2 + $0x2c] sm:$0xff] %vm1707, %v5702
        %5727 = vst.msk [vmem:[#allocation2 + $0x34] sm:$0xff] %vm1707, %v5703
        %5728 = vst.msk [vmem:[#allocation2 + $0x3c] sm:$0xff] %vm1707, %v5704
        %5729 = vst.msk [vmem:[#allocation2 + $0x44] sm:$0xff] %vm1707, %v5705
        %5730 = vst.msk [vmem:[#allocation2 + $0x4c] sm:$0xff] %vm1707, %v5706
        %5731 = vst.msk [vmem:[#allocation2 + $0x54] sm:$0xff] %vm1707, %v5707
        %5732 = vst.msk [vmem:[#allocation2 + $0x5c] sm:$0xff] %vm1707, %v5708
        %5733 = vst.msk [vmem:[#allocation2 + $0x64] sm:$0xff] %vm1707, %v5709
        %5734 = vst.msk [vmem:[#allocation2 + $0x6c] sm:$0xff] %vm1707, %v5710
        %5735 = vst.msk [vmem:[#allocation2 + $0x74] sm:$0xff] %vm1707, %v5711
        %5736 = vst.msk [vmem:[#allocation2 + $0x7c] sm:$0xff] %vm1707, %v5712
        %5737 = vst.msk [vmem:[#allocation2 + $0x84] sm:$0xff] %vm1707, %v5713
        %5738 = vst.msk [vmem:[#allocation2 + $0x8c] sm:$0xff] %vm1707, %v5714
        %5739 = vst.msk [vmem:[#allocation2 + $0x94] sm:$0xff] %vm1707, %v5715
        %5740 = vst.msk [vmem:[#allocation2 + $0x9c] sm:$0xff] %vm1707, %v5716
        %5741 = vst.msk [vmem:[#allocation2 + $0xa4] sm:$0xff] %vm1707, %v5717
        %5742 = vst.msk [vmem:[#allocation2 + $0xac] sm:$0xff] %vm1707, %v5718
        %5743 = vst.msk [vmem:[#allocation2 + $0xb4] sm:$0xff] %vm1707, %v5719
        %5744 = vst.msk [vmem:[#allocation2 + $0xbc] sm:$0xff] %vm1707, %v5720
        %v5745 = vld [vmem:[#allocation2 + $0x1] sm:$0xff]
        %v5746 = vld [vmem:[#allocation2 + $0x9] sm:$0xff]
        %v5747 = vld [vmem:[#allocation2 + $0x11] sm:$0xff]
        %v5748 = vld [vmem:[#allocation2 + $0x19] sm:$0xff]
        %v5749 = vld [vmem:[#allocation2 + $0x21] sm:$0xff]
        %v5750 = vld [vmem:[#allocation2 + $0x29] sm:$0xff]
        %v5751 = vld [vmem:[#allocation2 + $0x31] sm:$0xff]
        %v5752 = vld [vmem:[#allocation2 + $0x39] sm:$0xff]
        %v5753 = vld [vmem:[#allocation2 + $0x41] sm:$0xff]
        %v5754 = vld [vmem:[#allocation2 + $0x49] sm:$0xff]
        %v5755 = vld [vmem:[#allocation2 + $0x51] sm:$0xff]
        %v5756 = vld [vmem:[#allocation2 + $0x59] sm:$0xff]
        %v5757 = vld [vmem:[#allocation2 + $0x61] sm:$0xff]
        %v5758 = vld [vmem:[#allocation2 + $0x69] sm:$0xff]
        %v5759 = vld [vmem:[#allocation2 + $0x71] sm:$0xff]
        %v5760 = vld [vmem:[#allocation2 + $0x79] sm:$0xff]
        %v5761 = vld [vmem:[#allocation2 + $0x81] sm:$0xff]
        %v5762 = vld [vmem:[#allocation2 + $0x89] sm:$0xff]
        %v5763 = vld [vmem:[#allocation2 + $0x91] sm:$0xff]
        %v5764 = vld [vmem:[#allocation2 + $0x99] sm:$0xff]
        %v5765 = vld [vmem:[#allocation2 + $0xa1] sm:$0xff]
        %v5766 = vld [vmem:[#allocation2 + $0xa9] sm:$0xff]
        %v5767 = vld [vmem:[#allocation2 + $0xb1] sm:$0xff]
        %v5768 = vld [vmem:[#allocation2 + $0xb9] sm:$0xff]
        %v5769 = vld [vmem:[#allocation2 + $0x2] sm:$0xff]
        %v5770 = vld [vmem:[#allocation2 + $0xa] sm:$0xff]
        %v5771 = vld [vmem:[#allocation2 + $0x12] sm:$0xff]
        %v5772 = vld [vmem:[#allocation2 + $0x1a] sm:$0xff]
        %v5773 = vld [vmem:[#allocation2 + $0x22] sm:$0xff]
        %v5774 = vld [vmem:[#allocation2 + $0x2a] sm:$0xff]
        %v5775 = vld [vmem:[#allocation2 + $0x32] sm:$0xff]
        %v5776 = vld [vmem:[#allocation2 + $0x3a] sm:$0xff]
        %v5777 = vld [vmem:[#allocation2 + $0x42] sm:$0xff]
        %v5778 = vld [vmem:[#allocation2 + $0x4a] sm:$0xff]
        %v5779 = vld [vmem:[#allocation2 + $0x52] sm:$0xff]
        %v5780 = vld [vmem:[#allocation2 + $0x5a] sm:$0xff]
        %v5781 = vld [vmem:[#allocation2 + $0x62] sm:$0xff]
        %v5782 = vld [vmem:[#allocation2 + $0x6a] sm:$0xff]
        %v5783 = vld [vmem:[#allocation2 + $0x72] sm:$0xff]
        %v5784 = vld [vmem:[#allocation2 + $0x7a] sm:$0xff]
        %v5785 = vld [vmem:[#allocation2 + $0x82] sm:$0xff]
        %v5786 = vld [vmem:[#allocation2 + $0x8a] sm:$0xff]
        %v5787 = vld [vmem:[#allocation2 + $0x92] sm:$0xff]
        %v5788 = vld [vmem:[#allocation2 + $0x9a] sm:$0xff]
        %v5789 = vld [vmem:[#allocation2 + $0xa2] sm:$0xff]
        %v5790 = vld [vmem:[#allocation2 + $0xaa] sm:$0xff]
        %v5791 = vld [vmem:[#allocation2 + $0xb2] sm:$0xff]
        %v5792 = vld [vmem:[#allocation2 + $0xba] sm:$0xff]
        %v5793 = vld [vmem:[#allocation2 + $0x3] sm:$0xff]
        %v5794 = vld [vmem:[#allocation2 + $0xb] sm:$0xff]
        %v5795 = vld [vmem:[#allocation2 + $0x13] sm:$0xff]
        %v5796 = vld [vmem:[#allocation2 + $0x1b] sm:$0xff]
        %v5797 = vld [vmem:[#allocation2 + $0x23] sm:$0xff]
        %v5798 = vld [vmem:[#allocation2 + $0x2b] sm:$0xff]
        %v5799 = vld [vmem:[#allocation2 + $0x33] sm:$0xff]
        %v5800 = vld [vmem:[#allocation2 + $0x3b] sm:$0xff]
        %v5801 = vld [vmem:[#allocation2 + $0x43] sm:$0xff]
        %v5802 = vld [vmem:[#allocation2 + $0x4b] sm:$0xff]
        %v5803 = vld [vmem:[#allocation2 + $0x53] sm:$0xff]
        %v5804 = vld [vmem:[#allocation2 + $0x5b] sm:$0xff]
        %v5805 = vld [vmem:[#allocation2 + $0x63] sm:$0xff]
        %v5806 = vld [vmem:[#allocation2 + $0x6b] sm:$0xff]
        %v5807 = vld [vmem:[#allocation2 + $0x73] sm:$0xff]
        %v5808 = vld [vmem:[#allocation2 + $0x7b] sm:$0xff]
        %v5809 = vld [vmem:[#allocation2 + $0x83] sm:$0xff]
        %v5810 = vld [vmem:[#allocation2 + $0x8b] sm:$0xff]
        %v5811 = vld [vmem:[#allocation2 + $0x93] sm:$0xff]
        %v5812 = vld [vmem:[#allocation2 + $0x9b] sm:$0xff]
        %v5813 = vld [vmem:[#allocation2 + $0xa3] sm:$0xff]
        %v5814 = vld [vmem:[#allocation2 + $0xab] sm:$0xff]
        %v5815 = vld [vmem:[#allocation2 + $0xb3] sm:$0xff]
        %v5816 = vld [vmem:[#allocation2 + $0xbb] sm:$0xff]
        %v5817 = vld [vmem:[#allocation2 + $0x4] sm:$0xff]
        %v5818 = vld [vmem:[#allocation2 + $0xc] sm:$0xff]
        %v5819 = vld [vmem:[#allocation2 + $0x14] sm:$0xff]
        %v5820 = vld [vmem:[#allocation2 + $0x1c] sm:$0xff]
        %v5821 = vld [vmem:[#allocation2 + $0x24] sm:$0xff]
        %v5822 = vld [vmem:[#allocation2 + $0x2c] sm:$0xff]
        %v5823 = vld [vmem:[#allocation2 + $0x34] sm:$0xff]
        %v5824 = vld [vmem:[#allocation2 + $0x3c] sm:$0xff]
        %v5825 = vld [vmem:[#allocation2 + $0x44] sm:$0xff]
        %v5826 = vld [vmem:[#allocation2 + $0x4c] sm:$0xff]
        %v5827 = vld [vmem:[#allocation2 + $0x54] sm:$0xff]
        %v5828 = vld [vmem:[#allocation2 + $0x5c] sm:$0xff]
        %v5829 = vld [vmem:[#allocation2 + $0x64] sm:$0xff]
        %v5830 = vld [vmem:[#allocation2 + $0x6c] sm:$0xff]
        %v5831 = vld [vmem:[#allocation2 + $0x74] sm:$0xff]
        %v5832 = vld [vmem:[#allocation2 + $0x7c] sm:$0xff]
        %v5833 = vld [vmem:[#allocation2 + $0x84] sm:$0xff]
        %v5834 = vld [vmem:[#allocation2 + $0x8c] sm:$0xff]
        %v5835 = vld [vmem:[#allocation2 + $0x94] sm:$0xff]
        %v5836 = vld [vmem:[#allocation2 + $0x9c] sm:$0xff]
        %v5837 = vld [vmem:[#allocation2 + $0xa4] sm:$0xff]
        %v5838 = vld [vmem:[#allocation2 + $0xac] sm:$0xff]
        %v5839 = vld [vmem:[#allocation2 + $0xb4] sm:$0xff]
        %v5840 = vld [vmem:[#allocation2 + $0xbc] sm:$0xff]
        %v5841 = vld [vmem:[#allocation2 + $0x5] sm:$0xff]
        %v5842 = vld [vmem:[#allocation2 + $0xd] sm:$0xff]
        %v5843 = vld [vmem:[#allocation2 + $0x15] sm:$0xff]
        %v5844 = vld [vmem:[#allocation2 + $0x1d] sm:$0xff]
        %v5845 = vld [vmem:[#allocation2 + $0x25] sm:$0xff]
        %v5846 = vld [vmem:[#allocation2 + $0x2d] sm:$0xff]
        %v5847 = vld [vmem:[#allocation2 + $0x35] sm:$0xff]
        %v5848 = vld [vmem:[#allocation2 + $0x3d] sm:$0xff]
        %v5849 = vld [vmem:[#allocation2 + $0x45] sm:$0xff]
        %v5850 = vld [vmem:[#allocation2 + $0x4d] sm:$0xff]
        %v5851 = vld [vmem:[#allocation2 + $0x55] sm:$0xff]
        %v5852 = vld [vmem:[#allocation2 + $0x5d] sm:$0xff]
        %v5853 = vld [vmem:[#allocation2 + $0x65] sm:$0xff]
        %v5854 = vld [vmem:[#allocation2 + $0x6d] sm:$0xff]
        %v5855 = vld [vmem:[#allocation2 + $0x75] sm:$0xff]
        %v5856 = vld [vmem:[#allocation2 + $0x7d] sm:$0xff]
        %v5857 = vld [vmem:[#allocation2 + $0x85] sm:$0xff]
        %v5858 = vld [vmem:[#allocation2 + $0x8d] sm:$0xff]
        %v5859 = vld [vmem:[#allocation2 + $0x95] sm:$0xff]
        %v5860 = vld [vmem:[#allocation2 + $0x9d] sm:$0xff]
        %v5861 = vld [vmem:[#allocation2 + $0xa5] sm:$0xff]
        %v5862 = vld [vmem:[#allocation2 + $0xad] sm:$0xff]
        %v5863 = vld [vmem:[#allocation2 + $0xb5] sm:$0xff]
        %v5864 = vld [vmem:[#allocation2 + $0xbd] sm:$0xff]
        %v5865 = vld [vmem:[#allocation2 + $0x6] sm:$0xff]
        %v5866 = vld [vmem:[#allocation2 + $0xe] sm:$0xff]
        %v5867 = vld [vmem:[#allocation2 + $0x16] sm:$0xff]
        %v5868 = vld [vmem:[#allocation2 + $0x1e] sm:$0xff]
        %v5869 = vld [vmem:[#allocation2 + $0x26] sm:$0xff]
        %v5870 = vld [vmem:[#allocation2 + $0x2e] sm:$0xff]
        %v5871 = vld [vmem:[#allocation2 + $0x36] sm:$0xff]
        %v5872 = vld [vmem:[#allocation2 + $0x3e] sm:$0xff]
        %v5873 = vld [vmem:[#allocation2 + $0x46] sm:$0xff]
        %v5874 = vld [vmem:[#allocation2 + $0x4e] sm:$0xff]
        %v5875 = vld [vmem:[#allocation2 + $0x56] sm:$0xff]
        %v5876 = vld [vmem:[#allocation2 + $0x5e] sm:$0xff]
        %v5877 = vld [vmem:[#allocation2 + $0x66] sm:$0xff]
        %v5878 = vld [vmem:[#allocation2 + $0x6e] sm:$0xff]
        %v5879 = vld [vmem:[#allocation2 + $0x76] sm:$0xff]
        %v5880 = vld [vmem:[#allocation2 + $0x7e] sm:$0xff]
        %v5881 = vld [vmem:[#allocation2 + $0x86] sm:$0xff]
        %v5882 = vld [vmem:[#allocation2 + $0x8e] sm:$0xff]
        %v5883 = vld [vmem:[#allocation2 + $0x96] sm:$0xff]
        %v5884 = vld [vmem:[#allocation2 + $0x9e] sm:$0xff]
        %v5885 = vld [vmem:[#allocation2 + $0xa6] sm:$0xff]
        %v5886 = vld [vmem:[#allocation2 + $0xae] sm:$0xff]
        %v5887 = vld [vmem:[#allocation2 + $0xb6] sm:$0xff]
        %v5888 = vld [vmem:[#allocation2 + $0xbe] sm:$0xff]
        %v5889 = vld [vmem:[#allocation2 + $0x7] sm:$0xff]
        %v5890 = vld [vmem:[#allocation2 + $0xf] sm:$0xff]
        %v5891 = vld [vmem:[#allocation2 + $0x17] sm:$0xff]
        %v5892 = vld [vmem:[#allocation2 + $0x1f] sm:$0xff]
        %v5893 = vld [vmem:[#allocation2 + $0x27] sm:$0xff]
        %v5894 = vld [vmem:[#allocation2 + $0x2f] sm:$0xff]
        %v5895 = vld [vmem:[#allocation2 + $0x37] sm:$0xff]
        %v5896 = vld [vmem:[#allocation2 + $0x3f] sm:$0xff]
        %v5897 = vld [vmem:[#allocation2 + $0x47] sm:$0xff]
        %v5898 = vld [vmem:[#allocation2 + $0x4f] sm:$0xff]
        %v5899 = vld [vmem:[#allocation2 + $0x57] sm:$0xff]
        %v5900 = vld [vmem:[#allocation2 + $0x5f] sm:$0xff]
        %v5901 = vld [vmem:[#allocation2 + $0x67] sm:$0xff]
        %v5902 = vld [vmem:[#allocation2 + $0x6f] sm:$0xff]
        %v5903 = vld [vmem:[#allocation2 + $0x77] sm:$0xff]
        %v5904 = vld [vmem:[#allocation2 + $0x7f] sm:$0xff]
        %v5905 = vld [vmem:[#allocation2 + $0x87] sm:$0xff]
        %v5906 = vld [vmem:[#allocation2 + $0x8f] sm:$0xff]
        %v5907 = vld [vmem:[#allocation2 + $0x97] sm:$0xff]
        %v5908 = vld [vmem:[#allocation2 + $0x9f] sm:$0xff]
        %v5909 = vld [vmem:[#allocation2 + $0xa7] sm:$0xff]
        %v5910 = vld [vmem:[#allocation2 + $0xaf] sm:$0xff]
        %v5911 = vld [vmem:[#allocation2 + $0xb7] sm:$0xff]
        %v5912 = vld [vmem:[#allocation2 + $0xbf] sm:$0xff]
        %5937 = vrot.lane.b32.xlu0 %v5769, 64
        %v5938 = vpop.permute.xlu0 %5937
        %5939 = vrot.lane.b32.xlu0 %v5770, 64
        %v5940 = vpop.permute.xlu0 %5939
        %5941 = vrot.lane.b32.xlu0 %v5771, 64
        %v5942 = vpop.permute.xlu0 %5941
        %5943 = vrot.lane.b32.xlu0 %v5772, 64
        %v5944 = vpop.permute.xlu0 %5943
        %5945 = vrot.lane.b32.xlu0 %v5773, 64
        %v5946 = vpop.permute.xlu0 %5945
        %5947 = vrot.lane.b32.xlu0 %v5774, 64
        %v5948 = vpop.permute.xlu0 %5947
        %5949 = vrot.lane.b32.xlu0 %v5775, 64
        %v5950 = vpop.permute.xlu0 %5949
        %5951 = vrot.lane.b32.xlu0 %v5776, 64
        %v5952 = vpop.permute.xlu0 %5951
        %5953 = vrot.lane.b32.xlu0 %v5777, 64
        %v5954 = vpop.permute.xlu0 %5953
        %5955 = vrot.lane.b32.xlu0 %v5778, 64
        %v5956 = vpop.permute.xlu0 %5955
        %5957 = vrot.lane.b32.xlu0 %v5779, 64
        %v5958 = vpop.permute.xlu0 %5957
        %5959 = vrot.lane.b32.xlu0 %v5780, 64
        %v5960 = vpop.permute.xlu0 %5959
        %5961 = vrot.lane.b32.xlu0 %v5781, 64
        %v5962 = vpop.permute.xlu0 %5961
        %5963 = vrot.lane.b32.xlu0 %v5782, 64
        %v5964 = vpop.permute.xlu0 %5963
        %5965 = vrot.lane.b32.xlu0 %v5783, 64
        %v5966 = vpop.permute.xlu0 %5965
        %5967 = vrot.lane.b32.xlu0 %v5784, 64
        %v5968 = vpop.permute.xlu0 %5967
        %5969 = vrot.lane.b32.xlu0 %v5785, 64
        %v5970 = vpop.permute.xlu0 %5969
        %5971 = vrot.lane.b32.xlu0 %v5786, 64
        %v5972 = vpop.permute.xlu0 %5971
        %5973 = vrot.lane.b32.xlu0 %v5787, 64
        %v5974 = vpop.permute.xlu0 %5973
        %5975 = vrot.lane.b32.xlu0 %v5788, 64
        %v5976 = vpop.permute.xlu0 %5975
        %5977 = vrot.lane.b32.xlu0 %v5789, 64
        %v5978 = vpop.permute.xlu0 %5977
        %5979 = vrot.lane.b32.xlu0 %v5790, 64
        %v5980 = vpop.permute.xlu0 %5979
        %5981 = vrot.lane.b32.xlu0 %v5791, 64
        %v5982 = vpop.permute.xlu0 %5981
        %5983 = vrot.lane.b32.xlu0 %v5792, 64
        %v5984 = vpop.permute.xlu0 %5983
        %6033 = vrot.lane.b32.xlu0 %v5817, 64
        %v6034 = vpop.permute.xlu0 %6033
        %6035 = vrot.lane.b32.xlu0 %v5818, 64
        %v6036 = vpop.permute.xlu0 %6035
        %6037 = vrot.lane.b32.xlu0 %v5819, 64
        %v6038 = vpop.permute.xlu0 %6037
        %6039 = vrot.lane.b32.xlu0 %v5820, 64
        %v6040 = vpop.permute.xlu0 %6039
        %6041 = vrot.lane.b32.xlu0 %v5821, 64
        %v6042 = vpop.permute.xlu0 %6041
        %6043 = vrot.lane.b32.xlu0 %v5822, 64
        %v6044 = vpop.permute.xlu0 %6043
        %6045 = vrot.lane.b32.xlu0 %v5823, 64
        %v6046 = vpop.permute.xlu0 %6045
        %6047 = vrot.lane.b32.xlu0 %v5824, 64
        %v6048 = vpop.permute.xlu0 %6047
        %6049 = vrot.lane.b32.xlu0 %v5825, 64
        %v6050 = vpop.permute.xlu0 %6049
        %6051 = vrot.lane.b32.xlu0 %v5826, 64
        %v6052 = vpop.permute.xlu0 %6051
        %6053 = vrot.lane.b32.xlu0 %v5827, 64
        %v6054 = vpop.permute.xlu0 %6053
        %6055 = vrot.lane.b32.xlu0 %v5828, 64
        %v6056 = vpop.permute.xlu0 %6055
        %6057 = vrot.lane.b32.xlu0 %v5829, 64
        %v6058 = vpop.permute.xlu0 %6057
        %6059 = vrot.lane.b32.xlu0 %v5830, 64
        %v6060 = vpop.permute.xlu0 %6059
        %6061 = vrot.lane.b32.xlu0 %v5831, 64
        %v6062 = vpop.permute.xlu0 %6061
        %6063 = vrot.lane.b32.xlu0 %v5832, 64
        %v6064 = vpop.permute.xlu0 %6063
        %6065 = vrot.lane.b32.xlu0 %v5833, 64
        %v6066 = vpop.permute.xlu0 %6065
        %6067 = vrot.lane.b32.xlu0 %v5834, 64
        %v6068 = vpop.permute.xlu0 %6067
        %6069 = vrot.lane.b32.xlu0 %v5835, 64
        %v6070 = vpop.permute.xlu0 %6069
        %6071 = vrot.lane.b32.xlu0 %v5836, 64
        %v6072 = vpop.permute.xlu0 %6071
        %6073 = vrot.lane.b32.xlu0 %v5837, 64
        %v6074 = vpop.permute.xlu0 %6073
        %6075 = vrot.lane.b32.xlu0 %v5838, 64
        %v6076 = vpop.permute.xlu0 %6075
        %6077 = vrot.lane.b32.xlu0 %v5839, 64
        %v6078 = vpop.permute.xlu0 %6077
        %6079 = vrot.lane.b32.xlu0 %v5840, 64
        %v6080 = vpop.permute.xlu0 %6079
        %6129 = vrot.lane.b32.xlu0 %v5865, 64
        %v6130 = vpop.permute.xlu0 %6129
        %6131 = vrot.lane.b32.xlu0 %v5866, 64
        %v6132 = vpop.permute.xlu0 %6131
        %6133 = vrot.lane.b32.xlu0 %v5867, 64
        %v6134 = vpop.permute.xlu0 %6133
        %6135 = vrot.lane.b32.xlu0 %v5868, 64
        %v6136 = vpop.permute.xlu0 %6135
        %6137 = vrot.lane.b32.xlu0 %v5869, 64
        %v6138 = vpop.permute.xlu0 %6137
        %6139 = vrot.lane.b32.xlu0 %v5870, 64
        %v6140 = vpop.permute.xlu0 %6139
        %6141 = vrot.lane.b32.xlu0 %v5871, 64
        %v6142 = vpop.permute.xlu0 %6141
        %6143 = vrot.lane.b32.xlu0 %v5872, 64
        %v6144 = vpop.permute.xlu0 %6143
        %6145 = vrot.lane.b32.xlu0 %v5873, 64
        %v6146 = vpop.permute.xlu0 %6145
        %6147 = vrot.lane.b32.xlu0 %v5874, 64
        %v6148 = vpop.permute.xlu0 %6147
        %6149 = vrot.lane.b32.xlu0 %v5875, 64
        %v6150 = vpop.permute.xlu0 %6149
        %6151 = vrot.lane.b32.xlu0 %v5876, 64
        %v6152 = vpop.permute.xlu0 %6151
        %6153 = vrot.lane.b32.xlu0 %v5877, 64
        %v6154 = vpop.permute.xlu0 %6153
        %6155 = vrot.lane.b32.xlu0 %v5878, 64
        %v6156 = vpop.permute.xlu0 %6155
        %6157 = vrot.lane.b32.xlu0 %v5879, 64
        %v6158 = vpop.permute.xlu0 %6157
        %6159 = vrot.lane.b32.xlu0 %v5880, 64
        %v6160 = vpop.permute.xlu0 %6159
        %6161 = vrot.lane.b32.xlu0 %v5881, 64
        %v6162 = vpop.permute.xlu0 %6161
        %6163 = vrot.lane.b32.xlu0 %v5882, 64
        %v6164 = vpop.permute.xlu0 %6163
        %6165 = vrot.lane.b32.xlu0 %v5883, 64
        %v6166 = vpop.permute.xlu0 %6165
        %6167 = vrot.lane.b32.xlu0 %v5884, 64
        %v6168 = vpop.permute.xlu0 %6167
        %6169 = vrot.lane.b32.xlu0 %v5885, 64
        %v6170 = vpop.permute.xlu0 %6169
        %6171 = vrot.lane.b32.xlu0 %v5886, 64
        %v6172 = vpop.permute.xlu0 %6171
        %6173 = vrot.lane.b32.xlu0 %v5887, 64
        %v6174 = vpop.permute.xlu0 %6173
        %6175 = vrot.lane.b32.xlu0 %v5888, 64
        %v6176 = vpop.permute.xlu0 %6175
        %v6201 = vsel %vm1707, %v5745, %v5938
        %v6202 = vsel %vm1707, %v5746, %v5940
        %v6203 = vsel %vm1707, %v5747, %v5942
        %v6204 = vsel %vm1707, %v5748, %v5944
        %v6205 = vsel %vm1707, %v5749, %v5946
        %v6206 = vsel %vm1707, %v5750, %v5948
        %v6207 = vsel %vm1707, %v5751, %v5950
        %v6208 = vsel %vm1707, %v5752, %v5952
        %v6209 = vsel %vm1707, %v5753, %v5954
        %v6210 = vsel %vm1707, %v5754, %v5956
        %v6211 = vsel %vm1707, %v5755, %v5958
        %v6212 = vsel %vm1707, %v5756, %v5960
        %v6213 = vsel %vm1707, %v5757, %v5962
        %v6214 = vsel %vm1707, %v5758, %v5964
        %v6215 = vsel %vm1707, %v5759, %v5966
        %v6216 = vsel %vm1707, %v5760, %v5968
        %v6217 = vsel %vm1707, %v5761, %v5970
        %v6218 = vsel %vm1707, %v5762, %v5972
        %v6219 = vsel %vm1707, %v5763, %v5974
        %v6220 = vsel %vm1707, %v5764, %v5976
        %v6221 = vsel %vm1707, %v5765, %v5978
        %v6222 = vsel %vm1707, %v5766, %v5980
        %v6223 = vsel %vm1707, %v5767, %v5982
        %v6224 = vsel %vm1707, %v5768, %v5984
        %v6225 = vsel %vm1707, %v5793, %v6034
        %v6226 = vsel %vm1707, %v5794, %v6036
        %v6227 = vsel %vm1707, %v5795, %v6038
        %v6228 = vsel %vm1707, %v5796, %v6040
        %v6229 = vsel %vm1707, %v5797, %v6042
        %v6230 = vsel %vm1707, %v5798, %v6044
        %v6231 = vsel %vm1707, %v5799, %v6046
        %v6232 = vsel %vm1707, %v5800, %v6048
        %v6233 = vsel %vm1707, %v5801, %v6050
        %v6234 = vsel %vm1707, %v5802, %v6052
        %v6235 = vsel %vm1707, %v5803, %v6054
        %v6236 = vsel %vm1707, %v5804, %v6056
        %v6237 = vsel %vm1707, %v5805, %v6058
        %v6238 = vsel %vm1707, %v5806, %v6060
        %v6239 = vsel %vm1707, %v5807, %v6062
        %v6240 = vsel %vm1707, %v5808, %v6064
        %v6241 = vsel %vm1707, %v5809, %v6066
        %v6242 = vsel %vm1707, %v5810, %v6068
        %v6243 = vsel %vm1707, %v5811, %v6070
        %v6244 = vsel %vm1707, %v5812, %v6072
        %v6245 = vsel %vm1707, %v5813, %v6074
        %v6246 = vsel %vm1707, %v5814, %v6076
        %v6247 = vsel %vm1707, %v5815, %v6078
        %v6248 = vsel %vm1707, %v5816, %v6080
        %v6249 = vsel %vm1707, %v5841, %v6130
        %v6250 = vsel %vm1707, %v5842, %v6132
        %v6251 = vsel %vm1707, %v5843, %v6134
        %v6252 = vsel %vm1707, %v5844, %v6136
        %v6253 = vsel %vm1707, %v5845, %v6138
        %v6254 = vsel %vm1707, %v5846, %v6140
        %v6255 = vsel %vm1707, %v5847, %v6142
        %v6256 = vsel %vm1707, %v5848, %v6144
        %v6257 = vsel %vm1707, %v5849, %v6146
        %v6258 = vsel %vm1707, %v5850, %v6148
        %v6259 = vsel %vm1707, %v5851, %v6150
        %v6260 = vsel %vm1707, %v5852, %v6152
        %v6261 = vsel %vm1707, %v5853, %v6154
        %v6262 = vsel %vm1707, %v5854, %v6156
        %v6263 = vsel %vm1707, %v5855, %v6158
        %v6264 = vsel %vm1707, %v5856, %v6160
        %v6265 = vsel %vm1707, %v5857, %v6162
        %v6266 = vsel %vm1707, %v5858, %v6164
        %v6267 = vsel %vm1707, %v5859, %v6166
        %v6268 = vsel %vm1707, %v5860, %v6168
        %v6269 = vsel %vm1707, %v5861, %v6170
        %v6270 = vsel %vm1707, %v5862, %v6172
        %v6271 = vsel %vm1707, %v5863, %v6174
        %v6272 = vsel %vm1707, %v5864, %v6176
        %v6273 = vpack.c.bf16 %v6202, %v6201
        %v6274 = vpack.c.bf16 %v6226, %v6225
        %v6275 = vpack.c.bf16 %v6250, %v6249
        %v6276 = vpack.c.bf16 %v5890, %v5889
        %v6277 = vpack.c.bf16 %v6204, %v6203
        %v6278 = vpack.c.bf16 %v6228, %v6227
        %v6279 = vpack.c.bf16 %v6252, %v6251
        %v6280 = vpack.c.bf16 %v5892, %v5891
        %v6281 = vpack.c.bf16 %v6206, %v6205
        %v6282 = vpack.c.bf16 %v6230, %v6229
        %v6283 = vpack.c.bf16 %v6254, %v6253
        %v6284 = vpack.c.bf16 %v5894, %v5893
        %v6285 = vpack.c.bf16 %v6208, %v6207
        %v6286 = vpack.c.bf16 %v6232, %v6231
        %v6287 = vpack.c.bf16 %v6256, %v6255
        %v6288 = vpack.c.bf16 %v5896, %v5895
        %v6289 = vpack.c.bf16 %v6210, %v6209
        %v6290 = vpack.c.bf16 %v6234, %v6233
        %v6291 = vpack.c.bf16 %v6258, %v6257
        %v6292 = vpack.c.bf16 %v5898, %v5897
        %v6293 = vpack.c.bf16 %v6212, %v6211
        %v6294 = vpack.c.bf16 %v6236, %v6235
        %v6295 = vpack.c.bf16 %v6260, %v6259
        %v6296 = vpack.c.bf16 %v5900, %v5899
        %v6297 = vpack.c.bf16 %v6214, %v6213
        %v6298 = vpack.c.bf16 %v6238, %v6237
        %v6299 = vpack.c.bf16 %v6262, %v6261
        %v6300 = vpack.c.bf16 %v5902, %v5901
        %v6301 = vpack.c.bf16 %v6216, %v6215
        %v6302 = vpack.c.bf16 %v6240, %v6239
        %v6303 = vpack.c.bf16 %v6264, %v6263
        %v6304 = vpack.c.bf16 %v5904, %v5903
        %v6305 = vpack.c.bf16 %v6218, %v6217
        %v6306 = vpack.c.bf16 %v6242, %v6241
        %v6307 = vpack.c.bf16 %v6266, %v6265
        %v6308 = vpack.c.bf16 %v5906, %v5905
        %v6309 = vpack.c.bf16 %v6220, %v6219
        %v6310 = vpack.c.bf16 %v6244, %v6243
        %v6311 = vpack.c.bf16 %v6268, %v6267
        %v6312 = vpack.c.bf16 %v5908, %v5907
        %v6313 = vpack.c.bf16 %v6222, %v6221
        %v6314 = vpack.c.bf16 %v6246, %v6245
        %v6315 = vpack.c.bf16 %v6270, %v6269
        %v6316 = vpack.c.bf16 %v5910, %v5909
        %v6317 = vpack.c.bf16 %v6224, %v6223
        %v6318 = vpack.c.bf16 %v6248, %v6247
        %v6319 = vpack.c.bf16 %v6272, %v6271
        %v6320 = vpack.c.bf16 %v5912, %v5911
        %v6321 = vld [vmem:[%s9] sm:$0xf]
        %v6322 = vld [vmem:[%s9 + $0x4] sm:$0xf]
        %v6323 = vld [vmem:[%s9 + $0x8] sm:$0xf]
        %v6324 = vld [vmem:[%s9 + $0xc] sm:$0xf]
        %v6325 = vld [vmem:[%s9 + $0x10] sm:$0xf]
        %v6326 = vld [vmem:[%s9 + $0x14] sm:$0xf]
        %v6327 = vld [vmem:[%s9 + $0x18] sm:$0xf]
        %v6328 = vld [vmem:[%s9 + $0x1c] sm:$0xf]
        %v6329 = vld [vmem:[%s9 + $0x20] sm:$0xf]
        %v6330 = vld [vmem:[%s9 + $0x24] sm:$0xf]
        %v6331 = vld [vmem:[%s9 + $0x28] sm:$0xf]
        %v6332 = vld [vmem:[%s9 + $0x2c] sm:$0xf]
        %v6333 = vld [vmem:[%s9 + $0x30] sm:$0xf]
        %v6334 = vld [vmem:[%s9 + $0x34] sm:$0xf]
        %v6335 = vld [vmem:[%s9 + $0x38] sm:$0xf]
        %v6336 = vld [vmem:[%s9 + $0x3c] sm:$0xf]
        %v6337 = vld [vmem:[%s9 + $0x40] sm:$0xf]
        %v6338 = vld [vmem:[%s9 + $0x44] sm:$0xf]
        %v6339 = vld [vmem:[%s9 + $0x48] sm:$0xf]
        %v6340 = vld [vmem:[%s9 + $0x4c] sm:$0xf]
        %v6341 = vld [vmem:[%s9 + $0x50] sm:$0xf]
        %v6342 = vld [vmem:[%s9 + $0x54] sm:$0xf]
        %v6343 = vld [vmem:[%s9 + $0x58] sm:$0xf]
        %v6344 = vld [vmem:[%s9 + $0x5c] sm:$0xf]
        %v6345 = vld [vmem:[%s9 + $0x60] sm:$0xf]
        %v6346 = vld [vmem:[%s9 + $0x64] sm:$0xf]
        %v6347 = vld [vmem:[%s9 + $0x68] sm:$0xf]
        %v6348 = vld [vmem:[%s9 + $0x6c] sm:$0xf]
        %v6349 = vld [vmem:[%s9 + $0x70] sm:$0xf]
        %v6350 = vld [vmem:[%s9 + $0x74] sm:$0xf]
        %v6351 = vld [vmem:[%s9 + $0x78] sm:$0xf]
        %v6352 = vld [vmem:[%s9 + $0x7c] sm:$0xf]
        %v6353 = vld [vmem:[%s9 + $0x80] sm:$0xf]
        %v6354 = vld [vmem:[%s9 + $0x84] sm:$0xf]
        %v6355 = vld [vmem:[%s9 + $0x88] sm:$0xf]
        %v6356 = vld [vmem:[%s9 + $0x8c] sm:$0xf]
        %v6357 = vld [vmem:[%s9 + $0x90] sm:$0xf]
        %v6358 = vld [vmem:[%s9 + $0x94] sm:$0xf]
        %v6359 = vld [vmem:[%s9 + $0x98] sm:$0xf]
        %v6360 = vld [vmem:[%s9 + $0x9c] sm:$0xf]
        %v6361 = vld [vmem:[%s9 + $0xa0] sm:$0xf]
        %v6362 = vld [vmem:[%s9 + $0xa4] sm:$0xf]
        %v6363 = vld [vmem:[%s9 + $0xa8] sm:$0xf]
        %v6364 = vld [vmem:[%s9 + $0xac] sm:$0xf]
        %v6365 = vld [vmem:[%s9 + $0xb0] sm:$0xf]
        %v6366 = vld [vmem:[%s9 + $0xb4] sm:$0xf]
        %v6367 = vld [vmem:[%s9 + $0xb8] sm:$0xf]
        %v6368 = vld [vmem:[%s9 + $0xbc] sm:$0xf]
        %v6369 = vld [vmem:[%s9 + $0xc0] sm:$0xf]
        %v6370 = vld [vmem:[%s9 + $0xc4] sm:$0xf]
        %v6371 = vld [vmem:[%s9 + $0xc8] sm:$0xf]
        %v6372 = vld [vmem:[%s9 + $0xcc] sm:$0xf]
        %v6373 = vld [vmem:[%s9 + $0xd0] sm:$0xf]
        %v6374 = vld [vmem:[%s9 + $0xd4] sm:$0xf]
        %v6375 = vld [vmem:[%s9 + $0xd8] sm:$0xf]
        %v6376 = vld [vmem:[%s9 + $0xdc] sm:$0xf]
        %v6377 = vld [vmem:[%s10] sm:$0x1]
        %v6379 = vlaneseq
        %v6380 = vshrl.u32 %v6379, 7
        %v6381 = vsub.s32 0, %v6380
        %v6382 = vrot.slane %v6377, %v6381
        %v6440 = vunpack.c.l.b16 %v6321
        %v6441 = vunpack.c.l.b16 %v6322
        %v6442 = vunpack.c.l.b16 %v6323
        %v6443 = vunpack.c.l.b16 %v6324
        %v6444 = vunpack.c.l.b16 %v6325
        %v6445 = vunpack.c.l.b16 %v6326
        %v6446 = vunpack.c.l.b16 %v6327
        %v6447 = vunpack.c.l.b16 %v6328
        %v6448 = vunpack.c.l.b16 %v6329
        %v6449 = vunpack.c.l.b16 %v6330
        %v6450 = vunpack.c.l.b16 %v6331
        %v6451 = vunpack.c.l.b16 %v6332
        %v6452 = vunpack.c.l.b16 %v6333
        %v6453 = vunpack.c.l.b16 %v6334
        %v6454 = vunpack.c.l.b16 %v6335
        %v6455 = vunpack.c.l.b16 %v6336
        %v6456 = vunpack.c.l.b16 %v6337
        %v6457 = vunpack.c.l.b16 %v6338
        %v6458 = vunpack.c.l.b16 %v6339
        %v6459 = vunpack.c.l.b16 %v6340
        %v6460 = vunpack.c.l.b16 %v6341
        %v6461 = vunpack.c.l.b16 %v6342
        %v6462 = vunpack.c.l.b16 %v6343
        %v6463 = vunpack.c.l.b16 %v6344
        %v6464 = vunpack.c.l.b16 %v6345
        %v6465 = vunpack.c.l.b16 %v6346
        %v6466 = vunpack.c.l.b16 %v6347
        %v6467 = vunpack.c.l.b16 %v6348
        %v6468 = vunpack.c.l.b16 %v6349
        %v6469 = vunpack.c.l.b16 %v6350
        %v6470 = vunpack.c.l.b16 %v6351
        %v6471 = vunpack.c.l.b16 %v6352
        %v6472 = vunpack.c.l.b16 %v6353
        %v6473 = vunpack.c.l.b16 %v6354
        %v6474 = vunpack.c.l.b16 %v6355
        %v6475 = vunpack.c.l.b16 %v6356
        %v6476 = vunpack.c.l.b16 %v6357
        %v6477 = vunpack.c.l.b16 %v6358
        %v6478 = vunpack.c.l.b16 %v6359
        %v6479 = vunpack.c.l.b16 %v6360
        %v6480 = vunpack.c.l.b16 %v6361
        %v6481 = vunpack.c.l.b16 %v6362
        %v6482 = vunpack.c.l.b16 %v6363
        %v6483 = vunpack.c.l.b16 %v6364
        %v6484 = vunpack.c.l.b16 %v6365
        %v6485 = vunpack.c.l.b16 %v6366
        %v6486 = vunpack.c.l.b16 %v6367
        %v6487 = vunpack.c.l.b16 %v6368
        %v6488 = vunpack.c.l.b16 %v6369
        %v6489 = vunpack.c.l.b16 %v6370
        %v6490 = vunpack.c.l.b16 %v6371
        %v6491 = vunpack.c.l.b16 %v6372
        %v6492 = vunpack.c.l.b16 %v6373
        %v6493 = vunpack.c.l.b16 %v6374
        %v6494 = vunpack.c.l.b16 %v6375
        %v6495 = vunpack.c.l.b16 %v6376
        %v6496 = vpack.c.b16 %v6441, %v6440
        %v6497 = vpack.c.b16 %v6443, %v6442
        %v6498 = vpack.c.b16 %v6445, %v6444
        %v6499 = vpack.c.b16 %v6447, %v6446
        %v6500 = vpack.c.b16 %v6449, %v6448
        %v6501 = vpack.c.b16 %v6451, %v6450
        %v6502 = vpack.c.b16 %v6453, %v6452
        %v6503 = vpack.c.b16 %v6455, %v6454
        %v6504 = vpack.c.b16 %v6457, %v6456
        %v6505 = vpack.c.b16 %v6459, %v6458
        %v6506 = vpack.c.b16 %v6461, %v6460
        %v6507 = vpack.c.b16 %v6463, %v6462
        %v6508 = vpack.c.b16 %v6465, %v6464
        %v6509 = vpack.c.b16 %v6467, %v6466
        %v6510 = vpack.c.b16 %v6469, %v6468
        %v6511 = vpack.c.b16 %v6471, %v6470
        %v6512 = vpack.c.b16 %v6473, %v6472
        %v6513 = vpack.c.b16 %v6475, %v6474
        %v6514 = vpack.c.b16 %v6477, %v6476
        %v6515 = vpack.c.b16 %v6479, %v6478
        %v6516 = vpack.c.b16 %v6481, %v6480
        %v6517 = vpack.c.b16 %v6483, %v6482
        %v6518 = vpack.c.b16 %v6485, %v6484
        %v6519 = vpack.c.b16 %v6487, %v6486
        %v6520 = vpack.c.b16 %v6489, %v6488
        %v6521 = vpack.c.b16 %v6491, %v6490
        %v6522 = vpack.c.b16 %v6493, %v6492
        %v6523 = vpack.c.b16 %v6495, %v6494
        %v6553 = vsel %vm1707, %v6276, 0
        %v6556 = vsel %vm1707, %v6280, 0
        %v6559 = vsel %vm1707, %v6284, 0
        %v6562 = vsel %vm1707, %v6288, 0
        %v6565 = vsel %vm1707, %v6292, 0
        %v6568 = vsel %vm1707, %v6296, 0
        %v6571 = vsel %vm1707, %v6300, 0
        %v6574 = vsel %vm1707, %v6304, 0
        %v6577 = vsel %vm1707, %v6308, 0
        %v6580 = vsel %vm1707, %v6312, 0
        %v6583 = vsel %vm1707, %v6316, 0
        %v6586 = vsel %vm1707, %v6320, 0
        %6588 = vmatprep.subr.bf16.mxu0 0
        %6589 = vmatpush1.bf16.msra.mxu0 %v6496
        %6590 = vmatprep.subr.bf16.mxu0 0
        %6591 = vmatpush1.bf16.msra.mxu0 %v6497
        %6592 = vmatprep.subr.bf16.mxu0 0
        %6593 = vmatpush1.bf16.msra.mxu0 %v6498
        %6594 = vmatprep.subr.bf16.mxu0 0
        %6595 = vmatpush1.bf16.msra.mxu0 %v6499
        %6596 = vmatprep.subr.bf16.mxu0 0
        %6597 = vmatpush1.bf16.msra.mxu0 %v6500
        %6598 = vmatprep.subr.bf16.mxu0 0
        %6599 = vmatpush1.bf16.msra.mxu0 %v6501
        %6600 = vmatprep.subr.bf16.mxu0 0
        %6601 = vmatpush1.bf16.msra.mxu0 %v6502
        %6602 = vmatprep.subr.bf16.mxu0 0
        %6603 = vmatpush1.bf16.msra.mxu0 %v6503
        %6604 = vmatprep.subr.bf16.mxu0 0
        %6605 = vmatpush1.bf16.msra.mxu0 %v6504
        %6606 = vmatprep.subr.bf16.mxu0 0
        %6607 = vmatpush1.bf16.msra.mxu0 %v6505
        %6608 = vmatprep.subr.bf16.mxu0 0
        %6609 = vmatpush1.bf16.msra.mxu0 %v6506
        %6610 = vmatprep.subr.bf16.mxu0 0
        %6611 = vmatpush1.bf16.msra.mxu0 %v6507
        %6612 = vmatprep.subr.bf16.mxu0 0
        %6613 = vmatpush1.bf16.msra.mxu0 %v6508
        %6614 = vmatprep.subr.bf16.mxu0 0
        %6615 = vmatpush1.bf16.msra.mxu0 %v6509
        %6616 = vmatprep.subr.bf16.mxu0 0
        %6617 = vmatpush1.bf16.msra.mxu0 %v6510
        %6618 = vmatprep.subr.bf16.mxu0 0
        %6619 = vmatpush1.bf16.msra.mxu0 %v6511
        %6620 = vmatprep.mubr.bf16.mxu0 %v6274
        %6621 = vmatmul.mubr.bf16.gmra.mrb[0].mxu0 %v6273
        %v6622 = vpop.f32.mrb[0].mxu0
        %v6623 = vadd.f32 %v6382, %v6622
        %v6624 = vpop.f32.mrb[0].mxu0
        %v6625 = vpop.f32.mrb[0].mxu0
        %v6626 = vadd.f32 %v6382, %v6625
        %v6627 = vpop.f32.mrb[0].mxu0
        %6628 = vmatprep.mubr.bf16.mxu0 %v6278
        %6629 = vmatmul.mubr.bf16.gmra.mrb[0].mxu0 %v6277
        %v6630 = vpop.f32.mrb[0].mxu0
        %v6631 = vadd.f32 %v6382, %v6630
        %v6632 = vpop.f32.mrb[0].mxu0
        %v6633 = vpop.f32.mrb[0].mxu0
        %v6634 = vadd.f32 %v6382, %v6633
        %v6635 = vpop.f32.mrb[0].mxu0
        %6636 = vmatprep.mubr.bf16.mxu0 %v6282
        %6637 = vmatmul.mubr.bf16.gmra.mrb[0].mxu0 %v6281
        %v6638 = vpop.f32.mrb[0].mxu0
        %v6639 = vadd.f32 %v6382, %v6638
        %v6640 = vpop.f32.mrb[0].mxu0
        %v6641 = vpop.f32.mrb[0].mxu0
        %v6642 = vadd.f32 %v6382, %v6641
        %v6643 = vpop.f32.mrb[0].mxu0
        %6644 = vmatprep.mubr.bf16.mxu0 %v6286
        %6645 = vmatmul.mubr.bf16.gmra.mrb[0].mxu0 %v6285
        %v6646 = vpop.f32.mrb[0].mxu0
        %v6647 = vadd.f32 %v6382, %v6646
        %v6648 = vpop.f32.mrb[0].mxu0
        %v6649 = vpop.f32.mrb[0].mxu0
        %v6650 = vadd.f32 %v6382, %v6649
        %v6651 = vpop.f32.mrb[0].mxu0
        %6652 = vmatprep.mubr.bf16.mxu0 %v6290
        %6653 = vmatmul.mubr.bf16.gmra.mrb[0].mxu0 %v6289
        %v6654 = vpop.f32.mrb[0].mxu0
        %v6655 = vadd.f32 %v6382, %v6654
        %v6656 = vpop.f32.mrb[0].mxu0
        %v6657 = vpop.f32.mrb[0].mxu0
        %v6658 = vadd.f32 %v6382, %v6657
        %v6659 = vpop.f32.mrb[0].mxu0
        %6660 = vmatprep.mubr.bf16.mxu0 %v6294
        %6661 = vmatmul.mubr.bf16.gmra.mrb[0].mxu0 %v6293
        %v6662 = vpop.f32.mrb[0].mxu0
        %v6663 = vadd.f32 %v6382, %v6662
        %v6664 = vpop.f32.mrb[0].mxu0
        %v6665 = vpop.f32.mrb[0].mxu0
        %v6666 = vadd.f32 %v6382, %v6665
        %v6667 = vpop.f32.mrb[0].mxu0
        %6668 = vmatprep.mubr.bf16.mxu0 %v6298
        %6669 = vmatmul.mubr.bf16.gmra.mrb[0].mxu0 %v6297
        %v6670 = vpop.f32.mrb[0].mxu0
        %v6671 = vadd.f32 %v6382, %v6670
        %v6672 = vpop.f32.mrb[0].mxu0
        %v6673 = vpop.f32.mrb[0].mxu0
        %v6674 = vadd.f32 %v6382, %v6673
        %v6675 = vpop.f32.mrb[0].mxu0
        %6676 = vmatprep.mubr.bf16.mxu0 %v6302
        %6677 = vmatmul.mubr.bf16.gmra.mrb[0].mxu0 %v6301
        %v6678 = vpop.f32.mrb[0].mxu0
        %v6679 = vadd.f32 %v6382, %v6678
        %v6680 = vpop.f32.mrb[0].mxu0
        %v6681 = vpop.f32.mrb[0].mxu0
        %v6682 = vadd.f32 %v6382, %v6681
        %v6683 = vpop.f32.mrb[0].mxu0
        %6684 = vmatprep.mubr.bf16.mxu0 %v6306
        %6685 = vmatmul.mubr.bf16.gmra.mrb[0].mxu0 %v6305
        %v6686 = vpop.f32.mrb[0].mxu0
        %v6687 = vadd.f32 %v6382, %v6686
        %v6688 = vpop.f32.mrb[0].mxu0
        %v6689 = vpop.f32.mrb[0].mxu0
        %v6690 = vadd.f32 %v6382, %v6689
        %v6691 = vpop.f32.mrb[0].mxu0
        %6692 = vmatprep.mubr.bf16.mxu0 %v6310
        %6693 = vmatmul.mubr.bf16.gmra.mrb[0].mxu0 %v6309
        %v6694 = vpop.f32.mrb[0].mxu0
        %v6695 = vadd.f32 %v6382, %v6694
        %v6696 = vpop.f32.mrb[0].mxu0
        %v6697 = vpop.f32.mrb[0].mxu0
        %v6698 = vadd.f32 %v6382, %v6697
        %v6699 = vpop.f32.mrb[0].mxu0
        %6700 = vmatprep.mubr.bf16.mxu0 %v6314
        %6701 = vmatmul.mubr.bf16.gmra.mrb[0].mxu0 %v6313
        %v6702 = vpop.f32.mrb[0].mxu0
        %v6703 = vadd.f32 %v6382, %v6702
        %v6704 = vpop.f32.mrb[0].mxu0
        %v6705 = vpop.f32.mrb[0].mxu0
        %v6706 = vadd.f32 %v6382, %v6705
        %v6707 = vpop.f32.mrb[0].mxu0
        %6708 = vmatprep.mubr.bf16.mxu0 %v6318
        %6709 = vmatmul.mubr.bf16.gmra.mrb[0].mxu0 %v6317
        %v6710 = vpop.f32.mrb[0].mxu0
        %v6711 = vadd.f32 %v6382, %v6710
        %v6712 = vpop.f32.mrb[0].mxu0
        %v6713 = vpop.f32.mrb[0].mxu0
        %v6714 = vadd.f32 %v6382, %v6713
        %v6715 = vpop.f32.mrb[0].mxu0
        %6716 = vdwg.mxu0
        %6717 = vmatprep.subr.bf16.mxu0 0
        %6718 = vmatpush1.bf16.msra.mxu0 %v6512
        %6719 = vmatprep.subr.bf16.mxu0 0
        %6720 = vmatpush1.bf16.msra.mxu0 %v6513
        %6721 = vmatprep.subr.bf16.mxu0 0
        %6722 = vmatpush1.bf16.msra.mxu0 %v6514
        %6723 = vmatprep.subr.bf16.mxu0 0
        %6724 = vmatpush1.bf16.msra.mxu0 %v6515
        %6725 = vmatprep.subr.bf16.mxu0 0
        %6726 = vmatpush1.bf16.msra.mxu0 %v6516
        %6727 = vmatprep.subr.bf16.mxu0 0
        %6728 = vmatpush1.bf16.msra.mxu0 %v6517
        %6729 = vmatprep.subr.bf16.mxu0 0
        %6730 = vmatpush1.bf16.msra.mxu0 %v6518
        %6731 = vmatprep.subr.bf16.mxu0 0
        %6732 = vmatpush1.bf16.msra.mxu0 %v6519
        %6733 = vmatprep.subr.bf16.mxu0 0
        %6734 = vmatpush1.bf16.msra.mxu0 %v6520
        %6735 = vmatprep.subr.bf16.mxu0 0
        %6736 = vmatpush1.bf16.msra.mxu0 %v6521
        %6737 = vmatprep.subr.bf16.mxu0 0
        %6738 = vmatpush1.bf16.msra.mxu0 %v6522
        %6739 = vmatprep.subr.bf16.mxu0 0
        %6740 = vmatpush1.bf16.msra.mxu0 %v6523
        %6741 = vmatprep.subr.bf16.mxu0 0
        %6742 = vmatpush1.bf16.msra.mxu0 0
        %6743 = vmatprep.subr.bf16.mxu0 0
        %6744 = vmatpush1.bf16.msra.mxu0 0
        %6745 = vmatprep.subr.bf16.mxu0 0
        %6746 = vmatpush1.bf16.msra.mxu0 0
        %6747 = vmatprep.subr.bf16.mxu0 0
        %6748 = vmatpush1.bf16.msra.mxu0 0
        %6749 = vmatprep.mubr.bf16.mxu0 %v6553
        %6750 = vmatmul.mubr.bf16.gmra.mrb[0].mxu0 %v6275
        %v6751 = vpop.f32.mrb[0].mxu0
        %v6752 = vadd.f32 %v6623, %v6751
        %v6753 = vpop.f32.mrb[0].mxu0
        %v6754 = vpop.f32.mrb[0].mxu0
        %v6755 = vadd.f32 %v6626, %v6754
        %v6756 = vpop.f32.mrb[0].mxu0
        %6757 = vmatprep.mubr.bf16.mxu0 %v6556
        %6758 = vmatmul.mubr.bf16.gmra.mrb[0].mxu0 %v6279
        %v6759 = vpop.f32.mrb[0].mxu0
        %v6760 = vadd.f32 %v6631, %v6759
        %v6761 = vpop.f32.mrb[0].mxu0
        %v6762 = vpop.f32.mrb[0].mxu0
        %v6763 = vadd.f32 %v6634, %v6762
        %v6764 = vpop.f32.mrb[0].mxu0
        %6765 = vmatprep.mubr.bf16.mxu0 %v6559
        %6766 = vmatmul.mubr.bf16.gmra.mrb[0].mxu0 %v6283
        %v6767 = vpop.f32.mrb[0].mxu0
        %v6768 = vadd.f32 %v6639, %v6767
        %v6769 = vpop.f32.mrb[0].mxu0
        %v6770 = vpop.f32.mrb[0].mxu0
        %v6771 = vadd.f32 %v6642, %v6770
        %v6772 = vpop.f32.mrb[0].mxu0
        %6773 = vmatprep.mubr.bf16.mxu0 %v6562
        %6774 = vmatmul.mubr.bf16.gmra.mrb[0].mxu0 %v6287
        %v6775 = vpop.f32.mrb[0].mxu0
        %v6776 = vadd.f32 %v6647, %v6775
        %v6777 = vpop.f32.mrb[0].mxu0
        %v6778 = vpop.f32.mrb[0].mxu0
        %v6779 = vadd.f32 %v6650, %v6778
        %v6780 = vpop.f32.mrb[0].mxu0
        %6781 = vmatprep.mubr.bf16.mxu0 %v6565
        %6782 = vmatmul.mubr.bf16.gmra.mrb[0].mxu0 %v6291
        %v6783 = vpop.f32.mrb[0].mxu0
        %v6784 = vadd.f32 %v6655, %v6783
        %v6785 = vpop.f32.mrb[0].mxu0
        %v6786 = vpop.f32.mrb[0].mxu0
        %v6787 = vadd.f32 %v6658, %v6786
        %v6788 = vpop.f32.mrb[0].mxu0
        %6789 = vmatprep.mubr.bf16.mxu0 %v6568
        %6790 = vmatmul.mubr.bf16.gmra.mrb[0].mxu0 %v6295
        %v6791 = vpop.f32.mrb[0].mxu0
        %v6792 = vadd.f32 %v6663, %v6791
        %v6793 = vpop.f32.mrb[0].mxu0
        %v6794 = vpop.f32.mrb[0].mxu0
        %v6795 = vadd.f32 %v6666, %v6794
        %v6796 = vpop.f32.mrb[0].mxu0
        %6797 = vmatprep.mubr.bf16.mxu0 %v6571
        %6798 = vmatmul.mubr.bf16.gmra.mrb[0].mxu0 %v6299
        %v6799 = vpop.f32.mrb[0].mxu0
        %v6800 = vadd.f32 %v6671, %v6799
        %v6801 = vpop.f32.mrb[0].mxu0
        %v6802 = vpop.f32.mrb[0].mxu0
        %v6803 = vadd.f32 %v6674, %v6802
        %v6804 = vpop.f32.mrb[0].mxu0
        %6805 = vmatprep.mubr.bf16.mxu0 %v6574
        %6806 = vmatmul.mubr.bf16.gmra.mrb[0].mxu0 %v6303
        %v6807 = vpop.f32.mrb[0].mxu0
        %v6808 = vadd.f32 %v6679, %v6807
        %v6809 = vpop.f32.mrb[0].mxu0
        %v6810 = vpop.f32.mrb[0].mxu0
        %v6811 = vadd.f32 %v6682, %v6810
        %v6812 = vpop.f32.mrb[0].mxu0
        %6813 = vmatprep.mubr.bf16.mxu0 %v6577
        %6814 = vmatmul.mubr.bf16.gmra.mrb[0].mxu0 %v6307
        %v6815 = vpop.f32.mrb[0].mxu0
        %v6816 = vadd.f32 %v6687, %v6815
        %v6817 = vpop.f32.mrb[0].mxu0
        %v6818 = vpop.f32.mrb[0].mxu0
        %v6819 = vadd.f32 %v6690, %v6818
        %v6820 = vpop.f32.mrb[0].mxu0
        %6821 = vmatprep.mubr.bf16.mxu0 %v6580
        %6822 = vmatmul.mubr.bf16.gmra.mrb[0].mxu0 %v6311
        %v6823 = vpop.f32.mrb[0].mxu0
        %v6824 = vadd.f32 %v6695, %v6823
        %v6825 = vpop.f32.mrb[0].mxu0
        %v6826 = vpop.f32.mrb[0].mxu0
        %v6827 = vadd.f32 %v6698, %v6826
        %v6828 = vpop.f32.mrb[0].mxu0
        %6829 = vmatprep.mubr.bf16.mxu0 %v6583
        %6830 = vmatmul.mubr.bf16.gmra.mrb[0].mxu0 %v6315
        %v6831 = vpop.f32.mrb[0].mxu0
        %v6832 = vadd.f32 %v6703, %v6831
        %v6833 = vpop.f32.mrb[0].mxu0
        %v6834 = vpop.f32.mrb[0].mxu0
        %v6835 = vadd.f32 %v6706, %v6834
        %v6836 = vpop.f32.mrb[0].mxu0
        %6837 = vmatprep.mubr.bf16.mxu0 %v6586
        %6838 = vmatmul.mubr.bf16.gmra.mrb[0].mxu0 %v6319
        %v6839 = vpop.f32.mrb[0].mxu0
        %v6840 = vadd.f32 %v6711, %v6839
        %v6841 = vpop.f32.mrb[0].mxu0
        %v6842 = vpop.f32.mrb[0].mxu0
        %v6843 = vadd.f32 %v6714, %v6842
        %v6844 = vpop.f32.mrb[0].mxu0
        %6845 = vdwg.mxu0
        %v6846 = vmax.f32 %v6752, 0.0
        %v6847 = vmax.f32 %v6755, 0.0
        %v6848 = vmax.f32 %v6760, 0.0
        %v6849 = vmax.f32 %v6763, 0.0
        %v6850 = vmax.f32 %v6768, 0.0
        %v6851 = vmax.f32 %v6771, 0.0
        %v6852 = vmax.f32 %v6776, 0.0
        %v6853 = vmax.f32 %v6779, 0.0
        %v6854 = vmax.f32 %v6784, 0.0
        %v6855 = vmax.f32 %v6787, 0.0
        %v6856 = vmax.f32 %v6792, 0.0
        %v6857 = vmax.f32 %v6795, 0.0
        %v6858 = vmax.f32 %v6800, 0.0
        %v6859 = vmax.f32 %v6803, 0.0
        %v6860 = vmax.f32 %v6808, 0.0
        %v6861 = vmax.f32 %v6811, 0.0
        %v6862 = vmax.f32 %v6816, 0.0
        %v6863 = vmax.f32 %v6819, 0.0
        %v6864 = vmax.f32 %v6824, 0.0
        %v6865 = vmax.f32 %v6827, 0.0
        %v6866 = vmax.f32 %v6832, 0.0
        %v6867 = vmax.f32 %v6835, 0.0
        %v6868 = vmax.f32 %v6840, 0.0
        %v6869 = vmax.f32 %v6843, 0.0
        %6894 = vrot.lane.b32.xlu0 %v6752, 96
        %v6895 = vpop.permute.xlu0 %6894
        %6896 = vrot.lane.b32.xlu0 %v6755, 96
        %v6897 = vpop.permute.xlu0 %6896
        %6898 = vrot.lane.b32.xlu0 %v6760, 96
        %v6899 = vpop.permute.xlu0 %6898
        %6900 = vrot.lane.b32.xlu0 %v6763, 96
        %v6901 = vpop.permute.xlu0 %6900
        %6902 = vrot.lane.b32.xlu0 %v6768, 96
        %v6903 = vpop.permute.xlu0 %6902
        %6904 = vrot.lane.b32.xlu0 %v6771, 96
        %v6905 = vpop.permute.xlu0 %6904
        %6906 = vrot.lane.b32.xlu0 %v6776, 96
        %v6907 = vpop.permute.xlu0 %6906
        %6908 = vrot.lane.b32.xlu0 %v6779, 96
        %v6909 = vpop.permute.xlu0 %6908
        %6910 = vrot.lane.b32.xlu0 %v6784, 96
        %v6911 = vpop.permute.xlu0 %6910
        %6912 = vrot.lane.b32.xlu0 %v6787, 96
        %v6913 = vpop.permute.xlu0 %6912
        %6914 = vrot.lane.b32.xlu0 %v6792, 96
        %v6915 = vpop.permute.xlu0 %6914
        %6916 = vrot.lane.b32.xlu0 %v6795, 96
        %v6917 = vpop.permute.xlu0 %6916
        %6918 = vrot.lane.b32.xlu0 %v6800, 96
        %v6919 = vpop.permute.xlu0 %6918
        %6920 = vrot.lane.b32.xlu0 %v6803, 96
        %v6921 = vpop.permute.xlu0 %6920
        %6922 = vrot.lane.b32.xlu0 %v6808, 96
        %v6923 = vpop.permute.xlu0 %6922
        %6924 = vrot.lane.b32.xlu0 %v6811, 96
        %v6925 = vpop.permute.xlu0 %6924
        %6926 = vrot.lane.b32.xlu0 %v6816, 96
        %v6927 = vpop.permute.xlu0 %6926
        %6928 = vrot.lane.b32.xlu0 %v6819, 96
        %v6929 = vpop.permute.xlu0 %6928
        %6930 = vrot.lane.b32.xlu0 %v6824, 96
        %v6931 = vpop.permute.xlu0 %6930
        %6932 = vrot.lane.b32.xlu0 %v6827, 96
        %v6933 = vpop.permute.xlu0 %6932
        %6934 = vrot.lane.b32.xlu0 %v6832, 96
        %v6935 = vpop.permute.xlu0 %6934
        %6936 = vrot.lane.b32.xlu0 %v6835, 96
        %v6937 = vpop.permute.xlu0 %6936
        %6938 = vrot.lane.b32.xlu0 %v6840, 96
        %v6939 = vpop.permute.xlu0 %6938
        %6940 = vrot.lane.b32.xlu0 %v6843, 96
        %v6941 = vpop.permute.xlu0 %6940
        %v6966 = vadd.f32 %v6846, %v6895
        %v6967 = vadd.f32 %v6847, %v6897
        %v6968 = vadd.f32 %v6848, %v6899
        %v6969 = vadd.f32 %v6849, %v6901
        %v6970 = vadd.f32 %v6850, %v6903
        %v6971 = vadd.f32 %v6851, %v6905
        %v6972 = vadd.f32 %v6852, %v6907
        %v6973 = vadd.f32 %v6853, %v6909
        %v6974 = vadd.f32 %v6854, %v6911
        %v6975 = vadd.f32 %v6855, %v6913
        %v6976 = vadd.f32 %v6856, %v6915
        %v6977 = vadd.f32 %v6857, %v6917
        %v6978 = vadd.f32 %v6858, %v6919
        %v6979 = vadd.f32 %v6859, %v6921
        %v6980 = vadd.f32 %v6860, %v6923
        %v6981 = vadd.f32 %v6861, %v6925
        %v6982 = vadd.f32 %v6862, %v6927
        %v6983 = vadd.f32 %v6863, %v6929
        %v6984 = vadd.f32 %v6864, %v6931
        %v6985 = vadd.f32 %v6865, %v6933
        %v6986 = vadd.f32 %v6866, %v6935
        %v6987 = vadd.f32 %v6867, %v6937
        %v6988 = vadd.f32 %v6868, %v6939
        %v6989 = vadd.f32 %v6869, %v6941
        %v6990 = vmul.f32 %v4624, %v6966
        %v6991 = vmul.f32 %v4625, %v6967
        %v6992 = vmul.f32 %v4626, %v6968
        %v6993 = vmul.f32 %v4627, %v6969
        %v6994 = vmul.f32 %v4628, %v6970
        %v6995 = vmul.f32 %v4629, %v6971
        %v6996 = vmul.f32 %v4630, %v6972
        %v6997 = vmul.f32 %v4631, %v6973
        %v6998 = vmul.f32 %v4632, %v6974
        %v6999 = vmul.f32 %v4633, %v6975
        %v7000 = vmul.f32 %v4634, %v6976
        %v7001 = vmul.f32 %v4635, %v6977
        %v7002 = vmul.f32 %v4636, %v6978
        %v7003 = vmul.f32 %v4637, %v6979
        %v7004 = vmul.f32 %v4638, %v6980
        %v7005 = vmul.f32 %v4639, %v6981
        %v7006 = vmul.f32 %v4640, %v6982
        %v7007 = vmul.f32 %v4641, %v6983
        %v7008 = vmul.f32 %v4642, %v6984
        %v7009 = vmul.f32 %v4643, %v6985
        %v7010 = vmul.f32 %v4644, %v6986
        %v7011 = vmul.f32 %v4645, %v6987
        %v7012 = vmul.f32 %v4646, %v6988
        %v7013 = vmul.f32 %v4647, %v6989
        %v7014 = vmul.f32 %v6990, %v1343
        %v7015 = vmul.f32 %v6991, %v1344
        %v7016 = vmul.f32 %v6992, %v1345
        %v7017 = vmul.f32 %v6993, %v1346
        %v7018 = vmul.f32 %v6994, %v1347
        %v7019 = vmul.f32 %v6995, %v1348
        %v7020 = vmul.f32 %v6996, %v1349
        %v7021 = vmul.f32 %v6997, %v1350
        %v7022 = vmul.f32 %v6998, %v1351
        %v7023 = vmul.f32 %v6999, %v1352
        %v7024 = vmul.f32 %v7000, %v1353
        %v7025 = vmul.f32 %v7001, %v1354
        %v7026 = vmul.f32 %v7002, %v1355
        %v7027 = vmul.f32 %v7003, %v1356
        %v7028 = vmul.f32 %v7004, %v1357
        %v7029 = vmul.f32 %v7005, %v1358
        %v7030 = vmul.f32 %v7006, %v1359
        %v7031 = vmul.f32 %v7007, %v1360
        %v7032 = vmul.f32 %v7008, %v1361
        %v7033 = vmul.f32 %v7009, %v1362
        %v7034 = vmul.f32 %v7010, %v1363
        %v7035 = vmul.f32 %v7011, %v1364
        %v7036 = vmul.f32 %v7012, %v1365
        %v7037 = vmul.f32 %v7013, %v1366
        %vm7038 = vcmp.eq.s32.totalorder %v1319, 1
        %vm7039 = vcmp.eq.s32.totalorder %v1320, 1
        %vm7040 = vcmp.eq.s32.totalorder %v1321, 1
        %vm7041 = vcmp.eq.s32.totalorder %v1322, 1
        %vm7042 = vcmp.eq.s32.totalorder %v1323, 1
        %vm7043 = vcmp.eq.s32.totalorder %v1324, 1
        %vm7044 = vcmp.eq.s32.totalorder %v1325, 1
        %vm7045 = vcmp.eq.s32.totalorder %v1326, 1
        %vm7046 = vcmp.eq.s32.totalorder %v1327, 1
        %vm7047 = vcmp.eq.s32.totalorder %v1328, 1
        %vm7048 = vcmp.eq.s32.totalorder %v1329, 1
        %vm7049 = vcmp.eq.s32.totalorder %v1330, 1
        %vm7050 = vcmp.eq.s32.totalorder %v1331, 1
        %vm7051 = vcmp.eq.s32.totalorder %v1332, 1
        %vm7052 = vcmp.eq.s32.totalorder %v1333, 1
        %vm7053 = vcmp.eq.s32.totalorder %v1334, 1
        %vm7054 = vcmp.eq.s32.totalorder %v1335, 1
        %vm7055 = vcmp.eq.s32.totalorder %v1336, 1
        %vm7056 = vcmp.eq.s32.totalorder %v1337, 1
        %vm7057 = vcmp.eq.s32.totalorder %v1338, 1
        %vm7058 = vcmp.eq.s32.totalorder %v1339, 1
        %vm7059 = vcmp.eq.s32.totalorder %v1340, 1
        %vm7060 = vcmp.eq.s32.totalorder %v1341, 1
        %vm7061 = vcmp.eq.s32.totalorder %v1342, 1
        %v7062 = vsel %vm7038, %v4624, -inf
        %v7063 = vsel %vm7039, %v4625, -inf
        %v7064 = vsel %vm7040, %v4626, -inf
        %v7065 = vsel %vm7041, %v4627, -inf
        %v7066 = vsel %vm7042, %v4628, -inf
        %v7067 = vsel %vm7043, %v4629, -inf
        %v7068 = vsel %vm7044, %v4630, -inf
        %v7069 = vsel %vm7045, %v4631, -inf
        %v7070 = vsel %vm7046, %v4632, -inf
        %v7071 = vsel %vm7047, %v4633, -inf
        %v7072 = vsel %vm7048, %v4634, -inf
        %v7073 = vsel %vm7049, %v4635, -inf
        %v7074 = vsel %vm7050, %v4636, -inf
        %v7075 = vsel %vm7051, %v4637, -inf
        %v7076 = vsel %vm7052, %v4638, -inf
        %v7077 = vsel %vm7053, %v4639, -inf
        %v7078 = vsel %vm7054, %v4640, -inf
        %v7079 = vsel %vm7055, %v4641, -inf
        %v7080 = vsel %vm7056, %v4642, -inf
        %v7081 = vsel %vm7057, %v4643, -inf
        %v7082 = vsel %vm7058, %v4644, -inf
        %v7083 = vsel %vm7059, %v4645, -inf
        %v7084 = vsel %vm7060, %v4646, -inf
        %v7085 = vsel %vm7061, %v4647, -inf
        %v7086 = vsel %vm1394, %v7014, 0.0
        %v7087 = vsel %vm1394, %v7015, 0.0
        %v7088 = vadd.f32 %v7086, %v7087
        %v7089 = vsel %vm1394, %v7016, 0.0
        %v7090 = vadd.f32 %v7088, %v7089
        %v7091 = vrot.slane %v7090, 4
        %v7092 = vadd.f32 %v7090, %v7091
        %v7093 = vrot.slane %v7092, 2
        %v7094 = vadd.f32 %v7092, %v7093
        %v7095 = vrot.slane %v7094, 1
        %v7096 = vadd.f32 %v7094, %v7095
        %v7097 = vsel %vm1394, %v7062, -inf
        %v7098 = vsel %vm1394, %v7063, -inf
        %v7099 = vsel %vm1394, %v7064, -inf
        %v7100 = vmax.f32 %v7097, %v7098
        %v7101 = vmax.f32 %v7100, %v7099
        %v7102 = vrot.slane %v7101, 4
        %v7103 = vmax.f32 %v7101, %v7102
        %v7104 = vrot.slane %v7103, 2
        %v7105 = vmax.f32 %v7103, %v7104
        %v7106 = vrot.slane %v7105, 1
        %v7107 = vmax.f32 %v7105, %v7106
        %v7108 = vsel %vm1394, %v7017, 0.0
        %v7109 = vsel %vm1394, %v7018, 0.0
        %v7110 = vadd.f32 %v7108, %v7109
        %v7111 = vsel %vm1394, %v7019, 0.0
        %v7112 = vadd.f32 %v7110, %v7111
        %v7113 = vrot.slane %v7112, 4
        %v7114 = vadd.f32 %v7112, %v7113
        %v7115 = vrot.slane %v7114, 2
        %v7116 = vadd.f32 %v7114, %v7115
        %v7117 = vrot.slane %v7116, 1
        %v7118 = vadd.f32 %v7116, %v7117
        %v7119 = vsel %vm1394, %v7065, -inf
        %v7120 = vsel %vm1394, %v7066, -inf
        %v7121 = vsel %vm1394, %v7067, -inf
        %v7122 = vmax.f32 %v7119, %v7120
        %v7123 = vmax.f32 %v7122, %v7121
        %v7124 = vrot.slane %v7123, 4
        %v7125 = vmax.f32 %v7123, %v7124
        %v7126 = vrot.slane %v7125, 2
        %v7127 = vmax.f32 %v7125, %v7126
        %v7128 = vrot.slane %v7127, 1
        %v7129 = vmax.f32 %v7127, %v7128
        %v7130 = vsel %vm1394, %v7020, 0.0
        %v7131 = vsel %vm1394, %v7021, 0.0
        %v7132 = vadd.f32 %v7130, %v7131
        %v7133 = vsel %vm1394, %v7022, 0.0
        %v7134 = vadd.f32 %v7132, %v7133
        %v7135 = vrot.slane %v7134, 4
        %v7136 = vadd.f32 %v7134, %v7135
        %v7137 = vrot.slane %v7136, 2
        %v7138 = vadd.f32 %v7136, %v7137
        %v7139 = vrot.slane %v7138, 1
        %v7140 = vadd.f32 %v7138, %v7139
        %v7141 = vsel %vm1394, %v7068, -inf
        %v7142 = vsel %vm1394, %v7069, -inf
        %v7143 = vsel %vm1394, %v7070, -inf
        %v7144 = vmax.f32 %v7141, %v7142
        %v7145 = vmax.f32 %v7144, %v7143
        %v7146 = vrot.slane %v7145, 4
        %v7147 = vmax.f32 %v7145, %v7146
        %v7148 = vrot.slane %v7147, 2
        %v7149 = vmax.f32 %v7147, %v7148
        %v7150 = vrot.slane %v7149, 1
        %v7151 = vmax.f32 %v7149, %v7150
        %v7152 = vsel %vm1394, %v7023, 0.0
        %v7153 = vsel %vm1394, %v7024, 0.0
        %v7154 = vadd.f32 %v7152, %v7153
        %v7155 = vsel %vm1394, %v7025, 0.0
        %v7156 = vadd.f32 %v7154, %v7155
        %v7157 = vrot.slane %v7156, 4
        %v7158 = vadd.f32 %v7156, %v7157
        %v7159 = vrot.slane %v7158, 2
        %v7160 = vadd.f32 %v7158, %v7159
        %v7161 = vrot.slane %v7160, 1
        %v7162 = vadd.f32 %v7160, %v7161
        %v7163 = vsel %vm1394, %v7071, -inf
        %v7164 = vsel %vm1394, %v7072, -inf
        %v7165 = vsel %vm1394, %v7073, -inf
        %v7166 = vmax.f32 %v7163, %v7164
        %v7167 = vmax.f32 %v7166, %v7165
        %v7168 = vrot.slane %v7167, 4
        %v7169 = vmax.f32 %v7167, %v7168
        %v7170 = vrot.slane %v7169, 2
        %v7171 = vmax.f32 %v7169, %v7170
        %v7172 = vrot.slane %v7171, 1
        %v7173 = vmax.f32 %v7171, %v7172
        %v7174 = vsel %vm1394, %v7026, 0.0
        %v7175 = vsel %vm1394, %v7027, 0.0
        %v7176 = vadd.f32 %v7174, %v7175
        %v7177 = vsel %vm1394, %v7028, 0.0
        %v7178 = vadd.f32 %v7176, %v7177
        %v7179 = vrot.slane %v7178, 4
        %v7180 = vadd.f32 %v7178, %v7179
        %v7181 = vrot.slane %v7180, 2
        %v7182 = vadd.f32 %v7180, %v7181
        %v7183 = vrot.slane %v7182, 1
        %v7184 = vadd.f32 %v7182, %v7183
        %v7185 = vsel %vm1394, %v7074, -inf
        %v7186 = vsel %vm1394, %v7075, -inf
        %v7187 = vsel %vm1394, %v7076, -inf
        %v7188 = vmax.f32 %v7185, %v7186
        %v7189 = vmax.f32 %v7188, %v7187
        %v7190 = vrot.slane %v7189, 4
        %v7191 = vmax.f32 %v7189, %v7190
        %v7192 = vrot.slane %v7191, 2
        %v7193 = vmax.f32 %v7191, %v7192
        %v7194 = vrot.slane %v7193, 1
        %v7195 = vmax.f32 %v7193, %v7194
        %v7196 = vsel %vm1394, %v7029, 0.0
        %v7197 = vsel %vm1394, %v7030, 0.0
        %v7198 = vadd.f32 %v7196, %v7197
        %v7199 = vsel %vm1394, %v7031, 0.0
        %v7200 = vadd.f32 %v7198, %v7199
        %v7201 = vrot.slane %v7200, 4
        %v7202 = vadd.f32 %v7200, %v7201
        %v7203 = vrot.slane %v7202, 2
        %v7204 = vadd.f32 %v7202, %v7203
        %v7205 = vrot.slane %v7204, 1
        %v7206 = vadd.f32 %v7204, %v7205
        %v7207 = vsel %vm1394, %v7077, -inf
        %v7208 = vsel %vm1394, %v7078, -inf
        %v7209 = vsel %vm1394, %v7079, -inf
        %v7210 = vmax.f32 %v7207, %v7208
        %v7211 = vmax.f32 %v7210, %v7209
        %v7212 = vrot.slane %v7211, 4
        %v7213 = vmax.f32 %v7211, %v7212
        %v7214 = vrot.slane %v7213, 2
        %v7215 = vmax.f32 %v7213, %v7214
        %v7216 = vrot.slane %v7215, 1
        %v7217 = vmax.f32 %v7215, %v7216
        %v7218 = vsel %vm1394, %v7032, 0.0
        %v7219 = vsel %vm1394, %v7033, 0.0
        %v7220 = vadd.f32 %v7218, %v7219
        %v7221 = vsel %vm1394, %v7034, 0.0
        %v7222 = vadd.f32 %v7220, %v7221
        %v7223 = vrot.slane %v7222, 4
        %v7224 = vadd.f32 %v7222, %v7223
        %v7225 = vrot.slane %v7224, 2
        %v7226 = vadd.f32 %v7224, %v7225
        %v7227 = vrot.slane %v7226, 1
        %v7228 = vadd.f32 %v7226, %v7227
        %v7229 = vsel %vm1394, %v7080, -inf
        %v7230 = vsel %vm1394, %v7081, -inf
        %v7231 = vsel %vm1394, %v7082, -inf
        %v7232 = vmax.f32 %v7229, %v7230
        %v7233 = vmax.f32 %v7232, %v7231
        %v7234 = vrot.slane %v7233, 4
        %v7235 = vmax.f32 %v7233, %v7234
        %v7236 = vrot.slane %v7235, 2
        %v7237 = vmax.f32 %v7235, %v7236
        %v7238 = vrot.slane %v7237, 1
        %v7239 = vmax.f32 %v7237, %v7238
        %v7240 = vsel %vm1394, %v7035, 0.0
        %v7241 = vsel %vm1394, %v7036, 0.0
        %v7242 = vadd.f32 %v7240, %v7241
        %v7243 = vsel %vm1394, %v7037, 0.0
        %v7244 = vadd.f32 %v7242, %v7243
        %v7245 = vrot.slane %v7244, 4
        %v7246 = vadd.f32 %v7244, %v7245
        %v7247 = vrot.slane %v7246, 2
        %v7248 = vadd.f32 %v7246, %v7247
        %v7249 = vrot.slane %v7248, 1
        %v7250 = vadd.f32 %v7248, %v7249
        %v7251 = vsel %vm1394, %v7083, -inf
        %v7252 = vsel %vm1394, %v7084, -inf
        %v7253 = vsel %vm1394, %v7085, -inf
        %v7254 = vmax.f32 %v7251, %v7252
        %v7255 = vmax.f32 %v7254, %v7253
        %v7256 = vrot.slane %v7255, 4
        %v7257 = vmax.f32 %v7255, %v7256
        %v7258 = vrot.slane %v7257, 2
        %v7259 = vmax.f32 %v7257, %v7258
        %v7260 = vrot.slane %v7259, 1
        %v7261 = vmax.f32 %v7259, %v7260
        %vm7262 = vcmask 1040384
        %v7263 = vsel %vm7262, %v7096, %v7118
        %vm7264 = vcmask 1041408
        %v7265 = vsel %vm7264, %v7263, %v7140
        %vm7266 = vcmask 1042432
        %v7267 = vsel %vm7266, %v7265, %v7162
        %vm7268 = vcmask 1043456
        %v7269 = vsel %vm7268, %v7267, %v7184
        %vm7270 = vcmask 1044480
        %v7271 = vsel %vm7270, %v7269, %v7206
        %vm7272 = vcmask 1045504
        %v7273 = vsel %vm7272, %v7271, %v7228
        %vm7274 = vcmask 1046528
        %v7275 = vsel %vm7274, %v7273, %v7250
        %v7276 = vsel %vm7262, %v7107, %v7129
        %v7277 = vsel %vm7264, %v7276, %v7151
        %v7278 = vsel %vm7266, %v7277, %v7173
        %v7279 = vsel %vm7268, %v7278, %v7195
        %v7280 = vsel %vm7270, %v7279, %v7217
        %v7281 = vsel %vm7272, %v7280, %v7239
        %v7282 = vsel %vm7274, %v7281, %v7261
        %v7283 = vld [vmem:[%s11] sm:$0x1]
        %v7284 = vld [vmem:[%s12] sm:$0x1]
        %v7285 = vsel %vm1394, %v7275, 0.0
        %7286 = vadd.xlane.f32.xlu0 %v7285
        %v7287 = vpop.xlane.xlu0 %7286
        %v7288 = vrcp.pop 32.0
        %v7289 = vmul.f32 %v7287, %v7288
        %v7290 = vsub.f32 %v7275, %v7289
        %v7291 = vmul.f32 %v7290, %v7290
        %v7292 = vsel %vm1394, %v7291, 0.0
        %7293 = vadd.xlane.f32.xlu0 %v7292
        %v7294 = vpop.xlane.xlu0 %7293
        %v7295 = vmul.f32 %v7294, %v7288
        %v7296 = vadd.f32 %v7295, 1e-05
        %v7297 = vrsqrt.pop %v7296
        %v7298 = vmul.f32 %v7290, %v7297
        %v7300 = vlaneseq
        %v7301 = vshrl.u32 %v7300, 7
        %v7302 = vsub.s32 0, %v7301
        %v7303 = vrot.slane %v7283, %v7302
        %v7305 = vmul.f32 %v7298, %v7303
        %v7307 = vlaneseq
        %v7308 = vshrl.u32 %v7307, 7
        %v7309 = vsub.s32 0, %v7308
        %v7310 = vrot.slane %v7284, %v7309
        %v7312 = vadd.f32 %v7305, %v7310
        %v7313 = vsel %vm1394, %v7282, 0.0
        %7314 = vadd.xlane.f32.xlu0 %v7313
        %v7315 = vpop.xlane.xlu0 %7314
        %v7316 = vmul.f32 %v7315, %v7288
        %v7317 = vsub.f32 %v7282, %v7316
        %v7318 = vmul.f32 %v7317, %v7317
        %v7319 = vsel %vm1394, %v7318, 0.0
        %7320 = vadd.xlane.f32.xlu0 %v7319
        %v7321 = vpop.xlane.xlu0 %7320
        %v7322 = vmul.f32 %v7321, %v7288
        %v7323 = vadd.f32 %v7322, 1e-05
        %v7324 = vrsqrt.pop %v7323
        %v7325 = vmul.f32 %v7317, %v7324
        %v7326 = vmul.f32 %v7325, %v7303
        %v7327 = vadd.f32 %v7326, %v7310
        %7329 = vrot.lane.b32.xlu0 %v7327, 32
        %v7330 = vpop.permute.xlu0 %7329
        %v7332 = vsel %vm1394, %v7312, %v7330
        %v7333 = vpack.c.bf16 %v7332, %v7332
        %v7334 = vld [vmem:[%s13] sm:$0xf]
        %v7335 = vld [vmem:[%s13 + $0x4] sm:$0xf]
        %v7336 = vld [vmem:[%s13 + $0x8] sm:$0xf]
        %v7337 = vld [vmem:[%s13 + $0xc] sm:$0xf]
        %v7338 = vld [vmem:[%s13 + $0x10] sm:$0xf]
        %v7339 = vld [vmem:[%s13 + $0x14] sm:$0xf]
        %v7340 = vld [vmem:[%s13 + $0x18] sm:$0xf]
        %v7341 = vld [vmem:[%s13 + $0x1c] sm:$0xf]
        %v7342 = vld [vmem:[%s14] sm:$0x1]
        %v7344 = vlaneseq
        %v7345 = vshrl.u32 %v7344, 7
        %v7346 = vsub.s32 0, %v7345
        %v7347 = vrot.slane %v7342, %v7346
        %v7357 = vunpack.c.l.b16 %v7334
        %v7358 = vunpack.c.l.b16 %v7335
        %v7359 = vunpack.c.l.b16 %v7336
        %v7360 = vunpack.c.l.b16 %v7337
        %v7361 = vunpack.c.l.b16 %v7338
        %v7362 = vunpack.c.l.b16 %v7339
        %v7363 = vunpack.c.l.b16 %v7340
        %v7364 = vunpack.c.l.b16 %v7341
        %v7365 = vpack.c.b16 %v7358, %v7357
        %v7366 = vpack.c.b16 %v7360, %v7359
        %v7367 = vpack.c.b16 %v7362, %v7361
        %v7368 = vpack.c.b16 %v7364, %v7363
        %v7374 = vsel %vm1707, %v7333, 0
        %7376 = vmatprep.subr.bf16.mxu0 0
        %7377 = vmatpush1.bf16.msra.mxu0 %v7365
        %7378 = vmatprep.subr.bf16.mxu0 0
        %7379 = vmatpush1.bf16.msra.mxu0 %v7366
        %7380 = vmatprep.subr.bf16.mxu0 0
        %7381 = vmatpush1.bf16.msra.mxu0 %v7367
        %7382 = vmatprep.subr.bf16.mxu0 0
        %7383 = vmatpush1.bf16.msra.mxu0 %v7368
        %7384 = vmatprep.subr.bf16.mxu0 0
        %7385 = vmatpush1.bf16.msra.mxu0 0
        %7386 = vmatprep.subr.bf16.mxu0 0
        %7387 = vmatpush1.bf16.msra.mxu0 0
        %7388 = vmatprep.subr.bf16.mxu0 0
        %7389 = vmatpush1.bf16.msra.mxu0 0
        %7390 = vmatprep.subr.bf16.mxu0 0
        %7391 = vmatpush1.bf16.msra.mxu0 0
        %7392 = vmatprep.subr.bf16.mxu0 0
        %7393 = vmatpush1.bf16.msra.mxu0 0
        %7394 = vmatprep.subr.bf16.mxu0 0
        %7395 = vmatpush1.bf16.msra.mxu0 0
        %7396 = vmatprep.subr.bf16.mxu0 0
        %7397 = vmatpush1.bf16.msra.mxu0 0
        %7398 = vmatprep.subr.bf16.mxu0 0
        %7399 = vmatpush1.bf16.msra.mxu0 0
        %7400 = vmatprep.subr.bf16.mxu0 0
        %7401 = vmatpush1.bf16.msra.mxu0 0
        %7402 = vmatprep.subr.bf16.mxu0 0
        %7403 = vmatpush1.bf16.msra.mxu0 0
        %7404 = vmatprep.subr.bf16.mxu0 0
        %7405 = vmatpush1.bf16.msra.mxu0 0
        %7406 = vmatprep.subr.bf16.mxu0 0
        %7407 = vmatpush1.bf16.msra.mxu0 0
        %7408 = vmatprep.mubr.bf16.mxu0 0
        %7409 = vmatmul.mubr.bf16.gmra.mrb[0].mxu0 %v7374
        %v7410 = vpop.f32.mrb[0].mxu0
        %v7411 = vadd.f32 %v7347, %v7410
        %v7412 = vpop.f32.mrb[0].mxu0
        %v7413 = vpop.f32.mrb[0].mxu0
        %v7414 = vpop.f32.mrb[0].mxu0
        %7415 = vdwg.mxu0
        %v7416 = vtanh.pop %v7411
        %v7417 = vpack.c.bf16 %v7416, %v7416
        %v7418 = vld [vmem:[%s15] sm:$0xf]
        %v7419 = vld [vmem:[%s15 + $0x4] sm:$0xf]
        %v7420 = vld [vmem:[%s15 + $0x8] sm:$0xf]
        %v7421 = vld [vmem:[%s15 + $0xc] sm:$0xf]
        %v7422 = vld [vmem:[%s15 + $0x10] sm:$0xf]
        %v7423 = vld [vmem:[%s15 + $0x14] sm:$0xf]
        %v7424 = vld [vmem:[%s15 + $0x18] sm:$0xf]
        %v7425 = vld [vmem:[%s15 + $0x1c] sm:$0xf]
        %v7426 = vld [vmem:[%s16] sm:$0x1]
        %v7428 = vlaneseq
        %v7429 = vshrl.u32 %v7428, 7
        %v7430 = vsub.s32 0, %v7429
        %v7431 = vrot.slane %v7426, %v7430
        %v7441 = vunpack.c.l.b16 %v7418
        %v7442 = vunpack.c.l.b16 %v7419
        %v7443 = vunpack.c.l.b16 %v7420
        %v7444 = vunpack.c.l.b16 %v7421
        %v7445 = vunpack.c.l.b16 %v7422
        %v7446 = vunpack.c.l.b16 %v7423
        %v7447 = vunpack.c.l.b16 %v7424
        %v7448 = vunpack.c.l.b16 %v7425
        %v7449 = vpack.c.b16 %v7442, %v7441
        %v7450 = vpack.c.b16 %v7444, %v7443
        %v7451 = vpack.c.b16 %v7446, %v7445
        %v7452 = vpack.c.b16 %v7448, %v7447
        %v7458 = vsel %vm1707, %v7417, 0
        %7460 = vmatprep.subr.bf16.mxu0 0
        %7461 = vmatpush1.bf16.msra.mxu0 %v7449
        %7462 = vmatprep.subr.bf16.mxu0 0
        %7463 = vmatpush1.bf16.msra.mxu0 %v7450
        %7464 = vmatprep.subr.bf16.mxu0 0
        %7465 = vmatpush1.bf16.msra.mxu0 %v7451
        %7466 = vmatprep.subr.bf16.mxu0 0
        %7467 = vmatpush1.bf16.msra.mxu0 %v7452
        %7468 = vmatprep.subr.bf16.mxu0 0
        %7469 = vmatpush1.bf16.msra.mxu0 0
        %7470 = vmatprep.subr.bf16.mxu0 0
        %7471 = vmatpush1.bf16.msra.mxu0 0
        %7472 = vmatprep.subr.bf16.mxu0 0
        %7473 = vmatpush1.bf16.msra.mxu0 0
        %7474 = vmatprep.subr.bf16.mxu0 0
        %7475 = vmatpush1.bf16.msra.mxu0 0
        %7476 = vmatprep.subr.bf16.mxu0 0
        %7477 = vmatpush1.bf16.msra.mxu0 0
        %7478 = vmatprep.subr.bf16.mxu0 0
        %7479 = vmatpush1.bf16.msra.mxu0 0
        %7480 = vmatprep.subr.bf16.mxu0 0
        %7481 = vmatpush1.bf16.msra.mxu0 0
        %7482 = vmatprep.subr.bf16.mxu0 0
        %7483 = vmatpush1.bf16.msra.mxu0 0
        %7484 = vmatprep.subr.bf16.mxu0 0
        %7485 = vmatpush1.bf16.msra.mxu0 0
        %7486 = vmatprep.subr.bf16.mxu0 0
        %7487 = vmatpush1.bf16.msra.mxu0 0
        %7488 = vmatprep.subr.bf16.mxu0 0
        %7489 = vmatpush1.bf16.msra.mxu0 0
        %7490 = vmatprep.subr.bf16.mxu0 0
        %7491 = vmatpush1.bf16.msra.mxu0 0
        %7492 = vmatprep.mubr.bf16.mxu0 0
        %7493 = vmatmul.mubr.bf16.gmra.mrb[0].mxu0 %v7458
        %v7494 = vpop.f32.mrb[0].mxu0
        %v7495 = vadd.f32 %v7431, %v7494
        %v7496 = vpop.f32.mrb[0].mxu0
        %v7497 = vpop.f32.mrb[0].mxu0
        %v7498 = vpop.f32.mrb[0].mxu0
        %7499 = vdwg.mxu0
        %7500 = vst [vmem:[%s542] sm:$0xff] %v7495
        %s7501 = sand.u32 %s401, 1
        %s7502 = scalar_lea.sflag [#allocation4], %s7501
        %s7503 = sand.u32 %s401, 1
        %s7504 = smul.addr %s7503, 8
        %s7505 = scalar_lea.vmem [#allocation3], %s7504
        // Predicated region
        $region89: #{tpu_custom_call.1} parent=87 // pred_check
          %p7506 = pneg %p411
        $region90: #{tpu_custom_call.1} parent=87 // pred_check_branch
          %7508 = sbr.rel (%p7506) target = $region92
        $region91: #{tpu_custom_call.1} parent=87 // pred_region
          %s7510 = ssub.s32 128, 128
          %7511 = vsyncadd %s7502, %s7510
          %s7512 = smul.addr %s31, 128
          %s7513 = scalar_lea.hbm %s17, %s7512
          %s7515 = sshll.u32 %s7505, 4
          %s7516 = int_to_ptr.vmem [resolvable:$true] %s7515
          %7518 = dma.vmem_to_hbm [thread:$0]  %s7516, 128, %s7513, %s7502
        $region92: #{tpu_custom_call.1} parent=87 // pred_fallthru
          _
      $region88: #{tpu_custom_call.1} parent=5 // pred_fallthru
        _
      %p7519 = scmp.le.s32.totalorder 2, %s26
      // Predicated region
      $region93: #{tpu_custom_call.1} parent=5 // pred_check
        %p7520 = pneg %p7519
      $region94: #{tpu_custom_call.1} parent=5 // pred_check_branch
        %7522 = sbr.rel (%p7520) target = $region96
      $region95: #{tpu_custom_call.1} parent=5 // pred_region
        %s7523 = ssub.s32 %s26, 2
        // Predicated region
        $region97: #{tpu_custom_call.1} parent=95 // pred_check
          %p7524 = pneg %p417
        $region98: #{tpu_custom_call.1} parent=95 // pred_check_branch
          %7526 = sbr.rel (%p7524) target = $region100
        $region99: #{tpu_custom_call.1} parent=95 // pred_region
          %s7527 = sand.u32 %s402, 1
          %s7528 = scalar_lea.sflag [#allocation4], %s7527
          %s7529 = sand.u32 %s402, 1
          %s7530 = smul.addr %s7529, 8
          %s7531 = scalar_lea.vmem [#allocation3], %s7530
          %7532 = dma.done %s7528, 128
        $region100: #{tpu_custom_call.1} parent=95 // pred_fallthru
          _
      $region96: #{tpu_custom_call.1} parent=5 // pred_fallthru
        _
    $region6: #{tpu_custom_call.1} parent=1 // loop_footer
      %s30 = sadd.s32 1, %s26
    $region7: #{tpu_custom_call.1} parent=1 // loop_footer_branch
      %25 = sbr.rel target = $region3
    $region8: #{tpu_custom_call.1} parent=1 // loop_exit
      _
    %7533 = vsyncpa [#allocation4], 1
    %s7534 = scalar_lea.sflag [#allocation4], 1
    %7535 = vsyncpa %s7534, 1

</llo_original>
